<compile_context>
chip_gen: v7x
topology: tpu7x:2x2x1
jax: 0.10.0
libtpu: 0.0.40
codegen_flags: <defaults>
</compile_context>

<pallas_src>
import functools
import numpy as np

import jax
import jax.numpy as jnp
from jax.experimental import pallas as pl
from jax.experimental.pallas import tpu as pltpu

# ----------------------------- config (cfg) ----------------------------------
NUM_CLASSES = 20
HEAD_DIM = 32
STRIDES = (8, 16, 32)
CONF_THRESH = 0.05
NMS_THRESH = 0.6
TOPK = 1000
CIN_IMG = 3
CIN_PAD = 8          # pad image channels 3 -> 8 for a friendlier TPU layout

SMEM_SPEC = pl.BlockSpec(memory_space=pltpu.MemorySpace.SMEM)


# ----------------------------- fused Pallas kernel ----------------------------
def fcos_level_kernel(hs_ref, ws_ref, stride_ref, scale_ref,   # SMEM tables [L]
                      hw_ref,                                  # [M, 2] int32 (h, w) per row
                      pooled_ref,                              # [1, M, CIN_PAD] f32
                      wfpn_ref, bfpn_ref,                      # [1, 9, CIN_PAD, D] bf16 / [1, 1, D] f32
                      whead_ref, bhead_ref,                    # [9, D, 2D] bf16 / [1, 2D] f32
                      wcls_ref, bcls_ref,                      # [9, D, C]  bf16 / [1, C]  f32
                      wrc_ref, brc_ref,                        # [9, D, 8]  bf16 / [1, 8]  f32
                      out_ref,                                 # [1, M, 8] f32
                      *, hmax, wmax, head_dim):
    level = pl.program_id(0)
    m = hmax * wmax
    hs = hs_ref[level]               # valid rows of this level
    ws = ws_ref[level]               # valid cols of this level
    stride = stride_ref[level]       # f32
    scale = scale_ref[level]         # learnable Scale (f32)

    hw = hw_ref[...]
    h_idx = hw[:, 0:1]               # [M, 1] int32
    w_idx = hw[:, 1:2]

    # 9 (dy, dx) conv taps: flattened row shift + validity mask.  The mask
    # implements the implicit zero padding at the *valid* (hs, ws) border, so
    # levels smaller than (hmax, wmax) stay bit-exact with an un-padded conv.
    shifts, masks = [], []
    for dy in range(3):
        for dx in range(3):
            oy, ox = dy - 1, dx - 1
            shifts.append(oy * wmax + ox)
            hv = h_idx + oy
            wv = w_idx + ox
            masks.append((hv >= 0) & (hv < hs) & (wv >= 0) & (wv < ws))

    def shift_rows(x, off):
        # shifted[r] = x[r + off]  (zero fill outside the buffer; wrap cases
        # are killed by the tap mask anyway)
        if off == 0:
            return x
        c = x.shape[1]
        if off > 0:
            return jnp.concatenate([x[off:], jnp.zeros((off, c), x.dtype)], axis=0)
        return jnp.concatenate([jnp.zeros((-off, c), x.dtype), x[: m + off]], axis=0)

    def conv3x3(x, w, b, relu):
        # x: [M, Cin] f32, w: [9, Cin, Cout] bf16, b: [1, Cout] f32
        cout = w.shape[-1]
        acc = jnp.zeros((m, cout), jnp.float32)
        for t in range(9):
            src = jnp.where(masks[t], shift_rows(x, shifts[t]), 0.0)
            acc = acc + jnp.dot(src.astype(jnp.bfloat16), w[t],
                                preferred_element_type=jnp.float32)
        acc = acc + b
        if relu:
            acc = jnp.maximum(acc, 0.0)
        return acc

    pooled = pooled_ref[0]                                            # [M, CIN_PAD]
    feat = conv3x3(pooled, wfpn_ref[0], bfpn_ref[0], relu=True)       # [M, D]
    hf = conv3x3(feat, whead_ref[...], bhead_ref[...], relu=True)     # [M, 2D]
    cls_feat = hf[:, :head_dim]
    reg_feat = hf[:, head_dim:]
    cls = conv3x3(cls_feat, wcls_ref[...], bcls_ref[...], relu=False)  # [M, C]
    rc = conv3x3(reg_feat, wrc_ref[...], brc_ref[...], relu=False)     # [M, 8]

    # reg_pred = relu(scale * reg_pred) * stride
    reg = jnp.maximum(rc[:, :4] * scale, 0.0) * stride                 # [M, 4]
    ctn = rc[:, 4:5]                                                   # [M, 1]

    # scores, labels = max(sqrt(sigmoid(cls) * sigmoid(ctn)), dim=-1)
    s = jnp.sqrt(jax.nn.sigmoid(cls) * jax.nn.sigmoid(ctn))            # [M, C]
    smax = jnp.max(s, axis=-1, keepdims=True)                          # [M, 1]
    ids = jax.lax.broadcasted_iota(jnp.int32, s.shape, 1)
    labels = jnp.min(jnp.where(s >= smax, ids, jnp.int32(2 ** 30)),
                     axis=-1, keepdims=True)                           # [M, 1]

    # anchors + decode_boxes (anchor = ((w, h) + 0.5) * stride)
    ax = (w_idx.astype(jnp.float32) + 0.5) * stride
    ay = (h_idx.astype(jnp.float32) + 0.5) * stride
    x1 = ax - reg[:, 0:1]
    y1 = ay - reg[:, 1:2]
    x2 = ax + reg[:, 2:3]
    y2 = ay + reg[:, 3:4]

    # single packed lane-dense store: [score, label, x1, y1, x2, y2, 0, 0]
    out_ref[0] = jnp.concatenate(
        [smax, labels.astype(jnp.float32), x1, y1, x2, y2,
         jnp.zeros((m, 2), jnp.float32)], axis=-1)


def fcos_levels(packed, pooled, hw_idx, hs_arr, ws_arr, stride_arr, scale_arr,
                hmax, wmax):
    L = len(STRIDES)
    M = hmax * wmax
    D = HEAD_DIM
    C = NUM_CLASSES
    kernel = functools.partial(fcos_level_kernel, hmax=hmax, wmax=wmax, head_dim=D)
    grid_spec = pltpu.PrefetchScalarGridSpec(
        num_scalar_prefetch=0,
        grid=(L,),
        in_specs=[
            SMEM_SPEC, SMEM_SPEC, SMEM_SPEC, SMEM_SPEC,                # hs, ws, stride, scale
            pl.BlockSpec((M, 2), lambda l: (0, 0)),                    # hw_idx (shared)
            pl.BlockSpec((1, M, CIN_PAD), lambda l: (l, 0, 0)),        # pooled image, per level
            pl.BlockSpec((1, 9, CIN_PAD, D), lambda l: (l, 0, 0, 0)),  # fpn conv w, per level
            pl.BlockSpec((1, 1, D), lambda l: (l, 0, 0)),              # fpn conv b
            pl.BlockSpec((9, D, 2 * D), lambda l: (0, 0, 0)),          # merged head conv w
            pl.BlockSpec((1, 2 * D), lambda l: (0, 0)),
            pl.BlockSpec((9, D, C), lambda l: (0, 0, 0)),              # cls_pred w
            pl.BlockSpec((1, C), lambda l: (0, 0)),
            pl.BlockSpec((9, D, 8), lambda l: (0, 0, 0)),              # merged reg|ctn pred w
            pl.BlockSpec((1, 8), lambda l: (0, 0)),
        ],
        out_specs=pl.BlockSpec((1, M, 8), lambda l: (l, 0, 0)),
    )
    return pl.pallas_call(
        kernel,
        grid_spec=grid_spec,
        out_shape=jax.ShapeDtypeStruct((L, M, 8), jnp.float32),
        compiler_params=pltpu.CompilerParams(
            dimension_semantics=("parallel",)),
    )(hs_arr, ws_arr, stride_arr, scale_arr, hw_idx, pooled,
      packed["wfpn"], packed["bfpn"], packed["whead"], packed["bhead"],
      packed["wcls"], packed["bcls"], packed["wrc"], packed["brc"])


# ----------------------------- parameters -------------------------------------
def init_conv(key, cin, cout, std=None, bias_value=0.0):
    if std is None:
        std = 1.0 / np.sqrt(9 * cin)
    w = std * jax.random.normal(key, (3, 3, cin, cout), jnp.float32)
    b = jnp.full((cout,), bias_value, jnp.float32)
    return w, b


def init_params(key):
    keys = jax.random.split(key, 8)
    params = {}
    # stub backbone/FPN: one 3x3 conv (3 -> HEAD_DIM) per pyramid level
    params["fpn"] = [init_conv(keys[i], CIN_IMG, HEAD_DIM) for i in range(3)]
    # DecoupledHead stub: one conv per branch (num_cls_head = num_reg_head = 1)
    params["cls_head"] = init_conv(keys[3], HEAD_DIM, HEAD_DIM)
    params["reg_head"] = init_conv(keys[4], HEAD_DIM, HEAD_DIM)
    # prediction layers (init as in _init_pred_layers: std=0.01, cls prior bias)
    cls_bias = -float(np.log((1.0 - 0.01) / 0.01))
    params["cls_pred"] = init_conv(keys[5], HEAD_DIM, NUM_CLASSES, std=0.01,
                                   bias_value=cls_bias)
    params["reg_pred"] = init_conv(keys[6], HEAD_DIM, 4, std=0.01)
    params["ctn_pred"] = init_conv(keys[7], HEAD_DIM, 1, std=0.01)
    # Scale modules (init_value = 1.0), one per stride
    params["scales"] = jnp.ones((len(STRIDES),), jnp.float32)
    return params


def pack_params(params):
    """Merge / pad / bf16-cast weights into the kernel operand layout."""
    D, C = HEAD_DIM, NUM_CLASSES

    def tap_major(w):                     # [3,3,cin,cout] -> [9,cin,cout]
        return w.reshape(9, w.shape[2], w.shape[3])

    wfpn = jnp.stack([tap_major(w) for (w, _) in params["fpn"]])          # [L,9,3,D]
    wfpn = jnp.pad(wfpn, ((0, 0), (0, 0), (0, CIN_PAD - CIN_IMG), (0, 0)))
    bfpn = jnp.stack([b.reshape(1, D) for (_, b) in params["fpn"]])       # [L,1,D]

    wch, bch = params["cls_head"]
    wrh, brh = params["reg_head"]
    whead = jnp.concatenate([tap_major(wch), tap_major(wrh)], axis=-1)    # [9,D,2D]
    bhead = jnp.concatenate([bch, brh]).reshape(1, 2 * D)

    wcp, bcp = params["cls_pred"]
    wcls = tap_major(wcp)                                                 # [9,D,C]
    bcls = bcp.reshape(1, C)

    wrp, brp = params["reg_pred"]
    wtp, btp = params["ctn_pred"]
    wrc = jnp.concatenate([tap_major(wrp), tap_major(wtp),
                           jnp.zeros((9, D, 3), jnp.float32)], axis=-1)   # [9,D,8]
    brc = jnp.concatenate([brp, btp, jnp.zeros((3,), jnp.float32)]).reshape(1, 8)

    return {
        "wfpn": wfpn.astype(jnp.bfloat16), "bfpn": bfpn,
        "whead": whead.astype(jnp.bfloat16), "bhead": bhead,
        "wcls": wcls.astype(jnp.bfloat16), "bcls": bcls,
        "wrc": wrc.astype(jnp.bfloat16), "brc": brc,
        "scales": params["scales"],
    }


# ----------------------------- forward (inference) ----------------------------
def _fcos_forward(x_nchw, packed):
    img_h, img_w = x_nchw.shape[2], x_nchw.shape[3]
    x = jnp.transpose(x_nchw[0], (1, 2, 0)).astype(jnp.float32)           # [H, W, 3]

    hmax, wmax = img_h // STRIDES[0], img_w // STRIDES[0]
    M = hmax * wmax

    pooled_list, sizes = [], []
    for s in STRIDES:
        hs, ws = img_h // s, img_w // s
        # backbone/FPN stub: avg-pool the image to this stride
        p = x.reshape(hs, s, ws, s, CIN_IMG).mean(axis=(1, 3))            # [hs, ws, 3]
        p = jnp.pad(p, ((0, hmax - hs), (0, wmax - ws), (0, CIN_PAD - CIN_IMG)))
        pooled_list.append(p.reshape(M, CIN_PAD))
        sizes.append((hs, ws))
    pooled = jnp.stack(pooled_list)                                       # [L, M, CIN_PAD]

    hh, ww = np.meshgrid(np.arange(hmax), np.arange(wmax), indexing="ij")
    hw_idx = jnp.asarray(np.stack([hh, ww], axis=-1).reshape(M, 2), jnp.int32)

    hs_arr = jnp.asarray([sz[0] for sz in sizes], jnp.int32)
    ws_arr = jnp.asarray([sz[1] for sz in sizes], jnp.int32)
    stride_arr = jnp.asarray(STRIDES, jnp.float32)
    scale_arr = packed["scales"]

    out = fcos_levels(packed, pooled, hw_idx, hs_arr, ws_arr, stride_arr,
                      scale_arr, hmax, wmax)                              # [L, M, 8]

    all_scores, all_labels, all_bboxes = [], [], []
    for level, (hs, ws) in enumerate(sizes):
        lvl = out[level].reshape(hmax, wmax, 8)[:hs, :ws, :].reshape(hs * ws, 8)
        all_scores.append(lvl[:, 0])
        all_labels.append(lvl[:, 1].astype(jnp.int32))   # exact: labels < 2**24
        all_bboxes.append(lvl[:, 2:6])
        # TODO(synk): torch.topk branch not taken here (M <= topk at these shapes).

    return (jnp.concatenate(all_bboxes), jnp.concatenate(all_scores),
            jnp.concatenate(all_labels))


fcos_forward = jax.jit(_fcos_forward)


# ----------------------------- host-side numpy post-proc ----------------------
# (the reference also moves to .cpu().numpy() for thresholding / per-class NMS)
def nms_numpy(dets, scores, nms_thresh):
    x1, y1, x2, y2 = dets[:, 0], dets[:, 1], dets[:, 2], dets[:, 3]
    areas = (x2 - x1) * (y2 - y1)
    order = scores.argsort()[::-1]
    keep = []
    while order.size > 0:
        i = order[0]
        keep.append(i)
        xx1 = np.maximum(x1[i], x1[order[1:]])
        yy1 = np.maximum(y1[i], y1[order[1:]])
        xx2 = np.minimum(x2[i], x2[order[1:]])
        yy2 = np.minimum(y2[i], y2[order[1:]])
        w = np.maximum(1e-10, xx2 - xx1)
        h = np.maximum(1e-10, yy2 - yy1)
        inter = w * h
        ovr = inter / (areas[i] + areas[order[1:]] - inter + 1e-14)
        inds = np.where(ovr <= nms_thresh)[0]
        order = order[inds + 1]
    return keep


def postprocess_numpy(bboxes, scores, labels, img_h, img_w):
    scores = np.asarray(scores)
    labels = np.asarray(labels)
    bboxes = np.asarray(bboxes).copy()

    keep = np.where(scores >= CONF_THRESH)
    scores, labels, bboxes = scores[keep], labels[keep], bboxes[keep]

    keep = np.zeros(len(bboxes), dtype=np.int64)
    for i in range(NUM_CLASSES):
        inds = np.where(labels == i)[0]
        if len(inds) == 0:
            continue
        c_keep = nms_numpy(bboxes[inds], scores[inds], NMS_THRESH)
        keep[inds[c_keep]] = 1
    keep = np.where(keep > 0)
    bboxes, scores, labels = bboxes[keep], scores[keep], labels[keep]

    bboxes[..., [0, 2]] /= img_w
    bboxes[..., [1, 3]] /= img_h
    bboxes = bboxes.clip(0.0, 1.0)
    return bboxes, scores, labels


# ----------------------------- main --------------------------------------------
if __name__ == "__main__":
    key = jax.random.PRNGKey(0)
    kparam, kx = jax.random.split(key)
    params = init_params(kparam)
    packed = pack_params(params)

    # small image consistent with strides [8, 16, 32]: 1 x 3 x 64 x 64 (NCHW)
    x = jax.random.normal(kx, (1, 3, 64, 64), jnp.float32)

    bboxes_j, scores_j, labels_j = fcos_forward(x, packed)
    jax.block_until_ready((bboxes_j, scores_j, labels_j))

    img_h, img_w = x.shape[2], x.shape[3]
    n_anchors = sum((img_h // s) * (img_w // s) for s in STRIDES)
    assert scores_j.shape[0] == labels_j.shape[0] == bboxes_j.shape[0] == n_anchors

    bboxes, scores, labels = postprocess_numpy(bboxes_j, scores_j, labels_j, img_h, img_w)
    assert bboxes.ndim == 2 and bboxes.shape[1] == 4
    assert scores.shape[0] == labels.shape[0] == bboxes.shape[0]

    print("KERNEL_OK")
</pallas_src>

<mosaic_0001>
module attributes {stable_mosaic.version = 11 : i64} {
  func.func @fcos_level_kernel(%arg0: i32, %arg1: memref<3xi32, #tpu.memory_space<smem>>, %arg2: memref<3xi32, #tpu.memory_space<smem>>, %arg3: memref<3xf32, #tpu.memory_space<smem>>, %arg4: memref<3xf32, #tpu.memory_space<smem>>, %arg5: memref<64x2xi32, #tpu.memory_space<vmem>>, %arg6: memref<1x64x8xf32, #tpu.memory_space<vmem>>, %arg7: memref<1x9x8x32xbf16, #tpu.memory_space<vmem>>, %arg8: memref<1x1x32xf32, #tpu.memory_space<vmem>>, %arg9: memref<9x32x64xbf16, #tpu.memory_space<vmem>>, %arg10: memref<1x64xf32, #tpu.memory_space<vmem>>, %arg11: memref<9x32x20xbf16, #tpu.memory_space<vmem>>, %arg12: memref<1x20xf32, #tpu.memory_space<vmem>>, %arg13: memref<9x32x8xbf16, #tpu.memory_space<vmem>>, %arg14: memref<1x8xf32, #tpu.memory_space<vmem>>, %arg15: memref<1x64x8xf32, #tpu.memory_space<vmem>>) attributes {dimension_semantics = [#tpu.dimension_semantics<parallel>], iteration_bounds = array<i64: 3>, scalar_prefetch = 0 : i64, scratch_operands = 0 : i64, tpu.core_type = #tpu.core_type<tc>, window_params = [{transform_indices = @transform_0, window_bounds = array<i64: 3>}, {transform_indices = @transform_1, window_bounds = array<i64: 3>}, {transform_indices = @transform_2, window_bounds = array<i64: 3>}, {transform_indices = @transform_3, window_bounds = array<i64: 3>}, {pipeline_mode = #tpu.pipeline_mode<synchronous>, transform_indices = @transform_4, window_bounds = array<i64: 64, 2>}, {transform_indices = @transform_5, window_bounds = array<i64: 1, 64, 8>}, {transform_indices = @transform_6, window_bounds = array<i64: 1, 9, 8, 32>}, {transform_indices = @transform_7, window_bounds = array<i64: 1, 1, 32>}, {pipeline_mode = #tpu.pipeline_mode<synchronous>, transform_indices = @transform_8, window_bounds = array<i64: 9, 32, 64>}, {pipeline_mode = #tpu.pipeline_mode<synchronous>, transform_indices = @transform_9, window_bounds = array<i64: 1, 64>}, {pipeline_mode = #tpu.pipeline_mode<synchronous>, transform_indices = @transform_10, window_bounds = array<i64: 9, 32, 20>}, {pipeline_mode = #tpu.pipeline_mode<synchronous>, transform_indices = @transform_11, window_bounds = array<i64: 1, 20>}, {pipeline_mode = #tpu.pipeline_mode<synchronous>, transform_indices = @transform_12, window_bounds = array<i64: 9, 32, 8>}, {pipeline_mode = #tpu.pipeline_mode<synchronous>, transform_indices = @transform_13, window_bounds = array<i64: 1, 8>}, {transform_indices = @transform_14, window_bounds = array<i64: 1, 64, 8>}]} {
    %0 = arith.index_cast %arg0 : i32 to index
    %1 = memref.load %arg1[%0] : memref<3xi32, #tpu.memory_space<smem>>
    %2 = arith.index_cast %arg0 : i32 to index
    %3 = memref.load %arg2[%2] : memref<3xi32, #tpu.memory_space<smem>>
    %4 = arith.index_cast %arg0 : i32 to index
    %5 = memref.load %arg3[%4] : memref<3xf32, #tpu.memory_space<smem>>
    %6 = arith.index_cast %arg0 : i32 to index
    %7 = memref.load %arg4[%6] : memref<3xf32, #tpu.memory_space<smem>>
    %c0 = arith.constant 0 : index
    %c0_0 = arith.constant 0 : index
    %8 = vector.load %arg5[%c0, %c0_0] : memref<64x2xi32, #tpu.memory_space<vmem>>, vector<64x2xi32>
    %9 = vector.extract_strided_slice %8 {offsets = [0, 0], sizes = [64, 1], strides = [1, 1]} : vector<64x2xi32> to vector<64x1xi32>
    %10 = vector.extract_strided_slice %8 {offsets = [0, 1], sizes = [64, 1], strides = [1, 1]} : vector<64x2xi32> to vector<64x1xi32>
    %c-1_i32 = arith.constant -1 : i32
    %11 = vector.broadcast %c-1_i32 : i32 to vector<64x1xi32>
    %12 = arith.addi %9, %11 : vector<64x1xi32>
    %c-1_i32_1 = arith.constant -1 : i32
    %13 = vector.broadcast %c-1_i32_1 : i32 to vector<64x1xi32>
    %14 = arith.addi %10, %13 : vector<64x1xi32>
    %c0_i32 = arith.constant 0 : i32
    %15 = vector.broadcast %c0_i32 : i32 to vector<64x1xi32>
    %16 = arith.cmpi sge, %12, %15 : vector<64x1xi32>
    %17 = vector.broadcast %1 : i32 to vector<64x1xi32>
    %18 = arith.cmpi slt, %12, %17 : vector<64x1xi32>
    %19 = arith.andi %16, %18 : vector<64x1xi1>
    %c0_i32_2 = arith.constant 0 : i32
    %20 = vector.broadcast %c0_i32_2 : i32 to vector<64x1xi32>
    %21 = arith.cmpi sge, %14, %20 : vector<64x1xi32>
    %22 = arith.andi %19, %21 : vector<64x1xi1>
    %23 = vector.broadcast %3 : i32 to vector<64x1xi32>
    %24 = arith.cmpi slt, %14, %23 : vector<64x1xi32>
    %25 = arith.andi %22, %24 : vector<64x1xi1>
    %c-1_i32_3 = arith.constant -1 : i32
    %26 = vector.broadcast %c-1_i32_3 : i32 to vector<64x1xi32>
    %27 = arith.addi %9, %26 : vector<64x1xi32>
    %c0_i32_4 = arith.constant 0 : i32
    %28 = vector.broadcast %c0_i32_4 : i32 to vector<64x1xi32>
    %29 = arith.addi %10, %28 : vector<64x1xi32>
    %c0_i32_5 = arith.constant 0 : i32
    %30 = vector.broadcast %c0_i32_5 : i32 to vector<64x1xi32>
    %31 = arith.cmpi sge, %27, %30 : vector<64x1xi32>
    %32 = vector.broadcast %1 : i32 to vector<64x1xi32>
    %33 = arith.cmpi slt, %27, %32 : vector<64x1xi32>
    %34 = arith.andi %31, %33 : vector<64x1xi1>
    %c0_i32_6 = arith.constant 0 : i32
    %35 = vector.broadcast %c0_i32_6 : i32 to vector<64x1xi32>
    %36 = arith.cmpi sge, %29, %35 : vector<64x1xi32>
    %37 = arith.andi %34, %36 : vector<64x1xi1>
    %38 = vector.broadcast %3 : i32 to vector<64x1xi32>
    %39 = arith.cmpi slt, %29, %38 : vector<64x1xi32>
    %40 = arith.andi %37, %39 : vector<64x1xi1>
    %c-1_i32_7 = arith.constant -1 : i32
    %41 = vector.broadcast %c-1_i32_7 : i32 to vector<64x1xi32>
    %42 = arith.addi %9, %41 : vector<64x1xi32>
    %c1_i32 = arith.constant 1 : i32
    %43 = vector.broadcast %c1_i32 : i32 to vector<64x1xi32>
    %44 = arith.addi %10, %43 : vector<64x1xi32>
    %c0_i32_8 = arith.constant 0 : i32
    %45 = vector.broadcast %c0_i32_8 : i32 to vector<64x1xi32>
    %46 = arith.cmpi sge, %42, %45 : vector<64x1xi32>
    %47 = vector.broadcast %1 : i32 to vector<64x1xi32>
    %48 = arith.cmpi slt, %42, %47 : vector<64x1xi32>
    %49 = arith.andi %46, %48 : vector<64x1xi1>
    %c0_i32_9 = arith.constant 0 : i32
    %50 = vector.broadcast %c0_i32_9 : i32 to vector<64x1xi32>
    %51 = arith.cmpi sge, %44, %50 : vector<64x1xi32>
    %52 = arith.andi %49, %51 : vector<64x1xi1>
    %53 = vector.broadcast %3 : i32 to vector<64x1xi32>
    %54 = arith.cmpi slt, %44, %53 : vector<64x1xi32>
    %55 = arith.andi %52, %54 : vector<64x1xi1>
    %c0_i32_10 = arith.constant 0 : i32
    %56 = vector.broadcast %c0_i32_10 : i32 to vector<64x1xi32>
    %57 = arith.addi %9, %56 : vector<64x1xi32>
    %c-1_i32_11 = arith.constant -1 : i32
    %58 = vector.broadcast %c-1_i32_11 : i32 to vector<64x1xi32>
    %59 = arith.addi %10, %58 : vector<64x1xi32>
    %c0_i32_12 = arith.constant 0 : i32
    %60 = vector.broadcast %c0_i32_12 : i32 to vector<64x1xi32>
    %61 = arith.cmpi sge, %57, %60 : vector<64x1xi32>
    %62 = vector.broadcast %1 : i32 to vector<64x1xi32>
    %63 = arith.cmpi slt, %57, %62 : vector<64x1xi32>
    %64 = arith.andi %61, %63 : vector<64x1xi1>
    %c0_i32_13 = arith.constant 0 : i32
    %65 = vector.broadcast %c0_i32_13 : i32 to vector<64x1xi32>
    %66 = arith.cmpi sge, %59, %65 : vector<64x1xi32>
    %67 = arith.andi %64, %66 : vector<64x1xi1>
    %68 = vector.broadcast %3 : i32 to vector<64x1xi32>
    %69 = arith.cmpi slt, %59, %68 : vector<64x1xi32>
    %70 = arith.andi %67, %69 : vector<64x1xi1>
    %c0_i32_14 = arith.constant 0 : i32
    %71 = vector.broadcast %c0_i32_14 : i32 to vector<64x1xi32>
    %72 = arith.addi %9, %71 : vector<64x1xi32>
    %c0_i32_15 = arith.constant 0 : i32
    %73 = vector.broadcast %c0_i32_15 : i32 to vector<64x1xi32>
    %74 = arith.addi %10, %73 : vector<64x1xi32>
    %c0_i32_16 = arith.constant 0 : i32
    %75 = vector.broadcast %c0_i32_16 : i32 to vector<64x1xi32>
    %76 = arith.cmpi sge, %72, %75 : vector<64x1xi32>
    %77 = vector.broadcast %1 : i32 to vector<64x1xi32>
    %78 = arith.cmpi slt, %72, %77 : vector<64x1xi32>
    %79 = arith.andi %76, %78 : vector<64x1xi1>
    %c0_i32_17 = arith.constant 0 : i32
    %80 = vector.broadcast %c0_i32_17 : i32 to vector<64x1xi32>
    %81 = arith.cmpi sge, %74, %80 : vector<64x1xi32>
    %82 = arith.andi %79, %81 : vector<64x1xi1>
    %83 = vector.broadcast %3 : i32 to vector<64x1xi32>
    %84 = arith.cmpi slt, %74, %83 : vector<64x1xi32>
    %85 = arith.andi %82, %84 : vector<64x1xi1>
    %c0_i32_18 = arith.constant 0 : i32
    %86 = vector.broadcast %c0_i32_18 : i32 to vector<64x1xi32>
    %87 = arith.addi %9, %86 : vector<64x1xi32>
    %c1_i32_19 = arith.constant 1 : i32
    %88 = vector.broadcast %c1_i32_19 : i32 to vector<64x1xi32>
    %89 = arith.addi %10, %88 : vector<64x1xi32>
    %c0_i32_20 = arith.constant 0 : i32
    %90 = vector.broadcast %c0_i32_20 : i32 to vector<64x1xi32>
    %91 = arith.cmpi sge, %87, %90 : vector<64x1xi32>
    %92 = vector.broadcast %1 : i32 to vector<64x1xi32>
    %93 = arith.cmpi slt, %87, %92 : vector<64x1xi32>
    %94 = arith.andi %91, %93 : vector<64x1xi1>
    %c0_i32_21 = arith.constant 0 : i32
    %95 = vector.broadcast %c0_i32_21 : i32 to vector<64x1xi32>
    %96 = arith.cmpi sge, %89, %95 : vector<64x1xi32>
    %97 = arith.andi %94, %96 : vector<64x1xi1>
    %98 = vector.broadcast %3 : i32 to vector<64x1xi32>
    %99 = arith.cmpi slt, %89, %98 : vector<64x1xi32>
    %100 = arith.andi %97, %99 : vector<64x1xi1>
    %c1_i32_22 = arith.constant 1 : i32
    %101 = vector.broadcast %c1_i32_22 : i32 to vector<64x1xi32>
    %102 = arith.addi %9, %101 : vector<64x1xi32>
    %c-1_i32_23 = arith.constant -1 : i32
    %103 = vector.broadcast %c-1_i32_23 : i32 to vector<64x1xi32>
    %104 = arith.addi %10, %103 : vector<64x1xi32>
    %c0_i32_24 = arith.constant 0 : i32
    %105 = vector.broadcast %c0_i32_24 : i32 to vector<64x1xi32>
    %106 = arith.cmpi sge, %102, %105 : vector<64x1xi32>
    %107 = vector.broadcast %1 : i32 to vector<64x1xi32>
    %108 = arith.cmpi slt, %102, %107 : vector<64x1xi32>
    %109 = arith.andi %106, %108 : vector<64x1xi1>
    %c0_i32_25 = arith.constant 0 : i32
    %110 = vector.broadcast %c0_i32_25 : i32 to vector<64x1xi32>
    %111 = arith.cmpi sge, %104, %110 : vector<64x1xi32>
    %112 = arith.andi %109, %111 : vector<64x1xi1>
    %113 = vector.broadcast %3 : i32 to vector<64x1xi32>
    %114 = arith.cmpi slt, %104, %113 : vector<64x1xi32>
    %115 = arith.andi %112, %114 : vector<64x1xi1>
    %c1_i32_26 = arith.constant 1 : i32
    %116 = vector.broadcast %c1_i32_26 : i32 to vector<64x1xi32>
    %117 = arith.addi %9, %116 : vector<64x1xi32>
    %c0_i32_27 = arith.constant 0 : i32
    %118 = vector.broadcast %c0_i32_27 : i32 to vector<64x1xi32>
    %119 = arith.addi %10, %118 : vector<64x1xi32>
    %c0_i32_28 = arith.constant 0 : i32
    %120 = vector.broadcast %c0_i32_28 : i32 to vector<64x1xi32>
    %121 = arith.cmpi sge, %117, %120 : vector<64x1xi32>
    %122 = vector.broadcast %1 : i32 to vector<64x1xi32>
    %123 = arith.cmpi slt, %117, %122 : vector<64x1xi32>
    %124 = arith.andi %121, %123 : vector<64x1xi1>
    %c0_i32_29 = arith.constant 0 : i32
    %125 = vector.broadcast %c0_i32_29 : i32 to vector<64x1xi32>
    %126 = arith.cmpi sge, %119, %125 : vector<64x1xi32>
    %127 = arith.andi %124, %126 : vector<64x1xi1>
    %128 = vector.broadcast %3 : i32 to vector<64x1xi32>
    %129 = arith.cmpi slt, %119, %128 : vector<64x1xi32>
    %130 = arith.andi %127, %129 : vector<64x1xi1>
    %c1_i32_30 = arith.constant 1 : i32
    %131 = vector.broadcast %c1_i32_30 : i32 to vector<64x1xi32>
    %132 = arith.addi %9, %131 : vector<64x1xi32>
    %c1_i32_31 = arith.constant 1 : i32
    %133 = vector.broadcast %c1_i32_31 : i32 to vector<64x1xi32>
    %134 = arith.addi %10, %133 : vector<64x1xi32>
    %c0_i32_32 = arith.constant 0 : i32
    %135 = vector.broadcast %c0_i32_32 : i32 to vector<64x1xi32>
    %136 = arith.cmpi sge, %132, %135 : vector<64x1xi32>
    %137 = vector.broadcast %1 : i32 to vector<64x1xi32>
    %138 = arith.cmpi slt, %132, %137 : vector<64x1xi32>
    %139 = arith.andi %136, %138 : vector<64x1xi1>
    %c0_i32_33 = arith.constant 0 : i32
    %140 = vector.broadcast %c0_i32_33 : i32 to vector<64x1xi32>
    %141 = arith.cmpi sge, %134, %140 : vector<64x1xi32>
    %142 = arith.andi %139, %141 : vector<64x1xi1>
    %143 = vector.broadcast %3 : i32 to vector<64x1xi32>
    %144 = arith.cmpi slt, %134, %143 : vector<64x1xi32>
    %145 = arith.andi %142, %144 : vector<64x1xi1>
    %c0_34 = arith.constant 0 : index
    %c0_35 = arith.constant 0 : index
    %c0_36 = arith.constant 0 : index
    %146 = vector.load %arg6[%c0_34, %c0_35, %c0_36] : memref<1x64x8xf32, #tpu.memory_space<vmem>>, vector<1x64x8xf32>
    %147 = vector.shape_cast %146 : vector<1x64x8xf32> to vector<64x8xf32>
    %c0_37 = arith.constant 0 : index
    %c0_38 = arith.constant 0 : index
    %c0_39 = arith.constant 0 : index
    %c0_40 = arith.constant 0 : index
    %148 = vector.load %arg7[%c0_37, %c0_38, %c0_39, %c0_40] : memref<1x9x8x32xbf16, #tpu.memory_space<vmem>>, vector<1x9x8x32xbf16>
    %149 = vector.shape_cast %148 : vector<1x9x8x32xbf16> to vector<9x8x32xbf16>
    %c0_41 = arith.constant 0 : index
    %c0_42 = arith.constant 0 : index
    %c0_43 = arith.constant 0 : index
    %150 = vector.load %arg8[%c0_41, %c0_42, %c0_43] : memref<1x1x32xf32, #tpu.memory_space<vmem>>, vector<1x1x32xf32>
    %151 = vector.shape_cast %150 : vector<1x1x32xf32> to vector<1x32xf32>
    %cst = arith.constant 0.000000e+00 : f32
    %152 = vector.broadcast %cst : f32 to vector<64x32xf32>
    %cst_44 = arith.constant 0.000000e+00 : f32
    %153 = vector.broadcast %cst_44 : f32 to vector<9x8xf32>
    %154 = vector.extract_strided_slice %147 {offsets = [0, 0], sizes = [55, 8], strides = [1, 1]} : vector<64x8xf32> to vector<55x8xf32>
    %155 = tpu.concatenate %153, %154 in 0 : vector<9x8xf32>, vector<55x8xf32> -> vector<64x8xf32>
    %cst_45 = arith.constant 0.000000e+00 : f32
    %156 = vector.shape_cast %25 : vector<64x1xi1> to vector<64x1xi1>
    %157 = vector.broadcast %156 : vector<64x1xi1> to vector<64x8xi1>
    %158 = vector.broadcast %cst_45 : f32 to vector<64x8xf32>
    %159 = arith.select %157, %155, %158 : vector<64x8xi1>, vector<64x8xf32>
    %160 = arith.truncf %159 : vector<64x8xf32> to vector<64x8xbf16>
    %161 = vector.extract_strided_slice %149 {offsets = [0, 0, 0], sizes = [1, 8, 32], strides = [1, 1, 1]} : vector<9x8x32xbf16> to vector<1x8x32xbf16>
    %162 = vector.shape_cast %161 : vector<1x8x32xbf16> to vector<8x32xbf16>
    %cst_46 = arith.constant dense<0.000000e+00> : vector<64x32xf32>
    %163 = tpu.matmul %160, %162, %cst_46 {dimension_numbers = #tpu.dot_dimension_numbers<[1], [0], [0], [1], [0, 0, 1, 1], [], []>} : vector<64x8xbf16>, vector<8x32xbf16>, vector<64x32xf32> -> vector<64x32xf32>
    %164 = arith.addf %152, %163 : vector<64x32xf32>
    %cst_47 = arith.constant 0.000000e+00 : f32
    %165 = vector.broadcast %cst_47 : f32 to vector<8x8xf32>
    %166 = vector.extract_strided_slice %147 {offsets = [0, 0], sizes = [56, 8], strides = [1, 1]} : vector<64x8xf32> to vector<56x8xf32>
    %167 = tpu.concatenate %165, %166 in 0 : vector<8x8xf32>, vector<56x8xf32> -> vector<64x8xf32>
    %cst_48 = arith.constant 0.000000e+00 : f32
    %168 = vector.shape_cast %40 : vector<64x1xi1> to vector<64x1xi1>
    %169 = vector.broadcast %168 : vector<64x1xi1> to vector<64x8xi1>
    %170 = vector.broadcast %cst_48 : f32 to vector<64x8xf32>
    %171 = arith.select %169, %167, %170 : vector<64x8xi1>, vector<64x8xf32>
    %172 = arith.truncf %171 : vector<64x8xf32> to vector<64x8xbf16>
    %173 = vector.extract_strided_slice %149 {offsets = [1, 0, 0], sizes = [1, 8, 32], strides = [1, 1, 1]} : vector<9x8x32xbf16> to vector<1x8x32xbf16>
    %174 = vector.shape_cast %173 : vector<1x8x32xbf16> to vector<8x32xbf16>
    %cst_49 = arith.constant dense<0.000000e+00> : vector<64x32xf32>
    %175 = tpu.matmul %172, %174, %cst_49 {dimension_numbers = #tpu.dot_dimension_numbers<[1], [0], [0], [1], [0, 0, 1, 1], [], []>} : vector<64x8xbf16>, vector<8x32xbf16>, vector<64x32xf32> -> vector<64x32xf32>
    %176 = arith.addf %164, %175 : vector<64x32xf32>
    %cst_50 = arith.constant 0.000000e+00 : f32
    %177 = vector.broadcast %cst_50 : f32 to vector<7x8xf32>
    %178 = vector.extract_strided_slice %147 {offsets = [0, 0], sizes = [57, 8], strides = [1, 1]} : vector<64x8xf32> to vector<57x8xf32>
    %179 = tpu.concatenate %177, %178 in 0 : vector<7x8xf32>, vector<57x8xf32> -> vector<64x8xf32>
    %cst_51 = arith.constant 0.000000e+00 : f32
    %180 = vector.shape_cast %55 : vector<64x1xi1> to vector<64x1xi1>
    %181 = vector.broadcast %180 : vector<64x1xi1> to vector<64x8xi1>
    %182 = vector.broadcast %cst_51 : f32 to vector<64x8xf32>
    %183 = arith.select %181, %179, %182 : vector<64x8xi1>, vector<64x8xf32>
    %184 = arith.truncf %183 : vector<64x8xf32> to vector<64x8xbf16>
    %185 = vector.extract_strided_slice %149 {offsets = [2, 0, 0], sizes = [1, 8, 32], strides = [1, 1, 1]} : vector<9x8x32xbf16> to vector<1x8x32xbf16>
    %186 = vector.shape_cast %185 : vector<1x8x32xbf16> to vector<8x32xbf16>
    %cst_52 = arith.constant dense<0.000000e+00> : vector<64x32xf32>
    %187 = tpu.matmul %184, %186, %cst_52 {dimension_numbers = #tpu.dot_dimension_numbers<[1], [0], [0], [1], [0, 0, 1, 1], [], []>} : vector<64x8xbf16>, vector<8x32xbf16>, vector<64x32xf32> -> vector<64x32xf32>
    %188 = arith.addf %176, %187 : vector<64x32xf32>
    %cst_53 = arith.constant 0.000000e+00 : f32
    %189 = vector.broadcast %cst_53 : f32 to vector<1x8xf32>
    %190 = vector.extract_strided_slice %147 {offsets = [0, 0], sizes = [63, 8], strides = [1, 1]} : vector<64x8xf32> to vector<63x8xf32>
    %191 = tpu.concatenate %189, %190 in 0 : vector<1x8xf32>, vector<63x8xf32> -> vector<64x8xf32>
    %cst_54 = arith.constant 0.000000e+00 : f32
    %192 = vector.shape_cast %70 : vector<64x1xi1> to vector<64x1xi1>
    %193 = vector.broadcast %192 : vector<64x1xi1> to vector<64x8xi1>
    %194 = vector.broadcast %cst_54 : f32 to vector<64x8xf32>
    %195 = arith.select %193, %191, %194 : vector<64x8xi1>, vector<64x8xf32>
    %196 = arith.truncf %195 : vector<64x8xf32> to vector<64x8xbf16>
    %197 = vector.extract_strided_slice %149 {offsets = [3, 0, 0], sizes = [1, 8, 32], strides = [1, 1, 1]} : vector<9x8x32xbf16> to vector<1x8x32xbf16>
    %198 = vector.shape_cast %197 : vector<1x8x32xbf16> to vector<8x32xbf16>
    %cst_55 = arith.constant dense<0.000000e+00> : vector<64x32xf32>
    %199 = tpu.matmul %196, %198, %cst_55 {dimension_numbers = #tpu.dot_dimension_numbers<[1], [0], [0], [1], [0, 0, 1, 1], [], []>} : vector<64x8xbf16>, vector<8x32xbf16>, vector<64x32xf32> -> vector<64x32xf32>
    %200 = arith.addf %188, %199 : vector<64x32xf32>
    %cst_56 = arith.constant 0.000000e+00 : f32
    %201 = vector.shape_cast %85 : vector<64x1xi1> to vector<64x1xi1>
    %202 = vector.broadcast %201 : vector<64x1xi1> to vector<64x8xi1>
    %203 = vector.broadcast %cst_56 : f32 to vector<64x8xf32>
    %204 = arith.select %202, %147, %203 : vector<64x8xi1>, vector<64x8xf32>
    %205 = arith.truncf %204 : vector<64x8xf32> to vector<64x8xbf16>
    %206 = vector.extract_strided_slice %149 {offsets = [4, 0, 0], sizes = [1, 8, 32], strides = [1, 1, 1]} : vector<9x8x32xbf16> to vector<1x8x32xbf16>
    %207 = vector.shape_cast %206 : vector<1x8x32xbf16> to vector<8x32xbf16>
    %cst_57 = arith.constant dense<0.000000e+00> : vector<64x32xf32>
    %208 = tpu.matmul %205, %207, %cst_57 {dimension_numbers = #tpu.dot_dimension_numbers<[1], [0], [0], [1], [0, 0, 1, 1], [], []>} : vector<64x8xbf16>, vector<8x32xbf16>, vector<64x32xf32> -> vector<64x32xf32>
    %209 = arith.addf %200, %208 : vector<64x32xf32>
    %210 = vector.extract_strided_slice %147 {offsets = [1, 0], sizes = [63, 8], strides = [1, 1]} : vector<64x8xf32> to vector<63x8xf32>
    %cst_58 = arith.constant 0.000000e+00 : f32
    %211 = vector.broadcast %cst_58 : f32 to vector<1x8xf32>
    %212 = tpu.concatenate %210, %211 in 0 : vector<63x8xf32>, vector<1x8xf32> -> vector<64x8xf32>
    %cst_59 = arith.constant 0.000000e+00 : f32
    %213 = vector.shape_cast %100 : vector<64x1xi1> to vector<64x1xi1>
    %214 = vector.broadcast %213 : vector<64x1xi1> to vector<64x8xi1>
    %215 = vector.broadcast %cst_59 : f32 to vector<64x8xf32>
    %216 = arith.select %214, %212, %215 : vector<64x8xi1>, vector<64x8xf32>
    %217 = arith.truncf %216 : vector<64x8xf32> to vector<64x8xbf16>
    %218 = vector.extract_strided_slice %149 {offsets = [5, 0, 0], sizes = [1, 8, 32], strides = [1, 1, 1]} : vector<9x8x32xbf16> to vector<1x8x32xbf16>
    %219 = vector.shape_cast %218 : vector<1x8x32xbf16> to vector<8x32xbf16>
    %cst_60 = arith.constant dense<0.000000e+00> : vector<64x32xf32>
    %220 = tpu.matmul %217, %219, %cst_60 {dimension_numbers = #tpu.dot_dimension_numbers<[1], [0], [0], [1], [0, 0, 1, 1], [], []>} : vector<64x8xbf16>, vector<8x32xbf16>, vector<64x32xf32> -> vector<64x32xf32>
    %221 = arith.addf %209, %220 : vector<64x32xf32>
    %222 = vector.extract_strided_slice %147 {offsets = [7, 0], sizes = [57, 8], strides = [1, 1]} : vector<64x8xf32> to vector<57x8xf32>
    %cst_61 = arith.constant 0.000000e+00 : f32
    %223 = vector.broadcast %cst_61 : f32 to vector<7x8xf32>
    %224 = tpu.concatenate %222, %223 in 0 : vector<57x8xf32>, vector<7x8xf32> -> vector<64x8xf32>
    %cst_62 = arith.constant 0.000000e+00 : f32
    %225 = vector.shape_cast %115 : vector<64x1xi1> to vector<64x1xi1>
    %226 = vector.broadcast %225 : vector<64x1xi1> to vector<64x8xi1>
    %227 = vector.broadcast %cst_62 : f32 to vector<64x8xf32>
    %228 = arith.select %226, %224, %227 : vector<64x8xi1>, vector<64x8xf32>
    %229 = arith.truncf %228 : vector<64x8xf32> to vector<64x8xbf16>
    %230 = vector.extract_strided_slice %149 {offsets = [6, 0, 0], sizes = [1, 8, 32], strides = [1, 1, 1]} : vector<9x8x32xbf16> to vector<1x8x32xbf16>
    %231 = vector.shape_cast %230 : vector<1x8x32xbf16> to vector<8x32xbf16>
    %cst_63 = arith.constant dense<0.000000e+00> : vector<64x32xf32>
    %232 = tpu.matmul %229, %231, %cst_63 {dimension_numbers = #tpu.dot_dimension_numbers<[1], [0], [0], [1], [0, 0, 1, 1], [], []>} : vector<64x8xbf16>, vector<8x32xbf16>, vector<64x32xf32> -> vector<64x32xf32>
    %233 = arith.addf %221, %232 : vector<64x32xf32>
    %234 = vector.extract_strided_slice %147 {offsets = [8, 0], sizes = [56, 8], strides = [1, 1]} : vector<64x8xf32> to vector<56x8xf32>
    %cst_64 = arith.constant 0.000000e+00 : f32
    %235 = vector.broadcast %cst_64 : f32 to vector<8x8xf32>
    %236 = tpu.concatenate %234, %235 in 0 : vector<56x8xf32>, vector<8x8xf32> -> vector<64x8xf32>
    %cst_65 = arith.constant 0.000000e+00 : f32
    %237 = vector.shape_cast %130 : vector<64x1xi1> to vector<64x1xi1>
    %238 = vector.broadcast %237 : vector<64x1xi1> to vector<64x8xi1>
    %239 = vector.broadcast %cst_65 : f32 to vector<64x8xf32>
    %240 = arith.select %238, %236, %239 : vector<64x8xi1>, vector<64x8xf32>
    %241 = arith.truncf %240 : vector<64x8xf32> to vector<64x8xbf16>
    %242 = vector.extract_strided_slice %149 {offsets = [7, 0, 0], sizes = [1, 8, 32], strides = [1, 1, 1]} : vector<9x8x32xbf16> to vector<1x8x32xbf16>
    %243 = vector.shape_cast %242 : vector<1x8x32xbf16> to vector<8x32xbf16>
    %cst_66 = arith.constant dense<0.000000e+00> : vector<64x32xf32>
    %244 = tpu.matmul %241, %243, %cst_66 {dimension_numbers = #tpu.dot_dimension_numbers<[1], [0], [0], [1], [0, 0, 1, 1], [], []>} : vector<64x8xbf16>, vector<8x32xbf16>, vector<64x32xf32> -> vector<64x32xf32>
    %245 = arith.addf %233, %244 : vector<64x32xf32>
    %246 = vector.extract_strided_slice %147 {offsets = [9, 0], sizes = [55, 8], strides = [1, 1]} : vector<64x8xf32> to vector<55x8xf32>
    %cst_67 = arith.constant 0.000000e+00 : f32
    %247 = vector.broadcast %cst_67 : f32 to vector<9x8xf32>
    %248 = tpu.concatenate %246, %247 in 0 : vector<55x8xf32>, vector<9x8xf32> -> vector<64x8xf32>
    %cst_68 = arith.constant 0.000000e+00 : f32
    %249 = vector.shape_cast %145 : vector<64x1xi1> to vector<64x1xi1>
    %250 = vector.broadcast %249 : vector<64x1xi1> to vector<64x8xi1>
    %251 = vector.broadcast %cst_68 : f32 to vector<64x8xf32>
    %252 = arith.select %250, %248, %251 : vector<64x8xi1>, vector<64x8xf32>
    %253 = arith.truncf %252 : vector<64x8xf32> to vector<64x8xbf16>
    %254 = vector.extract_strided_slice %149 {offsets = [8, 0, 0], sizes = [1, 8, 32], strides = [1, 1, 1]} : vector<9x8x32xbf16> to vector<1x8x32xbf16>
    %255 = vector.shape_cast %254 : vector<1x8x32xbf16> to vector<8x32xbf16>
    %cst_69 = arith.constant dense<0.000000e+00> : vector<64x32xf32>
    %256 = tpu.matmul %253, %255, %cst_69 {dimension_numbers = #tpu.dot_dimension_numbers<[1], [0], [0], [1], [0, 0, 1, 1], [], []>} : vector<64x8xbf16>, vector<8x32xbf16>, vector<64x32xf32> -> vector<64x32xf32>
    %257 = arith.addf %245, %256 : vector<64x32xf32>
    %258 = vector.broadcast %151 : vector<1x32xf32> to vector<64x32xf32>
    %259 = arith.addf %257, %258 : vector<64x32xf32>
    %cst_70 = arith.constant 0.000000e+00 : f32
    %260 = vector.broadcast %cst_70 : f32 to vector<64x32xf32>
    %261 = arith.maximumf %259, %260 : vector<64x32xf32>
    %c0_71 = arith.constant 0 : index
    %c0_72 = arith.constant 0 : index
    %c0_73 = arith.constant 0 : index
    %262 = vector.load %arg9[%c0_71, %c0_72, %c0_73] : memref<9x32x64xbf16, #tpu.memory_space<vmem>>, vector<9x32x64xbf16>
    %c0_74 = arith.constant 0 : index
    %c0_75 = arith.constant 0 : index
    %263 = vector.load %arg10[%c0_74, %c0_75] : memref<1x64xf32, #tpu.memory_space<vmem>>, vector<1x64xf32>
    %cst_76 = arith.constant 0.000000e+00 : f32
    %264 = vector.broadcast %cst_76 : f32 to vector<64x64xf32>
    %cst_77 = arith.constant 0.000000e+00 : f32
    %265 = vector.broadcast %cst_77 : f32 to vector<9x32xf32>
    %266 = vector.extract_strided_slice %261 {offsets = [0, 0], sizes = [55, 32], strides = [1, 1]} : vector<64x32xf32> to vector<55x32xf32>
    %267 = tpu.concatenate %265, %266 in 0 : vector<9x32xf32>, vector<55x32xf32> -> vector<64x32xf32>
    %cst_78 = arith.constant 0.000000e+00 : f32
    %268 = vector.shape_cast %25 : vector<64x1xi1> to vector<64x1xi1>
    %269 = vector.broadcast %268 : vector<64x1xi1> to vector<64x32xi1>
    %270 = vector.broadcast %cst_78 : f32 to vector<64x32xf32>
    %271 = arith.select %269, %267, %270 : vector<64x32xi1>, vector<64x32xf32>
    %272 = arith.truncf %271 : vector<64x32xf32> to vector<64x32xbf16>
    %273 = vector.extract_strided_slice %262 {offsets = [0, 0, 0], sizes = [1, 32, 64], strides = [1, 1, 1]} : vector<9x32x64xbf16> to vector<1x32x64xbf16>
    %274 = vector.shape_cast %273 : vector<1x32x64xbf16> to vector<32x64xbf16>
    %cst_79 = arith.constant dense<0.000000e+00> : vector<64x64xf32>
    %275 = tpu.matmul %272, %274, %cst_79 {dimension_numbers = #tpu.dot_dimension_numbers<[1], [0], [0], [1], [0, 0, 1, 1], [], []>} : vector<64x32xbf16>, vector<32x64xbf16>, vector<64x64xf32> -> vector<64x64xf32>
    %276 = arith.addf %264, %275 : vector<64x64xf32>
    %cst_80 = arith.constant 0.000000e+00 : f32
    %277 = vector.broadcast %cst_80 : f32 to vector<8x32xf32>
    %278 = vector.extract_strided_slice %261 {offsets = [0, 0], sizes = [56, 32], strides = [1, 1]} : vector<64x32xf32> to vector<56x32xf32>
    %279 = tpu.concatenate %277, %278 in 0 : vector<8x32xf32>, vector<56x32xf32> -> vector<64x32xf32>
    %cst_81 = arith.constant 0.000000e+00 : f32
    %280 = vector.shape_cast %40 : vector<64x1xi1> to vector<64x1xi1>
    %281 = vector.broadcast %280 : vector<64x1xi1> to vector<64x32xi1>
    %282 = vector.broadcast %cst_81 : f32 to vector<64x32xf32>
    %283 = arith.select %281, %279, %282 : vector<64x32xi1>, vector<64x32xf32>
    %284 = arith.truncf %283 : vector<64x32xf32> to vector<64x32xbf16>
    %285 = vector.extract_strided_slice %262 {offsets = [1, 0, 0], sizes = [1, 32, 64], strides = [1, 1, 1]} : vector<9x32x64xbf16> to vector<1x32x64xbf16>
    %286 = vector.shape_cast %285 : vector<1x32x64xbf16> to vector<32x64xbf16>
    %cst_82 = arith.constant dense<0.000000e+00> : vector<64x64xf32>
    %287 = tpu.matmul %284, %286, %cst_82 {dimension_numbers = #tpu.dot_dimension_numbers<[1], [0], [0], [1], [0, 0, 1, 1], [], []>} : vector<64x32xbf16>, vector<32x64xbf16>, vector<64x64xf32> -> vector<64x64xf32>
    %288 = arith.addf %276, %287 : vector<64x64xf32>
    %cst_83 = arith.constant 0.000000e+00 : f32
    %289 = vector.broadcast %cst_83 : f32 to vector<7x32xf32>
    %290 = vector.extract_strided_slice %261 {offsets = [0, 0], sizes = [57, 32], strides = [1, 1]} : vector<64x32xf32> to vector<57x32xf32>
    %291 = tpu.concatenate %289, %290 in 0 : vector<7x32xf32>, vector<57x32xf32> -> vector<64x32xf32>
    %cst_84 = arith.constant 0.000000e+00 : f32
    %292 = vector.shape_cast %55 : vector<64x1xi1> to vector<64x1xi1>
    %293 = vector.broadcast %292 : vector<64x1xi1> to vector<64x32xi1>
    %294 = vector.broadcast %cst_84 : f32 to vector<64x32xf32>
    %295 = arith.select %293, %291, %294 : vector<64x32xi1>, vector<64x32xf32>
    %296 = arith.truncf %295 : vector<64x32xf32> to vector<64x32xbf16>
    %297 = vector.extract_strided_slice %262 {offsets = [2, 0, 0], sizes = [1, 32, 64], strides = [1, 1, 1]} : vector<9x32x64xbf16> to vector<1x32x64xbf16>
    %298 = vector.shape_cast %297 : vector<1x32x64xbf16> to vector<32x64xbf16>
    %cst_85 = arith.constant dense<0.000000e+00> : vector<64x64xf32>
    %299 = tpu.matmul %296, %298, %cst_85 {dimension_numbers = #tpu.dot_dimension_numbers<[1], [0], [0], [1], [0, 0, 1, 1], [], []>} : vector<64x32xbf16>, vector<32x64xbf16>, vector<64x64xf32> -> vector<64x64xf32>
    %300 = arith.addf %288, %299 : vector<64x64xf32>
    %cst_86 = arith.constant 0.000000e+00 : f32
    %301 = vector.broadcast %cst_86 : f32 to vector<1x32xf32>
    %302 = vector.extract_strided_slice %261 {offsets = [0, 0], sizes = [63, 32], strides = [1, 1]} : vector<64x32xf32> to vector<63x32xf32>
    %303 = tpu.concatenate %301, %302 in 0 : vector<1x32xf32>, vector<63x32xf32> -> vector<64x32xf32>
    %cst_87 = arith.constant 0.000000e+00 : f32
    %304 = vector.shape_cast %70 : vector<64x1xi1> to vector<64x1xi1>
    %305 = vector.broadcast %304 : vector<64x1xi1> to vector<64x32xi1>
    %306 = vector.broadcast %cst_87 : f32 to vector<64x32xf32>
    %307 = arith.select %305, %303, %306 : vector<64x32xi1>, vector<64x32xf32>
    %308 = arith.truncf %307 : vector<64x32xf32> to vector<64x32xbf16>
    %309 = vector.extract_strided_slice %262 {offsets = [3, 0, 0], sizes = [1, 32, 64], strides = [1, 1, 1]} : vector<9x32x64xbf16> to vector<1x32x64xbf16>
    %310 = vector.shape_cast %309 : vector<1x32x64xbf16> to vector<32x64xbf16>
    %cst_88 = arith.constant dense<0.000000e+00> : vector<64x64xf32>
    %311 = tpu.matmul %308, %310, %cst_88 {dimension_numbers = #tpu.dot_dimension_numbers<[1], [0], [0], [1], [0, 0, 1, 1], [], []>} : vector<64x32xbf16>, vector<32x64xbf16>, vector<64x64xf32> -> vector<64x64xf32>
    %312 = arith.addf %300, %311 : vector<64x64xf32>
    %cst_89 = arith.constant 0.000000e+00 : f32
    %313 = vector.shape_cast %85 : vector<64x1xi1> to vector<64x1xi1>
    %314 = vector.broadcast %313 : vector<64x1xi1> to vector<64x32xi1>
    %315 = vector.broadcast %cst_89 : f32 to vector<64x32xf32>
    %316 = arith.select %314, %261, %315 : vector<64x32xi1>, vector<64x32xf32>
    %317 = arith.truncf %316 : vector<64x32xf32> to vector<64x32xbf16>
    %318 = vector.extract_strided_slice %262 {offsets = [4, 0, 0], sizes = [1, 32, 64], strides = [1, 1, 1]} : vector<9x32x64xbf16> to vector<1x32x64xbf16>
    %319 = vector.shape_cast %318 : vector<1x32x64xbf16> to vector<32x64xbf16>
    %cst_90 = arith.constant dense<0.000000e+00> : vector<64x64xf32>
    %320 = tpu.matmul %317, %319, %cst_90 {dimension_numbers = #tpu.dot_dimension_numbers<[1], [0], [0], [1], [0, 0, 1, 1], [], []>} : vector<64x32xbf16>, vector<32x64xbf16>, vector<64x64xf32> -> vector<64x64xf32>
    %321 = arith.addf %312, %320 : vector<64x64xf32>
    %322 = vector.extract_strided_slice %261 {offsets = [1, 0], sizes = [63, 32], strides = [1, 1]} : vector<64x32xf32> to vector<63x32xf32>
    %cst_91 = arith.constant 0.000000e+00 : f32
    %323 = vector.broadcast %cst_91 : f32 to vector<1x32xf32>
    %324 = tpu.concatenate %322, %323 in 0 : vector<63x32xf32>, vector<1x32xf32> -> vector<64x32xf32>
    %cst_92 = arith.constant 0.000000e+00 : f32
    %325 = vector.shape_cast %100 : vector<64x1xi1> to vector<64x1xi1>
    %326 = vector.broadcast %325 : vector<64x1xi1> to vector<64x32xi1>
    %327 = vector.broadcast %cst_92 : f32 to vector<64x32xf32>
    %328 = arith.select %326, %324, %327 : vector<64x32xi1>, vector<64x32xf32>
    %329 = arith.truncf %328 : vector<64x32xf32> to vector<64x32xbf16>
    %330 = vector.extract_strided_slice %262 {offsets = [5, 0, 0], sizes = [1, 32, 64], strides = [1, 1, 1]} : vector<9x32x64xbf16> to vector<1x32x64xbf16>
    %331 = vector.shape_cast %330 : vector<1x32x64xbf16> to vector<32x64xbf16>
    %cst_93 = arith.constant dense<0.000000e+00> : vector<64x64xf32>
    %332 = tpu.matmul %329, %331, %cst_93 {dimension_numbers = #tpu.dot_dimension_numbers<[1], [0], [0], [1], [0, 0, 1, 1], [], []>} : vector<64x32xbf16>, vector<32x64xbf16>, vector<64x64xf32> -> vector<64x64xf32>
    %333 = arith.addf %321, %332 : vector<64x64xf32>
    %334 = vector.extract_strided_slice %261 {offsets = [7, 0], sizes = [57, 32], strides = [1, 1]} : vector<64x32xf32> to vector<57x32xf32>
    %cst_94 = arith.constant 0.000000e+00 : f32
    %335 = vector.broadcast %cst_94 : f32 to vector<7x32xf32>
    %336 = tpu.concatenate %334, %335 in 0 : vector<57x32xf32>, vector<7x32xf32> -> vector<64x32xf32>
    %cst_95 = arith.constant 0.000000e+00 : f32
    %337 = vector.shape_cast %115 : vector<64x1xi1> to vector<64x1xi1>
    %338 = vector.broadcast %337 : vector<64x1xi1> to vector<64x32xi1>
    %339 = vector.broadcast %cst_95 : f32 to vector<64x32xf32>
    %340 = arith.select %338, %336, %339 : vector<64x32xi1>, vector<64x32xf32>
    %341 = arith.truncf %340 : vector<64x32xf32> to vector<64x32xbf16>
    %342 = vector.extract_strided_slice %262 {offsets = [6, 0, 0], sizes = [1, 32, 64], strides = [1, 1, 1]} : vector<9x32x64xbf16> to vector<1x32x64xbf16>
    %343 = vector.shape_cast %342 : vector<1x32x64xbf16> to vector<32x64xbf16>
    %cst_96 = arith.constant dense<0.000000e+00> : vector<64x64xf32>
    %344 = tpu.matmul %341, %343, %cst_96 {dimension_numbers = #tpu.dot_dimension_numbers<[1], [0], [0], [1], [0, 0, 1, 1], [], []>} : vector<64x32xbf16>, vector<32x64xbf16>, vector<64x64xf32> -> vector<64x64xf32>
    %345 = arith.addf %333, %344 : vector<64x64xf32>
    %346 = vector.extract_strided_slice %261 {offsets = [8, 0], sizes = [56, 32], strides = [1, 1]} : vector<64x32xf32> to vector<56x32xf32>
    %cst_97 = arith.constant 0.000000e+00 : f32
    %347 = vector.broadcast %cst_97 : f32 to vector<8x32xf32>
    %348 = tpu.concatenate %346, %347 in 0 : vector<56x32xf32>, vector<8x32xf32> -> vector<64x32xf32>
    %cst_98 = arith.constant 0.000000e+00 : f32
    %349 = vector.shape_cast %130 : vector<64x1xi1> to vector<64x1xi1>
    %350 = vector.broadcast %349 : vector<64x1xi1> to vector<64x32xi1>
    %351 = vector.broadcast %cst_98 : f32 to vector<64x32xf32>
    %352 = arith.select %350, %348, %351 : vector<64x32xi1>, vector<64x32xf32>
    %353 = arith.truncf %352 : vector<64x32xf32> to vector<64x32xbf16>
    %354 = vector.extract_strided_slice %262 {offsets = [7, 0, 0], sizes = [1, 32, 64], strides = [1, 1, 1]} : vector<9x32x64xbf16> to vector<1x32x64xbf16>
    %355 = vector.shape_cast %354 : vector<1x32x64xbf16> to vector<32x64xbf16>
    %cst_99 = arith.constant dense<0.000000e+00> : vector<64x64xf32>
    %356 = tpu.matmul %353, %355, %cst_99 {dimension_numbers = #tpu.dot_dimension_numbers<[1], [0], [0], [1], [0, 0, 1, 1], [], []>} : vector<64x32xbf16>, vector<32x64xbf16>, vector<64x64xf32> -> vector<64x64xf32>
    %357 = arith.addf %345, %356 : vector<64x64xf32>
    %358 = vector.extract_strided_slice %261 {offsets = [9, 0], sizes = [55, 32], strides = [1, 1]} : vector<64x32xf32> to vector<55x32xf32>
    %cst_100 = arith.constant 0.000000e+00 : f32
    %359 = vector.broadcast %cst_100 : f32 to vector<9x32xf32>
    %360 = tpu.concatenate %358, %359 in 0 : vector<55x32xf32>, vector<9x32xf32> -> vector<64x32xf32>
    %cst_101 = arith.constant 0.000000e+00 : f32
    %361 = vector.shape_cast %145 : vector<64x1xi1> to vector<64x1xi1>
    %362 = vector.broadcast %361 : vector<64x1xi1> to vector<64x32xi1>
    %363 = vector.broadcast %cst_101 : f32 to vector<64x32xf32>
    %364 = arith.select %362, %360, %363 : vector<64x32xi1>, vector<64x32xf32>
    %365 = arith.truncf %364 : vector<64x32xf32> to vector<64x32xbf16>
    %366 = vector.extract_strided_slice %262 {offsets = [8, 0, 0], sizes = [1, 32, 64], strides = [1, 1, 1]} : vector<9x32x64xbf16> to vector<1x32x64xbf16>
    %367 = vector.shape_cast %366 : vector<1x32x64xbf16> to vector<32x64xbf16>
    %cst_102 = arith.constant dense<0.000000e+00> : vector<64x64xf32>
    %368 = tpu.matmul %365, %367, %cst_102 {dimension_numbers = #tpu.dot_dimension_numbers<[1], [0], [0], [1], [0, 0, 1, 1], [], []>} : vector<64x32xbf16>, vector<32x64xbf16>, vector<64x64xf32> -> vector<64x64xf32>
    %369 = arith.addf %357, %368 : vector<64x64xf32>
    %370 = vector.broadcast %263 : vector<1x64xf32> to vector<64x64xf32>
    %371 = arith.addf %369, %370 : vector<64x64xf32>
    %cst_103 = arith.constant 0.000000e+00 : f32
    %372 = vector.broadcast %cst_103 : f32 to vector<64x64xf32>
    %373 = arith.maximumf %371, %372 : vector<64x64xf32>
    %374 = vector.extract_strided_slice %373 {offsets = [0, 0], sizes = [64, 32], strides = [1, 1]} : vector<64x64xf32> to vector<64x32xf32>
    %375 = vector.extract_strided_slice %373 {offsets = [0, 32], sizes = [64, 32], strides = [1, 1]} : vector<64x64xf32> to vector<64x32xf32>
    %c0_104 = arith.constant 0 : index
    %c0_105 = arith.constant 0 : index
    %c0_106 = arith.constant 0 : index
    %376 = vector.load %arg11[%c0_104, %c0_105, %c0_106] : memref<9x32x20xbf16, #tpu.memory_space<vmem>>, vector<9x32x20xbf16>
    %c0_107 = arith.constant 0 : index
    %c0_108 = arith.constant 0 : index
    %377 = vector.load %arg12[%c0_107, %c0_108] : memref<1x20xf32, #tpu.memory_space<vmem>>, vector<1x20xf32>
    %cst_109 = arith.constant 0.000000e+00 : f32
    %378 = vector.broadcast %cst_109 : f32 to vector<64x20xf32>
    %cst_110 = arith.constant 0.000000e+00 : f32
    %379 = vector.broadcast %cst_110 : f32 to vector<9x32xf32>
    %380 = vector.extract_strided_slice %374 {offsets = [0, 0], sizes = [55, 32], strides = [1, 1]} : vector<64x32xf32> to vector<55x32xf32>
    %381 = tpu.concatenate %379, %380 in 0 : vector<9x32xf32>, vector<55x32xf32> -> vector<64x32xf32>
    %cst_111 = arith.constant 0.000000e+00 : f32
    %382 = vector.shape_cast %25 : vector<64x1xi1> to vector<64x1xi1>
    %383 = vector.broadcast %382 : vector<64x1xi1> to vector<64x32xi1>
    %384 = vector.broadcast %cst_111 : f32 to vector<64x32xf32>
    %385 = arith.select %383, %381, %384 : vector<64x32xi1>, vector<64x32xf32>
    %386 = arith.truncf %385 : vector<64x32xf32> to vector<64x32xbf16>
    %387 = vector.extract_strided_slice %376 {offsets = [0, 0, 0], sizes = [1, 32, 20], strides = [1, 1, 1]} : vector<9x32x20xbf16> to vector<1x32x20xbf16>
    %388 = vector.shape_cast %387 : vector<1x32x20xbf16> to vector<32x20xbf16>
    %cst_112 = arith.constant dense<0.000000e+00> : vector<64x20xf32>
    %389 = tpu.matmul %386, %388, %cst_112 {dimension_numbers = #tpu.dot_dimension_numbers<[1], [0], [0], [1], [0, 0, 1, 1], [], []>} : vector<64x32xbf16>, vector<32x20xbf16>, vector<64x20xf32> -> vector<64x20xf32>
    %390 = arith.addf %378, %389 : vector<64x20xf32>
    %cst_113 = arith.constant 0.000000e+00 : f32
    %391 = vector.broadcast %cst_113 : f32 to vector<8x32xf32>
    %392 = vector.extract_strided_slice %374 {offsets = [0, 0], sizes = [56, 32], strides = [1, 1]} : vector<64x32xf32> to vector<56x32xf32>
    %393 = tpu.concatenate %391, %392 in 0 : vector<8x32xf32>, vector<56x32xf32> -> vector<64x32xf32>
    %cst_114 = arith.constant 0.000000e+00 : f32
    %394 = vector.shape_cast %40 : vector<64x1xi1> to vector<64x1xi1>
    %395 = vector.broadcast %394 : vector<64x1xi1> to vector<64x32xi1>
    %396 = vector.broadcast %cst_114 : f32 to vector<64x32xf32>
    %397 = arith.select %395, %393, %396 : vector<64x32xi1>, vector<64x32xf32>
    %398 = arith.truncf %397 : vector<64x32xf32> to vector<64x32xbf16>
    %399 = vector.extract_strided_slice %376 {offsets = [1, 0, 0], sizes = [1, 32, 20], strides = [1, 1, 1]} : vector<9x32x20xbf16> to vector<1x32x20xbf16>
    %400 = vector.shape_cast %399 : vector<1x32x20xbf16> to vector<32x20xbf16>
    %cst_115 = arith.constant dense<0.000000e+00> : vector<64x20xf32>
    %401 = tpu.matmul %398, %400, %cst_115 {dimension_numbers = #tpu.dot_dimension_numbers<[1], [0], [0], [1], [0, 0, 1, 1], [], []>} : vector<64x32xbf16>, vector<32x20xbf16>, vector<64x20xf32> -> vector<64x20xf32>
    %402 = arith.addf %390, %401 : vector<64x20xf32>
    %cst_116 = arith.constant 0.000000e+00 : f32
    %403 = vector.broadcast %cst_116 : f32 to vector<7x32xf32>
    %404 = vector.extract_strided_slice %374 {offsets = [0, 0], sizes = [57, 32], strides = [1, 1]} : vector<64x32xf32> to vector<57x32xf32>
    %405 = tpu.concatenate %403, %404 in 0 : vector<7x32xf32>, vector<57x32xf32> -> vector<64x32xf32>
    %cst_117 = arith.constant 0.000000e+00 : f32
    %406 = vector.shape_cast %55 : vector<64x1xi1> to vector<64x1xi1>
    %407 = vector.broadcast %406 : vector<64x1xi1> to vector<64x32xi1>
    %408 = vector.broadcast %cst_117 : f32 to vector<64x32xf32>
    %409 = arith.select %407, %405, %408 : vector<64x32xi1>, vector<64x32xf32>
    %410 = arith.truncf %409 : vector<64x32xf32> to vector<64x32xbf16>
    %411 = vector.extract_strided_slice %376 {offsets = [2, 0, 0], sizes = [1, 32, 20], strides = [1, 1, 1]} : vector<9x32x20xbf16> to vector<1x32x20xbf16>
    %412 = vector.shape_cast %411 : vector<1x32x20xbf16> to vector<32x20xbf16>
    %cst_118 = arith.constant dense<0.000000e+00> : vector<64x20xf32>
    %413 = tpu.matmul %410, %412, %cst_118 {dimension_numbers = #tpu.dot_dimension_numbers<[1], [0], [0], [1], [0, 0, 1, 1], [], []>} : vector<64x32xbf16>, vector<32x20xbf16>, vector<64x20xf32> -> vector<64x20xf32>
    %414 = arith.addf %402, %413 : vector<64x20xf32>
    %cst_119 = arith.constant 0.000000e+00 : f32
    %415 = vector.broadcast %cst_119 : f32 to vector<1x32xf32>
    %416 = vector.extract_strided_slice %374 {offsets = [0, 0], sizes = [63, 32], strides = [1, 1]} : vector<64x32xf32> to vector<63x32xf32>
    %417 = tpu.concatenate %415, %416 in 0 : vector<1x32xf32>, vector<63x32xf32> -> vector<64x32xf32>
    %cst_120 = arith.constant 0.000000e+00 : f32
    %418 = vector.shape_cast %70 : vector<64x1xi1> to vector<64x1xi1>
    %419 = vector.broadcast %418 : vector<64x1xi1> to vector<64x32xi1>
    %420 = vector.broadcast %cst_120 : f32 to vector<64x32xf32>
    %421 = arith.select %419, %417, %420 : vector<64x32xi1>, vector<64x32xf32>
    %422 = arith.truncf %421 : vector<64x32xf32> to vector<64x32xbf16>
    %423 = vector.extract_strided_slice %376 {offsets = [3, 0, 0], sizes = [1, 32, 20], strides = [1, 1, 1]} : vector<9x32x20xbf16> to vector<1x32x20xbf16>
    %424 = vector.shape_cast %423 : vector<1x32x20xbf16> to vector<32x20xbf16>
    %cst_121 = arith.constant dense<0.000000e+00> : vector<64x20xf32>
    %425 = tpu.matmul %422, %424, %cst_121 {dimension_numbers = #tpu.dot_dimension_numbers<[1], [0], [0], [1], [0, 0, 1, 1], [], []>} : vector<64x32xbf16>, vector<32x20xbf16>, vector<64x20xf32> -> vector<64x20xf32>
    %426 = arith.addf %414, %425 : vector<64x20xf32>
    %cst_122 = arith.constant 0.000000e+00 : f32
    %427 = vector.shape_cast %85 : vector<64x1xi1> to vector<64x1xi1>
    %428 = vector.broadcast %427 : vector<64x1xi1> to vector<64x32xi1>
    %429 = vector.broadcast %cst_122 : f32 to vector<64x32xf32>
    %430 = arith.select %428, %374, %429 : vector<64x32xi1>, vector<64x32xf32>
    %431 = arith.truncf %430 : vector<64x32xf32> to vector<64x32xbf16>
    %432 = vector.extract_strided_slice %376 {offsets = [4, 0, 0], sizes = [1, 32, 20], strides = [1, 1, 1]} : vector<9x32x20xbf16> to vector<1x32x20xbf16>
    %433 = vector.shape_cast %432 : vector<1x32x20xbf16> to vector<32x20xbf16>
    %cst_123 = arith.constant dense<0.000000e+00> : vector<64x20xf32>
    %434 = tpu.matmul %431, %433, %cst_123 {dimension_numbers = #tpu.dot_dimension_numbers<[1], [0], [0], [1], [0, 0, 1, 1], [], []>} : vector<64x32xbf16>, vector<32x20xbf16>, vector<64x20xf32> -> vector<64x20xf32>
    %435 = arith.addf %426, %434 : vector<64x20xf32>
    %436 = vector.extract_strided_slice %374 {offsets = [1, 0], sizes = [63, 32], strides = [1, 1]} : vector<64x32xf32> to vector<63x32xf32>
    %cst_124 = arith.constant 0.000000e+00 : f32
    %437 = vector.broadcast %cst_124 : f32 to vector<1x32xf32>
    %438 = tpu.concatenate %436, %437 in 0 : vector<63x32xf32>, vector<1x32xf32> -> vector<64x32xf32>
    %cst_125 = arith.constant 0.000000e+00 : f32
    %439 = vector.shape_cast %100 : vector<64x1xi1> to vector<64x1xi1>
    %440 = vector.broadcast %439 : vector<64x1xi1> to vector<64x32xi1>
    %441 = vector.broadcast %cst_125 : f32 to vector<64x32xf32>
    %442 = arith.select %440, %438, %441 : vector<64x32xi1>, vector<64x32xf32>
    %443 = arith.truncf %442 : vector<64x32xf32> to vector<64x32xbf16>
    %444 = vector.extract_strided_slice %376 {offsets = [5, 0, 0], sizes = [1, 32, 20], strides = [1, 1, 1]} : vector<9x32x20xbf16> to vector<1x32x20xbf16>
    %445 = vector.shape_cast %444 : vector<1x32x20xbf16> to vector<32x20xbf16>
    %cst_126 = arith.constant dense<0.000000e+00> : vector<64x20xf32>
    %446 = tpu.matmul %443, %445, %cst_126 {dimension_numbers = #tpu.dot_dimension_numbers<[1], [0], [0], [1], [0, 0, 1, 1], [], []>} : vector<64x32xbf16>, vector<32x20xbf16>, vector<64x20xf32> -> vector<64x20xf32>
    %447 = arith.addf %435, %446 : vector<64x20xf32>
    %448 = vector.extract_strided_slice %374 {offsets = [7, 0], sizes = [57, 32], strides = [1, 1]} : vector<64x32xf32> to vector<57x32xf32>
    %cst_127 = arith.constant 0.000000e+00 : f32
    %449 = vector.broadcast %cst_127 : f32 to vector<7x32xf32>
    %450 = tpu.concatenate %448, %449 in 0 : vector<57x32xf32>, vector<7x32xf32> -> vector<64x32xf32>
    %cst_128 = arith.constant 0.000000e+00 : f32
    %451 = vector.shape_cast %115 : vector<64x1xi1> to vector<64x1xi1>
    %452 = vector.broadcast %451 : vector<64x1xi1> to vector<64x32xi1>
    %453 = vector.broadcast %cst_128 : f32 to vector<64x32xf32>
    %454 = arith.select %452, %450, %453 : vector<64x32xi1>, vector<64x32xf32>
    %455 = arith.truncf %454 : vector<64x32xf32> to vector<64x32xbf16>
    %456 = vector.extract_strided_slice %376 {offsets = [6, 0, 0], sizes = [1, 32, 20], strides = [1, 1, 1]} : vector<9x32x20xbf16> to vector<1x32x20xbf16>
    %457 = vector.shape_cast %456 : vector<1x32x20xbf16> to vector<32x20xbf16>
    %cst_129 = arith.constant dense<0.000000e+00> : vector<64x20xf32>
    %458 = tpu.matmul %455, %457, %cst_129 {dimension_numbers = #tpu.dot_dimension_numbers<[1], [0], [0], [1], [0, 0, 1, 1], [], []>} : vector<64x32xbf16>, vector<32x20xbf16>, vector<64x20xf32> -> vector<64x20xf32>
    %459 = arith.addf %447, %458 : vector<64x20xf32>
    %460 = vector.extract_strided_slice %374 {offsets = [8, 0], sizes = [56, 32], strides = [1, 1]} : vector<64x32xf32> to vector<56x32xf32>
    %cst_130 = arith.constant 0.000000e+00 : f32
    %461 = vector.broadcast %cst_130 : f32 to vector<8x32xf32>
    %462 = tpu.concatenate %460, %461 in 0 : vector<56x32xf32>, vector<8x32xf32> -> vector<64x32xf32>
    %cst_131 = arith.constant 0.000000e+00 : f32
    %463 = vector.shape_cast %130 : vector<64x1xi1> to vector<64x1xi1>
    %464 = vector.broadcast %463 : vector<64x1xi1> to vector<64x32xi1>
    %465 = vector.broadcast %cst_131 : f32 to vector<64x32xf32>
    %466 = arith.select %464, %462, %465 : vector<64x32xi1>, vector<64x32xf32>
    %467 = arith.truncf %466 : vector<64x32xf32> to vector<64x32xbf16>
    %468 = vector.extract_strided_slice %376 {offsets = [7, 0, 0], sizes = [1, 32, 20], strides = [1, 1, 1]} : vector<9x32x20xbf16> to vector<1x32x20xbf16>
    %469 = vector.shape_cast %468 : vector<1x32x20xbf16> to vector<32x20xbf16>
    %cst_132 = arith.constant dense<0.000000e+00> : vector<64x20xf32>
    %470 = tpu.matmul %467, %469, %cst_132 {dimension_numbers = #tpu.dot_dimension_numbers<[1], [0], [0], [1], [0, 0, 1, 1], [], []>} : vector<64x32xbf16>, vector<32x20xbf16>, vector<64x20xf32> -> vector<64x20xf32>
    %471 = arith.addf %459, %470 : vector<64x20xf32>
    %472 = vector.extract_strided_slice %374 {offsets = [9, 0], sizes = [55, 32], strides = [1, 1]} : vector<64x32xf32> to vector<55x32xf32>
    %cst_133 = arith.constant 0.000000e+00 : f32
    %473 = vector.broadcast %cst_133 : f32 to vector<9x32xf32>
    %474 = tpu.concatenate %472, %473 in 0 : vector<55x32xf32>, vector<9x32xf32> -> vector<64x32xf32>
    %cst_134 = arith.constant 0.000000e+00 : f32
    %475 = vector.shape_cast %145 : vector<64x1xi1> to vector<64x1xi1>
    %476 = vector.broadcast %475 : vector<64x1xi1> to vector<64x32xi1>
    %477 = vector.broadcast %cst_134 : f32 to vector<64x32xf32>
    %478 = arith.select %476, %474, %477 : vector<64x32xi1>, vector<64x32xf32>
    %479 = arith.truncf %478 : vector<64x32xf32> to vector<64x32xbf16>
    %480 = vector.extract_strided_slice %376 {offsets = [8, 0, 0], sizes = [1, 32, 20], strides = [1, 1, 1]} : vector<9x32x20xbf16> to vector<1x32x20xbf16>
    %481 = vector.shape_cast %480 : vector<1x32x20xbf16> to vector<32x20xbf16>
    %cst_135 = arith.constant dense<0.000000e+00> : vector<64x20xf32>
    %482 = tpu.matmul %479, %481, %cst_135 {dimension_numbers = #tpu.dot_dimension_numbers<[1], [0], [0], [1], [0, 0, 1, 1], [], []>} : vector<64x32xbf16>, vector<32x20xbf16>, vector<64x20xf32> -> vector<64x20xf32>
    %483 = arith.addf %471, %482 : vector<64x20xf32>
    %484 = vector.broadcast %377 : vector<1x20xf32> to vector<64x20xf32>
    %485 = arith.addf %483, %484 : vector<64x20xf32>
    %c0_136 = arith.constant 0 : index
    %c0_137 = arith.constant 0 : index
    %c0_138 = arith.constant 0 : index
    %486 = vector.load %arg13[%c0_136, %c0_137, %c0_138] : memref<9x32x8xbf16, #tpu.memory_space<vmem>>, vector<9x32x8xbf16>
    %c0_139 = arith.constant 0 : index
    %c0_140 = arith.constant 0 : index
    %487 = vector.load %arg14[%c0_139, %c0_140] : memref<1x8xf32, #tpu.memory_space<vmem>>, vector<1x8xf32>
    %cst_141 = arith.constant 0.000000e+00 : f32
    %488 = vector.broadcast %cst_141 : f32 to vector<64x8xf32>
    %cst_142 = arith.constant 0.000000e+00 : f32
    %489 = vector.broadcast %cst_142 : f32 to vector<9x32xf32>
    %490 = vector.extract_strided_slice %375 {offsets = [0, 0], sizes = [55, 32], strides = [1, 1]} : vector<64x32xf32> to vector<55x32xf32>
    %491 = tpu.concatenate %489, %490 in 0 : vector<9x32xf32>, vector<55x32xf32> -> vector<64x32xf32>
    %cst_143 = arith.constant 0.000000e+00 : f32
    %492 = vector.shape_cast %25 : vector<64x1xi1> to vector<64x1xi1>
    %493 = vector.broadcast %492 : vector<64x1xi1> to vector<64x32xi1>
    %494 = vector.broadcast %cst_143 : f32 to vector<64x32xf32>
    %495 = arith.select %493, %491, %494 : vector<64x32xi1>, vector<64x32xf32>
    %496 = arith.truncf %495 : vector<64x32xf32> to vector<64x32xbf16>
    %497 = vector.extract_strided_slice %486 {offsets = [0, 0, 0], sizes = [1, 32, 8], strides = [1, 1, 1]} : vector<9x32x8xbf16> to vector<1x32x8xbf16>
    %498 = vector.shape_cast %497 : vector<1x32x8xbf16> to vector<32x8xbf16>
    %cst_144 = arith.constant dense<0.000000e+00> : vector<64x8xf32>
    %499 = tpu.matmul %496, %498, %cst_144 {dimension_numbers = #tpu.dot_dimension_numbers<[1], [0], [0], [1], [0, 0, 1, 1], [], []>} : vector<64x32xbf16>, vector<32x8xbf16>, vector<64x8xf32> -> vector<64x8xf32>
    %500 = arith.addf %488, %499 : vector<64x8xf32>
    %cst_145 = arith.constant 0.000000e+00 : f32
    %501 = vector.broadcast %cst_145 : f32 to vector<8x32xf32>
    %502 = vector.extract_strided_slice %375 {offsets = [0, 0], sizes = [56, 32], strides = [1, 1]} : vector<64x32xf32> to vector<56x32xf32>
    %503 = tpu.concatenate %501, %502 in 0 : vector<8x32xf32>, vector<56x32xf32> -> vector<64x32xf32>
    %cst_146 = arith.constant 0.000000e+00 : f32
    %504 = vector.shape_cast %40 : vector<64x1xi1> to vector<64x1xi1>
    %505 = vector.broadcast %504 : vector<64x1xi1> to vector<64x32xi1>
    %506 = vector.broadcast %cst_146 : f32 to vector<64x32xf32>
    %507 = arith.select %505, %503, %506 : vector<64x32xi1>, vector<64x32xf32>
    %508 = arith.truncf %507 : vector<64x32xf32> to vector<64x32xbf16>
    %509 = vector.extract_strided_slice %486 {offsets = [1, 0, 0], sizes = [1, 32, 8], strides = [1, 1, 1]} : vector<9x32x8xbf16> to vector<1x32x8xbf16>
    %510 = vector.shape_cast %509 : vector<1x32x8xbf16> to vector<32x8xbf16>
    %cst_147 = arith.constant dense<0.000000e+00> : vector<64x8xf32>
    %511 = tpu.matmul %508, %510, %cst_147 {dimension_numbers = #tpu.dot_dimension_numbers<[1], [0], [0], [1], [0, 0, 1, 1], [], []>} : vector<64x32xbf16>, vector<32x8xbf16>, vector<64x8xf32> -> vector<64x8xf32>
    %512 = arith.addf %500, %511 : vector<64x8xf32>
    %cst_148 = arith.constant 0.000000e+00 : f32
    %513 = vector.broadcast %cst_148 : f32 to vector<7x32xf32>
    %514 = vector.extract_strided_slice %375 {offsets = [0, 0], sizes = [57, 32], strides = [1, 1]} : vector<64x32xf32> to vector<57x32xf32>
    %515 = tpu.concatenate %513, %514 in 0 : vector<7x32xf32>, vector<57x32xf32> -> vector<64x32xf32>
    %cst_149 = arith.constant 0.000000e+00 : f32
    %516 = vector.shape_cast %55 : vector<64x1xi1> to vector<64x1xi1>
    %517 = vector.broadcast %516 : vector<64x1xi1> to vector<64x32xi1>
    %518 = vector.broadcast %cst_149 : f32 to vector<64x32xf32>
    %519 = arith.select %517, %515, %518 : vector<64x32xi1>, vector<64x32xf32>
    %520 = arith.truncf %519 : vector<64x32xf32> to vector<64x32xbf16>
    %521 = vector.extract_strided_slice %486 {offsets = [2, 0, 0], sizes = [1, 32, 8], strides = [1, 1, 1]} : vector<9x32x8xbf16> to vector<1x32x8xbf16>
    %522 = vector.shape_cast %521 : vector<1x32x8xbf16> to vector<32x8xbf16>
    %cst_150 = arith.constant dense<0.000000e+00> : vector<64x8xf32>
    %523 = tpu.matmul %520, %522, %cst_150 {dimension_numbers = #tpu.dot_dimension_numbers<[1], [0], [0], [1], [0, 0, 1, 1], [], []>} : vector<64x32xbf16>, vector<32x8xbf16>, vector<64x8xf32> -> vector<64x8xf32>
    %524 = arith.addf %512, %523 : vector<64x8xf32>
    %cst_151 = arith.constant 0.000000e+00 : f32
    %525 = vector.broadcast %cst_151 : f32 to vector<1x32xf32>
    %526 = vector.extract_strided_slice %375 {offsets = [0, 0], sizes = [63, 32], strides = [1, 1]} : vector<64x32xf32> to vector<63x32xf32>
    %527 = tpu.concatenate %525, %526 in 0 : vector<1x32xf32>, vector<63x32xf32> -> vector<64x32xf32>
    %cst_152 = arith.constant 0.000000e+00 : f32
    %528 = vector.shape_cast %70 : vector<64x1xi1> to vector<64x1xi1>
    %529 = vector.broadcast %528 : vector<64x1xi1> to vector<64x32xi1>
    %530 = vector.broadcast %cst_152 : f32 to vector<64x32xf32>
    %531 = arith.select %529, %527, %530 : vector<64x32xi1>, vector<64x32xf32>
    %532 = arith.truncf %531 : vector<64x32xf32> to vector<64x32xbf16>
    %533 = vector.extract_strided_slice %486 {offsets = [3, 0, 0], sizes = [1, 32, 8], strides = [1, 1, 1]} : vector<9x32x8xbf16> to vector<1x32x8xbf16>
    %534 = vector.shape_cast %533 : vector<1x32x8xbf16> to vector<32x8xbf16>
    %cst_153 = arith.constant dense<0.000000e+00> : vector<64x8xf32>
    %535 = tpu.matmul %532, %534, %cst_153 {dimension_numbers = #tpu.dot_dimension_numbers<[1], [0], [0], [1], [0, 0, 1, 1], [], []>} : vector<64x32xbf16>, vector<32x8xbf16>, vector<64x8xf32> -> vector<64x8xf32>
    %536 = arith.addf %524, %535 : vector<64x8xf32>
    %cst_154 = arith.constant 0.000000e+00 : f32
    %537 = vector.shape_cast %85 : vector<64x1xi1> to vector<64x1xi1>
    %538 = vector.broadcast %537 : vector<64x1xi1> to vector<64x32xi1>
    %539 = vector.broadcast %cst_154 : f32 to vector<64x32xf32>
    %540 = arith.select %538, %375, %539 : vector<64x32xi1>, vector<64x32xf32>
    %541 = arith.truncf %540 : vector<64x32xf32> to vector<64x32xbf16>
    %542 = vector.extract_strided_slice %486 {offsets = [4, 0, 0], sizes = [1, 32, 8], strides = [1, 1, 1]} : vector<9x32x8xbf16> to vector<1x32x8xbf16>
    %543 = vector.shape_cast %542 : vector<1x32x8xbf16> to vector<32x8xbf16>
    %cst_155 = arith.constant dense<0.000000e+00> : vector<64x8xf32>
    %544 = tpu.matmul %541, %543, %cst_155 {dimension_numbers = #tpu.dot_dimension_numbers<[1], [0], [0], [1], [0, 0, 1, 1], [], []>} : vector<64x32xbf16>, vector<32x8xbf16>, vector<64x8xf32> -> vector<64x8xf32>
    %545 = arith.addf %536, %544 : vector<64x8xf32>
    %546 = vector.extract_strided_slice %375 {offsets = [1, 0], sizes = [63, 32], strides = [1, 1]} : vector<64x32xf32> to vector<63x32xf32>
    %cst_156 = arith.constant 0.000000e+00 : f32
    %547 = vector.broadcast %cst_156 : f32 to vector<1x32xf32>
    %548 = tpu.concatenate %546, %547 in 0 : vector<63x32xf32>, vector<1x32xf32> -> vector<64x32xf32>
    %cst_157 = arith.constant 0.000000e+00 : f32
    %549 = vector.shape_cast %100 : vector<64x1xi1> to vector<64x1xi1>
    %550 = vector.broadcast %549 : vector<64x1xi1> to vector<64x32xi1>
    %551 = vector.broadcast %cst_157 : f32 to vector<64x32xf32>
    %552 = arith.select %550, %548, %551 : vector<64x32xi1>, vector<64x32xf32>
    %553 = arith.truncf %552 : vector<64x32xf32> to vector<64x32xbf16>
    %554 = vector.extract_strided_slice %486 {offsets = [5, 0, 0], sizes = [1, 32, 8], strides = [1, 1, 1]} : vector<9x32x8xbf16> to vector<1x32x8xbf16>
    %555 = vector.shape_cast %554 : vector<1x32x8xbf16> to vector<32x8xbf16>
    %cst_158 = arith.constant dense<0.000000e+00> : vector<64x8xf32>
    %556 = tpu.matmul %553, %555, %cst_158 {dimension_numbers = #tpu.dot_dimension_numbers<[1], [0], [0], [1], [0, 0, 1, 1], [], []>} : vector<64x32xbf16>, vector<32x8xbf16>, vector<64x8xf32> -> vector<64x8xf32>
    %557 = arith.addf %545, %556 : vector<64x8xf32>
    %558 = vector.extract_strided_slice %375 {offsets = [7, 0], sizes = [57, 32], strides = [1, 1]} : vector<64x32xf32> to vector<57x32xf32>
    %cst_159 = arith.constant 0.000000e+00 : f32
    %559 = vector.broadcast %cst_159 : f32 to vector<7x32xf32>
    %560 = tpu.concatenate %558, %559 in 0 : vector<57x32xf32>, vector<7x32xf32> -> vector<64x32xf32>
    %cst_160 = arith.constant 0.000000e+00 : f32
    %561 = vector.shape_cast %115 : vector<64x1xi1> to vector<64x1xi1>
    %562 = vector.broadcast %561 : vector<64x1xi1> to vector<64x32xi1>
    %563 = vector.broadcast %cst_160 : f32 to vector<64x32xf32>
    %564 = arith.select %562, %560, %563 : vector<64x32xi1>, vector<64x32xf32>
    %565 = arith.truncf %564 : vector<64x32xf32> to vector<64x32xbf16>
    %566 = vector.extract_strided_slice %486 {offsets = [6, 0, 0], sizes = [1, 32, 8], strides = [1, 1, 1]} : vector<9x32x8xbf16> to vector<1x32x8xbf16>
    %567 = vector.shape_cast %566 : vector<1x32x8xbf16> to vector<32x8xbf16>
    %cst_161 = arith.constant dense<0.000000e+00> : vector<64x8xf32>
    %568 = tpu.matmul %565, %567, %cst_161 {dimension_numbers = #tpu.dot_dimension_numbers<[1], [0], [0], [1], [0, 0, 1, 1], [], []>} : vector<64x32xbf16>, vector<32x8xbf16>, vector<64x8xf32> -> vector<64x8xf32>
    %569 = arith.addf %557, %568 : vector<64x8xf32>
    %570 = vector.extract_strided_slice %375 {offsets = [8, 0], sizes = [56, 32], strides = [1, 1]} : vector<64x32xf32> to vector<56x32xf32>
    %cst_162 = arith.constant 0.000000e+00 : f32
    %571 = vector.broadcast %cst_162 : f32 to vector<8x32xf32>
    %572 = tpu.concatenate %570, %571 in 0 : vector<56x32xf32>, vector<8x32xf32> -> vector<64x32xf32>
    %cst_163 = arith.constant 0.000000e+00 : f32
    %573 = vector.shape_cast %130 : vector<64x1xi1> to vector<64x1xi1>
    %574 = vector.broadcast %573 : vector<64x1xi1> to vector<64x32xi1>
    %575 = vector.broadcast %cst_163 : f32 to vector<64x32xf32>
    %576 = arith.select %574, %572, %575 : vector<64x32xi1>, vector<64x32xf32>
    %577 = arith.truncf %576 : vector<64x32xf32> to vector<64x32xbf16>
    %578 = vector.extract_strided_slice %486 {offsets = [7, 0, 0], sizes = [1, 32, 8], strides = [1, 1, 1]} : vector<9x32x8xbf16> to vector<1x32x8xbf16>
    %579 = vector.shape_cast %578 : vector<1x32x8xbf16> to vector<32x8xbf16>
    %cst_164 = arith.constant dense<0.000000e+00> : vector<64x8xf32>
    %580 = tpu.matmul %577, %579, %cst_164 {dimension_numbers = #tpu.dot_dimension_numbers<[1], [0], [0], [1], [0, 0, 1, 1], [], []>} : vector<64x32xbf16>, vector<32x8xbf16>, vector<64x8xf32> -> vector<64x8xf32>
    %581 = arith.addf %569, %580 : vector<64x8xf32>
    %582 = vector.extract_strided_slice %375 {offsets = [9, 0], sizes = [55, 32], strides = [1, 1]} : vector<64x32xf32> to vector<55x32xf32>
    %cst_165 = arith.constant 0.000000e+00 : f32
    %583 = vector.broadcast %cst_165 : f32 to vector<9x32xf32>
    %584 = tpu.concatenate %582, %583 in 0 : vector<55x32xf32>, vector<9x32xf32> -> vector<64x32xf32>
    %cst_166 = arith.constant 0.000000e+00 : f32
    %585 = vector.shape_cast %145 : vector<64x1xi1> to vector<64x1xi1>
    %586 = vector.broadcast %585 : vector<64x1xi1> to vector<64x32xi1>
    %587 = vector.broadcast %cst_166 : f32 to vector<64x32xf32>
    %588 = arith.select %586, %584, %587 : vector<64x32xi1>, vector<64x32xf32>
    %589 = arith.truncf %588 : vector<64x32xf32> to vector<64x32xbf16>
    %590 = vector.extract_strided_slice %486 {offsets = [8, 0, 0], sizes = [1, 32, 8], strides = [1, 1, 1]} : vector<9x32x8xbf16> to vector<1x32x8xbf16>
    %591 = vector.shape_cast %590 : vector<1x32x8xbf16> to vector<32x8xbf16>
    %cst_167 = arith.constant dense<0.000000e+00> : vector<64x8xf32>
    %592 = tpu.matmul %589, %591, %cst_167 {dimension_numbers = #tpu.dot_dimension_numbers<[1], [0], [0], [1], [0, 0, 1, 1], [], []>} : vector<64x32xbf16>, vector<32x8xbf16>, vector<64x8xf32> -> vector<64x8xf32>
    %593 = arith.addf %581, %592 : vector<64x8xf32>
    %594 = vector.broadcast %487 : vector<1x8xf32> to vector<64x8xf32>
    %595 = arith.addf %593, %594 : vector<64x8xf32>
    %596 = vector.extract_strided_slice %595 {offsets = [0, 0], sizes = [64, 4], strides = [1, 1]} : vector<64x8xf32> to vector<64x4xf32>
    %597 = vector.broadcast %7 : f32 to vector<64x4xf32>
    %598 = arith.mulf %596, %597 : vector<64x4xf32>
    %cst_168 = arith.constant 0.000000e+00 : f32
    %599 = vector.broadcast %cst_168 : f32 to vector<64x4xf32>
    %600 = arith.maximumf %598, %599 : vector<64x4xf32>
    %601 = vector.broadcast %5 : f32 to vector<64x4xf32>
    %602 = arith.mulf %600, %601 : vector<64x4xf32>
    %603 = vector.extract_strided_slice %595 {offsets = [0, 4], sizes = [64, 1], strides = [1, 1]} : vector<64x8xf32> to vector<64x1xf32>
    %604 = arith.negf %485 : vector<64x20xf32>
    %605 = math.exp %604 : vector<64x20xf32>
    %cst_169 = arith.constant 1.000000e+00 : f32
    %606 = vector.broadcast %cst_169 : f32 to vector<64x20xf32>
    %607 = arith.addf %606, %605 : vector<64x20xf32>
    %608 = arith.divf %606, %607 : vector<64x20xf32>
    %609 = arith.negf %603 : vector<64x1xf32>
    %610 = math.exp %609 : vector<64x1xf32>
    %cst_170 = arith.constant 1.000000e+00 : f32
    %611 = vector.broadcast %cst_170 : f32 to vector<64x1xf32>
    %612 = arith.addf %611, %610 : vector<64x1xf32>
    %613 = arith.divf %611, %612 : vector<64x1xf32>
    %614 = vector.broadcast %613 : vector<64x1xf32> to vector<64x20xf32>
    %615 = arith.mulf %608, %614 : vector<64x20xf32>
    %616 = math.sqrt %615 : vector<64x20xf32>
    %cst_171 = arith.constant dense<0xFF800000> : vector<64xf32>
    %617 = vector.multi_reduction <maximumf>, %616, %cst_171 [1] : vector<64x20xf32> to vector<64xf32>
    %618 = vector.shape_cast %617 : vector<64xf32> to vector<64x1xf32>
    %619 = tpu.iota {dimensions = array<i32: 1>} : vector<64x20xi32>
    %620 = vector.broadcast %618 : vector<64x1xf32> to vector<64x20xf32>
    %621 = arith.cmpf oge, %616, %620 : vector<64x20xf32>
    %c1073741824_i32 = arith.constant 1073741824 : i32
    %622 = vector.broadcast %c1073741824_i32 : i32 to vector<64x20xi32>
    %623 = arith.select %621, %619, %622 : vector<64x20xi1>, vector<64x20xi32>
    %cst_172 = arith.constant dense<2147483647> : vector<64xi32>
    %624 = vector.multi_reduction <minsi>, %623, %cst_172 [1] : vector<64x20xi32> to vector<64xi32>
    %625 = vector.shape_cast %624 : vector<64xi32> to vector<64x1xi32>
    %626 = arith.sitofp %10 : vector<64x1xi32> to vector<64x1xf32>
    %cst_173 = arith.constant 5.000000e-01 : f32
    %627 = vector.broadcast %cst_173 : f32 to vector<64x1xf32>
    %628 = arith.addf %626, %627 : vector<64x1xf32>
    %629 = vector.broadcast %5 : f32 to vector<64x1xf32>
    %630 = arith.mulf %628, %629 : vector<64x1xf32>
    %631 = arith.sitofp %9 : vector<64x1xi32> to vector<64x1xf32>
    %cst_174 = arith.constant 5.000000e-01 : f32
    %632 = vector.broadcast %cst_174 : f32 to vector<64x1xf32>
    %633 = arith.addf %631, %632 : vector<64x1xf32>
    %634 = vector.broadcast %5 : f32 to vector<64x1xf32>
    %635 = arith.mulf %633, %634 : vector<64x1xf32>
    %636 = vector.extract_strided_slice %602 {offsets = [0, 0], sizes = [64, 1], strides = [1, 1]} : vector<64x4xf32> to vector<64x1xf32>
    %637 = arith.subf %630, %636 : vector<64x1xf32>
    %638 = vector.extract_strided_slice %602 {offsets = [0, 1], sizes = [64, 1], strides = [1, 1]} : vector<64x4xf32> to vector<64x1xf32>
    %639 = arith.subf %635, %638 : vector<64x1xf32>
    %640 = vector.extract_strided_slice %602 {offsets = [0, 2], sizes = [64, 1], strides = [1, 1]} : vector<64x4xf32> to vector<64x1xf32>
    %641 = arith.addf %630, %640 : vector<64x1xf32>
    %642 = vector.extract_strided_slice %602 {offsets = [0, 3], sizes = [64, 1], strides = [1, 1]} : vector<64x4xf32> to vector<64x1xf32>
    %643 = arith.addf %635, %642 : vector<64x1xf32>
    %644 = arith.sitofp %625 : vector<64x1xi32> to vector<64x1xf32>
    %cst_175 = arith.constant 0.000000e+00 : f32
    %645 = vector.broadcast %cst_175 : f32 to vector<64x2xf32>
    %646 = tpu.concatenate %618, %644, %637, %639, %641, %643, %645 in 1 : vector<64x1xf32>, vector<64x1xf32>, vector<64x1xf32>, vector<64x1xf32>, vector<64x1xf32>, vector<64x1xf32>, vector<64x2xf32> -> vector<64x8xf32>
    %c0_176 = arith.constant 0 : index
    %c0_177 = arith.constant 0 : index
    %c0_178 = arith.constant 0 : index
    %647 = vector.load %arg15[%c0_176, %c0_177, %c0_178] : memref<1x64x8xf32, #tpu.memory_space<vmem>>, vector<1x64x8xf32>
    %648 = vector.shape_cast %647 : vector<1x64x8xf32> to vector<64x8xf32>
    %649 = vector.shape_cast %646 : vector<64x8xf32> to vector<1x64x8xf32>
    tpu.vector_store %arg15[%c0_176, %c0_177, %c0_178], %649 {strides = array<i32>} : memref<1x64x8xf32, #tpu.memory_space<vmem>>, vector<1x64x8xf32>,
    return
  }
  func.func @transform_0(%arg0: i32) -> i32 {
    %c0_i32 = arith.constant 0 : i32
    %c0_i32_0 = arith.constant 0 : i32
    return %c0_i32 : i32
  }
  func.func @transform_1(%arg0: i32) -> i32 {
    %c0_i32 = arith.constant 0 : i32
    %c0_i32_0 = arith.constant 0 : i32
    return %c0_i32 : i32
  }
  func.func @transform_2(%arg0: i32) -> i32 {
    %c0_i32 = arith.constant 0 : i32
    %c0_i32_0 = arith.constant 0 : i32
    return %c0_i32 : i32
  }
  func.func @transform_3(%arg0: i32) -> i32 {
    %c0_i32 = arith.constant 0 : i32
    %c0_i32_0 = arith.constant 0 : i32
    return %c0_i32 : i32
  }
  func.func @transform_4(%arg0: i32) -> (i32, i32) {
    %c0_i32 = arith.constant 0 : i32
    %c0_i32_0 = arith.constant 0 : i32
    %c0_i32_1 = arith.constant 0 : i32
    return %c0_i32, %c0_i32_0 : i32, i32
  }
  func.func @transform_5(%arg0: i32) -> (i32, i32, i32) {
    %c0_i32 = arith.constant 0 : i32
    %c0_i32_0 = arith.constant 0 : i32
    %c0_i32_1 = arith.constant 0 : i32
    return %arg0, %c0_i32, %c0_i32_0 : i32, i32, i32
  }
  func.func @transform_6(%arg0: i32) -> (i32, i32, i32, i32) {
    %c0_i32 = arith.constant 0 : i32
    %c0_i32_0 = arith.constant 0 : i32
    %c0_i32_1 = arith.constant 0 : i32
    %c0_i32_2 = arith.constant 0 : i32
    return %arg0, %c0_i32, %c0_i32_0, %c0_i32_1 : i32, i32, i32, i32
  }
  func.func @transform_7(%arg0: i32) -> (i32, i32, i32) {
    %c0_i32 = arith.constant 0 : i32
    %c0_i32_0 = arith.constant 0 : i32
    %c0_i32_1 = arith.constant 0 : i32
    return %arg0, %c0_i32, %c0_i32_0 : i32, i32, i32
  }
  func.func @transform_8(%arg0: i32) -> (i32, i32, i32) {
    %c0_i32 = arith.constant 0 : i32
    %c0_i32_0 = arith.constant 0 : i32
    %c0_i32_1 = arith.constant 0 : i32
    %c0_i32_2 = arith.constant 0 : i32
    return %c0_i32, %c0_i32_0, %c0_i32_1 : i32, i32, i32
  }
  func.func @transform_9(%arg0: i32) -> (i32, i32) {
    %c0_i32 = arith.constant 0 : i32
    %c0_i32_0 = arith.constant 0 : i32
    %c0_i32_1 = arith.constant 0 : i32
    return %c0_i32, %c0_i32_0 : i32, i32
  }
  func.func @transform_10(%arg0: i32) -> (i32, i32, i32) {
    %c0_i32 = arith.constant 0 : i32
    %c0_i32_0 = arith.constant 0 : i32
    %c0_i32_1 = arith.constant 0 : i32
    %c0_i32_2 = arith.constant 0 : i32
    return %c0_i32, %c0_i32_0, %c0_i32_1 : i32, i32, i32
  }
  func.func @transform_11(%arg0: i32) -> (i32, i32) {
    %c0_i32 = arith.constant 0 : i32
    %c0_i32_0 = arith.constant 0 : i32
    %c0_i32_1 = arith.constant 0 : i32
    return %c0_i32, %c0_i32_0 : i32, i32
  }
  func.func @transform_12(%arg0: i32) -> (i32, i32, i32) {
    %c0_i32 = arith.constant 0 : i32
    %c0_i32_0 = arith.constant 0 : i32
    %c0_i32_1 = arith.constant 0 : i32
    %c0_i32_2 = arith.constant 0 : i32
    return %c0_i32, %c0_i32_0, %c0_i32_1 : i32, i32, i32
  }
  func.func @transform_13(%arg0: i32) -> (i32, i32) {
    %c0_i32 = arith.constant 0 : i32
    %c0_i32_0 = arith.constant 0 : i32
    %c0_i32_1 = arith.constant 0 : i32
    return %c0_i32, %c0_i32_0 : i32, i32
  }
  func.func @transform_14(%arg0: i32) -> (i32, i32, i32) {
    %c0_i32 = arith.constant 0 : i32
    %c0_i32_0 = arith.constant 0 : i32
    %c0_i32_1 = arith.constant 0 : i32
    return %arg0, %c0_i32, %c0_i32_0 : i32, i32, i32
  }
}

</mosaic_0001>

<llo_original>
// kernel: _fcos_forward.1
$region0: #{_fcos_forward.1}
  #allocation0 [shape = 'u32[]', space=smem, size = 0x4, offset = 0x4, fixed_abs, tag = 'smem constant byte address 0x4 - core index']
  #allocation1 [shape = 'u32[144,128]{1,0:T(1,128)}', space=vmem, size = 0x12000, scoped, tag = 'internal scratch']
  %s0 = inlined_call_operand.vmem [shape: s32[3], index: 0, kind: input, shape index: {}, may-alias: {0,1}]
  %s1 = inlined_call_operand.vmem [shape: s32[3], index: 1, kind: input, shape index: {}, may-alias: {0,1}]
  %s2 = inlined_call_operand.vmem [shape: f32[3], index: 2, kind: input, shape index: {}]
  %s3 = inlined_call_operand.vmem [shape: f32[3], index: 3, kind: input, shape index: {}]
  %s4 = inlined_call_operand.vmem [shape: s32[64,2], index: 4, kind: input, shape index: {}]
  %s5 = inlined_call_operand.vmem [shape: f32[3,64,8], index: 5, kind: input, shape index: {}]
  %s6 = inlined_call_operand.vmem [shape: bf16[3,9,8,32], index: 6, kind: input, shape index: {}]
  %s7 = inlined_call_operand.vmem [shape: f32[3,1,32], index: 7, kind: input, shape index: {}]
  %s8 = inlined_call_operand.vmem [shape: bf16[9,32,64], index: 8, kind: input, shape index: {}]
  %s9 = inlined_call_operand.vmem [shape: f32[1,64], index: 9, kind: input, shape index: {}]
  %s10 = inlined_call_operand.vmem [shape: bf16[9,32,20], index: 10, kind: input, shape index: {}]
  %s11 = inlined_call_operand.vmem [shape: f32[1,20], index: 11, kind: input, shape index: {}]
  %s12 = inlined_call_operand.vmem [shape: bf16[9,32,8], index: 12, kind: input, shape index: {}]
  %s13 = inlined_call_operand.vmem [shape: f32[1,8], index: 13, kind: input, shape index: {}]
  %s14 = inlined_call_operand.vmem [shape: f32[3,64,8], index: 14, kind: output, shape index: {}]
  %s15 = sld [smem:[#allocation0]]
  $region105: #{_fcos_forward.1} parent=0
    _
  %s17 = ssub.s32 1, %s15
  %s18 = scalar_select 0, %s17, %s15
  $region1: #{_fcos_forward.1} parent=0
    #allocation2 [shape = 'u8[512]{0}', space=smem, size = 0x200, scoped, tag = 'input window, operand 0, single buffered']
    #allocation3 [shape = 's32[2]{0}', space=sflag, size = 0x8, scoped, tag = 'scoped memory for _fcos_forward.1']
    #allocation4 [shape = 'u8[512]{0}', space=smem, size = 0x200, scoped, tag = 'input window, operand 1, single buffered']
    #allocation5 [shape = 's32[1]{0}', space=sflag, size = 0x4, scoped, tag = 'scoped memory for _fcos_forward.1']
    #allocation6 [shape = 'u8[512]{0}', space=smem, size = 0x200, scoped, tag = 'input window, operand 2, single buffered']
    #allocation7 [shape = 'u8[512]{0}', space=smem, size = 0x200, scoped, tag = 'input window, operand 3, single buffered']
    #allocation8 [shape = 's32[1]{0}', space=sflag, size = 0x4, scoped, tag = 'scoped memory for _fcos_forward.1']
    %19 = vsyncpa [#allocation3], 0
    %20 = vsyncpa [#allocation5], 0
    %21 = vsyncpa [#allocation8], 0
    loop: start=0, step=1, limit=5
    $region2: #{_fcos_forward.1} parent=1 // loop_pre_header
      _
    $region3: #{_fcos_forward.1} parent=1 // loop_header
      %s23 = sphi 0, %s27
      %p24 = scmp.ge.s32.totalorder %s23, 5
      %s31 = sphi 0, %s31
      %s33 = sphi 0, %s31
      %s34 = sphi 0, %s33
      %s48 = sphi 0, %s34
      %s52 = sphi 0, %s52
      %s54 = sphi 0, %s52
      %s55 = sphi 0, %s54
      %s69 = sphi 0, %s55
      %s73 = sphi 0, %s73
      %s75 = sphi 0, %s73
      %s76 = sphi 0, %s75
      %s90 = sphi 0, %s76
      %s94 = sphi 0, %s94
      %s96 = sphi 0, %s94
      %s97 = sphi 0, %s96
      %s111 = sphi 0, %s97
      %s115 = sphi 0, %s115
      %s117 = sphi 0, %s115
      %s118 = sphi 0, %s117
      %s132 = sphi 0, %s118
      %s138 = sphi 0, %s140
      %s141 = sphi 0, %s138
      %s142 = sphi 0, %s141
      %s158 = sphi 0, %s142
      %s164 = sphi 0, %s166
      %s167 = sphi 0, %s164
      %s168 = sphi 0, %s167
      %s184 = sphi 0, %s168
      %s190 = sphi 0, %s192
      %s193 = sphi 0, %s190
      %s194 = sphi 0, %s193
      %s210 = sphi 0, %s194
      %s214 = sphi 0, %s214
      %s216 = sphi 0, %s214
      %s217 = sphi 0, %s216
      %s231 = sphi 0, %s217
      %s235 = sphi 0, %s235
      %s237 = sphi 0, %s235
      %s238 = sphi 0, %s237
      %s252 = sphi 0, %s238
      %s256 = sphi 0, %s256
      %s258 = sphi 0, %s256
      %s259 = sphi 0, %s258
      %s273 = sphi 0, %s259
      %s277 = sphi 0, %s277
      %s279 = sphi 0, %s277
      %s280 = sphi 0, %s279
      %s294 = sphi 0, %s280
      %s298 = sphi 0, %s298
      %s300 = sphi 0, %s298
      %s301 = sphi 0, %s300
      %s315 = sphi 0, %s301
      %s319 = sphi 0, %s319
      %s321 = sphi 0, %s319
      %s322 = sphi 0, %s321
      %s336 = sphi 0, %s322
      %s342 = sphi 0, %s344
      %s345 = sphi 0, %s342
      %s346 = sphi 0, %s345
      %s362 = sphi 0, %s346
    $region4: #{_fcos_forward.1} parent=1 // loop_header_branch
      %26 = sbr.rel (%p24) target = $region8
    $region5: #{_fcos_forward.1} parent=1 // loop_body
      %s28 = ssub.s32 %s23, 1
      %s29 = ssub.s32 %s23, 2
      %s30 = sadd.s32 %s23, 1
      %s32 = sadd.s32 %s31, 1
      %p35 = scmp.eq.s32.totalorder %s23, 2
      %p36 = scmp.ne.s32.totalorder %s31, %s33
      %p37 = scmp.eq.s32.totalorder %s23, 0
      %p38 = por %p36, %p37
      %p39 = scmp.ne.s32.totalorder %s31, %s33
      %p40 = scmp.eq.s32.totalorder %s28, 2
      %p41 = por %p39, %p40
      %p42 = scmp.ne.s32.totalorder %s33, %s34
      %p43 = scmp.eq.s32.totalorder %s28, 0
      %p44 = por %p42, %p43
      %p45 = scmp.ne.s32.totalorder %s33, %s34
      %p46 = scmp.eq.s32.totalorder %s29, 2
      %p47 = por %p45, %p46
      %p49 = scmp.ne.s32.totalorder %s34, %s48
      %p50 = scmp.eq.s32.totalorder %s29, 0
      %p51 = por %p49, %p50
      %s53 = sadd.s32 %s52, 1
      %p56 = scmp.eq.s32.totalorder %s23, 2
      %p57 = scmp.ne.s32.totalorder %s52, %s54
      %p58 = scmp.eq.s32.totalorder %s23, 0
      %p59 = por %p57, %p58
      %p60 = scmp.ne.s32.totalorder %s52, %s54
      %p61 = scmp.eq.s32.totalorder %s28, 2
      %p62 = por %p60, %p61
      %p63 = scmp.ne.s32.totalorder %s54, %s55
      %p64 = scmp.eq.s32.totalorder %s28, 0
      %p65 = por %p63, %p64
      %p66 = scmp.ne.s32.totalorder %s54, %s55
      %p67 = scmp.eq.s32.totalorder %s29, 2
      %p68 = por %p66, %p67
      %p70 = scmp.ne.s32.totalorder %s55, %s69
      %p71 = scmp.eq.s32.totalorder %s29, 0
      %p72 = por %p70, %p71
      %s74 = sadd.s32 %s73, 1
      %p77 = scmp.eq.s32.totalorder %s23, 2
      %p78 = scmp.ne.s32.totalorder %s73, %s75
      %p79 = scmp.eq.s32.totalorder %s23, 0
      %p80 = por %p78, %p79
      %p81 = scmp.ne.s32.totalorder %s73, %s75
      %p82 = scmp.eq.s32.totalorder %s28, 2
      %p83 = por %p81, %p82
      %p84 = scmp.ne.s32.totalorder %s75, %s76
      %p85 = scmp.eq.s32.totalorder %s28, 0
      %p86 = por %p84, %p85
      %p87 = scmp.ne.s32.totalorder %s75, %s76
      %p88 = scmp.eq.s32.totalorder %s29, 2
      %p89 = por %p87, %p88
      %p91 = scmp.ne.s32.totalorder %s76, %s90
      %p92 = scmp.eq.s32.totalorder %s29, 0
      %p93 = por %p91, %p92
      %s95 = sadd.s32 %s94, 1
      %p98 = scmp.eq.s32.totalorder %s23, 2
      %p99 = scmp.ne.s32.totalorder %s94, %s96
      %p100 = scmp.eq.s32.totalorder %s23, 0
      %p101 = por %p99, %p100
      %p102 = scmp.ne.s32.totalorder %s94, %s96
      %p103 = scmp.eq.s32.totalorder %s28, 2
      %p104 = por %p102, %p103
      %p105 = scmp.ne.s32.totalorder %s96, %s97
      %p106 = scmp.eq.s32.totalorder %s28, 0
      %p107 = por %p105, %p106
      %p108 = scmp.ne.s32.totalorder %s96, %s97
      %p109 = scmp.eq.s32.totalorder %s29, 2
      %p110 = por %p108, %p109
      %p112 = scmp.ne.s32.totalorder %s97, %s111
      %p113 = scmp.eq.s32.totalorder %s29, 0
      %p114 = por %p112, %p113
      %s116 = sadd.s32 %s115, 1
      %p119 = scmp.eq.s32.totalorder %s23, 2
      %p120 = scmp.ne.s32.totalorder %s115, %s117
      %p121 = scmp.eq.s32.totalorder %s23, 0
      %p122 = por %p120, %p121
      %p123 = scmp.ne.s32.totalorder %s115, %s117
      %p124 = scmp.eq.s32.totalorder %s28, 2
      %p125 = por %p123, %p124
      %p126 = scmp.ne.s32.totalorder %s117, %s118
      %p127 = scmp.eq.s32.totalorder %s28, 0
      %p128 = por %p126, %p127
      %p129 = scmp.ne.s32.totalorder %s117, %s118
      %p130 = scmp.eq.s32.totalorder %s29, 2
      %p131 = por %p129, %p130
      %p133 = scmp.ne.s32.totalorder %s118, %s132
      %p134 = scmp.eq.s32.totalorder %s29, 0
      %p135 = por %p133, %p134
      %s136 = ssub.s32 %s23, %s30
      %p137 = scmp.eq.s32.totalorder %s136, 0
      %s139 = sadd.s32 %s138, 1
      %s140 = scalar_select %p137, %s138, %s139
      %p143 = pneg %p137
      %p144 = scmp.eq.s32.totalorder %s23, 2
      %p145 = por %p143, %p144
      %p146 = scmp.ne.s32.totalorder %s138, %s141
      %p147 = scmp.eq.s32.totalorder %s23, 0
      %p148 = por %p146, %p147
      %p149 = scmp.ne.s32.totalorder %s138, %s141
      %p150 = scmp.eq.s32.totalorder %s28, 2
      %p151 = por %p149, %p150
      %p152 = scmp.ne.s32.totalorder %s141, %s142
      %p153 = scmp.eq.s32.totalorder %s28, 0
      %p154 = por %p152, %p153
      %p155 = scmp.ne.s32.totalorder %s141, %s142
      %p156 = scmp.eq.s32.totalorder %s29, 2
      %p157 = por %p155, %p156
      %p159 = scmp.ne.s32.totalorder %s142, %s158
      %p160 = scmp.eq.s32.totalorder %s29, 0
      %p161 = por %p159, %p160
      %s162 = ssub.s32 %s23, %s30
      %p163 = scmp.eq.s32.totalorder %s162, 0
      %s165 = sadd.s32 %s164, 1
      %s166 = scalar_select %p163, %s164, %s165
      %p169 = pneg %p163
      %p170 = scmp.eq.s32.totalorder %s23, 2
      %p171 = por %p169, %p170
      %p172 = scmp.ne.s32.totalorder %s164, %s167
      %p173 = scmp.eq.s32.totalorder %s23, 0
      %p174 = por %p172, %p173
      %p175 = scmp.ne.s32.totalorder %s164, %s167
      %p176 = scmp.eq.s32.totalorder %s28, 2
      %p177 = por %p175, %p176
      %p178 = scmp.ne.s32.totalorder %s167, %s168
      %p179 = scmp.eq.s32.totalorder %s28, 0
      %p180 = por %p178, %p179
      %p181 = scmp.ne.s32.totalorder %s167, %s168
      %p182 = scmp.eq.s32.totalorder %s29, 2
      %p183 = por %p181, %p182
      %p185 = scmp.ne.s32.totalorder %s168, %s184
      %p186 = scmp.eq.s32.totalorder %s29, 0
      %p187 = por %p185, %p186
      %s188 = ssub.s32 %s23, %s30
      %p189 = scmp.eq.s32.totalorder %s188, 0
      %s191 = sadd.s32 %s190, 1
      %s192 = scalar_select %p189, %s190, %s191
      %p195 = pneg %p189
      %p196 = scmp.eq.s32.totalorder %s23, 2
      %p197 = por %p195, %p196
      %p198 = scmp.ne.s32.totalorder %s190, %s193
      %p199 = scmp.eq.s32.totalorder %s23, 0
      %p200 = por %p198, %p199
      %p201 = scmp.ne.s32.totalorder %s190, %s193
      %p202 = scmp.eq.s32.totalorder %s28, 2
      %p203 = por %p201, %p202
      %p204 = scmp.ne.s32.totalorder %s193, %s194
      %p205 = scmp.eq.s32.totalorder %s28, 0
      %p206 = por %p204, %p205
      %p207 = scmp.ne.s32.totalorder %s193, %s194
      %p208 = scmp.eq.s32.totalorder %s29, 2
      %p209 = por %p207, %p208
      %p211 = scmp.ne.s32.totalorder %s194, %s210
      %p212 = scmp.eq.s32.totalorder %s29, 0
      %p213 = por %p211, %p212
      %s215 = sadd.s32 %s214, 1
      %p218 = scmp.eq.s32.totalorder %s23, 2
      %p219 = scmp.ne.s32.totalorder %s214, %s216
      %p220 = scmp.eq.s32.totalorder %s23, 0
      %p221 = por %p219, %p220
      %p222 = scmp.ne.s32.totalorder %s214, %s216
      %p223 = scmp.eq.s32.totalorder %s28, 2
      %p224 = por %p222, %p223
      %p225 = scmp.ne.s32.totalorder %s216, %s217
      %p226 = scmp.eq.s32.totalorder %s28, 0
      %p227 = por %p225, %p226
      %p228 = scmp.ne.s32.totalorder %s216, %s217
      %p229 = scmp.eq.s32.totalorder %s29, 2
      %p230 = por %p228, %p229
      %p232 = scmp.ne.s32.totalorder %s217, %s231
      %p233 = scmp.eq.s32.totalorder %s29, 0
      %p234 = por %p232, %p233
      %s236 = sadd.s32 %s235, 1
      %p239 = scmp.eq.s32.totalorder %s23, 2
      %p240 = scmp.ne.s32.totalorder %s235, %s237
      %p241 = scmp.eq.s32.totalorder %s23, 0
      %p242 = por %p240, %p241
      %p243 = scmp.ne.s32.totalorder %s235, %s237
      %p244 = scmp.eq.s32.totalorder %s28, 2
      %p245 = por %p243, %p244
      %p246 = scmp.ne.s32.totalorder %s237, %s238
      %p247 = scmp.eq.s32.totalorder %s28, 0
      %p248 = por %p246, %p247
      %p249 = scmp.ne.s32.totalorder %s237, %s238
      %p250 = scmp.eq.s32.totalorder %s29, 2
      %p251 = por %p249, %p250
      %p253 = scmp.ne.s32.totalorder %s238, %s252
      %p254 = scmp.eq.s32.totalorder %s29, 0
      %p255 = por %p253, %p254
      %s257 = sadd.s32 %s256, 1
      %p260 = scmp.eq.s32.totalorder %s23, 2
      %p261 = scmp.ne.s32.totalorder %s256, %s258
      %p262 = scmp.eq.s32.totalorder %s23, 0
      %p263 = por %p261, %p262
      %p264 = scmp.ne.s32.totalorder %s256, %s258
      %p265 = scmp.eq.s32.totalorder %s28, 2
      %p266 = por %p264, %p265
      %p267 = scmp.ne.s32.totalorder %s258, %s259
      %p268 = scmp.eq.s32.totalorder %s28, 0
      %p269 = por %p267, %p268
      %p270 = scmp.ne.s32.totalorder %s258, %s259
      %p271 = scmp.eq.s32.totalorder %s29, 2
      %p272 = por %p270, %p271
      %p274 = scmp.ne.s32.totalorder %s259, %s273
      %p275 = scmp.eq.s32.totalorder %s29, 0
      %p276 = por %p274, %p275
      %s278 = sadd.s32 %s277, 1
      %p281 = scmp.eq.s32.totalorder %s23, 2
      %p282 = scmp.ne.s32.totalorder %s277, %s279
      %p283 = scmp.eq.s32.totalorder %s23, 0
      %p284 = por %p282, %p283
      %p285 = scmp.ne.s32.totalorder %s277, %s279
      %p286 = scmp.eq.s32.totalorder %s28, 2
      %p287 = por %p285, %p286
      %p288 = scmp.ne.s32.totalorder %s279, %s280
      %p289 = scmp.eq.s32.totalorder %s28, 0
      %p290 = por %p288, %p289
      %p291 = scmp.ne.s32.totalorder %s279, %s280
      %p292 = scmp.eq.s32.totalorder %s29, 2
      %p293 = por %p291, %p292
      %p295 = scmp.ne.s32.totalorder %s280, %s294
      %p296 = scmp.eq.s32.totalorder %s29, 0
      %p297 = por %p295, %p296
      %s299 = sadd.s32 %s298, 1
      %p302 = scmp.eq.s32.totalorder %s23, 2
      %p303 = scmp.ne.s32.totalorder %s298, %s300
      %p304 = scmp.eq.s32.totalorder %s23, 0
      %p305 = por %p303, %p304
      %p306 = scmp.ne.s32.totalorder %s298, %s300
      %p307 = scmp.eq.s32.totalorder %s28, 2
      %p308 = por %p306, %p307
      %p309 = scmp.ne.s32.totalorder %s300, %s301
      %p310 = scmp.eq.s32.totalorder %s28, 0
      %p311 = por %p309, %p310
      %p312 = scmp.ne.s32.totalorder %s300, %s301
      %p313 = scmp.eq.s32.totalorder %s29, 2
      %p314 = por %p312, %p313
      %p316 = scmp.ne.s32.totalorder %s301, %s315
      %p317 = scmp.eq.s32.totalorder %s29, 0
      %p318 = por %p316, %p317
      %s320 = sadd.s32 %s319, 1
      %p323 = scmp.eq.s32.totalorder %s23, 2
      %p324 = scmp.ne.s32.totalorder %s319, %s321
      %p325 = scmp.eq.s32.totalorder %s23, 0
      %p326 = por %p324, %p325
      %p327 = scmp.ne.s32.totalorder %s319, %s321
      %p328 = scmp.eq.s32.totalorder %s28, 2
      %p329 = por %p327, %p328
      %p330 = scmp.ne.s32.totalorder %s321, %s322
      %p331 = scmp.eq.s32.totalorder %s28, 0
      %p332 = por %p330, %p331
      %p333 = scmp.ne.s32.totalorder %s321, %s322
      %p334 = scmp.eq.s32.totalorder %s29, 2
      %p335 = por %p333, %p334
      %p337 = scmp.ne.s32.totalorder %s322, %s336
      %p338 = scmp.eq.s32.totalorder %s29, 0
      %p339 = por %p337, %p338
      %s340 = ssub.s32 %s23, %s30
      %p341 = scmp.eq.s32.totalorder %s340, 0
      %s343 = sadd.s32 %s342, 1
      %s344 = scalar_select %p341, %s342, %s343
      %p347 = pneg %p341
      %p348 = scmp.eq.s32.totalorder %s23, 2
      %p349 = por %p347, %p348
      %p350 = scmp.ne.s32.totalorder %s342, %s345
      %p351 = scmp.eq.s32.totalorder %s23, 0
      %p352 = por %p350, %p351
      %p353 = scmp.ne.s32.totalorder %s342, %s345
      %p354 = scmp.eq.s32.totalorder %s28, 2
      %p355 = por %p353, %p354
      %p356 = scmp.ne.s32.totalorder %s345, %s346
      %p357 = scmp.eq.s32.totalorder %s28, 0
      %p358 = por %p356, %p357
      %p359 = scmp.ne.s32.totalorder %s345, %s346
      %p360 = scmp.eq.s32.totalorder %s29, 2
      %p361 = por %p359, %p360
      %p363 = scmp.ne.s32.totalorder %s346, %s362
      %p364 = scmp.eq.s32.totalorder %s29, 0
      %p365 = por %p363, %p364
      %p366 = scmp.le.s32.totalorder 1, %s23
      %p367 = scmp.lt.s32.totalorder %s23, 4
      %p368 = pnand %p366, %p367
      %p369 = pneg %p368
      // Predicated region
      $region9: #{_fcos_forward.1} parent=5 // pred_check
        _
      $region10: #{_fcos_forward.1} parent=5 // pred_check_branch
        %371 = sbr.rel (%p368) target = $region12
      $region11: #{_fcos_forward.1} parent=5 // pred_region
        %s372 = ssub.s32 %s23, 1
        // Predicated region
        $region13: #{_fcos_forward.1} parent=11 // pred_check
          %p373 = pneg %p44
        $region14: #{_fcos_forward.1} parent=11 // pred_check_branch
          %375 = sbr.rel (%p373) target = $region16
        $region15: #{_fcos_forward.1} parent=11 // pred_region
          %s377 = ssub.s32 16, 16
          %378 = vsyncadd [#allocation3], %s377
          %s380 = sshll.u32 %s0, 4
          %s381 = int_to_ptr.vmem [resolvable:$true] %s380
          %383 = dma.vmem_to_smem %s381, 16, [#allocation2], [#allocation3]
        $region16: #{_fcos_forward.1} parent=11 // pred_fallthru
          _
        // Predicated region
        $region17: #{_fcos_forward.1} parent=11 // pred_check
          %p384 = pneg %p65
        $region18: #{_fcos_forward.1} parent=11 // pred_check_branch
          %386 = sbr.rel (%p384) target = $region20
        $region19: #{_fcos_forward.1} parent=11 // pred_region
          %s388 = ssub.s32 16, 16
          %389 = vsyncadd [#allocation5], %s388
          %s391 = sshll.u32 %s1, 4
          %s392 = int_to_ptr.vmem [resolvable:$true] %s391
          %394 = dma.vmem_to_smem %s392, 16, [#allocation4], [#allocation5]
        $region20: #{_fcos_forward.1} parent=11 // pred_fallthru
          _
        // Predicated region
        $region21: #{_fcos_forward.1} parent=11 // pred_check
          %p395 = pneg %p86
        $region22: #{_fcos_forward.1} parent=11 // pred_check_branch
          %397 = sbr.rel (%p395) target = $region24
        $region23: #{_fcos_forward.1} parent=11 // pred_region
          %s399 = ssub.s32 16, 16
          %400 = vsyncadd [#allocation5], %s399
          %s402 = sshll.u32 %s2, 4
          %s403 = int_to_ptr.vmem [resolvable:$true] %s402
          %405 = dma.vmem_to_smem %s403, 16, [#allocation6], [#allocation5]
        $region24: #{_fcos_forward.1} parent=11 // pred_fallthru
          _
        // Predicated region
        $region25: #{_fcos_forward.1} parent=11 // pred_check
          %p406 = pneg %p107
        $region26: #{_fcos_forward.1} parent=11 // pred_check_branch
          %408 = sbr.rel (%p406) target = $region28
        $region27: #{_fcos_forward.1} parent=11 // pred_region
          %s410 = ssub.s32 16, 16
          %411 = vsyncadd [#allocation8], %s410
          %s413 = sshll.u32 %s3, 4
          %s414 = int_to_ptr.vmem [resolvable:$true] %s413
          %416 = dma.vmem_to_smem %s414, 16, [#allocation7], [#allocation8]
        $region28: #{_fcos_forward.1} parent=11 // pred_fallthru
          _
        // Predicated region
        $region29: #{_fcos_forward.1} parent=11 // pred_check
          %p417 = pneg %p128
        $region30: #{_fcos_forward.1} parent=11 // pred_check_branch
          %419 = sbr.rel (%p417) target = $region32
        $region31: #{_fcos_forward.1} parent=11 // pred_region
          _
        $region32: #{_fcos_forward.1} parent=11 // pred_fallthru
          _
        // Predicated region
        $region33: #{_fcos_forward.1} parent=11 // pred_check
          %p420 = pneg %p227
        $region34: #{_fcos_forward.1} parent=11 // pred_check_branch
          %422 = sbr.rel (%p420) target = $region36
        $region35: #{_fcos_forward.1} parent=11 // pred_region
          _
        $region36: #{_fcos_forward.1} parent=11 // pred_fallthru
          _
        // Predicated region
        $region37: #{_fcos_forward.1} parent=11 // pred_check
          %p423 = pneg %p248
        $region38: #{_fcos_forward.1} parent=11 // pred_check_branch
          %425 = sbr.rel (%p423) target = $region40
        $region39: #{_fcos_forward.1} parent=11 // pred_region
          _
        $region40: #{_fcos_forward.1} parent=11 // pred_fallthru
          _
        // Predicated region
        $region41: #{_fcos_forward.1} parent=11 // pred_check
          %p426 = pneg %p269
        $region42: #{_fcos_forward.1} parent=11 // pred_check_branch
          %428 = sbr.rel (%p426) target = $region44
        $region43: #{_fcos_forward.1} parent=11 // pred_region
          _
        $region44: #{_fcos_forward.1} parent=11 // pred_fallthru
          _
        // Predicated region
        $region45: #{_fcos_forward.1} parent=11 // pred_check
          %p429 = pneg %p290
        $region46: #{_fcos_forward.1} parent=11 // pred_check_branch
          %431 = sbr.rel (%p429) target = $region48
        $region47: #{_fcos_forward.1} parent=11 // pred_region
          _
        $region48: #{_fcos_forward.1} parent=11 // pred_fallthru
          _
        // Predicated region
        $region49: #{_fcos_forward.1} parent=11 // pred_check
          %p432 = pneg %p311
        $region50: #{_fcos_forward.1} parent=11 // pred_check_branch
          %434 = sbr.rel (%p432) target = $region52
        $region51: #{_fcos_forward.1} parent=11 // pred_region
          _
        $region52: #{_fcos_forward.1} parent=11 // pred_fallthru
          _
        // Predicated region
        $region53: #{_fcos_forward.1} parent=11 // pred_check
          %p435 = pneg %p332
        $region54: #{_fcos_forward.1} parent=11 // pred_check_branch
          %437 = sbr.rel (%p435) target = $region56
        $region55: #{_fcos_forward.1} parent=11 // pred_region
          _
        $region56: #{_fcos_forward.1} parent=11 // pred_fallthru
          _
      $region12: #{_fcos_forward.1} parent=5 // pred_fallthru
        _
      %p438 = scmp.lt.s32.totalorder %s23, 3
      // Predicated region
      $region57: #{_fcos_forward.1} parent=5 // pred_check
        %p439 = pneg %p438
      $region58: #{_fcos_forward.1} parent=5 // pred_check_branch
        %441 = sbr.rel (%p439) target = $region60
      $region59: #{_fcos_forward.1} parent=5 // pred_region
        // Predicated region
        $region61: #{_fcos_forward.1} parent=59 // pred_check
          %p442 = pneg %p148
        $region62: #{_fcos_forward.1} parent=59 // pred_check_branch
          %444 = sbr.rel (%p442) target = $region64
        $region63: #{_fcos_forward.1} parent=59 // pred_region
          %p445 = scmp.lt.s32.totalorder %s23, 2
          %s446 = scalar_select %p445, %s23, 2
          %s447 = smul.addr %s446, 8
          %s448 = smul.addr %s447, 8
          %s449 = scalar_lea.vmem %s5, %s448
        $region64: #{_fcos_forward.1} parent=59 // pred_fallthru
          _
        // Predicated region
        $region65: #{_fcos_forward.1} parent=59 // pred_check
          %p450 = pneg %p174
        $region66: #{_fcos_forward.1} parent=59 // pred_check_branch
          %452 = sbr.rel (%p450) target = $region68
        $region67: #{_fcos_forward.1} parent=59 // pred_region
          %p453 = scmp.lt.s32.totalorder %s23, 2
          %s454 = scalar_select %p453, %s23, 2
          %s455 = smul.addr %s454, 9
          %s456 = smul.addr %s455, 4
          %s457 = scalar_lea.vmem %s6, %s456
        $region68: #{_fcos_forward.1} parent=59 // pred_fallthru
          _
        // Predicated region
        $region69: #{_fcos_forward.1} parent=59 // pred_check
          %p458 = pneg %p200
        $region70: #{_fcos_forward.1} parent=59 // pred_check_branch
          %460 = sbr.rel (%p458) target = $region72
        $region71: #{_fcos_forward.1} parent=59 // pred_region
          %p461 = scmp.lt.s32.totalorder %s23, 2
          %s462 = scalar_select %p461, %s23, 2
          %s463 = scalar_lea.vmem %s7, %s462
        $region72: #{_fcos_forward.1} parent=59 // pred_fallthru
          _
      $region60: #{_fcos_forward.1} parent=5 // pred_fallthru
        _
      %p464 = scmp.le.s32.totalorder 1, %s23
      %p465 = scmp.lt.s32.totalorder %s23, 4
      %p466 = pnand %p464, %p465
      %p467 = pneg %p466
      // Predicated region
      $region73: #{_fcos_forward.1} parent=5 // pred_check
        _
      $region74: #{_fcos_forward.1} parent=5 // pred_check_branch
        %469 = sbr.rel (%p466) target = $region76
      $region75: #{_fcos_forward.1} parent=5 // pred_region
        %s470 = ssub.s32 %s23, 1
        // Predicated region
        $region77: #{_fcos_forward.1} parent=75 // pred_check
          %p471 = pneg %p44
        $region78: #{_fcos_forward.1} parent=75 // pred_check_branch
          %473 = sbr.rel (%p471) target = $region80
        $region79: #{_fcos_forward.1} parent=75 // pred_region
          %474 = dma.done [#allocation3], 16
        $region80: #{_fcos_forward.1} parent=75 // pred_fallthru
          _
        // Predicated region
        $region81: #{_fcos_forward.1} parent=75 // pred_check
          %p475 = pneg %p65
        $region82: #{_fcos_forward.1} parent=75 // pred_check_branch
          %477 = sbr.rel (%p475) target = $region84
        $region83: #{_fcos_forward.1} parent=75 // pred_region
          %478 = dma.done [#allocation5], 16
        $region84: #{_fcos_forward.1} parent=75 // pred_fallthru
          _
        // Predicated region
        $region85: #{_fcos_forward.1} parent=75 // pred_check
          %p479 = pneg %p86
        $region86: #{_fcos_forward.1} parent=75 // pred_check_branch
          %481 = sbr.rel (%p479) target = $region88
        $region87: #{_fcos_forward.1} parent=75 // pred_region
          %482 = dma.done [#allocation5], 16
        $region88: #{_fcos_forward.1} parent=75 // pred_fallthru
          _
        // Predicated region
        $region89: #{_fcos_forward.1} parent=75 // pred_check
          %p483 = pneg %p107
        $region90: #{_fcos_forward.1} parent=75 // pred_check_branch
          %485 = sbr.rel (%p483) target = $region92
        $region91: #{_fcos_forward.1} parent=75 // pred_region
          %486 = dma.done [#allocation8], 16
        $region92: #{_fcos_forward.1} parent=75 // pred_fallthru
          _
        %487 = sfence
        %p488 = pneg %p44
        %p489 = pneg %p41
        %p490 = pneg %p65
        %p491 = pneg %p62
        %p492 = pneg %p86
        %p493 = pneg %p83
        %p494 = pneg %p107
        %p495 = pneg %p104
        %p496 = pneg %p128
        %p497 = pneg %p125
        %p498 = scmp.lt.s32.totalorder %s28, 2
        %s499 = scalar_select %p498, %s28, 2
        %s500 = smul.addr %s499, 8
        %s501 = smul.addr %s500, 8
        %s502 = scalar_lea.vmem %s5, %s501
        %p503 = pneg %p154
        %p504 = pneg %p151
        %p505 = scmp.lt.s32.totalorder %s28, 2
        %s506 = scalar_select %p505, %s28, 2
        %s507 = smul.addr %s506, 9
        %s508 = smul.addr %s507, 4
        %s509 = scalar_lea.vmem %s6, %s508
        %p510 = pneg %p180
        %p511 = pneg %p177
        %p512 = scmp.lt.s32.totalorder %s28, 2
        %s513 = scalar_select %p512, %s28, 2
        %s514 = scalar_lea.vmem %s7, %s513
        %p515 = pneg %p206
        %p516 = pneg %p203
        %p517 = pneg %p227
        %p518 = pneg %p224
        %p519 = pneg %p248
        %p520 = pneg %p245
        %p521 = pneg %p269
        %p522 = pneg %p266
        %p523 = pneg %p290
        %p524 = pneg %p287
        %p525 = pneg %p311
        %p526 = pneg %p308
        %p527 = pneg %p332
        %p528 = pneg %p329
        %p529 = pneg %p358
        %p530 = pneg %p355
        %p531 = scmp.lt.s32.totalorder %s28, 2
        %s532 = scalar_select %p531, %s28, 2
        %s533 = smul.addr %s532, 8
        %s534 = smul.addr %s533, 8
        %s535 = scalar_lea.vmem %s14, %s534
        %p536 = scmp.lt.s32.totalorder %s28, 2
        %s537 = scalar_select %p536, %s28, 2
        %s538 = smul.addr %s537, 8
        %s539 = smul.addr %s538, 8
        %s540 = scalar_lea.vmem %s5, %s539
        %p541 = scmp.lt.s32.totalorder %s28, 2
        %s542 = scalar_select %p541, %s28, 2
        %s543 = smul.addr %s542, 9
        %s544 = smul.addr %s543, 4
        %s545 = scalar_lea.vmem %s6, %s544
        %p546 = scmp.lt.s32.totalorder %s28, 2
        %s547 = scalar_select %p546, %s28, 2
        %s548 = scalar_lea.vmem %s7, %s547
        %p549 = scmp.lt.s32.totalorder %s28, 2
        %s550 = scalar_select %p549, %s28, 2
        %s551 = smul.addr %s550, 8
        %s552 = smul.addr %s551, 8
        %s553 = scalar_lea.vmem %s14, %s552
        %s555 = sld [smem:[#allocation2 + %s28]]
        %s556 = sld [smem:[#allocation4 + %s28]]
        %s557 = sld [smem:[#allocation6 + %s28]]
        %s558 = sld [smem:[#allocation7 + %s28]]
        %v559 = vld [vmem:[%s4] sm:$0xff]
        %v560 = vld [vmem:[%s4 + $0x8] sm:$0xff]
        %v561 = vld [vmem:[%s4 + $0x10] sm:$0xff]
        %v562 = vld [vmem:[%s4 + $0x18] sm:$0xff]
        %v563 = vld [vmem:[%s4 + $0x20] sm:$0xff]
        %v564 = vld [vmem:[%s4 + $0x28] sm:$0xff]
        %v565 = vld [vmem:[%s4 + $0x30] sm:$0xff]
        %v566 = vld [vmem:[%s4 + $0x38] sm:$0xff]
        %v567 = vadd.s32 %v559, 4294967295
        %v568 = vadd.s32 %v560, 4294967295
        %v569 = vadd.s32 %v561, 4294967295
        %v570 = vadd.s32 %v562, 4294967295
        %v571 = vadd.s32 %v563, 4294967295
        %v572 = vadd.s32 %v564, 4294967295
        %v573 = vadd.s32 %v565, 4294967295
        %v574 = vadd.s32 %v566, 4294967295
        %vm575 = vcmp.ge.s32.totalorder %v567, 0
        %vm576 = vcmp.ge.s32.totalorder %v568, 0
        %vm577 = vcmp.ge.s32.totalorder %v569, 0
        %vm578 = vcmp.ge.s32.totalorder %v570, 0
        %vm579 = vcmp.ge.s32.totalorder %v571, 0
        %vm580 = vcmp.ge.s32.totalorder %v572, 0
        %vm581 = vcmp.ge.s32.totalorder %v573, 0
        %vm582 = vcmp.ge.s32.totalorder %v574, 0
        %v583 = vstv %s555
        %vm584 = vcmp.lt.s32.totalorder %v567, %v583
        %vm585 = vcmp.lt.s32.totalorder %v568, %v583
        %vm586 = vcmp.lt.s32.totalorder %v569, %v583
        %vm587 = vcmp.lt.s32.totalorder %v570, %v583
        %vm588 = vcmp.lt.s32.totalorder %v571, %v583
        %vm589 = vcmp.lt.s32.totalorder %v572, %v583
        %vm590 = vcmp.lt.s32.totalorder %v573, %v583
        %vm591 = vcmp.lt.s32.totalorder %v574, %v583
        %vm592 = vmand %vm575, %vm584
        %vm593 = vmand %vm576, %vm585
        %vm594 = vmand %vm577, %vm586
        %vm595 = vmand %vm578, %vm587
        %vm596 = vmand %vm579, %vm588
        %vm597 = vmand %vm580, %vm589
        %vm598 = vmand %vm581, %vm590
        %vm599 = vmand %vm582, %vm591
        %v600 = vsel %vm576, 1, 0
        %v601 = vsel %vm577, 1, 0
        %v602 = vsel %vm578, 1, 0
        %v603 = vsel %vm579, 1, 0
        %v604 = vsel %vm580, 1, 0
        %v605 = vsel %vm581, 1, 0
        %v606 = vsel %vm582, 1, 0
        %607 = vrot.lane.b32.xlu0 %v600, 127
        %v608 = vpop.permute.xlu0 %607
        %609 = vrot.lane.b32.xlu0 %v601, 127
        %v610 = vpop.permute.xlu0 %609
        %611 = vrot.lane.b32.xlu0 %v602, 127
        %v612 = vpop.permute.xlu0 %611
        %613 = vrot.lane.b32.xlu0 %v603, 127
        %v614 = vpop.permute.xlu0 %613
        %615 = vrot.lane.b32.xlu0 %v604, 127
        %v616 = vpop.permute.xlu0 %615
        %617 = vrot.lane.b32.xlu0 %v605, 127
        %v618 = vpop.permute.xlu0 %617
        %619 = vrot.lane.b32.xlu0 %v606, 127
        %v620 = vpop.permute.xlu0 %619
        %vm621 = vcmp.ne.s32.totalorder %v608, 0
        %vm622 = vcmp.ne.s32.totalorder %v610, 0
        %vm623 = vcmp.ne.s32.totalorder %v612, 0
        %vm624 = vcmp.ne.s32.totalorder %v614, 0
        %vm625 = vcmp.ne.s32.totalorder %v616, 0
        %vm626 = vcmp.ne.s32.totalorder %v618, 0
        %vm627 = vcmp.ne.s32.totalorder %v620, 0
        %vm628 = vmand %vm593, %vm621
        %vm629 = vmand %vm594, %vm622
        %vm630 = vmand %vm595, %vm623
        %vm631 = vmand %vm596, %vm624
        %vm632 = vmand %vm597, %vm625
        %vm633 = vmand %vm598, %vm626
        %vm634 = vmand %vm599, %vm627
        %v635 = vstv %s556
        %vm636 = vcmp.lt.s32.totalorder %v567, %v635
        %vm637 = vcmp.lt.s32.totalorder %v568, %v635
        %vm638 = vcmp.lt.s32.totalorder %v569, %v635
        %vm639 = vcmp.lt.s32.totalorder %v570, %v635
        %vm640 = vcmp.lt.s32.totalorder %v571, %v635
        %vm641 = vcmp.lt.s32.totalorder %v572, %v635
        %vm642 = vcmp.lt.s32.totalorder %v573, %v635
        %vm643 = vcmp.lt.s32.totalorder %v574, %v635
        %v644 = vsel %vm637, 1, 0
        %v645 = vsel %vm638, 1, 0
        %v646 = vsel %vm639, 1, 0
        %v647 = vsel %vm640, 1, 0
        %v648 = vsel %vm641, 1, 0
        %v649 = vsel %vm642, 1, 0
        %v650 = vsel %vm643, 1, 0
        %651 = vrot.lane.b32.xlu0 %v644, 127
        %v652 = vpop.permute.xlu0 %651
        %653 = vrot.lane.b32.xlu0 %v645, 127
        %v654 = vpop.permute.xlu0 %653
        %655 = vrot.lane.b32.xlu0 %v646, 127
        %v656 = vpop.permute.xlu0 %655
        %657 = vrot.lane.b32.xlu0 %v647, 127
        %v658 = vpop.permute.xlu0 %657
        %659 = vrot.lane.b32.xlu0 %v648, 127
        %v660 = vpop.permute.xlu0 %659
        %661 = vrot.lane.b32.xlu0 %v649, 127
        %v662 = vpop.permute.xlu0 %661
        %663 = vrot.lane.b32.xlu0 %v650, 127
        %v664 = vpop.permute.xlu0 %663
        %vm665 = vcmp.ne.s32.totalorder %v652, 0
        %vm666 = vcmp.ne.s32.totalorder %v654, 0
        %vm667 = vcmp.ne.s32.totalorder %v656, 0
        %vm668 = vcmp.ne.s32.totalorder %v658, 0
        %vm669 = vcmp.ne.s32.totalorder %v660, 0
        %vm670 = vcmp.ne.s32.totalorder %v662, 0
        %vm671 = vcmp.ne.s32.totalorder %v664, 0
        %vm672 = vmand %vm628, %vm665
        %vm673 = vmand %vm629, %vm666
        %vm674 = vmand %vm630, %vm667
        %vm675 = vmand %vm631, %vm668
        %vm676 = vmand %vm632, %vm669
        %vm677 = vmand %vm633, %vm670
        %vm678 = vmand %vm634, %vm671
        %vm679 = vcmp.ge.s32.totalorder %v559, 0
        %vm680 = vcmp.ge.s32.totalorder %v560, 0
        %vm681 = vcmp.ge.s32.totalorder %v561, 0
        %vm682 = vcmp.ge.s32.totalorder %v562, 0
        %vm683 = vcmp.ge.s32.totalorder %v563, 0
        %vm684 = vcmp.ge.s32.totalorder %v564, 0
        %vm685 = vcmp.ge.s32.totalorder %v565, 0
        %vm686 = vcmp.ge.s32.totalorder %v566, 0
        %v687 = vsel %vm680, 1, 0
        %v688 = vsel %vm681, 1, 0
        %v689 = vsel %vm682, 1, 0
        %v690 = vsel %vm683, 1, 0
        %v691 = vsel %vm684, 1, 0
        %v692 = vsel %vm685, 1, 0
        %v693 = vsel %vm686, 1, 0
        %694 = vrot.lane.b32.xlu0 %v687, 127
        %v695 = vpop.permute.xlu0 %694
        %696 = vrot.lane.b32.xlu0 %v688, 127
        %v697 = vpop.permute.xlu0 %696
        %698 = vrot.lane.b32.xlu0 %v689, 127
        %v699 = vpop.permute.xlu0 %698
        %700 = vrot.lane.b32.xlu0 %v690, 127
        %v701 = vpop.permute.xlu0 %700
        %702 = vrot.lane.b32.xlu0 %v691, 127
        %v703 = vpop.permute.xlu0 %702
        %704 = vrot.lane.b32.xlu0 %v692, 127
        %v705 = vpop.permute.xlu0 %704
        %706 = vrot.lane.b32.xlu0 %v693, 127
        %v707 = vpop.permute.xlu0 %706
        %vm708 = vcmp.ne.s32.totalorder %v695, 0
        %vm709 = vcmp.ne.s32.totalorder %v697, 0
        %vm710 = vcmp.ne.s32.totalorder %v699, 0
        %vm711 = vcmp.ne.s32.totalorder %v701, 0
        %vm712 = vcmp.ne.s32.totalorder %v703, 0
        %vm713 = vcmp.ne.s32.totalorder %v705, 0
        %vm714 = vcmp.ne.s32.totalorder %v707, 0
        %vm715 = vmand %vm593, %vm708
        %vm716 = vmand %vm594, %vm709
        %vm717 = vmand %vm595, %vm710
        %vm718 = vmand %vm596, %vm711
        %vm719 = vmand %vm597, %vm712
        %vm720 = vmand %vm598, %vm713
        %vm721 = vmand %vm599, %vm714
        %vm722 = vcmp.lt.s32.totalorder %v559, %v635
        %vm723 = vcmp.lt.s32.totalorder %v560, %v635
        %vm724 = vcmp.lt.s32.totalorder %v561, %v635
        %vm725 = vcmp.lt.s32.totalorder %v562, %v635
        %vm726 = vcmp.lt.s32.totalorder %v563, %v635
        %vm727 = vcmp.lt.s32.totalorder %v564, %v635
        %vm728 = vcmp.lt.s32.totalorder %v565, %v635
        %vm729 = vcmp.lt.s32.totalorder %v566, %v635
        %v730 = vsel %vm723, 1, 0
        %v731 = vsel %vm724, 1, 0
        %v732 = vsel %vm725, 1, 0
        %v733 = vsel %vm726, 1, 0
        %v734 = vsel %vm727, 1, 0
        %v735 = vsel %vm728, 1, 0
        %v736 = vsel %vm729, 1, 0
        %737 = vrot.lane.b32.xlu0 %v730, 127
        %v738 = vpop.permute.xlu0 %737
        %739 = vrot.lane.b32.xlu0 %v731, 127
        %v740 = vpop.permute.xlu0 %739
        %741 = vrot.lane.b32.xlu0 %v732, 127
        %v742 = vpop.permute.xlu0 %741
        %743 = vrot.lane.b32.xlu0 %v733, 127
        %v744 = vpop.permute.xlu0 %743
        %745 = vrot.lane.b32.xlu0 %v734, 127
        %v746 = vpop.permute.xlu0 %745
        %747 = vrot.lane.b32.xlu0 %v735, 127
        %v748 = vpop.permute.xlu0 %747
        %749 = vrot.lane.b32.xlu0 %v736, 127
        %v750 = vpop.permute.xlu0 %749
        %vm751 = vcmp.ne.s32.totalorder %v738, 0
        %vm752 = vcmp.ne.s32.totalorder %v740, 0
        %vm753 = vcmp.ne.s32.totalorder %v742, 0
        %vm754 = vcmp.ne.s32.totalorder %v744, 0
        %vm755 = vcmp.ne.s32.totalorder %v746, 0
        %vm756 = vcmp.ne.s32.totalorder %v748, 0
        %vm757 = vcmp.ne.s32.totalorder %v750, 0
        %vm758 = vmand %vm715, %vm751
        %vm759 = vmand %vm716, %vm752
        %vm760 = vmand %vm717, %vm753
        %vm761 = vmand %vm718, %vm754
        %vm762 = vmand %vm719, %vm755
        %vm763 = vmand %vm720, %vm756
        %vm764 = vmand %vm721, %vm757
        %v765 = vadd.s32 %v559, 1
        %v766 = vadd.s32 %v560, 1
        %v767 = vadd.s32 %v561, 1
        %v768 = vadd.s32 %v562, 1
        %v769 = vadd.s32 %v563, 1
        %v770 = vadd.s32 %v564, 1
        %v771 = vadd.s32 %v565, 1
        %v772 = vadd.s32 %v566, 1
        %vm773 = vcmp.ge.s32.totalorder %v765, 0
        %vm774 = vcmp.ge.s32.totalorder %v766, 0
        %vm775 = vcmp.ge.s32.totalorder %v767, 0
        %vm776 = vcmp.ge.s32.totalorder %v768, 0
        %vm777 = vcmp.ge.s32.totalorder %v769, 0
        %vm778 = vcmp.ge.s32.totalorder %v770, 0
        %vm779 = vcmp.ge.s32.totalorder %v771, 0
        %vm780 = vcmp.ge.s32.totalorder %v772, 0
        %v781 = vsel %vm773, 1, 0
        %v782 = vsel %vm774, 1, 0
        %v783 = vsel %vm775, 1, 0
        %v784 = vsel %vm776, 1, 0
        %v785 = vsel %vm777, 1, 0
        %v786 = vsel %vm778, 1, 0
        %v787 = vsel %vm779, 1, 0
        %v788 = vsel %vm780, 1, 0
        %789 = vrot.lane.b32.xlu0 %v781, 127
        %v790 = vpop.permute.xlu0 %789
        %791 = vrot.lane.b32.xlu0 %v782, 127
        %v792 = vpop.permute.xlu0 %791
        %793 = vrot.lane.b32.xlu0 %v783, 127
        %v794 = vpop.permute.xlu0 %793
        %795 = vrot.lane.b32.xlu0 %v784, 127
        %v796 = vpop.permute.xlu0 %795
        %797 = vrot.lane.b32.xlu0 %v785, 127
        %v798 = vpop.permute.xlu0 %797
        %799 = vrot.lane.b32.xlu0 %v786, 127
        %v800 = vpop.permute.xlu0 %799
        %801 = vrot.lane.b32.xlu0 %v787, 127
        %v802 = vpop.permute.xlu0 %801
        %803 = vrot.lane.b32.xlu0 %v788, 127
        %v804 = vpop.permute.xlu0 %803
        %vm805 = vcmp.ne.s32.totalorder %v790, 0
        %vm806 = vcmp.ne.s32.totalorder %v792, 0
        %vm807 = vcmp.ne.s32.totalorder %v794, 0
        %vm808 = vcmp.ne.s32.totalorder %v796, 0
        %vm809 = vcmp.ne.s32.totalorder %v798, 0
        %vm810 = vcmp.ne.s32.totalorder %v800, 0
        %vm811 = vcmp.ne.s32.totalorder %v802, 0
        %vm812 = vcmp.ne.s32.totalorder %v804, 0
        %vm813 = vmand %vm592, %vm805
        %vm814 = vmand %vm593, %vm806
        %vm815 = vmand %vm594, %vm807
        %vm816 = vmand %vm595, %vm808
        %vm817 = vmand %vm596, %vm809
        %vm818 = vmand %vm597, %vm810
        %vm819 = vmand %vm598, %vm811
        %vm820 = vmand %vm599, %vm812
        %vm821 = vcmp.lt.s32.totalorder %v765, %v635
        %vm822 = vcmp.lt.s32.totalorder %v766, %v635
        %vm823 = vcmp.lt.s32.totalorder %v767, %v635
        %vm824 = vcmp.lt.s32.totalorder %v768, %v635
        %vm825 = vcmp.lt.s32.totalorder %v769, %v635
        %vm826 = vcmp.lt.s32.totalorder %v770, %v635
        %vm827 = vcmp.lt.s32.totalorder %v771, %v635
        %vm828 = vcmp.lt.s32.totalorder %v772, %v635
        %v829 = vsel %vm821, 1, 0
        %v830 = vsel %vm822, 1, 0
        %v831 = vsel %vm823, 1, 0
        %v832 = vsel %vm824, 1, 0
        %v833 = vsel %vm825, 1, 0
        %v834 = vsel %vm826, 1, 0
        %v835 = vsel %vm827, 1, 0
        %v836 = vsel %vm828, 1, 0
        %837 = vrot.lane.b32.xlu0 %v829, 127
        %v838 = vpop.permute.xlu0 %837
        %839 = vrot.lane.b32.xlu0 %v830, 127
        %v840 = vpop.permute.xlu0 %839
        %841 = vrot.lane.b32.xlu0 %v831, 127
        %v842 = vpop.permute.xlu0 %841
        %843 = vrot.lane.b32.xlu0 %v832, 127
        %v844 = vpop.permute.xlu0 %843
        %845 = vrot.lane.b32.xlu0 %v833, 127
        %v846 = vpop.permute.xlu0 %845
        %847 = vrot.lane.b32.xlu0 %v834, 127
        %v848 = vpop.permute.xlu0 %847
        %849 = vrot.lane.b32.xlu0 %v835, 127
        %v850 = vpop.permute.xlu0 %849
        %851 = vrot.lane.b32.xlu0 %v836, 127
        %v852 = vpop.permute.xlu0 %851
        %vm853 = vcmp.ne.s32.totalorder %v838, 0
        %vm854 = vcmp.ne.s32.totalorder %v840, 0
        %vm855 = vcmp.ne.s32.totalorder %v842, 0
        %vm856 = vcmp.ne.s32.totalorder %v844, 0
        %vm857 = vcmp.ne.s32.totalorder %v846, 0
        %vm858 = vcmp.ne.s32.totalorder %v848, 0
        %vm859 = vcmp.ne.s32.totalorder %v850, 0
        %vm860 = vcmp.ne.s32.totalorder %v852, 0
        %vm861 = vmand %vm813, %vm853
        %vm862 = vmand %vm814, %vm854
        %vm863 = vmand %vm815, %vm855
        %vm864 = vmand %vm816, %vm856
        %vm865 = vmand %vm817, %vm857
        %vm866 = vmand %vm818, %vm858
        %vm867 = vmand %vm819, %vm859
        %vm868 = vmand %vm820, %vm860
        %vm869 = vcmp.lt.s32.totalorder %v559, %v583
        %vm870 = vcmp.lt.s32.totalorder %v560, %v583
        %vm871 = vcmp.lt.s32.totalorder %v561, %v583
        %vm872 = vcmp.lt.s32.totalorder %v562, %v583
        %vm873 = vcmp.lt.s32.totalorder %v563, %v583
        %vm874 = vcmp.lt.s32.totalorder %v564, %v583
        %vm875 = vcmp.lt.s32.totalorder %v565, %v583
        %vm876 = vcmp.lt.s32.totalorder %v566, %v583
        %vm877 = vmand %vm679, %vm869
        %vm878 = vmand %vm680, %vm870
        %vm879 = vmand %vm681, %vm871
        %vm880 = vmand %vm682, %vm872
        %vm881 = vmand %vm683, %vm873
        %vm882 = vmand %vm684, %vm874
        %vm883 = vmand %vm685, %vm875
        %vm884 = vmand %vm686, %vm876
        %v885 = vsel %vm575, 1, 0
        %886 = vrot.lane.b32.xlu0 %v885, 127
        %v887 = vpop.permute.xlu0 %886
        %vm888 = vcmp.ne.s32.totalorder %v887, 0
        %vm889 = vmand %vm877, %vm888
        %vm890 = vmand %vm878, %vm621
        %vm891 = vmand %vm879, %vm622
        %vm892 = vmand %vm880, %vm623
        %vm893 = vmand %vm881, %vm624
        %vm894 = vmand %vm882, %vm625
        %vm895 = vmand %vm883, %vm626
        %vm896 = vmand %vm884, %vm627
        %v897 = vsel %vm636, 1, 0
        %898 = vrot.lane.b32.xlu0 %v897, 127
        %v899 = vpop.permute.xlu0 %898
        %vm900 = vcmp.ne.s32.totalorder %v899, 0
        %vm901 = vmand %vm889, %vm900
        %vm902 = vmand %vm890, %vm665
        %vm903 = vmand %vm891, %vm666
        %vm904 = vmand %vm892, %vm667
        %vm905 = vmand %vm893, %vm668
        %vm906 = vmand %vm894, %vm669
        %vm907 = vmand %vm895, %vm670
        %vm908 = vmand %vm896, %vm671
        %v909 = vsel %vm679, 1, 0
        %910 = vrot.lane.b32.xlu0 %v909, 127
        %v911 = vpop.permute.xlu0 %910
        %vm912 = vcmp.ne.s32.totalorder %v911, 0
        %vm913 = vmand %vm877, %vm912
        %vm914 = vmand %vm878, %vm708
        %vm915 = vmand %vm879, %vm709
        %vm916 = vmand %vm880, %vm710
        %vm917 = vmand %vm881, %vm711
        %vm918 = vmand %vm882, %vm712
        %vm919 = vmand %vm883, %vm713
        %vm920 = vmand %vm884, %vm714
        %v921 = vsel %vm722, 1, 0
        %922 = vrot.lane.b32.xlu0 %v921, 127
        %v923 = vpop.permute.xlu0 %922
        %vm924 = vcmp.ne.s32.totalorder %v923, 0
        %vm925 = vmand %vm913, %vm924
        %vm926 = vmand %vm914, %vm751
        %vm927 = vmand %vm915, %vm752
        %vm928 = vmand %vm916, %vm753
        %vm929 = vmand %vm917, %vm754
        %vm930 = vmand %vm918, %vm755
        %vm931 = vmand %vm919, %vm756
        %vm932 = vmand %vm920, %vm757
        %vm933 = vmand %vm877, %vm805
        %vm934 = vmand %vm878, %vm806
        %vm935 = vmand %vm879, %vm807
        %vm936 = vmand %vm880, %vm808
        %vm937 = vmand %vm881, %vm809
        %vm938 = vmand %vm882, %vm810
        %vm939 = vmand %vm883, %vm811
        %vm940 = vmand %vm884, %vm812
        %vm941 = vmand %vm933, %vm853
        %vm942 = vmand %vm934, %vm854
        %vm943 = vmand %vm935, %vm855
        %vm944 = vmand %vm936, %vm856
        %vm945 = vmand %vm937, %vm857
        %vm946 = vmand %vm938, %vm858
        %vm947 = vmand %vm939, %vm859
        %vm948 = vmand %vm940, %vm860
        %vm949 = vcmp.lt.s32.totalorder %v765, %v583
        %vm950 = vcmp.lt.s32.totalorder %v766, %v583
        %vm951 = vcmp.lt.s32.totalorder %v767, %v583
        %vm952 = vcmp.lt.s32.totalorder %v768, %v583
        %vm953 = vcmp.lt.s32.totalorder %v769, %v583
        %vm954 = vcmp.lt.s32.totalorder %v770, %v583
        %vm955 = vcmp.lt.s32.totalorder %v771, %v583
        %vm956 = vcmp.lt.s32.totalorder %v772, %v583
        %vm957 = vmand %vm773, %vm949
        %vm958 = vmand %vm774, %vm950
        %vm959 = vmand %vm775, %vm951
        %vm960 = vmand %vm776, %vm952
        %vm961 = vmand %vm777, %vm953
        %vm962 = vmand %vm778, %vm954
        %vm963 = vmand %vm779, %vm955
        %vm964 = vmand %vm780, %vm956
        %vm965 = vmand %vm957, %vm888
        %vm966 = vmand %vm958, %vm621
        %vm967 = vmand %vm959, %vm622
        %vm968 = vmand %vm960, %vm623
        %vm969 = vmand %vm961, %vm624
        %vm970 = vmand %vm962, %vm625
        %vm971 = vmand %vm963, %vm626
        %vm972 = vmand %vm964, %vm627
        %vm973 = vmand %vm965, %vm900
        %vm974 = vmand %vm966, %vm665
        %vm975 = vmand %vm967, %vm666
        %vm976 = vmand %vm968, %vm667
        %vm977 = vmand %vm969, %vm668
        %vm978 = vmand %vm970, %vm669
        %vm979 = vmand %vm971, %vm670
        %vm980 = vmand %vm972, %vm671
        %vm981 = vmand %vm957, %vm912
        %vm982 = vmand %vm958, %vm708
        %vm983 = vmand %vm959, %vm709
        %vm984 = vmand %vm960, %vm710
        %vm985 = vmand %vm961, %vm711
        %vm986 = vmand %vm962, %vm712
        %vm987 = vmand %vm963, %vm713
        %vm988 = vmand %vm981, %vm924
        %vm989 = vmand %vm982, %vm751
        %vm990 = vmand %vm983, %vm752
        %vm991 = vmand %vm984, %vm753
        %vm992 = vmand %vm985, %vm754
        %vm993 = vmand %vm986, %vm755
        %vm994 = vmand %vm987, %vm756
        %vm995 = vmand %vm957, %vm805
        %vm996 = vmand %vm958, %vm806
        %vm997 = vmand %vm959, %vm807
        %vm998 = vmand %vm960, %vm808
        %vm999 = vmand %vm961, %vm809
        %vm1000 = vmand %vm962, %vm810
        %vm1001 = vmand %vm963, %vm811
        %vm1002 = vmand %vm995, %vm853
        %vm1003 = vmand %vm996, %vm854
        %vm1004 = vmand %vm997, %vm855
        %vm1005 = vmand %vm998, %vm856
        %vm1006 = vmand %vm999, %vm857
        %vm1007 = vmand %vm1000, %vm858
        %vm1008 = vmand %vm1001, %vm859
        %v1009 = vld [vmem:[%s540] sm:$0xff]
        %v1010 = vld [vmem:[%s540 + $0x8] sm:$0xff]
        %v1011 = vld [vmem:[%s540 + $0x10] sm:$0xff]
        %v1012 = vld [vmem:[%s540 + $0x18] sm:$0xff]
        %v1013 = vld [vmem:[%s540 + $0x20] sm:$0xff]
        %v1014 = vld [vmem:[%s540 + $0x28] sm:$0xff]
        %v1015 = vld [vmem:[%s540 + $0x30] sm:$0xff]
        %v1016 = vld [vmem:[%s540 + $0x38] sm:$0xff]
        %v1017 = vld [vmem:[%s545] sm:$0xf]
        %v1018 = vld [vmem:[%s545 + $0x4] sm:$0xf]
        %v1019 = vld [vmem:[%s545 + $0x8] sm:$0xf]
        %v1020 = vld [vmem:[%s545 + $0xc] sm:$0xf]
        %v1021 = vld [vmem:[%s545 + $0x10] sm:$0xf]
        %v1022 = vld [vmem:[%s545 + $0x14] sm:$0xf]
        %v1023 = vld [vmem:[%s545 + $0x18] sm:$0xf]
        %v1024 = vld [vmem:[%s545 + $0x1c] sm:$0xf]
        %v1025 = vld [vmem:[%s545 + $0x20] sm:$0xf]
        %v1026 = vld [vmem:[%s548] sm:$0x1]
        %vm1034 = vcmask 1040384
        %v1035 = vrot.slane %v1009, 7
        %v1036 = vrot.slane %v1010, 7
        %v1037 = vsel %vm1034, %v1035, %v1036
        %v1038 = vrot.slane %v1011, 7
        %v1039 = vsel %vm1034, %v1036, %v1038
        %v1040 = vrot.slane %v1012, 7
        %v1041 = vsel %vm1034, %v1038, %v1040
        %v1042 = vrot.slane %v1013, 7
        %v1043 = vsel %vm1034, %v1040, %v1042
        %v1044 = vrot.slane %v1014, 7
        %v1045 = vsel %vm1034, %v1042, %v1044
        %v1046 = vrot.slane %v1015, 7
        %v1047 = vsel %vm1034, %v1044, %v1046
        %v1055 = vsel %vm1034, 0.0, %v1035
        %v1056 = vsel %vm672, 1, 0
        %v1057 = vsel %vm673, 1, 0
        %v1058 = vsel %vm674, 1, 0
        %v1059 = vsel %vm675, 1, 0
        %v1060 = vsel %vm676, 1, 0
        %v1061 = vsel %vm677, 1, 0
        %v1062 = vsel %vm678, 1, 0
        %1063 = vset.pattern.permute.xlu0 0
        %1064 = vperm.xlu0 %1063, %v1056
        %v1065 = vpop.permute.xlu0 %1064
        %1066 = vset.pattern.permute.xlu0 0
        %1067 = vperm.xlu0 %1066, %v1057
        %v1068 = vpop.permute.xlu0 %1067
        %1069 = vset.pattern.permute.xlu0 0
        %1070 = vperm.xlu0 %1069, %v1058
        %v1071 = vpop.permute.xlu0 %1070
        %1072 = vset.pattern.permute.xlu0 0
        %1073 = vperm.xlu0 %1072, %v1059
        %v1074 = vpop.permute.xlu0 %1073
        %1075 = vset.pattern.permute.xlu0 0
        %1076 = vperm.xlu0 %1075, %v1060
        %v1077 = vpop.permute.xlu0 %1076
        %1078 = vset.pattern.permute.xlu0 0
        %1079 = vperm.xlu0 %1078, %v1061
        %v1080 = vpop.permute.xlu0 %1079
        %1081 = vset.pattern.permute.xlu0 0
        %1082 = vperm.xlu0 %1081, %v1062
        %v1083 = vpop.permute.xlu0 %1082
        %vm1084 = vcmp.eq.s32.totalorder %v1065, 1
        %vm1085 = vcmp.eq.s32.totalorder %v1068, 1
        %vm1086 = vcmp.eq.s32.totalorder %v1071, 1
        %vm1087 = vcmp.eq.s32.totalorder %v1074, 1
        %vm1088 = vcmp.eq.s32.totalorder %v1077, 1
        %vm1089 = vcmp.eq.s32.totalorder %v1080, 1
        %vm1090 = vcmp.eq.s32.totalorder %v1083, 1
        %v1091 = vsel %vm1084, %v1055, 0.0
        %v1092 = vsel %vm1085, %v1037, 0.0
        %v1093 = vsel %vm1086, %v1039, 0.0
        %v1094 = vsel %vm1087, %v1041, 0.0
        %v1095 = vsel %vm1088, %v1043, 0.0
        %v1096 = vsel %vm1089, %v1045, 0.0
        %v1097 = vsel %vm1090, %v1047, 0.0
        %v1098 = vpack.c.bf16 %v1091, 0.0
        %v1099 = vpack.c.bf16 %v1093, %v1092
        %v1100 = vpack.c.bf16 %v1095, %v1094
        %v1101 = vpack.c.bf16 %v1097, %v1096
        %v1102 = vsel %vm758, 1, 0
        %v1103 = vsel %vm759, 1, 0
        %v1104 = vsel %vm760, 1, 0
        %v1105 = vsel %vm761, 1, 0
        %v1106 = vsel %vm762, 1, 0
        %v1107 = vsel %vm763, 1, 0
        %v1108 = vsel %vm764, 1, 0
        %1109 = vset.pattern.permute.xlu0 0
        %1110 = vperm.xlu0 %1109, %v1102
        %v1111 = vpop.permute.xlu0 %1110
        %1112 = vset.pattern.permute.xlu0 0
        %1113 = vperm.xlu0 %1112, %v1103
        %v1114 = vpop.permute.xlu0 %1113
        %1115 = vset.pattern.permute.xlu0 0
        %1116 = vperm.xlu0 %1115, %v1104
        %v1117 = vpop.permute.xlu0 %1116
        %1118 = vset.pattern.permute.xlu0 0
        %1119 = vperm.xlu0 %1118, %v1105
        %v1120 = vpop.permute.xlu0 %1119
        %1121 = vset.pattern.permute.xlu0 0
        %1122 = vperm.xlu0 %1121, %v1106
        %v1123 = vpop.permute.xlu0 %1122
        %1124 = vset.pattern.permute.xlu0 0
        %1125 = vperm.xlu0 %1124, %v1107
        %v1126 = vpop.permute.xlu0 %1125
        %1127 = vset.pattern.permute.xlu0 0
        %1128 = vperm.xlu0 %1127, %v1108
        %v1129 = vpop.permute.xlu0 %1128
        %vm1130 = vcmp.eq.s32.totalorder %v1111, 1
        %vm1131 = vcmp.eq.s32.totalorder %v1114, 1
        %vm1132 = vcmp.eq.s32.totalorder %v1117, 1
        %vm1133 = vcmp.eq.s32.totalorder %v1120, 1
        %vm1134 = vcmp.eq.s32.totalorder %v1123, 1
        %vm1135 = vcmp.eq.s32.totalorder %v1126, 1
        %vm1136 = vcmp.eq.s32.totalorder %v1129, 1
        %v1137 = vsel %vm1130, %v1009, 0.0
        %v1138 = vsel %vm1131, %v1010, 0.0
        %v1139 = vsel %vm1132, %v1011, 0.0
        %v1140 = vsel %vm1133, %v1012, 0.0
        %v1141 = vsel %vm1134, %v1013, 0.0
        %v1142 = vsel %vm1135, %v1014, 0.0
        %v1143 = vsel %vm1136, %v1015, 0.0
        %v1144 = vpack.c.bf16 %v1137, 0.0
        %v1145 = vpack.c.bf16 %v1139, %v1138
        %v1146 = vpack.c.bf16 %v1141, %v1140
        %v1147 = vpack.c.bf16 %v1143, %v1142
        %vm1148 = vcmask 64512
        %v1150 = vsel %vm1148, %v1144, 0
        %v1153 = vsel %vm1148, %v1145, 0
        %v1156 = vsel %vm1148, %v1146, 0
        %v1159 = vsel %vm1148, %v1147, 0
        %vm1161 = vcmask 1043456
        %v1163 = vsel %vm1161, %v1018, 0
        %1165 = vmatprep.subr.bf16.mxu0 0
        %1166 = vmatpush1.bf16.msra.mxu0 %v1163
        %1167 = vmatprep.subr.bf16.mxu0 0
        %1168 = vmatpush1.bf16.msra.mxu0 0
        %1169 = vmatprep.subr.bf16.mxu0 0
        %1170 = vmatpush1.bf16.msra.mxu0 0
        %1171 = vmatprep.subr.bf16.mxu0 0
        %1172 = vmatpush1.bf16.msra.mxu0 0
        %1173 = vmatprep.subr.bf16.mxu0 0
        %1174 = vmatpush1.bf16.msra.mxu0 0
        %1175 = vmatprep.subr.bf16.mxu0 0
        %1176 = vmatpush1.bf16.msra.mxu0 0
        %1177 = vmatprep.subr.bf16.mxu0 0
        %1178 = vmatpush1.bf16.msra.mxu0 0
        %1179 = vmatprep.subr.bf16.mxu0 0
        %1180 = vmatpush1.bf16.msra.mxu0 0
        %1181 = vmatprep.subr.bf16.mxu0 0
        %1182 = vmatpush1.bf16.msra.mxu0 0
        %1183 = vmatprep.subr.bf16.mxu0 0
        %1184 = vmatpush1.bf16.msra.mxu0 0
        %1185 = vmatprep.subr.bf16.mxu0 0
        %1186 = vmatpush1.bf16.msra.mxu0 0
        %1187 = vmatprep.subr.bf16.mxu0 0
        %1188 = vmatpush1.bf16.msra.mxu0 0
        %1189 = vmatprep.subr.bf16.mxu0 0
        %1190 = vmatpush1.bf16.msra.mxu0 0
        %1191 = vmatprep.subr.bf16.mxu0 0
        %1192 = vmatpush1.bf16.msra.mxu0 0
        %1193 = vmatprep.subr.bf16.mxu0 0
        %1194 = vmatpush1.bf16.msra.mxu0 0
        %1195 = vmatprep.subr.bf16.mxu0 0
        %1196 = vmatpush1.bf16.msra.mxu0 0
        %1197 = vmatprep.mubr.bf16.mxu0 0
        %1198 = vmatmul.mubr.bf16.gmra.mrb[0].mxu0 %v1150
        %v1199 = vpop.f32.mrb[0].mxu0
        %v1200 = vadd.f32 0.0, %v1199
        %v1201 = vpop.f32.mrb[0].mxu0
        %v1202 = vpop.f32.mrb[0].mxu0
        %v1203 = vadd.f32 0.0, %v1202
        %v1204 = vpop.f32.mrb[0].mxu0
        %1205 = vmatprep.mubr.bf16.mxu0 0
        %1206 = vmatmul.mubr.bf16.gmra.mrb[0].mxu0 %v1153
        %v1207 = vpop.f32.mrb[0].mxu0
        %v1208 = vadd.f32 0.0, %v1207
        %v1209 = vpop.f32.mrb[0].mxu0
        %v1210 = vpop.f32.mrb[0].mxu0
        %v1211 = vadd.f32 0.0, %v1210
        %v1212 = vpop.f32.mrb[0].mxu0
        %1213 = vmatprep.mubr.bf16.mxu0 0
        %1214 = vmatmul.mubr.bf16.gmra.mrb[0].mxu0 %v1156
        %v1215 = vpop.f32.mrb[0].mxu0
        %v1216 = vadd.f32 0.0, %v1215
        %v1217 = vpop.f32.mrb[0].mxu0
        %v1218 = vpop.f32.mrb[0].mxu0
        %v1219 = vadd.f32 0.0, %v1218
        %v1220 = vpop.f32.mrb[0].mxu0
        %1221 = vmatprep.mubr.bf16.mxu0 0
        %1222 = vmatmul.mubr.bf16.gmra.mrb[0].mxu0 %v1159
        %v1223 = vpop.f32.mrb[0].mxu0
        %v1224 = vadd.f32 0.0, %v1223
        %v1225 = vpop.f32.mrb[0].mxu0
        %v1226 = vpop.f32.mrb[0].mxu0
        %v1227 = vadd.f32 0.0, %v1226
        %v1228 = vpop.f32.mrb[0].mxu0
        %1229 = vdwg.mxu0
        %v1231 = vsel %vm1148, %v1098, 0
        %v1234 = vsel %vm1148, %v1099, 0
        %v1237 = vsel %vm1148, %v1100, 0
        %v1240 = vsel %vm1148, %v1101, 0
        %v1243 = vsel %vm1161, %v1017, 0
        %1245 = vmatprep.subr.bf16.mxu0 0
        %1246 = vmatpush1.bf16.msra.mxu0 %v1243
        %1247 = vmatprep.subr.bf16.mxu0 0
        %1248 = vmatpush1.bf16.msra.mxu0 0
        %1249 = vmatprep.subr.bf16.mxu0 0
        %1250 = vmatpush1.bf16.msra.mxu0 0
        %1251 = vmatprep.subr.bf16.mxu0 0
        %1252 = vmatpush1.bf16.msra.mxu0 0
        %1253 = vmatprep.subr.bf16.mxu0 0
        %1254 = vmatpush1.bf16.msra.mxu0 0
        %1255 = vmatprep.subr.bf16.mxu0 0
        %1256 = vmatpush1.bf16.msra.mxu0 0
        %1257 = vmatprep.subr.bf16.mxu0 0
        %1258 = vmatpush1.bf16.msra.mxu0 0
        %1259 = vmatprep.subr.bf16.mxu0 0
        %1260 = vmatpush1.bf16.msra.mxu0 0
        %1261 = vmatprep.subr.bf16.mxu0 0
        %1262 = vmatpush1.bf16.msra.mxu0 0
        %1263 = vmatprep.subr.bf16.mxu0 0
        %1264 = vmatpush1.bf16.msra.mxu0 0
        %1265 = vmatprep.subr.bf16.mxu0 0
        %1266 = vmatpush1.bf16.msra.mxu0 0
        %1267 = vmatprep.subr.bf16.mxu0 0
        %1268 = vmatpush1.bf16.msra.mxu0 0
        %1269 = vmatprep.subr.bf16.mxu0 0
        %1270 = vmatpush1.bf16.msra.mxu0 0
        %1271 = vmatprep.subr.bf16.mxu0 0
        %1272 = vmatpush1.bf16.msra.mxu0 0
        %1273 = vmatprep.subr.bf16.mxu0 0
        %1274 = vmatpush1.bf16.msra.mxu0 0
        %1275 = vmatprep.subr.bf16.mxu0 0
        %1276 = vmatpush1.bf16.msra.mxu0 0
        %1277 = vmatprep.mubr.bf16.mxu0 0
        %1278 = vmatmul.mubr.bf16.gmra.mrb[0].mxu0 %v1231
        %v1279 = vpop.f32.mrb[0].mxu0
        %v1280 = vadd.f32 %v1200, %v1279
        %v1281 = vpop.f32.mrb[0].mxu0
        %v1282 = vpop.f32.mrb[0].mxu0
        %v1283 = vadd.f32 %v1203, %v1282
        %v1284 = vpop.f32.mrb[0].mxu0
        %1285 = vmatprep.mubr.bf16.mxu0 0
        %1286 = vmatmul.mubr.bf16.gmra.mrb[0].mxu0 %v1234
        %v1287 = vpop.f32.mrb[0].mxu0
        %v1288 = vadd.f32 %v1208, %v1287
        %v1289 = vpop.f32.mrb[0].mxu0
        %v1290 = vpop.f32.mrb[0].mxu0
        %v1291 = vadd.f32 %v1211, %v1290
        %v1292 = vpop.f32.mrb[0].mxu0
        %1293 = vmatprep.mubr.bf16.mxu0 0
        %1294 = vmatmul.mubr.bf16.gmra.mrb[0].mxu0 %v1237
        %v1295 = vpop.f32.mrb[0].mxu0
        %v1296 = vadd.f32 %v1216, %v1295
        %v1297 = vpop.f32.mrb[0].mxu0
        %v1298 = vpop.f32.mrb[0].mxu0
        %v1299 = vadd.f32 %v1219, %v1298
        %v1300 = vpop.f32.mrb[0].mxu0
        %1301 = vmatprep.mubr.bf16.mxu0 0
        %1302 = vmatmul.mubr.bf16.gmra.mrb[0].mxu0 %v1240
        %v1303 = vpop.f32.mrb[0].mxu0
        %v1304 = vadd.f32 %v1224, %v1303
        %v1305 = vpop.f32.mrb[0].mxu0
        %v1306 = vpop.f32.mrb[0].mxu0
        %v1307 = vadd.f32 %v1227, %v1306
        %v1308 = vpop.f32.mrb[0].mxu0
        %1309 = vdwg.mxu0
        %vm1311 = vcmask 1046528
        %v1312 = vrot.slane %v1009, 1
        %v1313 = vrot.slane %v1010, 1
        %v1314 = vsel %vm1311, %v1312, %v1313
        %v1315 = vrot.slane %v1011, 1
        %v1316 = vsel %vm1311, %v1313, %v1315
        %v1317 = vrot.slane %v1012, 1
        %v1318 = vsel %vm1311, %v1315, %v1317
        %v1319 = vrot.slane %v1013, 1
        %v1320 = vsel %vm1311, %v1317, %v1319
        %v1321 = vrot.slane %v1014, 1
        %v1322 = vsel %vm1311, %v1319, %v1321
        %v1323 = vrot.slane %v1015, 1
        %v1324 = vsel %vm1311, %v1321, %v1323
        %v1325 = vrot.slane %v1016, 1
        %v1326 = vsel %vm1311, %v1323, %v1325
        %v1335 = vsel %vm1311, 0.0, %v1312
        %v1336 = vsel %vm861, 1, 0
        %v1337 = vsel %vm862, 1, 0
        %v1338 = vsel %vm863, 1, 0
        %v1339 = vsel %vm864, 1, 0
        %v1340 = vsel %vm865, 1, 0
        %v1341 = vsel %vm866, 1, 0
        %v1342 = vsel %vm867, 1, 0
        %v1343 = vsel %vm868, 1, 0
        %1344 = vset.pattern.permute.xlu0 0
        %1345 = vperm.xlu0 %1344, %v1336
        %v1346 = vpop.permute.xlu0 %1345
        %1347 = vset.pattern.permute.xlu0 0
        %1348 = vperm.xlu0 %1347, %v1337
        %v1349 = vpop.permute.xlu0 %1348
        %1350 = vset.pattern.permute.xlu0 0
        %1351 = vperm.xlu0 %1350, %v1338
        %v1352 = vpop.permute.xlu0 %1351
        %1353 = vset.pattern.permute.xlu0 0
        %1354 = vperm.xlu0 %1353, %v1339
        %v1355 = vpop.permute.xlu0 %1354
        %1356 = vset.pattern.permute.xlu0 0
        %1357 = vperm.xlu0 %1356, %v1340
        %v1358 = vpop.permute.xlu0 %1357
        %1359 = vset.pattern.permute.xlu0 0
        %1360 = vperm.xlu0 %1359, %v1341
        %v1361 = vpop.permute.xlu0 %1360
        %1362 = vset.pattern.permute.xlu0 0
        %1363 = vperm.xlu0 %1362, %v1342
        %v1364 = vpop.permute.xlu0 %1363
        %1365 = vset.pattern.permute.xlu0 0
        %1366 = vperm.xlu0 %1365, %v1343
        %v1367 = vpop.permute.xlu0 %1366
        %vm1368 = vcmp.eq.s32.totalorder %v1346, 1
        %vm1369 = vcmp.eq.s32.totalorder %v1349, 1
        %vm1370 = vcmp.eq.s32.totalorder %v1352, 1
        %vm1371 = vcmp.eq.s32.totalorder %v1355, 1
        %vm1372 = vcmp.eq.s32.totalorder %v1358, 1
        %vm1373 = vcmp.eq.s32.totalorder %v1361, 1
        %vm1374 = vcmp.eq.s32.totalorder %v1364, 1
        %vm1375 = vcmp.eq.s32.totalorder %v1367, 1
        %v1376 = vsel %vm1368, %v1335, 0.0
        %v1377 = vsel %vm1369, %v1314, 0.0
        %v1378 = vsel %vm1370, %v1316, 0.0
        %v1379 = vsel %vm1371, %v1318, 0.0
        %v1380 = vsel %vm1372, %v1320, 0.0
        %v1381 = vsel %vm1373, %v1322, 0.0
        %v1382 = vsel %vm1374, %v1324, 0.0
        %v1383 = vsel %vm1375, %v1326, 0.0
        %v1384 = vpack.c.bf16 %v1377, %v1376
        %v1385 = vpack.c.bf16 %v1379, %v1378
        %v1386 = vpack.c.bf16 %v1381, %v1380
        %v1387 = vpack.c.bf16 %v1383, %v1382
        %v1389 = vsel %vm1148, %v1384, 0
        %v1392 = vsel %vm1148, %v1385, 0
        %v1395 = vsel %vm1148, %v1386, 0
        %v1398 = vsel %vm1148, %v1387, 0
        %v1401 = vsel %vm1161, %v1019, 0
        %1403 = vmatprep.subr.bf16.mxu0 0
        %1404 = vmatpush1.bf16.msra.mxu0 %v1401
        %1405 = vmatprep.subr.bf16.mxu0 0
        %1406 = vmatpush1.bf16.msra.mxu0 0
        %1407 = vmatprep.subr.bf16.mxu0 0
        %1408 = vmatpush1.bf16.msra.mxu0 0
        %1409 = vmatprep.subr.bf16.mxu0 0
        %1410 = vmatpush1.bf16.msra.mxu0 0
        %1411 = vmatprep.subr.bf16.mxu0 0
        %1412 = vmatpush1.bf16.msra.mxu0 0
        %1413 = vmatprep.subr.bf16.mxu0 0
        %1414 = vmatpush1.bf16.msra.mxu0 0
        %1415 = vmatprep.subr.bf16.mxu0 0
        %1416 = vmatpush1.bf16.msra.mxu0 0
        %1417 = vmatprep.subr.bf16.mxu0 0
        %1418 = vmatpush1.bf16.msra.mxu0 0
        %1419 = vmatprep.subr.bf16.mxu0 0
        %1420 = vmatpush1.bf16.msra.mxu0 0
        %1421 = vmatprep.subr.bf16.mxu0 0
        %1422 = vmatpush1.bf16.msra.mxu0 0
        %1423 = vmatprep.subr.bf16.mxu0 0
        %1424 = vmatpush1.bf16.msra.mxu0 0
        %1425 = vmatprep.subr.bf16.mxu0 0
        %1426 = vmatpush1.bf16.msra.mxu0 0
        %1427 = vmatprep.subr.bf16.mxu0 0
        %1428 = vmatpush1.bf16.msra.mxu0 0
        %1429 = vmatprep.subr.bf16.mxu0 0
        %1430 = vmatpush1.bf16.msra.mxu0 0
        %1431 = vmatprep.subr.bf16.mxu0 0
        %1432 = vmatpush1.bf16.msra.mxu0 0
        %1433 = vmatprep.subr.bf16.mxu0 0
        %1434 = vmatpush1.bf16.msra.mxu0 0
        %1435 = vmatprep.mubr.bf16.mxu0 0
        %1436 = vmatmul.mubr.bf16.gmra.mrb[0].mxu0 %v1389
        %v1437 = vpop.f32.mrb[0].mxu0
        %v1438 = vadd.f32 0.0, %v1437
        %v1439 = vpop.f32.mrb[0].mxu0
        %v1440 = vpop.f32.mrb[0].mxu0
        %v1441 = vadd.f32 0.0, %v1440
        %v1442 = vpop.f32.mrb[0].mxu0
        %1443 = vmatprep.mubr.bf16.mxu0 0
        %1444 = vmatmul.mubr.bf16.gmra.mrb[0].mxu0 %v1392
        %v1445 = vpop.f32.mrb[0].mxu0
        %v1446 = vadd.f32 0.0, %v1445
        %v1447 = vpop.f32.mrb[0].mxu0
        %v1448 = vpop.f32.mrb[0].mxu0
        %v1449 = vadd.f32 0.0, %v1448
        %v1450 = vpop.f32.mrb[0].mxu0
        %1451 = vmatprep.mubr.bf16.mxu0 0
        %1452 = vmatmul.mubr.bf16.gmra.mrb[0].mxu0 %v1395
        %v1453 = vpop.f32.mrb[0].mxu0
        %v1454 = vadd.f32 0.0, %v1453
        %v1455 = vpop.f32.mrb[0].mxu0
        %v1456 = vpop.f32.mrb[0].mxu0
        %v1457 = vadd.f32 0.0, %v1456
        %v1458 = vpop.f32.mrb[0].mxu0
        %1459 = vmatprep.mubr.bf16.mxu0 0
        %1460 = vmatmul.mubr.bf16.gmra.mrb[0].mxu0 %v1398
        %v1461 = vpop.f32.mrb[0].mxu0
        %v1462 = vadd.f32 0.0, %v1461
        %v1463 = vpop.f32.mrb[0].mxu0
        %v1464 = vpop.f32.mrb[0].mxu0
        %v1465 = vadd.f32 0.0, %v1464
        %v1466 = vpop.f32.mrb[0].mxu0
        %1467 = vdwg.mxu0
        %v1468 = vadd.f32 %v1280, %v1438
        %v1469 = vadd.f32 %v1283, %v1441
        %v1470 = vadd.f32 %v1288, %v1446
        %v1471 = vadd.f32 %v1291, %v1449
        %v1472 = vadd.f32 %v1296, %v1454
        %v1473 = vadd.f32 %v1299, %v1457
        %v1474 = vadd.f32 %v1304, %v1462
        %v1475 = vadd.f32 %v1307, %v1465
        %v1476 = vrot.slane %v1016, 7
        %v1477 = vsel %vm1034, %v1046, %v1476
        %v1479 = vsel %vm901, 1, 0
        %v1480 = vsel %vm902, 1, 0
        %v1481 = vsel %vm903, 1, 0
        %v1482 = vsel %vm904, 1, 0
        %v1483 = vsel %vm905, 1, 0
        %v1484 = vsel %vm906, 1, 0
        %v1485 = vsel %vm907, 1, 0
        %v1486 = vsel %vm908, 1, 0
        %1487 = vset.pattern.permute.xlu0 0
        %1488 = vperm.xlu0 %1487, %v1479
        %v1489 = vpop.permute.xlu0 %1488
        %1490 = vset.pattern.permute.xlu0 0
        %1491 = vperm.xlu0 %1490, %v1480
        %v1492 = vpop.permute.xlu0 %1491
        %1493 = vset.pattern.permute.xlu0 0
        %1494 = vperm.xlu0 %1493, %v1481
        %v1495 = vpop.permute.xlu0 %1494
        %1496 = vset.pattern.permute.xlu0 0
        %1497 = vperm.xlu0 %1496, %v1482
        %v1498 = vpop.permute.xlu0 %1497
        %1499 = vset.pattern.permute.xlu0 0
        %1500 = vperm.xlu0 %1499, %v1483
        %v1501 = vpop.permute.xlu0 %1500
        %1502 = vset.pattern.permute.xlu0 0
        %1503 = vperm.xlu0 %1502, %v1484
        %v1504 = vpop.permute.xlu0 %1503
        %1505 = vset.pattern.permute.xlu0 0
        %1506 = vperm.xlu0 %1505, %v1485
        %v1507 = vpop.permute.xlu0 %1506
        %1508 = vset.pattern.permute.xlu0 0
        %1509 = vperm.xlu0 %1508, %v1486
        %v1510 = vpop.permute.xlu0 %1509
        %vm1511 = vcmp.eq.s32.totalorder %v1489, 1
        %vm1512 = vcmp.eq.s32.totalorder %v1492, 1
        %vm1513 = vcmp.eq.s32.totalorder %v1495, 1
        %vm1514 = vcmp.eq.s32.totalorder %v1498, 1
        %vm1515 = vcmp.eq.s32.totalorder %v1501, 1
        %vm1516 = vcmp.eq.s32.totalorder %v1504, 1
        %vm1517 = vcmp.eq.s32.totalorder %v1507, 1
        %vm1518 = vcmp.eq.s32.totalorder %v1510, 1
        %v1519 = vsel %vm1511, %v1055, 0.0
        %v1520 = vsel %vm1512, %v1037, 0.0
        %v1521 = vsel %vm1513, %v1039, 0.0
        %v1522 = vsel %vm1514, %v1041, 0.0
        %v1523 = vsel %vm1515, %v1043, 0.0
        %v1524 = vsel %vm1516, %v1045, 0.0
        %v1525 = vsel %vm1517, %v1047, 0.0
        %v1526 = vsel %vm1518, %v1477, 0.0
        %v1527 = vpack.c.bf16 %v1520, %v1519
        %v1528 = vpack.c.bf16 %v1522, %v1521
        %v1529 = vpack.c.bf16 %v1524, %v1523
        %v1530 = vpack.c.bf16 %v1526, %v1525
        %v1532 = vsel %vm1148, %v1527, 0
        %v1535 = vsel %vm1148, %v1528, 0
        %v1538 = vsel %vm1148, %v1529, 0
        %v1541 = vsel %vm1148, %v1530, 0
        %v1544 = vsel %vm1161, %v1020, 0
        %1546 = vmatprep.subr.bf16.mxu0 0
        %1547 = vmatpush1.bf16.msra.mxu0 %v1544
        %1548 = vmatprep.subr.bf16.mxu0 0
        %1549 = vmatpush1.bf16.msra.mxu0 0
        %1550 = vmatprep.subr.bf16.mxu0 0
        %1551 = vmatpush1.bf16.msra.mxu0 0
        %1552 = vmatprep.subr.bf16.mxu0 0
        %1553 = vmatpush1.bf16.msra.mxu0 0
        %1554 = vmatprep.subr.bf16.mxu0 0
        %1555 = vmatpush1.bf16.msra.mxu0 0
        %1556 = vmatprep.subr.bf16.mxu0 0
        %1557 = vmatpush1.bf16.msra.mxu0 0
        %1558 = vmatprep.subr.bf16.mxu0 0
        %1559 = vmatpush1.bf16.msra.mxu0 0
        %1560 = vmatprep.subr.bf16.mxu0 0
        %1561 = vmatpush1.bf16.msra.mxu0 0
        %1562 = vmatprep.subr.bf16.mxu0 0
        %1563 = vmatpush1.bf16.msra.mxu0 0
        %1564 = vmatprep.subr.bf16.mxu0 0
        %1565 = vmatpush1.bf16.msra.mxu0 0
        %1566 = vmatprep.subr.bf16.mxu0 0
        %1567 = vmatpush1.bf16.msra.mxu0 0
        %1568 = vmatprep.subr.bf16.mxu0 0
        %1569 = vmatpush1.bf16.msra.mxu0 0
        %1570 = vmatprep.subr.bf16.mxu0 0
        %1571 = vmatpush1.bf16.msra.mxu0 0
        %1572 = vmatprep.subr.bf16.mxu0 0
        %1573 = vmatpush1.bf16.msra.mxu0 0
        %1574 = vmatprep.subr.bf16.mxu0 0
        %1575 = vmatpush1.bf16.msra.mxu0 0
        %1576 = vmatprep.subr.bf16.mxu0 0
        %1577 = vmatpush1.bf16.msra.mxu0 0
        %1578 = vmatprep.mubr.bf16.mxu0 0
        %1579 = vmatmul.mubr.bf16.gmra.mrb[0].mxu0 %v1532
        %v1580 = vpop.f32.mrb[0].mxu0
        %v1581 = vadd.f32 0.0, %v1580
        %v1582 = vpop.f32.mrb[0].mxu0
        %v1583 = vpop.f32.mrb[0].mxu0
        %v1584 = vadd.f32 0.0, %v1583
        %v1585 = vpop.f32.mrb[0].mxu0
        %1586 = vmatprep.mubr.bf16.mxu0 0
        %1587 = vmatmul.mubr.bf16.gmra.mrb[0].mxu0 %v1535
        %v1588 = vpop.f32.mrb[0].mxu0
        %v1589 = vadd.f32 0.0, %v1588
        %v1590 = vpop.f32.mrb[0].mxu0
        %v1591 = vpop.f32.mrb[0].mxu0
        %v1592 = vadd.f32 0.0, %v1591
        %v1593 = vpop.f32.mrb[0].mxu0
        %1594 = vmatprep.mubr.bf16.mxu0 0
        %1595 = vmatmul.mubr.bf16.gmra.mrb[0].mxu0 %v1538
        %v1596 = vpop.f32.mrb[0].mxu0
        %v1597 = vadd.f32 0.0, %v1596
        %v1598 = vpop.f32.mrb[0].mxu0
        %v1599 = vpop.f32.mrb[0].mxu0
        %v1600 = vadd.f32 0.0, %v1599
        %v1601 = vpop.f32.mrb[0].mxu0
        %1602 = vmatprep.mubr.bf16.mxu0 0
        %1603 = vmatmul.mubr.bf16.gmra.mrb[0].mxu0 %v1541
        %v1604 = vpop.f32.mrb[0].mxu0
        %v1605 = vadd.f32 0.0, %v1604
        %v1606 = vpop.f32.mrb[0].mxu0
        %v1607 = vpop.f32.mrb[0].mxu0
        %v1608 = vadd.f32 0.0, %v1607
        %v1609 = vpop.f32.mrb[0].mxu0
        %1610 = vdwg.mxu0
        %v1611 = vadd.f32 %v1468, %v1581
        %v1612 = vadd.f32 %v1469, %v1584
        %v1613 = vadd.f32 %v1470, %v1589
        %v1614 = vadd.f32 %v1471, %v1592
        %v1615 = vadd.f32 %v1472, %v1597
        %v1616 = vadd.f32 %v1473, %v1600
        %v1617 = vadd.f32 %v1474, %v1605
        %v1618 = vadd.f32 %v1475, %v1608
        %v1619 = vsel %vm925, 1, 0
        %v1620 = vsel %vm926, 1, 0
        %v1621 = vsel %vm927, 1, 0
        %v1622 = vsel %vm928, 1, 0
        %v1623 = vsel %vm929, 1, 0
        %v1624 = vsel %vm930, 1, 0
        %v1625 = vsel %vm931, 1, 0
        %v1626 = vsel %vm932, 1, 0
        %1627 = vset.pattern.permute.xlu0 0
        %1628 = vperm.xlu0 %1627, %v1619
        %v1629 = vpop.permute.xlu0 %1628
        %1630 = vset.pattern.permute.xlu0 0
        %1631 = vperm.xlu0 %1630, %v1620
        %v1632 = vpop.permute.xlu0 %1631
        %1633 = vset.pattern.permute.xlu0 0
        %1634 = vperm.xlu0 %1633, %v1621
        %v1635 = vpop.permute.xlu0 %1634
        %1636 = vset.pattern.permute.xlu0 0
        %1637 = vperm.xlu0 %1636, %v1622
        %v1638 = vpop.permute.xlu0 %1637
        %1639 = vset.pattern.permute.xlu0 0
        %1640 = vperm.xlu0 %1639, %v1623
        %v1641 = vpop.permute.xlu0 %1640
        %1642 = vset.pattern.permute.xlu0 0
        %1643 = vperm.xlu0 %1642, %v1624
        %v1644 = vpop.permute.xlu0 %1643
        %1645 = vset.pattern.permute.xlu0 0
        %1646 = vperm.xlu0 %1645, %v1625
        %v1647 = vpop.permute.xlu0 %1646
        %1648 = vset.pattern.permute.xlu0 0
        %1649 = vperm.xlu0 %1648, %v1626
        %v1650 = vpop.permute.xlu0 %1649
        %vm1651 = vcmp.eq.s32.totalorder %v1629, 1
        %vm1652 = vcmp.eq.s32.totalorder %v1632, 1
        %vm1653 = vcmp.eq.s32.totalorder %v1635, 1
        %vm1654 = vcmp.eq.s32.totalorder %v1638, 1
        %vm1655 = vcmp.eq.s32.totalorder %v1641, 1
        %vm1656 = vcmp.eq.s32.totalorder %v1644, 1
        %vm1657 = vcmp.eq.s32.totalorder %v1647, 1
        %vm1658 = vcmp.eq.s32.totalorder %v1650, 1
        %v1659 = vsel %vm1651, %v1009, 0.0
        %v1660 = vsel %vm1652, %v1010, 0.0
        %v1661 = vsel %vm1653, %v1011, 0.0
        %v1662 = vsel %vm1654, %v1012, 0.0
        %v1663 = vsel %vm1655, %v1013, 0.0
        %v1664 = vsel %vm1656, %v1014, 0.0
        %v1665 = vsel %vm1657, %v1015, 0.0
        %v1666 = vsel %vm1658, %v1016, 0.0
        %v1667 = vpack.c.bf16 %v1660, %v1659
        %v1668 = vpack.c.bf16 %v1662, %v1661
        %v1669 = vpack.c.bf16 %v1664, %v1663
        %v1670 = vpack.c.bf16 %v1666, %v1665
        %v1672 = vsel %vm1148, %v1667, 0
        %v1675 = vsel %vm1148, %v1668, 0
        %v1678 = vsel %vm1148, %v1669, 0
        %v1681 = vsel %vm1148, %v1670, 0
        %v1684 = vsel %vm1161, %v1021, 0
        %1686 = vmatprep.subr.bf16.mxu0 0
        %1687 = vmatpush1.bf16.msra.mxu0 %v1684
        %1688 = vmatprep.subr.bf16.mxu0 0
        %1689 = vmatpush1.bf16.msra.mxu0 0
        %1690 = vmatprep.subr.bf16.mxu0 0
        %1691 = vmatpush1.bf16.msra.mxu0 0
        %1692 = vmatprep.subr.bf16.mxu0 0
        %1693 = vmatpush1.bf16.msra.mxu0 0
        %1694 = vmatprep.subr.bf16.mxu0 0
        %1695 = vmatpush1.bf16.msra.mxu0 0
        %1696 = vmatprep.subr.bf16.mxu0 0
        %1697 = vmatpush1.bf16.msra.mxu0 0
        %1698 = vmatprep.subr.bf16.mxu0 0
        %1699 = vmatpush1.bf16.msra.mxu0 0
        %1700 = vmatprep.subr.bf16.mxu0 0
        %1701 = vmatpush1.bf16.msra.mxu0 0
        %1702 = vmatprep.subr.bf16.mxu0 0
        %1703 = vmatpush1.bf16.msra.mxu0 0
        %1704 = vmatprep.subr.bf16.mxu0 0
        %1705 = vmatpush1.bf16.msra.mxu0 0
        %1706 = vmatprep.subr.bf16.mxu0 0
        %1707 = vmatpush1.bf16.msra.mxu0 0
        %1708 = vmatprep.subr.bf16.mxu0 0
        %1709 = vmatpush1.bf16.msra.mxu0 0
        %1710 = vmatprep.subr.bf16.mxu0 0
        %1711 = vmatpush1.bf16.msra.mxu0 0
        %1712 = vmatprep.subr.bf16.mxu0 0
        %1713 = vmatpush1.bf16.msra.mxu0 0
        %1714 = vmatprep.subr.bf16.mxu0 0
        %1715 = vmatpush1.bf16.msra.mxu0 0
        %1716 = vmatprep.subr.bf16.mxu0 0
        %1717 = vmatpush1.bf16.msra.mxu0 0
        %1718 = vmatprep.mubr.bf16.mxu0 0
        %1719 = vmatmul.mubr.bf16.gmra.mrb[0].mxu0 %v1672
        %v1720 = vpop.f32.mrb[0].mxu0
        %v1721 = vadd.f32 0.0, %v1720
        %v1722 = vpop.f32.mrb[0].mxu0
        %v1723 = vpop.f32.mrb[0].mxu0
        %v1724 = vadd.f32 0.0, %v1723
        %v1725 = vpop.f32.mrb[0].mxu0
        %1726 = vmatprep.mubr.bf16.mxu0 0
        %1727 = vmatmul.mubr.bf16.gmra.mrb[0].mxu0 %v1675
        %v1728 = vpop.f32.mrb[0].mxu0
        %v1729 = vadd.f32 0.0, %v1728
        %v1730 = vpop.f32.mrb[0].mxu0
        %v1731 = vpop.f32.mrb[0].mxu0
        %v1732 = vadd.f32 0.0, %v1731
        %v1733 = vpop.f32.mrb[0].mxu0
        %1734 = vmatprep.mubr.bf16.mxu0 0
        %1735 = vmatmul.mubr.bf16.gmra.mrb[0].mxu0 %v1678
        %v1736 = vpop.f32.mrb[0].mxu0
        %v1737 = vadd.f32 0.0, %v1736
        %v1738 = vpop.f32.mrb[0].mxu0
        %v1739 = vpop.f32.mrb[0].mxu0
        %v1740 = vadd.f32 0.0, %v1739
        %v1741 = vpop.f32.mrb[0].mxu0
        %1742 = vmatprep.mubr.bf16.mxu0 0
        %1743 = vmatmul.mubr.bf16.gmra.mrb[0].mxu0 %v1681
        %v1744 = vpop.f32.mrb[0].mxu0
        %v1745 = vadd.f32 0.0, %v1744
        %v1746 = vpop.f32.mrb[0].mxu0
        %v1747 = vpop.f32.mrb[0].mxu0
        %v1748 = vadd.f32 0.0, %v1747
        %v1749 = vpop.f32.mrb[0].mxu0
        %1750 = vdwg.mxu0
        %v1751 = vadd.f32 %v1611, %v1721
        %v1752 = vadd.f32 %v1612, %v1724
        %v1753 = vadd.f32 %v1613, %v1729
        %v1754 = vadd.f32 %v1614, %v1732
        %v1755 = vadd.f32 %v1615, %v1737
        %v1756 = vadd.f32 %v1616, %v1740
        %v1757 = vadd.f32 %v1617, %v1745
        %v1758 = vadd.f32 %v1618, %v1748
        %v1760 = vsel %vm1311, %v1325, 0.0
        %v1761 = vsel %vm941, 1, 0
        %v1762 = vsel %vm942, 1, 0
        %v1763 = vsel %vm943, 1, 0
        %v1764 = vsel %vm944, 1, 0
        %v1765 = vsel %vm945, 1, 0
        %v1766 = vsel %vm946, 1, 0
        %v1767 = vsel %vm947, 1, 0
        %v1768 = vsel %vm948, 1, 0
        %1769 = vset.pattern.permute.xlu0 0
        %1770 = vperm.xlu0 %1769, %v1761
        %v1771 = vpop.permute.xlu0 %1770
        %1772 = vset.pattern.permute.xlu0 0
        %1773 = vperm.xlu0 %1772, %v1762
        %v1774 = vpop.permute.xlu0 %1773
        %1775 = vset.pattern.permute.xlu0 0
        %1776 = vperm.xlu0 %1775, %v1763
        %v1777 = vpop.permute.xlu0 %1776
        %1778 = vset.pattern.permute.xlu0 0
        %1779 = vperm.xlu0 %1778, %v1764
        %v1780 = vpop.permute.xlu0 %1779
        %1781 = vset.pattern.permute.xlu0 0
        %1782 = vperm.xlu0 %1781, %v1765
        %v1783 = vpop.permute.xlu0 %1782
        %1784 = vset.pattern.permute.xlu0 0
        %1785 = vperm.xlu0 %1784, %v1766
        %v1786 = vpop.permute.xlu0 %1785
        %1787 = vset.pattern.permute.xlu0 0
        %1788 = vperm.xlu0 %1787, %v1767
        %v1789 = vpop.permute.xlu0 %1788
        %1790 = vset.pattern.permute.xlu0 0
        %1791 = vperm.xlu0 %1790, %v1768
        %v1792 = vpop.permute.xlu0 %1791
        %vm1793 = vcmp.eq.s32.totalorder %v1771, 1
        %vm1794 = vcmp.eq.s32.totalorder %v1774, 1
        %vm1795 = vcmp.eq.s32.totalorder %v1777, 1
        %vm1796 = vcmp.eq.s32.totalorder %v1780, 1
        %vm1797 = vcmp.eq.s32.totalorder %v1783, 1
        %vm1798 = vcmp.eq.s32.totalorder %v1786, 1
        %vm1799 = vcmp.eq.s32.totalorder %v1789, 1
        %vm1800 = vcmp.eq.s32.totalorder %v1792, 1
        %v1801 = vsel %vm1793, %v1314, 0.0
        %v1802 = vsel %vm1794, %v1316, 0.0
        %v1803 = vsel %vm1795, %v1318, 0.0
        %v1804 = vsel %vm1796, %v1320, 0.0
        %v1805 = vsel %vm1797, %v1322, 0.0
        %v1806 = vsel %vm1798, %v1324, 0.0
        %v1807 = vsel %vm1799, %v1326, 0.0
        %v1808 = vsel %vm1800, %v1760, 0.0
        %v1809 = vpack.c.bf16 %v1802, %v1801
        %v1810 = vpack.c.bf16 %v1804, %v1803
        %v1811 = vpack.c.bf16 %v1806, %v1805
        %v1812 = vpack.c.bf16 %v1808, %v1807
        %v1814 = vsel %vm1148, %v1809, 0
        %v1817 = vsel %vm1148, %v1810, 0
        %v1820 = vsel %vm1148, %v1811, 0
        %v1823 = vsel %vm1148, %v1812, 0
        %v1826 = vsel %vm1161, %v1022, 0
        %1828 = vmatprep.subr.bf16.mxu0 0
        %1829 = vmatpush1.bf16.msra.mxu0 %v1826
        %1830 = vmatprep.subr.bf16.mxu0 0
        %1831 = vmatpush1.bf16.msra.mxu0 0
        %1832 = vmatprep.subr.bf16.mxu0 0
        %1833 = vmatpush1.bf16.msra.mxu0 0
        %1834 = vmatprep.subr.bf16.mxu0 0
        %1835 = vmatpush1.bf16.msra.mxu0 0
        %1836 = vmatprep.subr.bf16.mxu0 0
        %1837 = vmatpush1.bf16.msra.mxu0 0
        %1838 = vmatprep.subr.bf16.mxu0 0
        %1839 = vmatpush1.bf16.msra.mxu0 0
        %1840 = vmatprep.subr.bf16.mxu0 0
        %1841 = vmatpush1.bf16.msra.mxu0 0
        %1842 = vmatprep.subr.bf16.mxu0 0
        %1843 = vmatpush1.bf16.msra.mxu0 0
        %1844 = vmatprep.subr.bf16.mxu0 0
        %1845 = vmatpush1.bf16.msra.mxu0 0
        %1846 = vmatprep.subr.bf16.mxu0 0
        %1847 = vmatpush1.bf16.msra.mxu0 0
        %1848 = vmatprep.subr.bf16.mxu0 0
        %1849 = vmatpush1.bf16.msra.mxu0 0
        %1850 = vmatprep.subr.bf16.mxu0 0
        %1851 = vmatpush1.bf16.msra.mxu0 0
        %1852 = vmatprep.subr.bf16.mxu0 0
        %1853 = vmatpush1.bf16.msra.mxu0 0
        %1854 = vmatprep.subr.bf16.mxu0 0
        %1855 = vmatpush1.bf16.msra.mxu0 0
        %1856 = vmatprep.subr.bf16.mxu0 0
        %1857 = vmatpush1.bf16.msra.mxu0 0
        %1858 = vmatprep.subr.bf16.mxu0 0
        %1859 = vmatpush1.bf16.msra.mxu0 0
        %1860 = vmatprep.mubr.bf16.mxu0 0
        %1861 = vmatmul.mubr.bf16.gmra.mrb[0].mxu0 %v1814
        %v1862 = vpop.f32.mrb[0].mxu0
        %v1863 = vadd.f32 0.0, %v1862
        %v1864 = vpop.f32.mrb[0].mxu0
        %v1865 = vpop.f32.mrb[0].mxu0
        %v1866 = vadd.f32 0.0, %v1865
        %v1867 = vpop.f32.mrb[0].mxu0
        %1868 = vmatprep.mubr.bf16.mxu0 0
        %1869 = vmatmul.mubr.bf16.gmra.mrb[0].mxu0 %v1817
        %v1870 = vpop.f32.mrb[0].mxu0
        %v1871 = vadd.f32 0.0, %v1870
        %v1872 = vpop.f32.mrb[0].mxu0
        %v1873 = vpop.f32.mrb[0].mxu0
        %v1874 = vadd.f32 0.0, %v1873
        %v1875 = vpop.f32.mrb[0].mxu0
        %1876 = vmatprep.mubr.bf16.mxu0 0
        %1877 = vmatmul.mubr.bf16.gmra.mrb[0].mxu0 %v1820
        %v1878 = vpop.f32.mrb[0].mxu0
        %v1879 = vadd.f32 0.0, %v1878
        %v1880 = vpop.f32.mrb[0].mxu0
        %v1881 = vpop.f32.mrb[0].mxu0
        %v1882 = vadd.f32 0.0, %v1881
        %v1883 = vpop.f32.mrb[0].mxu0
        %1884 = vmatprep.mubr.bf16.mxu0 0
        %1885 = vmatmul.mubr.bf16.gmra.mrb[0].mxu0 %v1823
        %v1886 = vpop.f32.mrb[0].mxu0
        %v1887 = vadd.f32 0.0, %v1886
        %v1888 = vpop.f32.mrb[0].mxu0
        %v1889 = vpop.f32.mrb[0].mxu0
        %v1890 = vadd.f32 0.0, %v1889
        %v1891 = vpop.f32.mrb[0].mxu0
        %1892 = vdwg.mxu0
        %v1893 = vadd.f32 %v1751, %v1863
        %v1894 = vadd.f32 %v1752, %v1866
        %v1895 = vadd.f32 %v1753, %v1871
        %v1896 = vadd.f32 %v1754, %v1874
        %v1897 = vadd.f32 %v1755, %v1879
        %v1898 = vadd.f32 %v1756, %v1882
        %v1899 = vadd.f32 %v1757, %v1887
        %v1900 = vadd.f32 %v1758, %v1890
        %v1902 = vsel %vm1034, %v1476, 0.0
        %v1903 = vsel %vm973, 1, 0
        %v1904 = vsel %vm974, 1, 0
        %v1905 = vsel %vm975, 1, 0
        %v1906 = vsel %vm976, 1, 0
        %v1907 = vsel %vm977, 1, 0
        %v1908 = vsel %vm978, 1, 0
        %v1909 = vsel %vm979, 1, 0
        %v1910 = vsel %vm980, 1, 0
        %1911 = vset.pattern.permute.xlu0 0
        %1912 = vperm.xlu0 %1911, %v1903
        %v1913 = vpop.permute.xlu0 %1912
        %1914 = vset.pattern.permute.xlu0 0
        %1915 = vperm.xlu0 %1914, %v1904
        %v1916 = vpop.permute.xlu0 %1915
        %1917 = vset.pattern.permute.xlu0 0
        %1918 = vperm.xlu0 %1917, %v1905
        %v1919 = vpop.permute.xlu0 %1918
        %1920 = vset.pattern.permute.xlu0 0
        %1921 = vperm.xlu0 %1920, %v1906
        %v1922 = vpop.permute.xlu0 %1921
        %1923 = vset.pattern.permute.xlu0 0
        %1924 = vperm.xlu0 %1923, %v1907
        %v1925 = vpop.permute.xlu0 %1924
        %1926 = vset.pattern.permute.xlu0 0
        %1927 = vperm.xlu0 %1926, %v1908
        %v1928 = vpop.permute.xlu0 %1927
        %1929 = vset.pattern.permute.xlu0 0
        %1930 = vperm.xlu0 %1929, %v1909
        %v1931 = vpop.permute.xlu0 %1930
        %1932 = vset.pattern.permute.xlu0 0
        %1933 = vperm.xlu0 %1932, %v1910
        %v1934 = vpop.permute.xlu0 %1933
        %vm1935 = vcmp.eq.s32.totalorder %v1913, 1
        %vm1936 = vcmp.eq.s32.totalorder %v1916, 1
        %vm1937 = vcmp.eq.s32.totalorder %v1919, 1
        %vm1938 = vcmp.eq.s32.totalorder %v1922, 1
        %vm1939 = vcmp.eq.s32.totalorder %v1925, 1
        %vm1940 = vcmp.eq.s32.totalorder %v1928, 1
        %vm1941 = vcmp.eq.s32.totalorder %v1931, 1
        %vm1942 = vcmp.eq.s32.totalorder %v1934, 1
        %v1943 = vsel %vm1935, %v1037, 0.0
        %v1944 = vsel %vm1936, %v1039, 0.0
        %v1945 = vsel %vm1937, %v1041, 0.0
        %v1946 = vsel %vm1938, %v1043, 0.0
        %v1947 = vsel %vm1939, %v1045, 0.0
        %v1948 = vsel %vm1940, %v1047, 0.0
        %v1949 = vsel %vm1941, %v1477, 0.0
        %v1950 = vsel %vm1942, %v1902, 0.0
        %v1951 = vpack.c.bf16 %v1944, %v1943
        %v1952 = vpack.c.bf16 %v1946, %v1945
        %v1953 = vpack.c.bf16 %v1948, %v1947
        %v1954 = vpack.c.bf16 %v1950, %v1949
        %v1956 = vsel %vm1148, %v1951, 0
        %v1959 = vsel %vm1148, %v1952, 0
        %v1962 = vsel %vm1148, %v1953, 0
        %v1965 = vsel %vm1148, %v1954, 0
        %v1968 = vsel %vm1161, %v1023, 0
        %1970 = vmatprep.subr.bf16.mxu0 0
        %1971 = vmatpush1.bf16.msra.mxu0 %v1968
        %1972 = vmatprep.subr.bf16.mxu0 0
        %1973 = vmatpush1.bf16.msra.mxu0 0
        %1974 = vmatprep.subr.bf16.mxu0 0
        %1975 = vmatpush1.bf16.msra.mxu0 0
        %1976 = vmatprep.subr.bf16.mxu0 0
        %1977 = vmatpush1.bf16.msra.mxu0 0
        %1978 = vmatprep.subr.bf16.mxu0 0
        %1979 = vmatpush1.bf16.msra.mxu0 0
        %1980 = vmatprep.subr.bf16.mxu0 0
        %1981 = vmatpush1.bf16.msra.mxu0 0
        %1982 = vmatprep.subr.bf16.mxu0 0
        %1983 = vmatpush1.bf16.msra.mxu0 0
        %1984 = vmatprep.subr.bf16.mxu0 0
        %1985 = vmatpush1.bf16.msra.mxu0 0
        %1986 = vmatprep.subr.bf16.mxu0 0
        %1987 = vmatpush1.bf16.msra.mxu0 0
        %1988 = vmatprep.subr.bf16.mxu0 0
        %1989 = vmatpush1.bf16.msra.mxu0 0
        %1990 = vmatprep.subr.bf16.mxu0 0
        %1991 = vmatpush1.bf16.msra.mxu0 0
        %1992 = vmatprep.subr.bf16.mxu0 0
        %1993 = vmatpush1.bf16.msra.mxu0 0
        %1994 = vmatprep.subr.bf16.mxu0 0
        %1995 = vmatpush1.bf16.msra.mxu0 0
        %1996 = vmatprep.subr.bf16.mxu0 0
        %1997 = vmatpush1.bf16.msra.mxu0 0
        %1998 = vmatprep.subr.bf16.mxu0 0
        %1999 = vmatpush1.bf16.msra.mxu0 0
        %2000 = vmatprep.subr.bf16.mxu0 0
        %2001 = vmatpush1.bf16.msra.mxu0 0
        %2002 = vmatprep.mubr.bf16.mxu0 0
        %2003 = vmatmul.mubr.bf16.gmra.mrb[0].mxu0 %v1956
        %v2004 = vpop.f32.mrb[0].mxu0
        %v2005 = vadd.f32 0.0, %v2004
        %v2006 = vpop.f32.mrb[0].mxu0
        %v2007 = vpop.f32.mrb[0].mxu0
        %v2008 = vadd.f32 0.0, %v2007
        %v2009 = vpop.f32.mrb[0].mxu0
        %2010 = vmatprep.mubr.bf16.mxu0 0
        %2011 = vmatmul.mubr.bf16.gmra.mrb[0].mxu0 %v1959
        %v2012 = vpop.f32.mrb[0].mxu0
        %v2013 = vadd.f32 0.0, %v2012
        %v2014 = vpop.f32.mrb[0].mxu0
        %v2015 = vpop.f32.mrb[0].mxu0
        %v2016 = vadd.f32 0.0, %v2015
        %v2017 = vpop.f32.mrb[0].mxu0
        %2018 = vmatprep.mubr.bf16.mxu0 0
        %2019 = vmatmul.mubr.bf16.gmra.mrb[0].mxu0 %v1962
        %v2020 = vpop.f32.mrb[0].mxu0
        %v2021 = vadd.f32 0.0, %v2020
        %v2022 = vpop.f32.mrb[0].mxu0
        %v2023 = vpop.f32.mrb[0].mxu0
        %v2024 = vadd.f32 0.0, %v2023
        %v2025 = vpop.f32.mrb[0].mxu0
        %2026 = vmatprep.mubr.bf16.mxu0 0
        %2027 = vmatmul.mubr.bf16.gmra.mrb[0].mxu0 %v1965
        %v2028 = vpop.f32.mrb[0].mxu0
        %v2029 = vadd.f32 0.0, %v2028
        %v2030 = vpop.f32.mrb[0].mxu0
        %v2031 = vpop.f32.mrb[0].mxu0
        %v2032 = vadd.f32 0.0, %v2031
        %v2033 = vpop.f32.mrb[0].mxu0
        %2034 = vdwg.mxu0
        %v2035 = vadd.f32 %v1893, %v2005
        %v2036 = vadd.f32 %v1894, %v2008
        %v2037 = vadd.f32 %v1895, %v2013
        %v2038 = vadd.f32 %v1896, %v2016
        %v2039 = vadd.f32 %v1897, %v2021
        %v2040 = vadd.f32 %v1898, %v2024
        %v2041 = vadd.f32 %v1899, %v2029
        %v2042 = vadd.f32 %v1900, %v2032
        %v2043 = vsel %vm988, 1, 0
        %v2044 = vsel %vm989, 1, 0
        %v2045 = vsel %vm990, 1, 0
        %v2046 = vsel %vm991, 1, 0
        %v2047 = vsel %vm992, 1, 0
        %v2048 = vsel %vm993, 1, 0
        %v2049 = vsel %vm994, 1, 0
        %2050 = vset.pattern.permute.xlu0 0
        %2051 = vperm.xlu0 %2050, %v2043
        %v2052 = vpop.permute.xlu0 %2051
        %2053 = vset.pattern.permute.xlu0 0
        %2054 = vperm.xlu0 %2053, %v2044
        %v2055 = vpop.permute.xlu0 %2054
        %2056 = vset.pattern.permute.xlu0 0
        %2057 = vperm.xlu0 %2056, %v2045
        %v2058 = vpop.permute.xlu0 %2057
        %2059 = vset.pattern.permute.xlu0 0
        %2060 = vperm.xlu0 %2059, %v2046
        %v2061 = vpop.permute.xlu0 %2060
        %2062 = vset.pattern.permute.xlu0 0
        %2063 = vperm.xlu0 %2062, %v2047
        %v2064 = vpop.permute.xlu0 %2063
        %2065 = vset.pattern.permute.xlu0 0
        %2066 = vperm.xlu0 %2065, %v2048
        %v2067 = vpop.permute.xlu0 %2066
        %2068 = vset.pattern.permute.xlu0 0
        %2069 = vperm.xlu0 %2068, %v2049
        %v2070 = vpop.permute.xlu0 %2069
        %vm2071 = vcmp.eq.s32.totalorder %v2052, 1
        %vm2072 = vcmp.eq.s32.totalorder %v2055, 1
        %vm2073 = vcmp.eq.s32.totalorder %v2058, 1
        %vm2074 = vcmp.eq.s32.totalorder %v2061, 1
        %vm2075 = vcmp.eq.s32.totalorder %v2064, 1
        %vm2076 = vcmp.eq.s32.totalorder %v2067, 1
        %vm2077 = vcmp.eq.s32.totalorder %v2070, 1
        %v2078 = vsel %vm2071, %v1010, 0.0
        %v2079 = vsel %vm2072, %v1011, 0.0
        %v2080 = vsel %vm2073, %v1012, 0.0
        %v2081 = vsel %vm2074, %v1013, 0.0
        %v2082 = vsel %vm2075, %v1014, 0.0
        %v2083 = vsel %vm2076, %v1015, 0.0
        %v2084 = vsel %vm2077, %v1016, 0.0
        %v2085 = vpack.c.bf16 %v2079, %v2078
        %v2086 = vpack.c.bf16 %v2081, %v2080
        %v2087 = vpack.c.bf16 %v2083, %v2082
        %v2088 = vpack.c.bf16 0.0, %v2084
        %v2090 = vsel %vm1148, %v2085, 0
        %v2093 = vsel %vm1148, %v2086, 0
        %v2096 = vsel %vm1148, %v2087, 0
        %v2099 = vsel %vm1148, %v2088, 0
        %v2102 = vsel %vm1161, %v1024, 0
        %2104 = vmatprep.subr.bf16.mxu0 0
        %2105 = vmatpush1.bf16.msra.mxu0 %v2102
        %2106 = vmatprep.subr.bf16.mxu0 0
        %2107 = vmatpush1.bf16.msra.mxu0 0
        %2108 = vmatprep.subr.bf16.mxu0 0
        %2109 = vmatpush1.bf16.msra.mxu0 0
        %2110 = vmatprep.subr.bf16.mxu0 0
        %2111 = vmatpush1.bf16.msra.mxu0 0
        %2112 = vmatprep.subr.bf16.mxu0 0
        %2113 = vmatpush1.bf16.msra.mxu0 0
        %2114 = vmatprep.subr.bf16.mxu0 0
        %2115 = vmatpush1.bf16.msra.mxu0 0
        %2116 = vmatprep.subr.bf16.mxu0 0
        %2117 = vmatpush1.bf16.msra.mxu0 0
        %2118 = vmatprep.subr.bf16.mxu0 0
        %2119 = vmatpush1.bf16.msra.mxu0 0
        %2120 = vmatprep.subr.bf16.mxu0 0
        %2121 = vmatpush1.bf16.msra.mxu0 0
        %2122 = vmatprep.subr.bf16.mxu0 0
        %2123 = vmatpush1.bf16.msra.mxu0 0
        %2124 = vmatprep.subr.bf16.mxu0 0
        %2125 = vmatpush1.bf16.msra.mxu0 0
        %2126 = vmatprep.subr.bf16.mxu0 0
        %2127 = vmatpush1.bf16.msra.mxu0 0
        %2128 = vmatprep.subr.bf16.mxu0 0
        %2129 = vmatpush1.bf16.msra.mxu0 0
        %2130 = vmatprep.subr.bf16.mxu0 0
        %2131 = vmatpush1.bf16.msra.mxu0 0
        %2132 = vmatprep.subr.bf16.mxu0 0
        %2133 = vmatpush1.bf16.msra.mxu0 0
        %2134 = vmatprep.subr.bf16.mxu0 0
        %2135 = vmatpush1.bf16.msra.mxu0 0
        %2136 = vmatprep.mubr.bf16.mxu0 0
        %2137 = vmatmul.mubr.bf16.gmra.mrb[0].mxu0 %v2090
        %v2138 = vpop.f32.mrb[0].mxu0
        %v2139 = vadd.f32 0.0, %v2138
        %v2140 = vpop.f32.mrb[0].mxu0
        %v2141 = vpop.f32.mrb[0].mxu0
        %v2142 = vadd.f32 0.0, %v2141
        %v2143 = vpop.f32.mrb[0].mxu0
        %2144 = vmatprep.mubr.bf16.mxu0 0
        %2145 = vmatmul.mubr.bf16.gmra.mrb[0].mxu0 %v2093
        %v2146 = vpop.f32.mrb[0].mxu0
        %v2147 = vadd.f32 0.0, %v2146
        %v2148 = vpop.f32.mrb[0].mxu0
        %v2149 = vpop.f32.mrb[0].mxu0
        %v2150 = vadd.f32 0.0, %v2149
        %v2151 = vpop.f32.mrb[0].mxu0
        %2152 = vmatprep.mubr.bf16.mxu0 0
        %2153 = vmatmul.mubr.bf16.gmra.mrb[0].mxu0 %v2096
        %v2154 = vpop.f32.mrb[0].mxu0
        %v2155 = vadd.f32 0.0, %v2154
        %v2156 = vpop.f32.mrb[0].mxu0
        %v2157 = vpop.f32.mrb[0].mxu0
        %v2158 = vadd.f32 0.0, %v2157
        %v2159 = vpop.f32.mrb[0].mxu0
        %2160 = vmatprep.mubr.bf16.mxu0 0
        %2161 = vmatmul.mubr.bf16.gmra.mrb[0].mxu0 %v2099
        %v2162 = vpop.f32.mrb[0].mxu0
        %v2163 = vadd.f32 0.0, %v2162
        %v2164 = vpop.f32.mrb[0].mxu0
        %v2165 = vpop.f32.mrb[0].mxu0
        %v2166 = vadd.f32 0.0, %v2165
        %v2167 = vpop.f32.mrb[0].mxu0
        %2168 = vdwg.mxu0
        %v2169 = vadd.f32 %v2035, %v2139
        %v2170 = vadd.f32 %v2036, %v2142
        %v2171 = vadd.f32 %v2037, %v2147
        %v2172 = vadd.f32 %v2038, %v2150
        %v2173 = vadd.f32 %v2039, %v2155
        %v2174 = vadd.f32 %v2040, %v2158
        %v2175 = vadd.f32 %v2041, %v2163
        %v2176 = vadd.f32 %v2042, %v2166
        %v2177 = vsel %vm1002, 1, 0
        %v2178 = vsel %vm1003, 1, 0
        %v2179 = vsel %vm1004, 1, 0
        %v2180 = vsel %vm1005, 1, 0
        %v2181 = vsel %vm1006, 1, 0
        %v2182 = vsel %vm1007, 1, 0
        %v2183 = vsel %vm1008, 1, 0
        %2184 = vset.pattern.permute.xlu0 0
        %2185 = vperm.xlu0 %2184, %v2177
        %v2186 = vpop.permute.xlu0 %2185
        %2187 = vset.pattern.permute.xlu0 0
        %2188 = vperm.xlu0 %2187, %v2178
        %v2189 = vpop.permute.xlu0 %2188
        %2190 = vset.pattern.permute.xlu0 0
        %2191 = vperm.xlu0 %2190, %v2179
        %v2192 = vpop.permute.xlu0 %2191
        %2193 = vset.pattern.permute.xlu0 0
        %2194 = vperm.xlu0 %2193, %v2180
        %v2195 = vpop.permute.xlu0 %2194
        %2196 = vset.pattern.permute.xlu0 0
        %2197 = vperm.xlu0 %2196, %v2181
        %v2198 = vpop.permute.xlu0 %2197
        %2199 = vset.pattern.permute.xlu0 0
        %2200 = vperm.xlu0 %2199, %v2182
        %v2201 = vpop.permute.xlu0 %2200
        %2202 = vset.pattern.permute.xlu0 0
        %2203 = vperm.xlu0 %2202, %v2183
        %v2204 = vpop.permute.xlu0 %2203
        %vm2205 = vcmp.eq.s32.totalorder %v2186, 1
        %vm2206 = vcmp.eq.s32.totalorder %v2189, 1
        %vm2207 = vcmp.eq.s32.totalorder %v2192, 1
        %vm2208 = vcmp.eq.s32.totalorder %v2195, 1
        %vm2209 = vcmp.eq.s32.totalorder %v2198, 1
        %vm2210 = vcmp.eq.s32.totalorder %v2201, 1
        %vm2211 = vcmp.eq.s32.totalorder %v2204, 1
        %v2212 = vsel %vm2205, %v1316, 0.0
        %v2213 = vsel %vm2206, %v1318, 0.0
        %v2214 = vsel %vm2207, %v1320, 0.0
        %v2215 = vsel %vm2208, %v1322, 0.0
        %v2216 = vsel %vm2209, %v1324, 0.0
        %v2217 = vsel %vm2210, %v1326, 0.0
        %v2218 = vsel %vm2211, %v1760, 0.0
        %v2219 = vpack.c.bf16 %v2213, %v2212
        %v2220 = vpack.c.bf16 %v2215, %v2214
        %v2221 = vpack.c.bf16 %v2217, %v2216
        %v2222 = vpack.c.bf16 0.0, %v2218
        %v2224 = vsel %vm1148, %v2219, 0
        %v2227 = vsel %vm1148, %v2220, 0
        %v2230 = vsel %vm1148, %v2221, 0
        %v2233 = vsel %vm1148, %v2222, 0
        %v2236 = vsel %vm1161, %v1025, 0
        %2238 = vmatprep.subr.bf16.mxu0 0
        %2239 = vmatpush1.bf16.msra.mxu0 %v2236
        %2240 = vmatprep.subr.bf16.mxu0 0
        %2241 = vmatpush1.bf16.msra.mxu0 0
        %2242 = vmatprep.subr.bf16.mxu0 0
        %2243 = vmatpush1.bf16.msra.mxu0 0
        %2244 = vmatprep.subr.bf16.mxu0 0
        %2245 = vmatpush1.bf16.msra.mxu0 0
        %2246 = vmatprep.subr.bf16.mxu0 0
        %2247 = vmatpush1.bf16.msra.mxu0 0
        %2248 = vmatprep.subr.bf16.mxu0 0
        %2249 = vmatpush1.bf16.msra.mxu0 0
        %2250 = vmatprep.subr.bf16.mxu0 0
        %2251 = vmatpush1.bf16.msra.mxu0 0
        %2252 = vmatprep.subr.bf16.mxu0 0
        %2253 = vmatpush1.bf16.msra.mxu0 0
        %2254 = vmatprep.subr.bf16.mxu0 0
        %2255 = vmatpush1.bf16.msra.mxu0 0
        %2256 = vmatprep.subr.bf16.mxu0 0
        %2257 = vmatpush1.bf16.msra.mxu0 0
        %2258 = vmatprep.subr.bf16.mxu0 0
        %2259 = vmatpush1.bf16.msra.mxu0 0
        %2260 = vmatprep.subr.bf16.mxu0 0
        %2261 = vmatpush1.bf16.msra.mxu0 0
        %2262 = vmatprep.subr.bf16.mxu0 0
        %2263 = vmatpush1.bf16.msra.mxu0 0
        %2264 = vmatprep.subr.bf16.mxu0 0
        %2265 = vmatpush1.bf16.msra.mxu0 0
        %2266 = vmatprep.subr.bf16.mxu0 0
        %2267 = vmatpush1.bf16.msra.mxu0 0
        %2268 = vmatprep.subr.bf16.mxu0 0
        %2269 = vmatpush1.bf16.msra.mxu0 0
        %2270 = vmatprep.mubr.bf16.mxu0 0
        %2271 = vmatmul.mubr.bf16.gmra.mrb[0].mxu0 %v2224
        %v2272 = vpop.f32.mrb[0].mxu0
        %v2273 = vadd.f32 0.0, %v2272
        %v2274 = vpop.f32.mrb[0].mxu0
        %v2275 = vpop.f32.mrb[0].mxu0
        %v2276 = vadd.f32 0.0, %v2275
        %v2277 = vpop.f32.mrb[0].mxu0
        %2278 = vmatprep.mubr.bf16.mxu0 0
        %2279 = vmatmul.mubr.bf16.gmra.mrb[0].mxu0 %v2227
        %v2280 = vpop.f32.mrb[0].mxu0
        %v2281 = vadd.f32 0.0, %v2280
        %v2282 = vpop.f32.mrb[0].mxu0
        %v2283 = vpop.f32.mrb[0].mxu0
        %v2284 = vadd.f32 0.0, %v2283
        %v2285 = vpop.f32.mrb[0].mxu0
        %2286 = vmatprep.mubr.bf16.mxu0 0
        %2287 = vmatmul.mubr.bf16.gmra.mrb[0].mxu0 %v2230
        %v2288 = vpop.f32.mrb[0].mxu0
        %v2289 = vadd.f32 0.0, %v2288
        %v2290 = vpop.f32.mrb[0].mxu0
        %v2291 = vpop.f32.mrb[0].mxu0
        %v2292 = vadd.f32 0.0, %v2291
        %v2293 = vpop.f32.mrb[0].mxu0
        %2294 = vmatprep.mubr.bf16.mxu0 0
        %2295 = vmatmul.mubr.bf16.gmra.mrb[0].mxu0 %v2233
        %v2296 = vpop.f32.mrb[0].mxu0
        %v2297 = vadd.f32 0.0, %v2296
        %v2298 = vpop.f32.mrb[0].mxu0
        %v2299 = vpop.f32.mrb[0].mxu0
        %v2300 = vadd.f32 0.0, %v2299
        %v2301 = vpop.f32.mrb[0].mxu0
        %2302 = vdwg.mxu0
        %v2303 = vadd.f32 %v2169, %v2273
        %v2304 = vadd.f32 %v2170, %v2276
        %v2305 = vadd.f32 %v2171, %v2281
        %v2306 = vadd.f32 %v2172, %v2284
        %v2307 = vadd.f32 %v2173, %v2289
        %v2308 = vadd.f32 %v2174, %v2292
        %v2309 = vadd.f32 %v2175, %v2297
        %v2310 = vadd.f32 %v2176, %v2300
        %v2312 = vlaneseq
        %v2313 = vshrl.u32 %v2312, 7
        %v2314 = vsub.s32 0, %v2313
        %v2315 = vrot.slane %v1026, %v2314
        %v2317 = vadd.f32 %v2303, %v2315
        %v2318 = vadd.f32 %v2304, %v2315
        %v2319 = vadd.f32 %v2305, %v2315
        %v2320 = vadd.f32 %v2306, %v2315
        %v2321 = vadd.f32 %v2307, %v2315
        %v2322 = vadd.f32 %v2308, %v2315
        %v2323 = vadd.f32 %v2309, %v2315
        %v2324 = vadd.f32 %v2310, %v2315
        %v2325 = vmax.f32 %v2317, 0.0
        %v2326 = vmax.f32 %v2318, 0.0
        %v2327 = vmax.f32 %v2319, 0.0
        %v2328 = vmax.f32 %v2320, 0.0
        %v2329 = vmax.f32 %v2321, 0.0
        %v2330 = vmax.f32 %v2322, 0.0
        %v2331 = vmax.f32 %v2323, 0.0
        %v2332 = vmax.f32 %v2324, 0.0
        %v2333 = vld [vmem:[%s8] sm:$0xf]
        %v2334 = vld [vmem:[%s8 + $0x4] sm:$0xf]
        %v2335 = vld [vmem:[%s8 + $0x8] sm:$0xf]
        %v2336 = vld [vmem:[%s8 + $0xc] sm:$0xf]
        %v2337 = vld [vmem:[%s8 + $0x10] sm:$0xf]
        %v2338 = vld [vmem:[%s8 + $0x14] sm:$0xf]
        %v2339 = vld [vmem:[%s8 + $0x18] sm:$0xf]
        %v2340 = vld [vmem:[%s8 + $0x1c] sm:$0xf]
        %v2341 = vld [vmem:[%s8 + $0x20] sm:$0xf]
        %v2342 = vld [vmem:[%s8 + $0x24] sm:$0xf]
        %v2343 = vld [vmem:[%s8 + $0x28] sm:$0xf]
        %v2344 = vld [vmem:[%s8 + $0x2c] sm:$0xf]
        %v2345 = vld [vmem:[%s8 + $0x30] sm:$0xf]
        %v2346 = vld [vmem:[%s8 + $0x34] sm:$0xf]
        %v2347 = vld [vmem:[%s8 + $0x38] sm:$0xf]
        %v2348 = vld [vmem:[%s8 + $0x3c] sm:$0xf]
        %v2349 = vld [vmem:[%s8 + $0x40] sm:$0xf]
        %v2350 = vld [vmem:[%s8 + $0x44] sm:$0xf]
        %v2351 = vld [vmem:[%s8 + $0x48] sm:$0xf]
        %v2352 = vld [vmem:[%s8 + $0x4c] sm:$0xf]
        %v2353 = vld [vmem:[%s8 + $0x50] sm:$0xf]
        %v2354 = vld [vmem:[%s8 + $0x54] sm:$0xf]
        %v2355 = vld [vmem:[%s8 + $0x58] sm:$0xf]
        %v2356 = vld [vmem:[%s8 + $0x5c] sm:$0xf]
        %v2357 = vld [vmem:[%s8 + $0x60] sm:$0xf]
        %v2358 = vld [vmem:[%s8 + $0x64] sm:$0xf]
        %v2359 = vld [vmem:[%s8 + $0x68] sm:$0xf]
        %v2360 = vld [vmem:[%s8 + $0x6c] sm:$0xf]
        %v2361 = vld [vmem:[%s8 + $0x70] sm:$0xf]
        %v2362 = vld [vmem:[%s8 + $0x74] sm:$0xf]
        %v2363 = vld [vmem:[%s8 + $0x78] sm:$0xf]
        %v2364 = vld [vmem:[%s8 + $0x7c] sm:$0xf]
        %v2365 = vld [vmem:[%s8 + $0x80] sm:$0xf]
        %v2366 = vld [vmem:[%s8 + $0x84] sm:$0xf]
        %v2367 = vld [vmem:[%s8 + $0x88] sm:$0xf]
        %v2368 = vld [vmem:[%s8 + $0x8c] sm:$0xf]
        %v2369 = vld [vmem:[%s9] sm:$0x1]
        %v2377 = vrot.slane %v2325, 7
        %v2378 = vrot.slane %v2326, 7
        %v2379 = vsel %vm1034, %v2377, %v2378
        %v2380 = vrot.slane %v2327, 7
        %v2381 = vsel %vm1034, %v2378, %v2380
        %v2382 = vrot.slane %v2328, 7
        %v2383 = vsel %vm1034, %v2380, %v2382
        %v2384 = vrot.slane %v2329, 7
        %v2385 = vsel %vm1034, %v2382, %v2384
        %v2386 = vrot.slane %v2330, 7
        %v2387 = vsel %vm1034, %v2384, %v2386
        %v2388 = vrot.slane %v2331, 7
        %v2389 = vsel %vm1034, %v2386, %v2388
        %v2397 = vsel %vm1034, 0.0, %v2377
        %v2398 = vsel %vm1084, %v2397, 0.0
        %v2399 = vsel %vm1085, %v2379, 0.0
        %v2400 = vsel %vm1086, %v2381, 0.0
        %v2401 = vsel %vm1087, %v2383, 0.0
        %v2402 = vsel %vm1088, %v2385, 0.0
        %v2403 = vsel %vm1089, %v2387, 0.0
        %v2404 = vsel %vm1090, %v2389, 0.0
        %v2405 = vpack.c.bf16 %v2398, 0.0
        %v2406 = vpack.c.bf16 %v2400, %v2399
        %v2407 = vpack.c.bf16 %v2402, %v2401
        %v2408 = vpack.c.bf16 %v2404, %v2403
        %v2409 = vsel %vm1130, %v2325, 0.0
        %v2410 = vsel %vm1131, %v2326, 0.0
        %v2411 = vsel %vm1132, %v2327, 0.0
        %v2412 = vsel %vm1133, %v2328, 0.0
        %v2413 = vsel %vm1134, %v2329, 0.0
        %v2414 = vsel %vm1135, %v2330, 0.0
        %v2415 = vsel %vm1136, %v2331, 0.0
        %v2416 = vpack.c.bf16 %v2409, 0.0
        %v2417 = vpack.c.bf16 %v2411, %v2410
        %v2418 = vpack.c.bf16 %v2413, %v2412
        %v2419 = vpack.c.bf16 %v2415, %v2414
        %v2424 = vunpack.c.l.b16 %v2337
        %v2425 = vunpack.c.l.b16 %v2338
        %v2426 = vunpack.c.l.b16 %v2339
        %v2427 = vunpack.c.l.b16 %v2340
        %v2428 = vpack.c.b16 %v2425, %v2424
        %v2429 = vpack.c.b16 %v2427, %v2426
        %vm2432 = vcmask 261120
        %v2434 = vsel %vm2432, %v2416, 0
        %v2437 = vsel %vm2432, %v2417, 0
        %v2440 = vsel %vm2432, %v2418, 0
        %v2443 = vsel %vm2432, %v2419, 0
        %2445 = vmatprep.subr.bf16.mxu0 0
        %2446 = vmatpush1.bf16.msra.mxu0 %v2428
        %2447 = vmatprep.subr.bf16.mxu0 0
        %2448 = vmatpush1.bf16.msra.mxu0 %v2429
        %2449 = vmatprep.subr.bf16.mxu0 0
        %2450 = vmatpush1.bf16.msra.mxu0 0
        %2451 = vmatprep.subr.bf16.mxu0 0
        %2452 = vmatpush1.bf16.msra.mxu0 0
        %2453 = vmatprep.subr.bf16.mxu0 0
        %2454 = vmatpush1.bf16.msra.mxu0 0
        %2455 = vmatprep.subr.bf16.mxu0 0
        %2456 = vmatpush1.bf16.msra.mxu0 0
        %2457 = vmatprep.subr.bf16.mxu0 0
        %2458 = vmatpush1.bf16.msra.mxu0 0
        %2459 = vmatprep.subr.bf16.mxu0 0
        %2460 = vmatpush1.bf16.msra.mxu0 0
        %2461 = vmatprep.subr.bf16.mxu0 0
        %2462 = vmatpush1.bf16.msra.mxu0 0
        %2463 = vmatprep.subr.bf16.mxu0 0
        %2464 = vmatpush1.bf16.msra.mxu0 0
        %2465 = vmatprep.subr.bf16.mxu0 0
        %2466 = vmatpush1.bf16.msra.mxu0 0
        %2467 = vmatprep.subr.bf16.mxu0 0
        %2468 = vmatpush1.bf16.msra.mxu0 0
        %2469 = vmatprep.subr.bf16.mxu0 0
        %2470 = vmatpush1.bf16.msra.mxu0 0
        %2471 = vmatprep.subr.bf16.mxu0 0
        %2472 = vmatpush1.bf16.msra.mxu0 0
        %2473 = vmatprep.subr.bf16.mxu0 0
        %2474 = vmatpush1.bf16.msra.mxu0 0
        %2475 = vmatprep.subr.bf16.mxu0 0
        %2476 = vmatpush1.bf16.msra.mxu0 0
        %2477 = vmatprep.mubr.bf16.mxu0 0
        %2478 = vmatmul.mubr.bf16.gmra.mrb[0].mxu0 %v2434
        %v2479 = vpop.f32.mrb[0].mxu0
        %v2480 = vadd.f32 0.0, %v2479
        %v2481 = vpop.f32.mrb[0].mxu0
        %v2482 = vpop.f32.mrb[0].mxu0
        %v2483 = vadd.f32 0.0, %v2482
        %v2484 = vpop.f32.mrb[0].mxu0
        %2485 = vmatprep.mubr.bf16.mxu0 0
        %2486 = vmatmul.mubr.bf16.gmra.mrb[0].mxu0 %v2437
        %v2487 = vpop.f32.mrb[0].mxu0
        %v2488 = vadd.f32 0.0, %v2487
        %v2489 = vpop.f32.mrb[0].mxu0
        %v2490 = vpop.f32.mrb[0].mxu0
        %v2491 = vadd.f32 0.0, %v2490
        %v2492 = vpop.f32.mrb[0].mxu0
        %2493 = vmatprep.mubr.bf16.mxu0 0
        %2494 = vmatmul.mubr.bf16.gmra.mrb[0].mxu0 %v2440
        %v2495 = vpop.f32.mrb[0].mxu0
        %v2496 = vadd.f32 0.0, %v2495
        %v2497 = vpop.f32.mrb[0].mxu0
        %v2498 = vpop.f32.mrb[0].mxu0
        %v2499 = vadd.f32 0.0, %v2498
        %v2500 = vpop.f32.mrb[0].mxu0
        %2501 = vmatprep.mubr.bf16.mxu0 0
        %2502 = vmatmul.mubr.bf16.gmra.mrb[0].mxu0 %v2443
        %v2503 = vpop.f32.mrb[0].mxu0
        %v2504 = vadd.f32 0.0, %v2503
        %v2505 = vpop.f32.mrb[0].mxu0
        %v2506 = vpop.f32.mrb[0].mxu0
        %v2507 = vadd.f32 0.0, %v2506
        %v2508 = vpop.f32.mrb[0].mxu0
        %2509 = vdwg.mxu0
        %v2514 = vunpack.c.l.b16 %v2333
        %v2515 = vunpack.c.l.b16 %v2334
        %v2516 = vunpack.c.l.b16 %v2335
        %v2517 = vunpack.c.l.b16 %v2336
        %v2518 = vpack.c.b16 %v2515, %v2514
        %v2519 = vpack.c.b16 %v2517, %v2516
        %v2523 = vsel %vm2432, %v2405, 0
        %v2526 = vsel %vm2432, %v2406, 0
        %v2529 = vsel %vm2432, %v2407, 0
        %v2532 = vsel %vm2432, %v2408, 0
        %2534 = vmatprep.subr.bf16.mxu0 0
        %2535 = vmatpush1.bf16.msra.mxu0 %v2518
        %2536 = vmatprep.subr.bf16.mxu0 0
        %2537 = vmatpush1.bf16.msra.mxu0 %v2519
        %2538 = vmatprep.subr.bf16.mxu0 0
        %2539 = vmatpush1.bf16.msra.mxu0 0
        %2540 = vmatprep.subr.bf16.mxu0 0
        %2541 = vmatpush1.bf16.msra.mxu0 0
        %2542 = vmatprep.subr.bf16.mxu0 0
        %2543 = vmatpush1.bf16.msra.mxu0 0
        %2544 = vmatprep.subr.bf16.mxu0 0
        %2545 = vmatpush1.bf16.msra.mxu0 0
        %2546 = vmatprep.subr.bf16.mxu0 0
        %2547 = vmatpush1.bf16.msra.mxu0 0
        %2548 = vmatprep.subr.bf16.mxu0 0
        %2549 = vmatpush1.bf16.msra.mxu0 0
        %2550 = vmatprep.subr.bf16.mxu0 0
        %2551 = vmatpush1.bf16.msra.mxu0 0
        %2552 = vmatprep.subr.bf16.mxu0 0
        %2553 = vmatpush1.bf16.msra.mxu0 0
        %2554 = vmatprep.subr.bf16.mxu0 0
        %2555 = vmatpush1.bf16.msra.mxu0 0
        %2556 = vmatprep.subr.bf16.mxu0 0
        %2557 = vmatpush1.bf16.msra.mxu0 0
        %2558 = vmatprep.subr.bf16.mxu0 0
        %2559 = vmatpush1.bf16.msra.mxu0 0
        %2560 = vmatprep.subr.bf16.mxu0 0
        %2561 = vmatpush1.bf16.msra.mxu0 0
        %2562 = vmatprep.subr.bf16.mxu0 0
        %2563 = vmatpush1.bf16.msra.mxu0 0
        %2564 = vmatprep.subr.bf16.mxu0 0
        %2565 = vmatpush1.bf16.msra.mxu0 0
        %2566 = vmatprep.mubr.bf16.mxu0 0
        %2567 = vmatmul.mubr.bf16.gmra.mrb[0].mxu0 %v2523
        %v2568 = vpop.f32.mrb[0].mxu0
        %v2569 = vadd.f32 %v2480, %v2568
        %v2570 = vpop.f32.mrb[0].mxu0
        %v2571 = vpop.f32.mrb[0].mxu0
        %v2572 = vadd.f32 %v2483, %v2571
        %v2573 = vpop.f32.mrb[0].mxu0
        %2574 = vmatprep.mubr.bf16.mxu0 0
        %2575 = vmatmul.mubr.bf16.gmra.mrb[0].mxu0 %v2526
        %v2576 = vpop.f32.mrb[0].mxu0
        %v2577 = vadd.f32 %v2488, %v2576
        %v2578 = vpop.f32.mrb[0].mxu0
        %v2579 = vpop.f32.mrb[0].mxu0
        %v2580 = vadd.f32 %v2491, %v2579
        %v2581 = vpop.f32.mrb[0].mxu0
        %2582 = vmatprep.mubr.bf16.mxu0 0
        %2583 = vmatmul.mubr.bf16.gmra.mrb[0].mxu0 %v2529
        %v2584 = vpop.f32.mrb[0].mxu0
        %v2585 = vadd.f32 %v2496, %v2584
        %v2586 = vpop.f32.mrb[0].mxu0
        %v2587 = vpop.f32.mrb[0].mxu0
        %v2588 = vadd.f32 %v2499, %v2587
        %v2589 = vpop.f32.mrb[0].mxu0
        %2590 = vmatprep.mubr.bf16.mxu0 0
        %2591 = vmatmul.mubr.bf16.gmra.mrb[0].mxu0 %v2532
        %v2592 = vpop.f32.mrb[0].mxu0
        %v2593 = vadd.f32 %v2504, %v2592
        %v2594 = vpop.f32.mrb[0].mxu0
        %v2595 = vpop.f32.mrb[0].mxu0
        %v2596 = vadd.f32 %v2507, %v2595
        %v2597 = vpop.f32.mrb[0].mxu0
        %2598 = vdwg.mxu0
        %v2600 = vrot.slane %v2325, 1
        %v2601 = vrot.slane %v2326, 1
        %v2602 = vsel %vm1311, %v2600, %v2601
        %v2603 = vrot.slane %v2327, 1
        %v2604 = vsel %vm1311, %v2601, %v2603
        %v2605 = vrot.slane %v2328, 1
        %v2606 = vsel %vm1311, %v2603, %v2605
        %v2607 = vrot.slane %v2329, 1
        %v2608 = vsel %vm1311, %v2605, %v2607
        %v2609 = vrot.slane %v2330, 1
        %v2610 = vsel %vm1311, %v2607, %v2609
        %v2611 = vrot.slane %v2331, 1
        %v2612 = vsel %vm1311, %v2609, %v2611
        %v2613 = vrot.slane %v2332, 1
        %v2614 = vsel %vm1311, %v2611, %v2613
        %v2623 = vsel %vm1311, 0.0, %v2600
        %v2624 = vsel %vm1368, %v2623, 0.0
        %v2625 = vsel %vm1369, %v2602, 0.0
        %v2626 = vsel %vm1370, %v2604, 0.0
        %v2627 = vsel %vm1371, %v2606, 0.0
        %v2628 = vsel %vm1372, %v2608, 0.0
        %v2629 = vsel %vm1373, %v2610, 0.0
        %v2630 = vsel %vm1374, %v2612, 0.0
        %v2631 = vsel %vm1375, %v2614, 0.0
        %v2632 = vpack.c.bf16 %v2625, %v2624
        %v2633 = vpack.c.bf16 %v2627, %v2626
        %v2634 = vpack.c.bf16 %v2629, %v2628
        %v2635 = vpack.c.bf16 %v2631, %v2630
        %v2640 = vunpack.c.l.b16 %v2341
        %v2641 = vunpack.c.l.b16 %v2342
        %v2642 = vunpack.c.l.b16 %v2343
        %v2643 = vunpack.c.l.b16 %v2344
        %v2644 = vpack.c.b16 %v2641, %v2640
        %v2645 = vpack.c.b16 %v2643, %v2642
        %v2649 = vsel %vm2432, %v2632, 0
        %v2652 = vsel %vm2432, %v2633, 0
        %v2655 = vsel %vm2432, %v2634, 0
        %v2658 = vsel %vm2432, %v2635, 0
        %2660 = vmatprep.subr.bf16.mxu0 0
        %2661 = vmatpush1.bf16.msra.mxu0 %v2644
        %2662 = vmatprep.subr.bf16.mxu0 0
        %2663 = vmatpush1.bf16.msra.mxu0 %v2645
        %2664 = vmatprep.subr.bf16.mxu0 0
        %2665 = vmatpush1.bf16.msra.mxu0 0
        %2666 = vmatprep.subr.bf16.mxu0 0
        %2667 = vmatpush1.bf16.msra.mxu0 0
        %2668 = vmatprep.subr.bf16.mxu0 0
        %2669 = vmatpush1.bf16.msra.mxu0 0
        %2670 = vmatprep.subr.bf16.mxu0 0
        %2671 = vmatpush1.bf16.msra.mxu0 0
        %2672 = vmatprep.subr.bf16.mxu0 0
        %2673 = vmatpush1.bf16.msra.mxu0 0
        %2674 = vmatprep.subr.bf16.mxu0 0
        %2675 = vmatpush1.bf16.msra.mxu0 0
        %2676 = vmatprep.subr.bf16.mxu0 0
        %2677 = vmatpush1.bf16.msra.mxu0 0
        %2678 = vmatprep.subr.bf16.mxu0 0
        %2679 = vmatpush1.bf16.msra.mxu0 0
        %2680 = vmatprep.subr.bf16.mxu0 0
        %2681 = vmatpush1.bf16.msra.mxu0 0
        %2682 = vmatprep.subr.bf16.mxu0 0
        %2683 = vmatpush1.bf16.msra.mxu0 0
        %2684 = vmatprep.subr.bf16.mxu0 0
        %2685 = vmatpush1.bf16.msra.mxu0 0
        %2686 = vmatprep.subr.bf16.mxu0 0
        %2687 = vmatpush1.bf16.msra.mxu0 0
        %2688 = vmatprep.subr.bf16.mxu0 0
        %2689 = vmatpush1.bf16.msra.mxu0 0
        %2690 = vmatprep.subr.bf16.mxu0 0
        %2691 = vmatpush1.bf16.msra.mxu0 0
        %2692 = vmatprep.mubr.bf16.mxu0 0
        %2693 = vmatmul.mubr.bf16.gmra.mrb[0].mxu0 %v2649
        %v2694 = vpop.f32.mrb[0].mxu0
        %v2695 = vadd.f32 0.0, %v2694
        %v2696 = vpop.f32.mrb[0].mxu0
        %v2697 = vpop.f32.mrb[0].mxu0
        %v2698 = vadd.f32 0.0, %v2697
        %v2699 = vpop.f32.mrb[0].mxu0
        %2700 = vmatprep.mubr.bf16.mxu0 0
        %2701 = vmatmul.mubr.bf16.gmra.mrb[0].mxu0 %v2652
        %v2702 = vpop.f32.mrb[0].mxu0
        %v2703 = vadd.f32 0.0, %v2702
        %v2704 = vpop.f32.mrb[0].mxu0
        %v2705 = vpop.f32.mrb[0].mxu0
        %v2706 = vadd.f32 0.0, %v2705
        %v2707 = vpop.f32.mrb[0].mxu0
        %2708 = vmatprep.mubr.bf16.mxu0 0
        %2709 = vmatmul.mubr.bf16.gmra.mrb[0].mxu0 %v2655
        %v2710 = vpop.f32.mrb[0].mxu0
        %v2711 = vadd.f32 0.0, %v2710
        %v2712 = vpop.f32.mrb[0].mxu0
        %v2713 = vpop.f32.mrb[0].mxu0
        %v2714 = vadd.f32 0.0, %v2713
        %v2715 = vpop.f32.mrb[0].mxu0
        %2716 = vmatprep.mubr.bf16.mxu0 0
        %2717 = vmatmul.mubr.bf16.gmra.mrb[0].mxu0 %v2658
        %v2718 = vpop.f32.mrb[0].mxu0
        %v2719 = vadd.f32 0.0, %v2718
        %v2720 = vpop.f32.mrb[0].mxu0
        %v2721 = vpop.f32.mrb[0].mxu0
        %v2722 = vadd.f32 0.0, %v2721
        %v2723 = vpop.f32.mrb[0].mxu0
        %2724 = vdwg.mxu0
        %v2725 = vadd.f32 %v2569, %v2695
        %v2726 = vadd.f32 %v2572, %v2698
        %v2727 = vadd.f32 %v2577, %v2703
        %v2728 = vadd.f32 %v2580, %v2706
        %v2729 = vadd.f32 %v2585, %v2711
        %v2730 = vadd.f32 %v2588, %v2714
        %v2731 = vadd.f32 %v2593, %v2719
        %v2732 = vadd.f32 %v2596, %v2722
        %v2733 = vrot.slane %v2332, 7
        %v2734 = vsel %vm1034, %v2388, %v2733
        %v2736 = vsel %vm1511, %v2397, 0.0
        %v2737 = vsel %vm1512, %v2379, 0.0
        %v2738 = vsel %vm1513, %v2381, 0.0
        %v2739 = vsel %vm1514, %v2383, 0.0
        %v2740 = vsel %vm1515, %v2385, 0.0
        %v2741 = vsel %vm1516, %v2387, 0.0
        %v2742 = vsel %vm1517, %v2389, 0.0
        %v2743 = vsel %vm1518, %v2734, 0.0
        %v2744 = vpack.c.bf16 %v2737, %v2736
        %v2745 = vpack.c.bf16 %v2739, %v2738
        %v2746 = vpack.c.bf16 %v2741, %v2740
        %v2747 = vpack.c.bf16 %v2743, %v2742
        %v2752 = vunpack.c.l.b16 %v2345
        %v2753 = vunpack.c.l.b16 %v2346
        %v2754 = vunpack.c.l.b16 %v2347
        %v2755 = vunpack.c.l.b16 %v2348
        %v2756 = vpack.c.b16 %v2753, %v2752
        %v2757 = vpack.c.b16 %v2755, %v2754
        %v2761 = vsel %vm2432, %v2744, 0
        %v2764 = vsel %vm2432, %v2745, 0
        %v2767 = vsel %vm2432, %v2746, 0
        %v2770 = vsel %vm2432, %v2747, 0
        %2772 = vmatprep.subr.bf16.mxu0 0
        %2773 = vmatpush1.bf16.msra.mxu0 %v2756
        %2774 = vmatprep.subr.bf16.mxu0 0
        %2775 = vmatpush1.bf16.msra.mxu0 %v2757
        %2776 = vmatprep.subr.bf16.mxu0 0
        %2777 = vmatpush1.bf16.msra.mxu0 0
        %2778 = vmatprep.subr.bf16.mxu0 0
        %2779 = vmatpush1.bf16.msra.mxu0 0
        %2780 = vmatprep.subr.bf16.mxu0 0
        %2781 = vmatpush1.bf16.msra.mxu0 0
        %2782 = vmatprep.subr.bf16.mxu0 0
        %2783 = vmatpush1.bf16.msra.mxu0 0
        %2784 = vmatprep.subr.bf16.mxu0 0
        %2785 = vmatpush1.bf16.msra.mxu0 0
        %2786 = vmatprep.subr.bf16.mxu0 0
        %2787 = vmatpush1.bf16.msra.mxu0 0
        %2788 = vmatprep.subr.bf16.mxu0 0
        %2789 = vmatpush1.bf16.msra.mxu0 0
        %2790 = vmatprep.subr.bf16.mxu0 0
        %2791 = vmatpush1.bf16.msra.mxu0 0
        %2792 = vmatprep.subr.bf16.mxu0 0
        %2793 = vmatpush1.bf16.msra.mxu0 0
        %2794 = vmatprep.subr.bf16.mxu0 0
        %2795 = vmatpush1.bf16.msra.mxu0 0
        %2796 = vmatprep.subr.bf16.mxu0 0
        %2797 = vmatpush1.bf16.msra.mxu0 0
        %2798 = vmatprep.subr.bf16.mxu0 0
        %2799 = vmatpush1.bf16.msra.mxu0 0
        %2800 = vmatprep.subr.bf16.mxu0 0
        %2801 = vmatpush1.bf16.msra.mxu0 0
        %2802 = vmatprep.subr.bf16.mxu0 0
        %2803 = vmatpush1.bf16.msra.mxu0 0
        %2804 = vmatprep.mubr.bf16.mxu0 0
        %2805 = vmatmul.mubr.bf16.gmra.mrb[0].mxu0 %v2761
        %v2806 = vpop.f32.mrb[0].mxu0
        %v2807 = vadd.f32 0.0, %v2806
        %v2808 = vpop.f32.mrb[0].mxu0
        %v2809 = vpop.f32.mrb[0].mxu0
        %v2810 = vadd.f32 0.0, %v2809
        %v2811 = vpop.f32.mrb[0].mxu0
        %2812 = vmatprep.mubr.bf16.mxu0 0
        %2813 = vmatmul.mubr.bf16.gmra.mrb[0].mxu0 %v2764
        %v2814 = vpop.f32.mrb[0].mxu0
        %v2815 = vadd.f32 0.0, %v2814
        %v2816 = vpop.f32.mrb[0].mxu0
        %v2817 = vpop.f32.mrb[0].mxu0
        %v2818 = vadd.f32 0.0, %v2817
        %v2819 = vpop.f32.mrb[0].mxu0
        %2820 = vmatprep.mubr.bf16.mxu0 0
        %2821 = vmatmul.mubr.bf16.gmra.mrb[0].mxu0 %v2767
        %v2822 = vpop.f32.mrb[0].mxu0
        %v2823 = vadd.f32 0.0, %v2822
        %v2824 = vpop.f32.mrb[0].mxu0
        %v2825 = vpop.f32.mrb[0].mxu0
        %v2826 = vadd.f32 0.0, %v2825
        %v2827 = vpop.f32.mrb[0].mxu0
        %2828 = vmatprep.mubr.bf16.mxu0 0
        %2829 = vmatmul.mubr.bf16.gmra.mrb[0].mxu0 %v2770
        %v2830 = vpop.f32.mrb[0].mxu0
        %v2831 = vadd.f32 0.0, %v2830
        %v2832 = vpop.f32.mrb[0].mxu0
        %v2833 = vpop.f32.mrb[0].mxu0
        %v2834 = vadd.f32 0.0, %v2833
        %v2835 = vpop.f32.mrb[0].mxu0
        %2836 = vdwg.mxu0
        %v2837 = vadd.f32 %v2725, %v2807
        %v2838 = vadd.f32 %v2726, %v2810
        %v2839 = vadd.f32 %v2727, %v2815
        %v2840 = vadd.f32 %v2728, %v2818
        %v2841 = vadd.f32 %v2729, %v2823
        %v2842 = vadd.f32 %v2730, %v2826
        %v2843 = vadd.f32 %v2731, %v2831
        %v2844 = vadd.f32 %v2732, %v2834
        %v2845 = vsel %vm1651, %v2325, 0.0
        %v2846 = vsel %vm1652, %v2326, 0.0
        %v2847 = vsel %vm1653, %v2327, 0.0
        %v2848 = vsel %vm1654, %v2328, 0.0
        %v2849 = vsel %vm1655, %v2329, 0.0
        %v2850 = vsel %vm1656, %v2330, 0.0
        %v2851 = vsel %vm1657, %v2331, 0.0
        %v2852 = vsel %vm1658, %v2332, 0.0
        %v2853 = vpack.c.bf16 %v2846, %v2845
        %v2854 = vpack.c.bf16 %v2848, %v2847
        %v2855 = vpack.c.bf16 %v2850, %v2849
        %v2856 = vpack.c.bf16 %v2852, %v2851
        %v2861 = vunpack.c.l.b16 %v2349
        %v2862 = vunpack.c.l.b16 %v2350
        %v2863 = vunpack.c.l.b16 %v2351
        %v2864 = vunpack.c.l.b16 %v2352
        %v2865 = vpack.c.b16 %v2862, %v2861
        %v2866 = vpack.c.b16 %v2864, %v2863
        %v2870 = vsel %vm2432, %v2853, 0
        %v2873 = vsel %vm2432, %v2854, 0
        %v2876 = vsel %vm2432, %v2855, 0
        %v2879 = vsel %vm2432, %v2856, 0
        %2881 = vmatprep.subr.bf16.mxu0 0
        %2882 = vmatpush1.bf16.msra.mxu0 %v2865
        %2883 = vmatprep.subr.bf16.mxu0 0
        %2884 = vmatpush1.bf16.msra.mxu0 %v2866
        %2885 = vmatprep.subr.bf16.mxu0 0
        %2886 = vmatpush1.bf16.msra.mxu0 0
        %2887 = vmatprep.subr.bf16.mxu0 0
        %2888 = vmatpush1.bf16.msra.mxu0 0
        %2889 = vmatprep.subr.bf16.mxu0 0
        %2890 = vmatpush1.bf16.msra.mxu0 0
        %2891 = vmatprep.subr.bf16.mxu0 0
        %2892 = vmatpush1.bf16.msra.mxu0 0
        %2893 = vmatprep.subr.bf16.mxu0 0
        %2894 = vmatpush1.bf16.msra.mxu0 0
        %2895 = vmatprep.subr.bf16.mxu0 0
        %2896 = vmatpush1.bf16.msra.mxu0 0
        %2897 = vmatprep.subr.bf16.mxu0 0
        %2898 = vmatpush1.bf16.msra.mxu0 0
        %2899 = vmatprep.subr.bf16.mxu0 0
        %2900 = vmatpush1.bf16.msra.mxu0 0
        %2901 = vmatprep.subr.bf16.mxu0 0
        %2902 = vmatpush1.bf16.msra.mxu0 0
        %2903 = vmatprep.subr.bf16.mxu0 0
        %2904 = vmatpush1.bf16.msra.mxu0 0
        %2905 = vmatprep.subr.bf16.mxu0 0
        %2906 = vmatpush1.bf16.msra.mxu0 0
        %2907 = vmatprep.subr.bf16.mxu0 0
        %2908 = vmatpush1.bf16.msra.mxu0 0
        %2909 = vmatprep.subr.bf16.mxu0 0
        %2910 = vmatpush1.bf16.msra.mxu0 0
        %2911 = vmatprep.subr.bf16.mxu0 0
        %2912 = vmatpush1.bf16.msra.mxu0 0
        %2913 = vmatprep.mubr.bf16.mxu0 0
        %2914 = vmatmul.mubr.bf16.gmra.mrb[0].mxu0 %v2870
        %v2915 = vpop.f32.mrb[0].mxu0
        %v2916 = vadd.f32 0.0, %v2915
        %v2917 = vpop.f32.mrb[0].mxu0
        %v2918 = vpop.f32.mrb[0].mxu0
        %v2919 = vadd.f32 0.0, %v2918
        %v2920 = vpop.f32.mrb[0].mxu0
        %2921 = vmatprep.mubr.bf16.mxu0 0
        %2922 = vmatmul.mubr.bf16.gmra.mrb[0].mxu0 %v2873
        %v2923 = vpop.f32.mrb[0].mxu0
        %v2924 = vadd.f32 0.0, %v2923
        %v2925 = vpop.f32.mrb[0].mxu0
        %v2926 = vpop.f32.mrb[0].mxu0
        %v2927 = vadd.f32 0.0, %v2926
        %v2928 = vpop.f32.mrb[0].mxu0
        %2929 = vmatprep.mubr.bf16.mxu0 0
        %2930 = vmatmul.mubr.bf16.gmra.mrb[0].mxu0 %v2876
        %v2931 = vpop.f32.mrb[0].mxu0
        %v2932 = vadd.f32 0.0, %v2931
        %v2933 = vpop.f32.mrb[0].mxu0
        %v2934 = vpop.f32.mrb[0].mxu0
        %v2935 = vadd.f32 0.0, %v2934
        %v2936 = vpop.f32.mrb[0].mxu0
        %2937 = vmatprep.mubr.bf16.mxu0 0
        %2938 = vmatmul.mubr.bf16.gmra.mrb[0].mxu0 %v2879
        %v2939 = vpop.f32.mrb[0].mxu0
        %v2940 = vadd.f32 0.0, %v2939
        %v2941 = vpop.f32.mrb[0].mxu0
        %v2942 = vpop.f32.mrb[0].mxu0
        %v2943 = vadd.f32 0.0, %v2942
        %v2944 = vpop.f32.mrb[0].mxu0
        %2945 = vdwg.mxu0
        %v2946 = vadd.f32 %v2837, %v2916
        %v2947 = vadd.f32 %v2838, %v2919
        %v2948 = vadd.f32 %v2839, %v2924
        %v2949 = vadd.f32 %v2840, %v2927
        %v2950 = vadd.f32 %v2841, %v2932
        %v2951 = vadd.f32 %v2842, %v2935
        %v2952 = vadd.f32 %v2843, %v2940
        %v2953 = vadd.f32 %v2844, %v2943
        %v2955 = vsel %vm1311, %v2613, 0.0
        %v2956 = vsel %vm1793, %v2602, 0.0
        %v2957 = vsel %vm1794, %v2604, 0.0
        %v2958 = vsel %vm1795, %v2606, 0.0
        %v2959 = vsel %vm1796, %v2608, 0.0
        %v2960 = vsel %vm1797, %v2610, 0.0
        %v2961 = vsel %vm1798, %v2612, 0.0
        %v2962 = vsel %vm1799, %v2614, 0.0
        %v2963 = vsel %vm1800, %v2955, 0.0
        %v2964 = vpack.c.bf16 %v2957, %v2956
        %v2965 = vpack.c.bf16 %v2959, %v2958
        %v2966 = vpack.c.bf16 %v2961, %v2960
        %v2967 = vpack.c.bf16 %v2963, %v2962
        %v2972 = vunpack.c.l.b16 %v2353
        %v2973 = vunpack.c.l.b16 %v2354
        %v2974 = vunpack.c.l.b16 %v2355
        %v2975 = vunpack.c.l.b16 %v2356
        %v2976 = vpack.c.b16 %v2973, %v2972
        %v2977 = vpack.c.b16 %v2975, %v2974
        %v2981 = vsel %vm2432, %v2964, 0
        %v2984 = vsel %vm2432, %v2965, 0
        %v2987 = vsel %vm2432, %v2966, 0
        %v2990 = vsel %vm2432, %v2967, 0
        %2992 = vmatprep.subr.bf16.mxu0 0
        %2993 = vmatpush1.bf16.msra.mxu0 %v2976
        %2994 = vmatprep.subr.bf16.mxu0 0
        %2995 = vmatpush1.bf16.msra.mxu0 %v2977
        %2996 = vmatprep.subr.bf16.mxu0 0
        %2997 = vmatpush1.bf16.msra.mxu0 0
        %2998 = vmatprep.subr.bf16.mxu0 0
        %2999 = vmatpush1.bf16.msra.mxu0 0
        %3000 = vmatprep.subr.bf16.mxu0 0
        %3001 = vmatpush1.bf16.msra.mxu0 0
        %3002 = vmatprep.subr.bf16.mxu0 0
        %3003 = vmatpush1.bf16.msra.mxu0 0
        %3004 = vmatprep.subr.bf16.mxu0 0
        %3005 = vmatpush1.bf16.msra.mxu0 0
        %3006 = vmatprep.subr.bf16.mxu0 0
        %3007 = vmatpush1.bf16.msra.mxu0 0
        %3008 = vmatprep.subr.bf16.mxu0 0
        %3009 = vmatpush1.bf16.msra.mxu0 0
        %3010 = vmatprep.subr.bf16.mxu0 0
        %3011 = vmatpush1.bf16.msra.mxu0 0
        %3012 = vmatprep.subr.bf16.mxu0 0
        %3013 = vmatpush1.bf16.msra.mxu0 0
        %3014 = vmatprep.subr.bf16.mxu0 0
        %3015 = vmatpush1.bf16.msra.mxu0 0
        %3016 = vmatprep.subr.bf16.mxu0 0
        %3017 = vmatpush1.bf16.msra.mxu0 0
        %3018 = vmatprep.subr.bf16.mxu0 0
        %3019 = vmatpush1.bf16.msra.mxu0 0
        %3020 = vmatprep.subr.bf16.mxu0 0
        %3021 = vmatpush1.bf16.msra.mxu0 0
        %3022 = vmatprep.subr.bf16.mxu0 0
        %3023 = vmatpush1.bf16.msra.mxu0 0
        %3024 = vmatprep.mubr.bf16.mxu0 0
        %3025 = vmatmul.mubr.bf16.gmra.mrb[0].mxu0 %v2981
        %v3026 = vpop.f32.mrb[0].mxu0
        %v3027 = vadd.f32 0.0, %v3026
        %v3028 = vpop.f32.mrb[0].mxu0
        %v3029 = vpop.f32.mrb[0].mxu0
        %v3030 = vadd.f32 0.0, %v3029
        %v3031 = vpop.f32.mrb[0].mxu0
        %3032 = vmatprep.mubr.bf16.mxu0 0
        %3033 = vmatmul.mubr.bf16.gmra.mrb[0].mxu0 %v2984
        %v3034 = vpop.f32.mrb[0].mxu0
        %v3035 = vadd.f32 0.0, %v3034
        %v3036 = vpop.f32.mrb[0].mxu0
        %v3037 = vpop.f32.mrb[0].mxu0
        %v3038 = vadd.f32 0.0, %v3037
        %v3039 = vpop.f32.mrb[0].mxu0
        %3040 = vmatprep.mubr.bf16.mxu0 0
        %3041 = vmatmul.mubr.bf16.gmra.mrb[0].mxu0 %v2987
        %v3042 = vpop.f32.mrb[0].mxu0
        %v3043 = vadd.f32 0.0, %v3042
        %v3044 = vpop.f32.mrb[0].mxu0
        %v3045 = vpop.f32.mrb[0].mxu0
        %v3046 = vadd.f32 0.0, %v3045
        %v3047 = vpop.f32.mrb[0].mxu0
        %3048 = vmatprep.mubr.bf16.mxu0 0
        %3049 = vmatmul.mubr.bf16.gmra.mrb[0].mxu0 %v2990
        %v3050 = vpop.f32.mrb[0].mxu0
        %v3051 = vadd.f32 0.0, %v3050
        %v3052 = vpop.f32.mrb[0].mxu0
        %v3053 = vpop.f32.mrb[0].mxu0
        %v3054 = vadd.f32 0.0, %v3053
        %v3055 = vpop.f32.mrb[0].mxu0
        %3056 = vdwg.mxu0
        %v3057 = vadd.f32 %v2946, %v3027
        %v3058 = vadd.f32 %v2947, %v3030
        %v3059 = vadd.f32 %v2948, %v3035
        %v3060 = vadd.f32 %v2949, %v3038
        %v3061 = vadd.f32 %v2950, %v3043
        %v3062 = vadd.f32 %v2951, %v3046
        %v3063 = vadd.f32 %v2952, %v3051
        %v3064 = vadd.f32 %v2953, %v3054
        %v3066 = vsel %vm1034, %v2733, 0.0
        %v3067 = vsel %vm1935, %v2379, 0.0
        %v3068 = vsel %vm1936, %v2381, 0.0
        %v3069 = vsel %vm1937, %v2383, 0.0
        %v3070 = vsel %vm1938, %v2385, 0.0
        %v3071 = vsel %vm1939, %v2387, 0.0
        %v3072 = vsel %vm1940, %v2389, 0.0
        %v3073 = vsel %vm1941, %v2734, 0.0
        %v3074 = vsel %vm1942, %v3066, 0.0
        %v3075 = vpack.c.bf16 %v3068, %v3067
        %v3076 = vpack.c.bf16 %v3070, %v3069
        %v3077 = vpack.c.bf16 %v3072, %v3071
        %v3078 = vpack.c.bf16 %v3074, %v3073
        %v3083 = vunpack.c.l.b16 %v2357
        %v3084 = vunpack.c.l.b16 %v2358
        %v3085 = vunpack.c.l.b16 %v2359
        %v3086 = vunpack.c.l.b16 %v2360
        %v3087 = vpack.c.b16 %v3084, %v3083
        %v3088 = vpack.c.b16 %v3086, %v3085
        %v3092 = vsel %vm2432, %v3075, 0
        %v3095 = vsel %vm2432, %v3076, 0
        %v3098 = vsel %vm2432, %v3077, 0
        %v3101 = vsel %vm2432, %v3078, 0
        %3103 = vmatprep.subr.bf16.mxu0 0
        %3104 = vmatpush1.bf16.msra.mxu0 %v3087
        %3105 = vmatprep.subr.bf16.mxu0 0
        %3106 = vmatpush1.bf16.msra.mxu0 %v3088
        %3107 = vmatprep.subr.bf16.mxu0 0
        %3108 = vmatpush1.bf16.msra.mxu0 0
        %3109 = vmatprep.subr.bf16.mxu0 0
        %3110 = vmatpush1.bf16.msra.mxu0 0
        %3111 = vmatprep.subr.bf16.mxu0 0
        %3112 = vmatpush1.bf16.msra.mxu0 0
        %3113 = vmatprep.subr.bf16.mxu0 0
        %3114 = vmatpush1.bf16.msra.mxu0 0
        %3115 = vmatprep.subr.bf16.mxu0 0
        %3116 = vmatpush1.bf16.msra.mxu0 0
        %3117 = vmatprep.subr.bf16.mxu0 0
        %3118 = vmatpush1.bf16.msra.mxu0 0
        %3119 = vmatprep.subr.bf16.mxu0 0
        %3120 = vmatpush1.bf16.msra.mxu0 0
        %3121 = vmatprep.subr.bf16.mxu0 0
        %3122 = vmatpush1.bf16.msra.mxu0 0
        %3123 = vmatprep.subr.bf16.mxu0 0
        %3124 = vmatpush1.bf16.msra.mxu0 0
        %3125 = vmatprep.subr.bf16.mxu0 0
        %3126 = vmatpush1.bf16.msra.mxu0 0
        %3127 = vmatprep.subr.bf16.mxu0 0
        %3128 = vmatpush1.bf16.msra.mxu0 0
        %3129 = vmatprep.subr.bf16.mxu0 0
        %3130 = vmatpush1.bf16.msra.mxu0 0
        %3131 = vmatprep.subr.bf16.mxu0 0
        %3132 = vmatpush1.bf16.msra.mxu0 0
        %3133 = vmatprep.subr.bf16.mxu0 0
        %3134 = vmatpush1.bf16.msra.mxu0 0
        %3135 = vmatprep.mubr.bf16.mxu0 0
        %3136 = vmatmul.mubr.bf16.gmra.mrb[0].mxu0 %v3092
        %v3137 = vpop.f32.mrb[0].mxu0
        %v3138 = vadd.f32 0.0, %v3137
        %v3139 = vpop.f32.mrb[0].mxu0
        %v3140 = vpop.f32.mrb[0].mxu0
        %v3141 = vadd.f32 0.0, %v3140
        %v3142 = vpop.f32.mrb[0].mxu0
        %3143 = vmatprep.mubr.bf16.mxu0 0
        %3144 = vmatmul.mubr.bf16.gmra.mrb[0].mxu0 %v3095
        %v3145 = vpop.f32.mrb[0].mxu0
        %v3146 = vadd.f32 0.0, %v3145
        %v3147 = vpop.f32.mrb[0].mxu0
        %v3148 = vpop.f32.mrb[0].mxu0
        %v3149 = vadd.f32 0.0, %v3148
        %v3150 = vpop.f32.mrb[0].mxu0
        %3151 = vmatprep.mubr.bf16.mxu0 0
        %3152 = vmatmul.mubr.bf16.gmra.mrb[0].mxu0 %v3098
        %v3153 = vpop.f32.mrb[0].mxu0
        %v3154 = vadd.f32 0.0, %v3153
        %v3155 = vpop.f32.mrb[0].mxu0
        %v3156 = vpop.f32.mrb[0].mxu0
        %v3157 = vadd.f32 0.0, %v3156
        %v3158 = vpop.f32.mrb[0].mxu0
        %3159 = vmatprep.mubr.bf16.mxu0 0
        %3160 = vmatmul.mubr.bf16.gmra.mrb[0].mxu0 %v3101
        %v3161 = vpop.f32.mrb[0].mxu0
        %v3162 = vadd.f32 0.0, %v3161
        %v3163 = vpop.f32.mrb[0].mxu0
        %v3164 = vpop.f32.mrb[0].mxu0
        %v3165 = vadd.f32 0.0, %v3164
        %v3166 = vpop.f32.mrb[0].mxu0
        %3167 = vdwg.mxu0
        %v3168 = vadd.f32 %v3057, %v3138
        %v3169 = vadd.f32 %v3058, %v3141
        %v3170 = vadd.f32 %v3059, %v3146
        %v3171 = vadd.f32 %v3060, %v3149
        %v3172 = vadd.f32 %v3061, %v3154
        %v3173 = vadd.f32 %v3062, %v3157
        %v3174 = vadd.f32 %v3063, %v3162
        %v3175 = vadd.f32 %v3064, %v3165
        %v3176 = vsel %vm2071, %v2326, 0.0
        %v3177 = vsel %vm2072, %v2327, 0.0
        %v3178 = vsel %vm2073, %v2328, 0.0
        %v3179 = vsel %vm2074, %v2329, 0.0
        %v3180 = vsel %vm2075, %v2330, 0.0
        %v3181 = vsel %vm2076, %v2331, 0.0
        %v3182 = vsel %vm2077, %v2332, 0.0
        %v3183 = vpack.c.bf16 %v3177, %v3176
        %v3184 = vpack.c.bf16 %v3179, %v3178
        %v3185 = vpack.c.bf16 %v3181, %v3180
        %v3186 = vpack.c.bf16 0.0, %v3182
        %v3191 = vunpack.c.l.b16 %v2361
        %v3192 = vunpack.c.l.b16 %v2362
        %v3193 = vunpack.c.l.b16 %v2363
        %v3194 = vunpack.c.l.b16 %v2364
        %v3195 = vpack.c.b16 %v3192, %v3191
        %v3196 = vpack.c.b16 %v3194, %v3193
        %v3200 = vsel %vm2432, %v3183, 0
        %v3203 = vsel %vm2432, %v3184, 0
        %v3206 = vsel %vm2432, %v3185, 0
        %v3209 = vsel %vm2432, %v3186, 0
        %3211 = vmatprep.subr.bf16.mxu0 0
        %3212 = vmatpush1.bf16.msra.mxu0 %v3195
        %3213 = vmatprep.subr.bf16.mxu0 0
        %3214 = vmatpush1.bf16.msra.mxu0 %v3196
        %3215 = vmatprep.subr.bf16.mxu0 0
        %3216 = vmatpush1.bf16.msra.mxu0 0
        %3217 = vmatprep.subr.bf16.mxu0 0
        %3218 = vmatpush1.bf16.msra.mxu0 0
        %3219 = vmatprep.subr.bf16.mxu0 0
        %3220 = vmatpush1.bf16.msra.mxu0 0
        %3221 = vmatprep.subr.bf16.mxu0 0
        %3222 = vmatpush1.bf16.msra.mxu0 0
        %3223 = vmatprep.subr.bf16.mxu0 0
        %3224 = vmatpush1.bf16.msra.mxu0 0
        %3225 = vmatprep.subr.bf16.mxu0 0
        %3226 = vmatpush1.bf16.msra.mxu0 0
        %3227 = vmatprep.subr.bf16.mxu0 0
        %3228 = vmatpush1.bf16.msra.mxu0 0
        %3229 = vmatprep.subr.bf16.mxu0 0
        %3230 = vmatpush1.bf16.msra.mxu0 0
        %3231 = vmatprep.subr.bf16.mxu0 0
        %3232 = vmatpush1.bf16.msra.mxu0 0
        %3233 = vmatprep.subr.bf16.mxu0 0
        %3234 = vmatpush1.bf16.msra.mxu0 0
        %3235 = vmatprep.subr.bf16.mxu0 0
        %3236 = vmatpush1.bf16.msra.mxu0 0
        %3237 = vmatprep.subr.bf16.mxu0 0
        %3238 = vmatpush1.bf16.msra.mxu0 0
        %3239 = vmatprep.subr.bf16.mxu0 0
        %3240 = vmatpush1.bf16.msra.mxu0 0
        %3241 = vmatprep.subr.bf16.mxu0 0
        %3242 = vmatpush1.bf16.msra.mxu0 0
        %3243 = vmatprep.mubr.bf16.mxu0 0
        %3244 = vmatmul.mubr.bf16.gmra.mrb[0].mxu0 %v3200
        %v3245 = vpop.f32.mrb[0].mxu0
        %v3246 = vadd.f32 0.0, %v3245
        %v3247 = vpop.f32.mrb[0].mxu0
        %v3248 = vpop.f32.mrb[0].mxu0
        %v3249 = vadd.f32 0.0, %v3248
        %v3250 = vpop.f32.mrb[0].mxu0
        %3251 = vmatprep.mubr.bf16.mxu0 0
        %3252 = vmatmul.mubr.bf16.gmra.mrb[0].mxu0 %v3203
        %v3253 = vpop.f32.mrb[0].mxu0
        %v3254 = vadd.f32 0.0, %v3253
        %v3255 = vpop.f32.mrb[0].mxu0
        %v3256 = vpop.f32.mrb[0].mxu0
        %v3257 = vadd.f32 0.0, %v3256
        %v3258 = vpop.f32.mrb[0].mxu0
        %3259 = vmatprep.mubr.bf16.mxu0 0
        %3260 = vmatmul.mubr.bf16.gmra.mrb[0].mxu0 %v3206
        %v3261 = vpop.f32.mrb[0].mxu0
        %v3262 = vadd.f32 0.0, %v3261
        %v3263 = vpop.f32.mrb[0].mxu0
        %v3264 = vpop.f32.mrb[0].mxu0
        %v3265 = vadd.f32 0.0, %v3264
        %v3266 = vpop.f32.mrb[0].mxu0
        %3267 = vmatprep.mubr.bf16.mxu0 0
        %3268 = vmatmul.mubr.bf16.gmra.mrb[0].mxu0 %v3209
        %v3269 = vpop.f32.mrb[0].mxu0
        %v3270 = vadd.f32 0.0, %v3269
        %v3271 = vpop.f32.mrb[0].mxu0
        %v3272 = vpop.f32.mrb[0].mxu0
        %v3273 = vadd.f32 0.0, %v3272
        %v3274 = vpop.f32.mrb[0].mxu0
        %3275 = vdwg.mxu0
        %v3276 = vadd.f32 %v3168, %v3246
        %v3277 = vadd.f32 %v3169, %v3249
        %v3278 = vadd.f32 %v3170, %v3254
        %v3279 = vadd.f32 %v3171, %v3257
        %v3280 = vadd.f32 %v3172, %v3262
        %v3281 = vadd.f32 %v3173, %v3265
        %v3282 = vadd.f32 %v3174, %v3270
        %v3283 = vadd.f32 %v3175, %v3273
        %v3284 = vsel %vm2205, %v2604, 0.0
        %v3285 = vsel %vm2206, %v2606, 0.0
        %v3286 = vsel %vm2207, %v2608, 0.0
        %v3287 = vsel %vm2208, %v2610, 0.0
        %v3288 = vsel %vm2209, %v2612, 0.0
        %v3289 = vsel %vm2210, %v2614, 0.0
        %v3290 = vsel %vm2211, %v2955, 0.0
        %v3291 = vpack.c.bf16 %v3285, %v3284
        %v3292 = vpack.c.bf16 %v3287, %v3286
        %v3293 = vpack.c.bf16 %v3289, %v3288
        %v3294 = vpack.c.bf16 0.0, %v3290
        %v3299 = vunpack.c.l.b16 %v2365
        %v3300 = vunpack.c.l.b16 %v2366
        %v3301 = vunpack.c.l.b16 %v2367
        %v3302 = vunpack.c.l.b16 %v2368
        %v3303 = vpack.c.b16 %v3300, %v3299
        %v3304 = vpack.c.b16 %v3302, %v3301
        %v3308 = vsel %vm2432, %v3291, 0
        %v3311 = vsel %vm2432, %v3292, 0
        %v3314 = vsel %vm2432, %v3293, 0
        %v3317 = vsel %vm2432, %v3294, 0
        %3319 = vmatprep.subr.bf16.mxu0 0
        %3320 = vmatpush1.bf16.msra.mxu0 %v3303
        %3321 = vmatprep.subr.bf16.mxu0 0
        %3322 = vmatpush1.bf16.msra.mxu0 %v3304
        %3323 = vmatprep.subr.bf16.mxu0 0
        %3324 = vmatpush1.bf16.msra.mxu0 0
        %3325 = vmatprep.subr.bf16.mxu0 0
        %3326 = vmatpush1.bf16.msra.mxu0 0
        %3327 = vmatprep.subr.bf16.mxu0 0
        %3328 = vmatpush1.bf16.msra.mxu0 0
        %3329 = vmatprep.subr.bf16.mxu0 0
        %3330 = vmatpush1.bf16.msra.mxu0 0
        %3331 = vmatprep.subr.bf16.mxu0 0
        %3332 = vmatpush1.bf16.msra.mxu0 0
        %3333 = vmatprep.subr.bf16.mxu0 0
        %3334 = vmatpush1.bf16.msra.mxu0 0
        %3335 = vmatprep.subr.bf16.mxu0 0
        %3336 = vmatpush1.bf16.msra.mxu0 0
        %3337 = vmatprep.subr.bf16.mxu0 0
        %3338 = vmatpush1.bf16.msra.mxu0 0
        %3339 = vmatprep.subr.bf16.mxu0 0
        %3340 = vmatpush1.bf16.msra.mxu0 0
        %3341 = vmatprep.subr.bf16.mxu0 0
        %3342 = vmatpush1.bf16.msra.mxu0 0
        %3343 = vmatprep.subr.bf16.mxu0 0
        %3344 = vmatpush1.bf16.msra.mxu0 0
        %3345 = vmatprep.subr.bf16.mxu0 0
        %3346 = vmatpush1.bf16.msra.mxu0 0
        %3347 = vmatprep.subr.bf16.mxu0 0
        %3348 = vmatpush1.bf16.msra.mxu0 0
        %3349 = vmatprep.subr.bf16.mxu0 0
        %3350 = vmatpush1.bf16.msra.mxu0 0
        %3351 = vmatprep.mubr.bf16.mxu0 0
        %3352 = vmatmul.mubr.bf16.gmra.mrb[0].mxu0 %v3308
        %v3353 = vpop.f32.mrb[0].mxu0
        %v3354 = vadd.f32 0.0, %v3353
        %v3355 = vpop.f32.mrb[0].mxu0
        %v3356 = vpop.f32.mrb[0].mxu0
        %v3357 = vadd.f32 0.0, %v3356
        %v3358 = vpop.f32.mrb[0].mxu0
        %3359 = vmatprep.mubr.bf16.mxu0 0
        %3360 = vmatmul.mubr.bf16.gmra.mrb[0].mxu0 %v3311
        %v3361 = vpop.f32.mrb[0].mxu0
        %v3362 = vadd.f32 0.0, %v3361
        %v3363 = vpop.f32.mrb[0].mxu0
        %v3364 = vpop.f32.mrb[0].mxu0
        %v3365 = vadd.f32 0.0, %v3364
        %v3366 = vpop.f32.mrb[0].mxu0
        %3367 = vmatprep.mubr.bf16.mxu0 0
        %3368 = vmatmul.mubr.bf16.gmra.mrb[0].mxu0 %v3314
        %v3369 = vpop.f32.mrb[0].mxu0
        %v3370 = vadd.f32 0.0, %v3369
        %v3371 = vpop.f32.mrb[0].mxu0
        %v3372 = vpop.f32.mrb[0].mxu0
        %v3373 = vadd.f32 0.0, %v3372
        %v3374 = vpop.f32.mrb[0].mxu0
        %3375 = vmatprep.mubr.bf16.mxu0 0
        %3376 = vmatmul.mubr.bf16.gmra.mrb[0].mxu0 %v3317
        %v3377 = vpop.f32.mrb[0].mxu0
        %v3378 = vadd.f32 0.0, %v3377
        %v3379 = vpop.f32.mrb[0].mxu0
        %v3380 = vpop.f32.mrb[0].mxu0
        %v3381 = vadd.f32 0.0, %v3380
        %v3382 = vpop.f32.mrb[0].mxu0
        %3383 = vdwg.mxu0
        %v3384 = vadd.f32 %v3276, %v3354
        %v3385 = vadd.f32 %v3277, %v3357
        %v3386 = vadd.f32 %v3278, %v3362
        %v3387 = vadd.f32 %v3279, %v3365
        %v3388 = vadd.f32 %v3280, %v3370
        %v3389 = vadd.f32 %v3281, %v3373
        %v3390 = vadd.f32 %v3282, %v3378
        %v3391 = vadd.f32 %v3283, %v3381
        %v3393 = vlaneseq
        %v3394 = vshrl.u32 %v3393, 7
        %v3395 = vsub.s32 0, %v3394
        %v3396 = vrot.slane %v2369, %v3395
        %v3398 = vadd.f32 %v3384, %v3396
        %v3399 = vadd.f32 %v3385, %v3396
        %v3400 = vadd.f32 %v3386, %v3396
        %v3401 = vadd.f32 %v3387, %v3396
        %v3402 = vadd.f32 %v3388, %v3396
        %v3403 = vadd.f32 %v3389, %v3396
        %v3404 = vadd.f32 %v3390, %v3396
        %v3405 = vadd.f32 %v3391, %v3396
        %v3406 = vmax.f32 %v3398, 0.0
        %v3407 = vmax.f32 %v3399, 0.0
        %v3408 = vmax.f32 %v3400, 0.0
        %v3409 = vmax.f32 %v3401, 0.0
        %v3410 = vmax.f32 %v3402, 0.0
        %v3411 = vmax.f32 %v3403, 0.0
        %v3412 = vmax.f32 %v3404, 0.0
        %v3413 = vmax.f32 %v3405, 0.0
        %v3414 = vld [vmem:[%s10] sm:$0xf]
        %v3415 = vld [vmem:[%s10 + $0x4] sm:$0xf]
        %v3416 = vld [vmem:[%s10 + $0x8] sm:$0xf]
        %v3417 = vld [vmem:[%s10 + $0xc] sm:$0xf]
        %v3418 = vld [vmem:[%s10 + $0x10] sm:$0xf]
        %v3419 = vld [vmem:[%s10 + $0x14] sm:$0xf]
        %v3420 = vld [vmem:[%s10 + $0x18] sm:$0xf]
        %v3421 = vld [vmem:[%s10 + $0x1c] sm:$0xf]
        %v3422 = vld [vmem:[%s10 + $0x20] sm:$0xf]
        %v3423 = vld [vmem:[%s10 + $0x24] sm:$0xf]
        %v3424 = vld [vmem:[%s10 + $0x28] sm:$0xf]
        %v3425 = vld [vmem:[%s10 + $0x2c] sm:$0xf]
        %v3426 = vld [vmem:[%s10 + $0x30] sm:$0xf]
        %v3427 = vld [vmem:[%s10 + $0x34] sm:$0xf]
        %v3428 = vld [vmem:[%s10 + $0x38] sm:$0xf]
        %v3429 = vld [vmem:[%s10 + $0x3c] sm:$0xf]
        %v3430 = vld [vmem:[%s10 + $0x40] sm:$0xf]
        %v3431 = vld [vmem:[%s10 + $0x44] sm:$0xf]
        %v3432 = vld [vmem:[%s10 + $0x48] sm:$0xf]
        %v3433 = vld [vmem:[%s10 + $0x4c] sm:$0xf]
        %v3434 = vld [vmem:[%s10 + $0x50] sm:$0xf]
        %v3435 = vld [vmem:[%s10 + $0x54] sm:$0xf]
        %v3436 = vld [vmem:[%s10 + $0x58] sm:$0xf]
        %v3437 = vld [vmem:[%s10 + $0x5c] sm:$0xf]
        %v3438 = vld [vmem:[%s10 + $0x60] sm:$0xf]
        %v3439 = vld [vmem:[%s10 + $0x64] sm:$0xf]
        %v3440 = vld [vmem:[%s10 + $0x68] sm:$0xf]
        %v3441 = vld [vmem:[%s10 + $0x6c] sm:$0xf]
        %v3442 = vld [vmem:[%s10 + $0x70] sm:$0xf]
        %v3443 = vld [vmem:[%s10 + $0x74] sm:$0xf]
        %v3444 = vld [vmem:[%s10 + $0x78] sm:$0xf]
        %v3445 = vld [vmem:[%s10 + $0x7c] sm:$0xf]
        %v3446 = vld [vmem:[%s10 + $0x80] sm:$0xf]
        %v3447 = vld [vmem:[%s10 + $0x84] sm:$0xf]
        %v3448 = vld [vmem:[%s10 + $0x88] sm:$0xf]
        %v3449 = vld [vmem:[%s10 + $0x8c] sm:$0xf]
        %v3450 = vld [vmem:[%s11] sm:$0x1]
        %v3458 = vrot.slane %v3406, 7
        %v3459 = vrot.slane %v3407, 7
        %v3460 = vsel %vm1034, %v3458, %v3459
        %v3461 = vrot.slane %v3408, 7
        %v3462 = vsel %vm1034, %v3459, %v3461
        %v3463 = vrot.slane %v3409, 7
        %v3464 = vsel %vm1034, %v3461, %v3463
        %v3465 = vrot.slane %v3410, 7
        %v3466 = vsel %vm1034, %v3463, %v3465
        %v3467 = vrot.slane %v3411, 7
        %v3468 = vsel %vm1034, %v3465, %v3467
        %v3469 = vrot.slane %v3412, 7
        %v3470 = vsel %vm1034, %v3467, %v3469
        %v3478 = vsel %vm1034, 0.0, %v3458
        %v3479 = vsel %vm1084, %v3478, 0.0
        %v3480 = vsel %vm1085, %v3460, 0.0
        %v3481 = vsel %vm1086, %v3462, 0.0
        %v3482 = vsel %vm1087, %v3464, 0.0
        %v3483 = vsel %vm1088, %v3466, 0.0
        %v3484 = vsel %vm1089, %v3468, 0.0
        %v3485 = vsel %vm1090, %v3470, 0.0
        %v3486 = vpack.c.bf16 %v3479, 0.0
        %v3487 = vpack.c.bf16 %v3481, %v3480
        %v3488 = vpack.c.bf16 %v3483, %v3482
        %v3489 = vpack.c.bf16 %v3485, %v3484
        %v3490 = vsel %vm1130, %v3406, 0.0
        %v3491 = vsel %vm1131, %v3407, 0.0
        %v3492 = vsel %vm1132, %v3408, 0.0
        %v3493 = vsel %vm1133, %v3409, 0.0
        %v3494 = vsel %vm1134, %v3410, 0.0
        %v3495 = vsel %vm1135, %v3411, 0.0
        %v3496 = vsel %vm1136, %v3412, 0.0
        %v3497 = vpack.c.bf16 %v3490, 0.0
        %v3498 = vpack.c.bf16 %v3492, %v3491
        %v3499 = vpack.c.bf16 %v3494, %v3493
        %v3500 = vpack.c.bf16 %v3496, %v3495
        %v3505 = vunpack.c.l.b16 %v3418
        %v3506 = vunpack.c.l.b16 %v3419
        %v3507 = vunpack.c.l.b16 %v3420
        %v3508 = vunpack.c.l.b16 %v3421
        %v3509 = vpack.c.b16 %v3506, %v3505
        %v3510 = vpack.c.b16 %v3508, %v3507
        %v3514 = vsel %vm2432, %v3497, 0
        %v3517 = vsel %vm2432, %v3498, 0
        %v3520 = vsel %vm2432, %v3499, 0
        %v3523 = vsel %vm2432, %v3500, 0
        %3525 = vmatprep.subr.bf16.mxu0 0
        %3526 = vmatpush1.bf16.msra.mxu0 %v3509
        %3527 = vmatprep.subr.bf16.mxu0 0
        %3528 = vmatpush1.bf16.msra.mxu0 %v3510
        %3529 = vmatprep.subr.bf16.mxu0 0
        %3530 = vmatpush1.bf16.msra.mxu0 0
        %3531 = vmatprep.subr.bf16.mxu0 0
        %3532 = vmatpush1.bf16.msra.mxu0 0
        %3533 = vmatprep.subr.bf16.mxu0 0
        %3534 = vmatpush1.bf16.msra.mxu0 0
        %3535 = vmatprep.subr.bf16.mxu0 0
        %3536 = vmatpush1.bf16.msra.mxu0 0
        %3537 = vmatprep.subr.bf16.mxu0 0
        %3538 = vmatpush1.bf16.msra.mxu0 0
        %3539 = vmatprep.subr.bf16.mxu0 0
        %3540 = vmatpush1.bf16.msra.mxu0 0
        %3541 = vmatprep.subr.bf16.mxu0 0
        %3542 = vmatpush1.bf16.msra.mxu0 0
        %3543 = vmatprep.subr.bf16.mxu0 0
        %3544 = vmatpush1.bf16.msra.mxu0 0
        %3545 = vmatprep.subr.bf16.mxu0 0
        %3546 = vmatpush1.bf16.msra.mxu0 0
        %3547 = vmatprep.subr.bf16.mxu0 0
        %3548 = vmatpush1.bf16.msra.mxu0 0
        %3549 = vmatprep.subr.bf16.mxu0 0
        %3550 = vmatpush1.bf16.msra.mxu0 0
        %3551 = vmatprep.subr.bf16.mxu0 0
        %3552 = vmatpush1.bf16.msra.mxu0 0
        %3553 = vmatprep.subr.bf16.mxu0 0
        %3554 = vmatpush1.bf16.msra.mxu0 0
        %3555 = vmatprep.subr.bf16.mxu0 0
        %3556 = vmatpush1.bf16.msra.mxu0 0
        %3557 = vmatprep.mubr.bf16.mxu0 0
        %3558 = vmatmul.mubr.bf16.gmra.mrb[0].mxu0 %v3514
        %v3559 = vpop.f32.mrb[0].mxu0
        %v3560 = vadd.f32 0.0, %v3559
        %v3561 = vpop.f32.mrb[0].mxu0
        %v3562 = vpop.f32.mrb[0].mxu0
        %v3563 = vadd.f32 0.0, %v3562
        %v3564 = vpop.f32.mrb[0].mxu0
        %3565 = vmatprep.mubr.bf16.mxu0 0
        %3566 = vmatmul.mubr.bf16.gmra.mrb[0].mxu0 %v3517
        %v3567 = vpop.f32.mrb[0].mxu0
        %v3568 = vadd.f32 0.0, %v3567
        %v3569 = vpop.f32.mrb[0].mxu0
        %v3570 = vpop.f32.mrb[0].mxu0
        %v3571 = vadd.f32 0.0, %v3570
        %v3572 = vpop.f32.mrb[0].mxu0
        %3573 = vmatprep.mubr.bf16.mxu0 0
        %3574 = vmatmul.mubr.bf16.gmra.mrb[0].mxu0 %v3520
        %v3575 = vpop.f32.mrb[0].mxu0
        %v3576 = vadd.f32 0.0, %v3575
        %v3577 = vpop.f32.mrb[0].mxu0
        %v3578 = vpop.f32.mrb[0].mxu0
        %v3579 = vadd.f32 0.0, %v3578
        %v3580 = vpop.f32.mrb[0].mxu0
        %3581 = vmatprep.mubr.bf16.mxu0 0
        %3582 = vmatmul.mubr.bf16.gmra.mrb[0].mxu0 %v3523
        %v3583 = vpop.f32.mrb[0].mxu0
        %v3584 = vadd.f32 0.0, %v3583
        %v3585 = vpop.f32.mrb[0].mxu0
        %v3586 = vpop.f32.mrb[0].mxu0
        %v3587 = vadd.f32 0.0, %v3586
        %v3588 = vpop.f32.mrb[0].mxu0
        %3589 = vdwg.mxu0
        %v3594 = vunpack.c.l.b16 %v3414
        %v3595 = vunpack.c.l.b16 %v3415
        %v3596 = vunpack.c.l.b16 %v3416
        %v3597 = vunpack.c.l.b16 %v3417
        %v3598 = vpack.c.b16 %v3595, %v3594
        %v3599 = vpack.c.b16 %v3597, %v3596
        %v3603 = vsel %vm2432, %v3486, 0
        %v3606 = vsel %vm2432, %v3487, 0
        %v3609 = vsel %vm2432, %v3488, 0
        %v3612 = vsel %vm2432, %v3489, 0
        %3614 = vmatprep.subr.bf16.mxu0 0
        %3615 = vmatpush1.bf16.msra.mxu0 %v3598
        %3616 = vmatprep.subr.bf16.mxu0 0
        %3617 = vmatpush1.bf16.msra.mxu0 %v3599
        %3618 = vmatprep.subr.bf16.mxu0 0
        %3619 = vmatpush1.bf16.msra.mxu0 0
        %3620 = vmatprep.subr.bf16.mxu0 0
        %3621 = vmatpush1.bf16.msra.mxu0 0
        %3622 = vmatprep.subr.bf16.mxu0 0
        %3623 = vmatpush1.bf16.msra.mxu0 0
        %3624 = vmatprep.subr.bf16.mxu0 0
        %3625 = vmatpush1.bf16.msra.mxu0 0
        %3626 = vmatprep.subr.bf16.mxu0 0
        %3627 = vmatpush1.bf16.msra.mxu0 0
        %3628 = vmatprep.subr.bf16.mxu0 0
        %3629 = vmatpush1.bf16.msra.mxu0 0
        %3630 = vmatprep.subr.bf16.mxu0 0
        %3631 = vmatpush1.bf16.msra.mxu0 0
        %3632 = vmatprep.subr.bf16.mxu0 0
        %3633 = vmatpush1.bf16.msra.mxu0 0
        %3634 = vmatprep.subr.bf16.mxu0 0
        %3635 = vmatpush1.bf16.msra.mxu0 0
        %3636 = vmatprep.subr.bf16.mxu0 0
        %3637 = vmatpush1.bf16.msra.mxu0 0
        %3638 = vmatprep.subr.bf16.mxu0 0
        %3639 = vmatpush1.bf16.msra.mxu0 0
        %3640 = vmatprep.subr.bf16.mxu0 0
        %3641 = vmatpush1.bf16.msra.mxu0 0
        %3642 = vmatprep.subr.bf16.mxu0 0
        %3643 = vmatpush1.bf16.msra.mxu0 0
        %3644 = vmatprep.subr.bf16.mxu0 0
        %3645 = vmatpush1.bf16.msra.mxu0 0
        %3646 = vmatprep.mubr.bf16.mxu0 0
        %3647 = vmatmul.mubr.bf16.gmra.mrb[0].mxu0 %v3603
        %v3648 = vpop.f32.mrb[0].mxu0
        %v3649 = vadd.f32 %v3560, %v3648
        %v3650 = vpop.f32.mrb[0].mxu0
        %v3651 = vpop.f32.mrb[0].mxu0
        %v3652 = vadd.f32 %v3563, %v3651
        %v3653 = vpop.f32.mrb[0].mxu0
        %3654 = vmatprep.mubr.bf16.mxu0 0
        %3655 = vmatmul.mubr.bf16.gmra.mrb[0].mxu0 %v3606
        %v3656 = vpop.f32.mrb[0].mxu0
        %v3657 = vadd.f32 %v3568, %v3656
        %v3658 = vpop.f32.mrb[0].mxu0
        %v3659 = vpop.f32.mrb[0].mxu0
        %v3660 = vadd.f32 %v3571, %v3659
        %v3661 = vpop.f32.mrb[0].mxu0
        %3662 = vmatprep.mubr.bf16.mxu0 0
        %3663 = vmatmul.mubr.bf16.gmra.mrb[0].mxu0 %v3609
        %v3664 = vpop.f32.mrb[0].mxu0
        %v3665 = vadd.f32 %v3576, %v3664
        %v3666 = vpop.f32.mrb[0].mxu0
        %v3667 = vpop.f32.mrb[0].mxu0
        %v3668 = vadd.f32 %v3579, %v3667
        %v3669 = vpop.f32.mrb[0].mxu0
        %3670 = vmatprep.mubr.bf16.mxu0 0
        %3671 = vmatmul.mubr.bf16.gmra.mrb[0].mxu0 %v3612
        %v3672 = vpop.f32.mrb[0].mxu0
        %v3673 = vadd.f32 %v3584, %v3672
        %v3674 = vpop.f32.mrb[0].mxu0
        %v3675 = vpop.f32.mrb[0].mxu0
        %v3676 = vadd.f32 %v3587, %v3675
        %v3677 = vpop.f32.mrb[0].mxu0
        %3678 = vdwg.mxu0
        %v3680 = vrot.slane %v3406, 1
        %v3681 = vrot.slane %v3407, 1
        %v3682 = vsel %vm1311, %v3680, %v3681
        %v3683 = vrot.slane %v3408, 1
        %v3684 = vsel %vm1311, %v3681, %v3683
        %v3685 = vrot.slane %v3409, 1
        %v3686 = vsel %vm1311, %v3683, %v3685
        %v3687 = vrot.slane %v3410, 1
        %v3688 = vsel %vm1311, %v3685, %v3687
        %v3689 = vrot.slane %v3411, 1
        %v3690 = vsel %vm1311, %v3687, %v3689
        %v3691 = vrot.slane %v3412, 1
        %v3692 = vsel %vm1311, %v3689, %v3691
        %v3693 = vrot.slane %v3413, 1
        %v3694 = vsel %vm1311, %v3691, %v3693
        %v3703 = vsel %vm1311, 0.0, %v3680
        %v3704 = vsel %vm1368, %v3703, 0.0
        %v3705 = vsel %vm1369, %v3682, 0.0
        %v3706 = vsel %vm1370, %v3684, 0.0
        %v3707 = vsel %vm1371, %v3686, 0.0
        %v3708 = vsel %vm1372, %v3688, 0.0
        %v3709 = vsel %vm1373, %v3690, 0.0
        %v3710 = vsel %vm1374, %v3692, 0.0
        %v3711 = vsel %vm1375, %v3694, 0.0
        %v3712 = vpack.c.bf16 %v3705, %v3704
        %v3713 = vpack.c.bf16 %v3707, %v3706
        %v3714 = vpack.c.bf16 %v3709, %v3708
        %v3715 = vpack.c.bf16 %v3711, %v3710
        %v3720 = vunpack.c.l.b16 %v3422
        %v3721 = vunpack.c.l.b16 %v3423
        %v3722 = vunpack.c.l.b16 %v3424
        %v3723 = vunpack.c.l.b16 %v3425
        %v3724 = vpack.c.b16 %v3721, %v3720
        %v3725 = vpack.c.b16 %v3723, %v3722
        %v3729 = vsel %vm2432, %v3712, 0
        %v3732 = vsel %vm2432, %v3713, 0
        %v3735 = vsel %vm2432, %v3714, 0
        %v3738 = vsel %vm2432, %v3715, 0
        %3740 = vmatprep.subr.bf16.mxu0 0
        %3741 = vmatpush1.bf16.msra.mxu0 %v3724
        %3742 = vmatprep.subr.bf16.mxu0 0
        %3743 = vmatpush1.bf16.msra.mxu0 %v3725
        %3744 = vmatprep.subr.bf16.mxu0 0
        %3745 = vmatpush1.bf16.msra.mxu0 0
        %3746 = vmatprep.subr.bf16.mxu0 0
        %3747 = vmatpush1.bf16.msra.mxu0 0
        %3748 = vmatprep.subr.bf16.mxu0 0
        %3749 = vmatpush1.bf16.msra.mxu0 0
        %3750 = vmatprep.subr.bf16.mxu0 0
        %3751 = vmatpush1.bf16.msra.mxu0 0
        %3752 = vmatprep.subr.bf16.mxu0 0
        %3753 = vmatpush1.bf16.msra.mxu0 0
        %3754 = vmatprep.subr.bf16.mxu0 0
        %3755 = vmatpush1.bf16.msra.mxu0 0
        %3756 = vmatprep.subr.bf16.mxu0 0
        %3757 = vmatpush1.bf16.msra.mxu0 0
        %3758 = vmatprep.subr.bf16.mxu0 0
        %3759 = vmatpush1.bf16.msra.mxu0 0
        %3760 = vmatprep.subr.bf16.mxu0 0
        %3761 = vmatpush1.bf16.msra.mxu0 0
        %3762 = vmatprep.subr.bf16.mxu0 0
        %3763 = vmatpush1.bf16.msra.mxu0 0
        %3764 = vmatprep.subr.bf16.mxu0 0
        %3765 = vmatpush1.bf16.msra.mxu0 0
        %3766 = vmatprep.subr.bf16.mxu0 0
        %3767 = vmatpush1.bf16.msra.mxu0 0
        %3768 = vmatprep.subr.bf16.mxu0 0
        %3769 = vmatpush1.bf16.msra.mxu0 0
        %3770 = vmatprep.subr.bf16.mxu0 0
        %3771 = vmatpush1.bf16.msra.mxu0 0
        %3772 = vmatprep.mubr.bf16.mxu0 0
        %3773 = vmatmul.mubr.bf16.gmra.mrb[0].mxu0 %v3729
        %v3774 = vpop.f32.mrb[0].mxu0
        %v3775 = vadd.f32 0.0, %v3774
        %v3776 = vpop.f32.mrb[0].mxu0
        %v3777 = vpop.f32.mrb[0].mxu0
        %v3778 = vadd.f32 0.0, %v3777
        %v3779 = vpop.f32.mrb[0].mxu0
        %3780 = vmatprep.mubr.bf16.mxu0 0
        %3781 = vmatmul.mubr.bf16.gmra.mrb[0].mxu0 %v3732
        %v3782 = vpop.f32.mrb[0].mxu0
        %v3783 = vadd.f32 0.0, %v3782
        %v3784 = vpop.f32.mrb[0].mxu0
        %v3785 = vpop.f32.mrb[0].mxu0
        %v3786 = vadd.f32 0.0, %v3785
        %v3787 = vpop.f32.mrb[0].mxu0
        %3788 = vmatprep.mubr.bf16.mxu0 0
        %3789 = vmatmul.mubr.bf16.gmra.mrb[0].mxu0 %v3735
        %v3790 = vpop.f32.mrb[0].mxu0
        %v3791 = vadd.f32 0.0, %v3790
        %v3792 = vpop.f32.mrb[0].mxu0
        %v3793 = vpop.f32.mrb[0].mxu0
        %v3794 = vadd.f32 0.0, %v3793
        %v3795 = vpop.f32.mrb[0].mxu0
        %3796 = vmatprep.mubr.bf16.mxu0 0
        %3797 = vmatmul.mubr.bf16.gmra.mrb[0].mxu0 %v3738
        %v3798 = vpop.f32.mrb[0].mxu0
        %v3799 = vadd.f32 0.0, %v3798
        %v3800 = vpop.f32.mrb[0].mxu0
        %v3801 = vpop.f32.mrb[0].mxu0
        %v3802 = vadd.f32 0.0, %v3801
        %v3803 = vpop.f32.mrb[0].mxu0
        %3804 = vdwg.mxu0
        %v3805 = vadd.f32 %v3649, %v3775
        %v3806 = vadd.f32 %v3652, %v3778
        %v3807 = vadd.f32 %v3657, %v3783
        %v3808 = vadd.f32 %v3660, %v3786
        %v3809 = vadd.f32 %v3665, %v3791
        %v3810 = vadd.f32 %v3668, %v3794
        %v3811 = vadd.f32 %v3673, %v3799
        %v3812 = vadd.f32 %v3676, %v3802
        %v3813 = vrot.slane %v3413, 7
        %v3814 = vsel %vm1034, %v3469, %v3813
        %v3816 = vsel %vm1511, %v3478, 0.0
        %v3817 = vsel %vm1512, %v3460, 0.0
        %v3818 = vsel %vm1513, %v3462, 0.0
        %v3819 = vsel %vm1514, %v3464, 0.0
        %v3820 = vsel %vm1515, %v3466, 0.0
        %v3821 = vsel %vm1516, %v3468, 0.0
        %v3822 = vsel %vm1517, %v3470, 0.0
        %v3823 = vsel %vm1518, %v3814, 0.0
        %v3824 = vpack.c.bf16 %v3817, %v3816
        %v3825 = vpack.c.bf16 %v3819, %v3818
        %v3826 = vpack.c.bf16 %v3821, %v3820
        %v3827 = vpack.c.bf16 %v3823, %v3822
        %v3832 = vunpack.c.l.b16 %v3426
        %v3833 = vunpack.c.l.b16 %v3427
        %v3834 = vunpack.c.l.b16 %v3428
        %v3835 = vunpack.c.l.b16 %v3429
        %v3836 = vpack.c.b16 %v3833, %v3832
        %v3837 = vpack.c.b16 %v3835, %v3834
        %v3841 = vsel %vm2432, %v3824, 0
        %v3844 = vsel %vm2432, %v3825, 0
        %v3847 = vsel %vm2432, %v3826, 0
        %v3850 = vsel %vm2432, %v3827, 0
        %3852 = vmatprep.subr.bf16.mxu0 0
        %3853 = vmatpush1.bf16.msra.mxu0 %v3836
        %3854 = vmatprep.subr.bf16.mxu0 0
        %3855 = vmatpush1.bf16.msra.mxu0 %v3837
        %3856 = vmatprep.subr.bf16.mxu0 0
        %3857 = vmatpush1.bf16.msra.mxu0 0
        %3858 = vmatprep.subr.bf16.mxu0 0
        %3859 = vmatpush1.bf16.msra.mxu0 0
        %3860 = vmatprep.subr.bf16.mxu0 0
        %3861 = vmatpush1.bf16.msra.mxu0 0
        %3862 = vmatprep.subr.bf16.mxu0 0
        %3863 = vmatpush1.bf16.msra.mxu0 0
        %3864 = vmatprep.subr.bf16.mxu0 0
        %3865 = vmatpush1.bf16.msra.mxu0 0
        %3866 = vmatprep.subr.bf16.mxu0 0
        %3867 = vmatpush1.bf16.msra.mxu0 0
        %3868 = vmatprep.subr.bf16.mxu0 0
        %3869 = vmatpush1.bf16.msra.mxu0 0
        %3870 = vmatprep.subr.bf16.mxu0 0
        %3871 = vmatpush1.bf16.msra.mxu0 0
        %3872 = vmatprep.subr.bf16.mxu0 0
        %3873 = vmatpush1.bf16.msra.mxu0 0
        %3874 = vmatprep.subr.bf16.mxu0 0
        %3875 = vmatpush1.bf16.msra.mxu0 0
        %3876 = vmatprep.subr.bf16.mxu0 0
        %3877 = vmatpush1.bf16.msra.mxu0 0
        %3878 = vmatprep.subr.bf16.mxu0 0
        %3879 = vmatpush1.bf16.msra.mxu0 0
        %3880 = vmatprep.subr.bf16.mxu0 0
        %3881 = vmatpush1.bf16.msra.mxu0 0
        %3882 = vmatprep.subr.bf16.mxu0 0
        %3883 = vmatpush1.bf16.msra.mxu0 0
        %3884 = vmatprep.mubr.bf16.mxu0 0
        %3885 = vmatmul.mubr.bf16.gmra.mrb[0].mxu0 %v3841
        %v3886 = vpop.f32.mrb[0].mxu0
        %v3887 = vadd.f32 0.0, %v3886
        %v3888 = vpop.f32.mrb[0].mxu0
        %v3889 = vpop.f32.mrb[0].mxu0
        %v3890 = vadd.f32 0.0, %v3889
        %v3891 = vpop.f32.mrb[0].mxu0
        %3892 = vmatprep.mubr.bf16.mxu0 0
        %3893 = vmatmul.mubr.bf16.gmra.mrb[0].mxu0 %v3844
        %v3894 = vpop.f32.mrb[0].mxu0
        %v3895 = vadd.f32 0.0, %v3894
        %v3896 = vpop.f32.mrb[0].mxu0
        %v3897 = vpop.f32.mrb[0].mxu0
        %v3898 = vadd.f32 0.0, %v3897
        %v3899 = vpop.f32.mrb[0].mxu0
        %3900 = vmatprep.mubr.bf16.mxu0 0
        %3901 = vmatmul.mubr.bf16.gmra.mrb[0].mxu0 %v3847
        %v3902 = vpop.f32.mrb[0].mxu0
        %v3903 = vadd.f32 0.0, %v3902
        %v3904 = vpop.f32.mrb[0].mxu0
        %v3905 = vpop.f32.mrb[0].mxu0
        %v3906 = vadd.f32 0.0, %v3905
        %v3907 = vpop.f32.mrb[0].mxu0
        %3908 = vmatprep.mubr.bf16.mxu0 0
        %3909 = vmatmul.mubr.bf16.gmra.mrb[0].mxu0 %v3850
        %v3910 = vpop.f32.mrb[0].mxu0
        %v3911 = vadd.f32 0.0, %v3910
        %v3912 = vpop.f32.mrb[0].mxu0
        %v3913 = vpop.f32.mrb[0].mxu0
        %v3914 = vadd.f32 0.0, %v3913
        %v3915 = vpop.f32.mrb[0].mxu0
        %3916 = vdwg.mxu0
        %v3917 = vadd.f32 %v3805, %v3887
        %v3918 = vadd.f32 %v3806, %v3890
        %v3919 = vadd.f32 %v3807, %v3895
        %v3920 = vadd.f32 %v3808, %v3898
        %v3921 = vadd.f32 %v3809, %v3903
        %v3922 = vadd.f32 %v3810, %v3906
        %v3923 = vadd.f32 %v3811, %v3911
        %v3924 = vadd.f32 %v3812, %v3914
        %v3925 = vsel %vm1651, %v3406, 0.0
        %v3926 = vsel %vm1652, %v3407, 0.0
        %v3927 = vsel %vm1653, %v3408, 0.0
        %v3928 = vsel %vm1654, %v3409, 0.0
        %v3929 = vsel %vm1655, %v3410, 0.0
        %v3930 = vsel %vm1656, %v3411, 0.0
        %v3931 = vsel %vm1657, %v3412, 0.0
        %v3932 = vsel %vm1658, %v3413, 0.0
        %v3933 = vpack.c.bf16 %v3926, %v3925
        %v3934 = vpack.c.bf16 %v3928, %v3927
        %v3935 = vpack.c.bf16 %v3930, %v3929
        %v3936 = vpack.c.bf16 %v3932, %v3931
        %v3941 = vunpack.c.l.b16 %v3430
        %v3942 = vunpack.c.l.b16 %v3431
        %v3943 = vunpack.c.l.b16 %v3432
        %v3944 = vunpack.c.l.b16 %v3433
        %v3945 = vpack.c.b16 %v3942, %v3941
        %v3946 = vpack.c.b16 %v3944, %v3943
        %v3950 = vsel %vm2432, %v3933, 0
        %v3953 = vsel %vm2432, %v3934, 0
        %v3956 = vsel %vm2432, %v3935, 0
        %v3959 = vsel %vm2432, %v3936, 0
        %3961 = vmatprep.subr.bf16.mxu0 0
        %3962 = vmatpush1.bf16.msra.mxu0 %v3945
        %3963 = vmatprep.subr.bf16.mxu0 0
        %3964 = vmatpush1.bf16.msra.mxu0 %v3946
        %3965 = vmatprep.subr.bf16.mxu0 0
        %3966 = vmatpush1.bf16.msra.mxu0 0
        %3967 = vmatprep.subr.bf16.mxu0 0
        %3968 = vmatpush1.bf16.msra.mxu0 0
        %3969 = vmatprep.subr.bf16.mxu0 0
        %3970 = vmatpush1.bf16.msra.mxu0 0
        %3971 = vmatprep.subr.bf16.mxu0 0
        %3972 = vmatpush1.bf16.msra.mxu0 0
        %3973 = vmatprep.subr.bf16.mxu0 0
        %3974 = vmatpush1.bf16.msra.mxu0 0
        %3975 = vmatprep.subr.bf16.mxu0 0
        %3976 = vmatpush1.bf16.msra.mxu0 0
        %3977 = vmatprep.subr.bf16.mxu0 0
        %3978 = vmatpush1.bf16.msra.mxu0 0
        %3979 = vmatprep.subr.bf16.mxu0 0
        %3980 = vmatpush1.bf16.msra.mxu0 0
        %3981 = vmatprep.subr.bf16.mxu0 0
        %3982 = vmatpush1.bf16.msra.mxu0 0
        %3983 = vmatprep.subr.bf16.mxu0 0
        %3984 = vmatpush1.bf16.msra.mxu0 0
        %3985 = vmatprep.subr.bf16.mxu0 0
        %3986 = vmatpush1.bf16.msra.mxu0 0
        %3987 = vmatprep.subr.bf16.mxu0 0
        %3988 = vmatpush1.bf16.msra.mxu0 0
        %3989 = vmatprep.subr.bf16.mxu0 0
        %3990 = vmatpush1.bf16.msra.mxu0 0
        %3991 = vmatprep.subr.bf16.mxu0 0
        %3992 = vmatpush1.bf16.msra.mxu0 0
        %3993 = vmatprep.mubr.bf16.mxu0 0
        %3994 = vmatmul.mubr.bf16.gmra.mrb[0].mxu0 %v3950
        %v3995 = vpop.f32.mrb[0].mxu0
        %v3996 = vadd.f32 0.0, %v3995
        %v3997 = vpop.f32.mrb[0].mxu0
        %v3998 = vpop.f32.mrb[0].mxu0
        %v3999 = vadd.f32 0.0, %v3998
        %v4000 = vpop.f32.mrb[0].mxu0
        %4001 = vmatprep.mubr.bf16.mxu0 0
        %4002 = vmatmul.mubr.bf16.gmra.mrb[0].mxu0 %v3953
        %v4003 = vpop.f32.mrb[0].mxu0
        %v4004 = vadd.f32 0.0, %v4003
        %v4005 = vpop.f32.mrb[0].mxu0
        %v4006 = vpop.f32.mrb[0].mxu0
        %v4007 = vadd.f32 0.0, %v4006
        %v4008 = vpop.f32.mrb[0].mxu0
        %4009 = vmatprep.mubr.bf16.mxu0 0
        %4010 = vmatmul.mubr.bf16.gmra.mrb[0].mxu0 %v3956
        %v4011 = vpop.f32.mrb[0].mxu0
        %v4012 = vadd.f32 0.0, %v4011
        %v4013 = vpop.f32.mrb[0].mxu0
        %v4014 = vpop.f32.mrb[0].mxu0
        %v4015 = vadd.f32 0.0, %v4014
        %v4016 = vpop.f32.mrb[0].mxu0
        %4017 = vmatprep.mubr.bf16.mxu0 0
        %4018 = vmatmul.mubr.bf16.gmra.mrb[0].mxu0 %v3959
        %v4019 = vpop.f32.mrb[0].mxu0
        %v4020 = vadd.f32 0.0, %v4019
        %v4021 = vpop.f32.mrb[0].mxu0
        %v4022 = vpop.f32.mrb[0].mxu0
        %v4023 = vadd.f32 0.0, %v4022
        %v4024 = vpop.f32.mrb[0].mxu0
        %4025 = vdwg.mxu0
        %v4026 = vadd.f32 %v3917, %v3996
        %v4027 = vadd.f32 %v3918, %v3999
        %v4028 = vadd.f32 %v3919, %v4004
        %v4029 = vadd.f32 %v3920, %v4007
        %v4030 = vadd.f32 %v3921, %v4012
        %v4031 = vadd.f32 %v3922, %v4015
        %v4032 = vadd.f32 %v3923, %v4020
        %v4033 = vadd.f32 %v3924, %v4023
        %v4035 = vsel %vm1311, %v3693, 0.0
        %v4036 = vsel %vm1793, %v3682, 0.0
        %v4037 = vsel %vm1794, %v3684, 0.0
        %v4038 = vsel %vm1795, %v3686, 0.0
        %v4039 = vsel %vm1796, %v3688, 0.0
        %v4040 = vsel %vm1797, %v3690, 0.0
        %v4041 = vsel %vm1798, %v3692, 0.0
        %v4042 = vsel %vm1799, %v3694, 0.0
        %v4043 = vsel %vm1800, %v4035, 0.0
        %v4044 = vpack.c.bf16 %v4037, %v4036
        %v4045 = vpack.c.bf16 %v4039, %v4038
        %v4046 = vpack.c.bf16 %v4041, %v4040
        %v4047 = vpack.c.bf16 %v4043, %v4042
        %v4052 = vunpack.c.l.b16 %v3434
        %v4053 = vunpack.c.l.b16 %v3435
        %v4054 = vunpack.c.l.b16 %v3436
        %v4055 = vunpack.c.l.b16 %v3437
        %v4056 = vpack.c.b16 %v4053, %v4052
        %v4057 = vpack.c.b16 %v4055, %v4054
        %v4061 = vsel %vm2432, %v4044, 0
        %v4064 = vsel %vm2432, %v4045, 0
        %v4067 = vsel %vm2432, %v4046, 0
        %v4070 = vsel %vm2432, %v4047, 0
        %4072 = vmatprep.subr.bf16.mxu0 0
        %4073 = vmatpush1.bf16.msra.mxu0 %v4056
        %4074 = vmatprep.subr.bf16.mxu0 0
        %4075 = vmatpush1.bf16.msra.mxu0 %v4057
        %4076 = vmatprep.subr.bf16.mxu0 0
        %4077 = vmatpush1.bf16.msra.mxu0 0
        %4078 = vmatprep.subr.bf16.mxu0 0
        %4079 = vmatpush1.bf16.msra.mxu0 0
        %4080 = vmatprep.subr.bf16.mxu0 0
        %4081 = vmatpush1.bf16.msra.mxu0 0
        %4082 = vmatprep.subr.bf16.mxu0 0
        %4083 = vmatpush1.bf16.msra.mxu0 0
        %4084 = vmatprep.subr.bf16.mxu0 0
        %4085 = vmatpush1.bf16.msra.mxu0 0
        %4086 = vmatprep.subr.bf16.mxu0 0
        %4087 = vmatpush1.bf16.msra.mxu0 0
        %4088 = vmatprep.subr.bf16.mxu0 0
        %4089 = vmatpush1.bf16.msra.mxu0 0
        %4090 = vmatprep.subr.bf16.mxu0 0
        %4091 = vmatpush1.bf16.msra.mxu0 0
        %4092 = vmatprep.subr.bf16.mxu0 0
        %4093 = vmatpush1.bf16.msra.mxu0 0
        %4094 = vmatprep.subr.bf16.mxu0 0
        %4095 = vmatpush1.bf16.msra.mxu0 0
        %4096 = vmatprep.subr.bf16.mxu0 0
        %4097 = vmatpush1.bf16.msra.mxu0 0
        %4098 = vmatprep.subr.bf16.mxu0 0
        %4099 = vmatpush1.bf16.msra.mxu0 0
        %4100 = vmatprep.subr.bf16.mxu0 0
        %4101 = vmatpush1.bf16.msra.mxu0 0
        %4102 = vmatprep.subr.bf16.mxu0 0
        %4103 = vmatpush1.bf16.msra.mxu0 0
        %4104 = vmatprep.mubr.bf16.mxu0 0
        %4105 = vmatmul.mubr.bf16.gmra.mrb[0].mxu0 %v4061
        %v4106 = vpop.f32.mrb[0].mxu0
        %v4107 = vadd.f32 0.0, %v4106
        %v4108 = vpop.f32.mrb[0].mxu0
        %v4109 = vpop.f32.mrb[0].mxu0
        %v4110 = vadd.f32 0.0, %v4109
        %v4111 = vpop.f32.mrb[0].mxu0
        %4112 = vmatprep.mubr.bf16.mxu0 0
        %4113 = vmatmul.mubr.bf16.gmra.mrb[0].mxu0 %v4064
        %v4114 = vpop.f32.mrb[0].mxu0
        %v4115 = vadd.f32 0.0, %v4114
        %v4116 = vpop.f32.mrb[0].mxu0
        %v4117 = vpop.f32.mrb[0].mxu0
        %v4118 = vadd.f32 0.0, %v4117
        %v4119 = vpop.f32.mrb[0].mxu0
        %4120 = vmatprep.mubr.bf16.mxu0 0
        %4121 = vmatmul.mubr.bf16.gmra.mrb[0].mxu0 %v4067
        %v4122 = vpop.f32.mrb[0].mxu0
        %v4123 = vadd.f32 0.0, %v4122
        %v4124 = vpop.f32.mrb[0].mxu0
        %v4125 = vpop.f32.mrb[0].mxu0
        %v4126 = vadd.f32 0.0, %v4125
        %v4127 = vpop.f32.mrb[0].mxu0
        %4128 = vmatprep.mubr.bf16.mxu0 0
        %4129 = vmatmul.mubr.bf16.gmra.mrb[0].mxu0 %v4070
        %v4130 = vpop.f32.mrb[0].mxu0
        %v4131 = vadd.f32 0.0, %v4130
        %v4132 = vpop.f32.mrb[0].mxu0
        %v4133 = vpop.f32.mrb[0].mxu0
        %v4134 = vadd.f32 0.0, %v4133
        %v4135 = vpop.f32.mrb[0].mxu0
        %4136 = vdwg.mxu0
        %v4137 = vadd.f32 %v4026, %v4107
        %v4138 = vadd.f32 %v4027, %v4110
        %v4139 = vadd.f32 %v4028, %v4115
        %v4140 = vadd.f32 %v4029, %v4118
        %v4141 = vadd.f32 %v4030, %v4123
        %v4142 = vadd.f32 %v4031, %v4126
        %v4143 = vadd.f32 %v4032, %v4131
        %v4144 = vadd.f32 %v4033, %v4134
        %v4146 = vsel %vm1034, %v3813, 0.0
        %v4147 = vsel %vm1935, %v3460, 0.0
        %v4148 = vsel %vm1936, %v3462, 0.0
        %v4149 = vsel %vm1937, %v3464, 0.0
        %v4150 = vsel %vm1938, %v3466, 0.0
        %v4151 = vsel %vm1939, %v3468, 0.0
        %v4152 = vsel %vm1940, %v3470, 0.0
        %v4153 = vsel %vm1941, %v3814, 0.0
        %v4154 = vsel %vm1942, %v4146, 0.0
        %v4155 = vpack.c.bf16 %v4148, %v4147
        %v4156 = vpack.c.bf16 %v4150, %v4149
        %v4157 = vpack.c.bf16 %v4152, %v4151
        %v4158 = vpack.c.bf16 %v4154, %v4153
        %v4163 = vunpack.c.l.b16 %v3438
        %v4164 = vunpack.c.l.b16 %v3439
        %v4165 = vunpack.c.l.b16 %v3440
        %v4166 = vunpack.c.l.b16 %v3441
        %v4167 = vpack.c.b16 %v4164, %v4163
        %v4168 = vpack.c.b16 %v4166, %v4165
        %v4172 = vsel %vm2432, %v4155, 0
        %v4175 = vsel %vm2432, %v4156, 0
        %v4178 = vsel %vm2432, %v4157, 0
        %v4181 = vsel %vm2432, %v4158, 0
        %4183 = vmatprep.subr.bf16.mxu0 0
        %4184 = vmatpush1.bf16.msra.mxu0 %v4167
        %4185 = vmatprep.subr.bf16.mxu0 0
        %4186 = vmatpush1.bf16.msra.mxu0 %v4168
        %4187 = vmatprep.subr.bf16.mxu0 0
        %4188 = vmatpush1.bf16.msra.mxu0 0
        %4189 = vmatprep.subr.bf16.mxu0 0
        %4190 = vmatpush1.bf16.msra.mxu0 0
        %4191 = vmatprep.subr.bf16.mxu0 0
        %4192 = vmatpush1.bf16.msra.mxu0 0
        %4193 = vmatprep.subr.bf16.mxu0 0
        %4194 = vmatpush1.bf16.msra.mxu0 0
        %4195 = vmatprep.subr.bf16.mxu0 0
        %4196 = vmatpush1.bf16.msra.mxu0 0
        %4197 = vmatprep.subr.bf16.mxu0 0
        %4198 = vmatpush1.bf16.msra.mxu0 0
        %4199 = vmatprep.subr.bf16.mxu0 0
        %4200 = vmatpush1.bf16.msra.mxu0 0
        %4201 = vmatprep.subr.bf16.mxu0 0
        %4202 = vmatpush1.bf16.msra.mxu0 0
        %4203 = vmatprep.subr.bf16.mxu0 0
        %4204 = vmatpush1.bf16.msra.mxu0 0
        %4205 = vmatprep.subr.bf16.mxu0 0
        %4206 = vmatpush1.bf16.msra.mxu0 0
        %4207 = vmatprep.subr.bf16.mxu0 0
        %4208 = vmatpush1.bf16.msra.mxu0 0
        %4209 = vmatprep.subr.bf16.mxu0 0
        %4210 = vmatpush1.bf16.msra.mxu0 0
        %4211 = vmatprep.subr.bf16.mxu0 0
        %4212 = vmatpush1.bf16.msra.mxu0 0
        %4213 = vmatprep.subr.bf16.mxu0 0
        %4214 = vmatpush1.bf16.msra.mxu0 0
        %4215 = vmatprep.mubr.bf16.mxu0 0
        %4216 = vmatmul.mubr.bf16.gmra.mrb[0].mxu0 %v4172
        %v4217 = vpop.f32.mrb[0].mxu0
        %v4218 = vadd.f32 0.0, %v4217
        %v4219 = vpop.f32.mrb[0].mxu0
        %v4220 = vpop.f32.mrb[0].mxu0
        %v4221 = vadd.f32 0.0, %v4220
        %v4222 = vpop.f32.mrb[0].mxu0
        %4223 = vmatprep.mubr.bf16.mxu0 0
        %4224 = vmatmul.mubr.bf16.gmra.mrb[0].mxu0 %v4175
        %v4225 = vpop.f32.mrb[0].mxu0
        %v4226 = vadd.f32 0.0, %v4225
        %v4227 = vpop.f32.mrb[0].mxu0
        %v4228 = vpop.f32.mrb[0].mxu0
        %v4229 = vadd.f32 0.0, %v4228
        %v4230 = vpop.f32.mrb[0].mxu0
        %4231 = vmatprep.mubr.bf16.mxu0 0
        %4232 = vmatmul.mubr.bf16.gmra.mrb[0].mxu0 %v4178
        %v4233 = vpop.f32.mrb[0].mxu0
        %v4234 = vadd.f32 0.0, %v4233
        %v4235 = vpop.f32.mrb[0].mxu0
        %v4236 = vpop.f32.mrb[0].mxu0
        %v4237 = vadd.f32 0.0, %v4236
        %v4238 = vpop.f32.mrb[0].mxu0
        %4239 = vmatprep.mubr.bf16.mxu0 0
        %4240 = vmatmul.mubr.bf16.gmra.mrb[0].mxu0 %v4181
        %v4241 = vpop.f32.mrb[0].mxu0
        %v4242 = vadd.f32 0.0, %v4241
        %v4243 = vpop.f32.mrb[0].mxu0
        %v4244 = vpop.f32.mrb[0].mxu0
        %v4245 = vadd.f32 0.0, %v4244
        %v4246 = vpop.f32.mrb[0].mxu0
        %4247 = vdwg.mxu0
        %v4248 = vadd.f32 %v4137, %v4218
        %v4249 = vadd.f32 %v4138, %v4221
        %v4250 = vadd.f32 %v4139, %v4226
        %v4251 = vadd.f32 %v4140, %v4229
        %v4252 = vadd.f32 %v4141, %v4234
        %v4253 = vadd.f32 %v4142, %v4237
        %v4254 = vadd.f32 %v4143, %v4242
        %v4255 = vadd.f32 %v4144, %v4245
        %v4256 = vsel %vm2071, %v3407, 0.0
        %v4257 = vsel %vm2072, %v3408, 0.0
        %v4258 = vsel %vm2073, %v3409, 0.0
        %v4259 = vsel %vm2074, %v3410, 0.0
        %v4260 = vsel %vm2075, %v3411, 0.0
        %v4261 = vsel %vm2076, %v3412, 0.0
        %v4262 = vsel %vm2077, %v3413, 0.0
        %v4263 = vpack.c.bf16 %v4257, %v4256
        %v4264 = vpack.c.bf16 %v4259, %v4258
        %v4265 = vpack.c.bf16 %v4261, %v4260
        %v4266 = vpack.c.bf16 0.0, %v4262
        %v4271 = vunpack.c.l.b16 %v3442
        %v4272 = vunpack.c.l.b16 %v3443
        %v4273 = vunpack.c.l.b16 %v3444
        %v4274 = vunpack.c.l.b16 %v3445
        %v4275 = vpack.c.b16 %v4272, %v4271
        %v4276 = vpack.c.b16 %v4274, %v4273
        %v4280 = vsel %vm2432, %v4263, 0
        %v4283 = vsel %vm2432, %v4264, 0
        %v4286 = vsel %vm2432, %v4265, 0
        %v4289 = vsel %vm2432, %v4266, 0
        %4291 = vmatprep.subr.bf16.mxu0 0
        %4292 = vmatpush1.bf16.msra.mxu0 %v4275
        %4293 = vmatprep.subr.bf16.mxu0 0
        %4294 = vmatpush1.bf16.msra.mxu0 %v4276
        %4295 = vmatprep.subr.bf16.mxu0 0
        %4296 = vmatpush1.bf16.msra.mxu0 0
        %4297 = vmatprep.subr.bf16.mxu0 0
        %4298 = vmatpush1.bf16.msra.mxu0 0
        %4299 = vmatprep.subr.bf16.mxu0 0
        %4300 = vmatpush1.bf16.msra.mxu0 0
        %4301 = vmatprep.subr.bf16.mxu0 0
        %4302 = vmatpush1.bf16.msra.mxu0 0
        %4303 = vmatprep.subr.bf16.mxu0 0
        %4304 = vmatpush1.bf16.msra.mxu0 0
        %4305 = vmatprep.subr.bf16.mxu0 0
        %4306 = vmatpush1.bf16.msra.mxu0 0
        %4307 = vmatprep.subr.bf16.mxu0 0
        %4308 = vmatpush1.bf16.msra.mxu0 0
        %4309 = vmatprep.subr.bf16.mxu0 0
        %4310 = vmatpush1.bf16.msra.mxu0 0
        %4311 = vmatprep.subr.bf16.mxu0 0
        %4312 = vmatpush1.bf16.msra.mxu0 0
        %4313 = vmatprep.subr.bf16.mxu0 0
        %4314 = vmatpush1.bf16.msra.mxu0 0
        %4315 = vmatprep.subr.bf16.mxu0 0
        %4316 = vmatpush1.bf16.msra.mxu0 0
        %4317 = vmatprep.subr.bf16.mxu0 0
        %4318 = vmatpush1.bf16.msra.mxu0 0
        %4319 = vmatprep.subr.bf16.mxu0 0
        %4320 = vmatpush1.bf16.msra.mxu0 0
        %4321 = vmatprep.subr.bf16.mxu0 0
        %4322 = vmatpush1.bf16.msra.mxu0 0
        %4323 = vmatprep.mubr.bf16.mxu0 0
        %4324 = vmatmul.mubr.bf16.gmra.mrb[0].mxu0 %v4280
        %v4325 = vpop.f32.mrb[0].mxu0
        %v4326 = vadd.f32 0.0, %v4325
        %v4327 = vpop.f32.mrb[0].mxu0
        %v4328 = vpop.f32.mrb[0].mxu0
        %v4329 = vadd.f32 0.0, %v4328
        %v4330 = vpop.f32.mrb[0].mxu0
        %4331 = vmatprep.mubr.bf16.mxu0 0
        %4332 = vmatmul.mubr.bf16.gmra.mrb[0].mxu0 %v4283
        %v4333 = vpop.f32.mrb[0].mxu0
        %v4334 = vadd.f32 0.0, %v4333
        %v4335 = vpop.f32.mrb[0].mxu0
        %v4336 = vpop.f32.mrb[0].mxu0
        %v4337 = vadd.f32 0.0, %v4336
        %v4338 = vpop.f32.mrb[0].mxu0
        %4339 = vmatprep.mubr.bf16.mxu0 0
        %4340 = vmatmul.mubr.bf16.gmra.mrb[0].mxu0 %v4286
        %v4341 = vpop.f32.mrb[0].mxu0
        %v4342 = vadd.f32 0.0, %v4341
        %v4343 = vpop.f32.mrb[0].mxu0
        %v4344 = vpop.f32.mrb[0].mxu0
        %v4345 = vadd.f32 0.0, %v4344
        %v4346 = vpop.f32.mrb[0].mxu0
        %4347 = vmatprep.mubr.bf16.mxu0 0
        %4348 = vmatmul.mubr.bf16.gmra.mrb[0].mxu0 %v4289
        %v4349 = vpop.f32.mrb[0].mxu0
        %v4350 = vadd.f32 0.0, %v4349
        %v4351 = vpop.f32.mrb[0].mxu0
        %v4352 = vpop.f32.mrb[0].mxu0
        %v4353 = vadd.f32 0.0, %v4352
        %v4354 = vpop.f32.mrb[0].mxu0
        %4355 = vdwg.mxu0
        %v4356 = vadd.f32 %v4248, %v4326
        %v4357 = vadd.f32 %v4249, %v4329
        %v4358 = vadd.f32 %v4250, %v4334
        %v4359 = vadd.f32 %v4251, %v4337
        %v4360 = vadd.f32 %v4252, %v4342
        %v4361 = vadd.f32 %v4253, %v4345
        %v4362 = vadd.f32 %v4254, %v4350
        %v4363 = vadd.f32 %v4255, %v4353
        %v4364 = vsel %vm2205, %v3684, 0.0
        %v4365 = vsel %vm2206, %v3686, 0.0
        %v4366 = vsel %vm2207, %v3688, 0.0
        %v4367 = vsel %vm2208, %v3690, 0.0
        %v4368 = vsel %vm2209, %v3692, 0.0
        %v4369 = vsel %vm2210, %v3694, 0.0
        %v4370 = vsel %vm2211, %v4035, 0.0
        %v4371 = vpack.c.bf16 %v4365, %v4364
        %v4372 = vpack.c.bf16 %v4367, %v4366
        %v4373 = vpack.c.bf16 %v4369, %v4368
        %v4374 = vpack.c.bf16 0.0, %v4370
        %v4379 = vunpack.c.l.b16 %v3446
        %v4380 = vunpack.c.l.b16 %v3447
        %v4381 = vunpack.c.l.b16 %v3448
        %v4382 = vunpack.c.l.b16 %v3449
        %v4383 = vpack.c.b16 %v4380, %v4379
        %v4384 = vpack.c.b16 %v4382, %v4381
        %v4388 = vsel %vm2432, %v4371, 0
        %v4391 = vsel %vm2432, %v4372, 0
        %v4394 = vsel %vm2432, %v4373, 0
        %v4397 = vsel %vm2432, %v4374, 0
        %4399 = vmatprep.subr.bf16.mxu0 0
        %4400 = vmatpush1.bf16.msra.mxu0 %v4383
        %4401 = vmatprep.subr.bf16.mxu0 0
        %4402 = vmatpush1.bf16.msra.mxu0 %v4384
        %4403 = vmatprep.subr.bf16.mxu0 0
        %4404 = vmatpush1.bf16.msra.mxu0 0
        %4405 = vmatprep.subr.bf16.mxu0 0
        %4406 = vmatpush1.bf16.msra.mxu0 0
        %4407 = vmatprep.subr.bf16.mxu0 0
        %4408 = vmatpush1.bf16.msra.mxu0 0
        %4409 = vmatprep.subr.bf16.mxu0 0
        %4410 = vmatpush1.bf16.msra.mxu0 0
        %4411 = vmatprep.subr.bf16.mxu0 0
        %4412 = vmatpush1.bf16.msra.mxu0 0
        %4413 = vmatprep.subr.bf16.mxu0 0
        %4414 = vmatpush1.bf16.msra.mxu0 0
        %4415 = vmatprep.subr.bf16.mxu0 0
        %4416 = vmatpush1.bf16.msra.mxu0 0
        %4417 = vmatprep.subr.bf16.mxu0 0
        %4418 = vmatpush1.bf16.msra.mxu0 0
        %4419 = vmatprep.subr.bf16.mxu0 0
        %4420 = vmatpush1.bf16.msra.mxu0 0
        %4421 = vmatprep.subr.bf16.mxu0 0
        %4422 = vmatpush1.bf16.msra.mxu0 0
        %4423 = vmatprep.subr.bf16.mxu0 0
        %4424 = vmatpush1.bf16.msra.mxu0 0
        %4425 = vmatprep.subr.bf16.mxu0 0
        %4426 = vmatpush1.bf16.msra.mxu0 0
        %4427 = vmatprep.subr.bf16.mxu0 0
        %4428 = vmatpush1.bf16.msra.mxu0 0
        %4429 = vmatprep.subr.bf16.mxu0 0
        %4430 = vmatpush1.bf16.msra.mxu0 0
        %4431 = vmatprep.mubr.bf16.mxu0 0
        %4432 = vmatmul.mubr.bf16.gmra.mrb[0].mxu0 %v4388
        %v4433 = vpop.f32.mrb[0].mxu0
        %v4434 = vadd.f32 0.0, %v4433
        %v4435 = vpop.f32.mrb[0].mxu0
        %v4436 = vpop.f32.mrb[0].mxu0
        %v4437 = vadd.f32 0.0, %v4436
        %v4438 = vpop.f32.mrb[0].mxu0
        %4439 = vmatprep.mubr.bf16.mxu0 0
        %4440 = vmatmul.mubr.bf16.gmra.mrb[0].mxu0 %v4391
        %v4441 = vpop.f32.mrb[0].mxu0
        %v4442 = vadd.f32 0.0, %v4441
        %v4443 = vpop.f32.mrb[0].mxu0
        %v4444 = vpop.f32.mrb[0].mxu0
        %v4445 = vadd.f32 0.0, %v4444
        %v4446 = vpop.f32.mrb[0].mxu0
        %4447 = vmatprep.mubr.bf16.mxu0 0
        %4448 = vmatmul.mubr.bf16.gmra.mrb[0].mxu0 %v4394
        %v4449 = vpop.f32.mrb[0].mxu0
        %v4450 = vadd.f32 0.0, %v4449
        %v4451 = vpop.f32.mrb[0].mxu0
        %v4452 = vpop.f32.mrb[0].mxu0
        %v4453 = vadd.f32 0.0, %v4452
        %v4454 = vpop.f32.mrb[0].mxu0
        %4455 = vmatprep.mubr.bf16.mxu0 0
        %4456 = vmatmul.mubr.bf16.gmra.mrb[0].mxu0 %v4397
        %v4457 = vpop.f32.mrb[0].mxu0
        %v4458 = vadd.f32 0.0, %v4457
        %v4459 = vpop.f32.mrb[0].mxu0
        %v4460 = vpop.f32.mrb[0].mxu0
        %v4461 = vadd.f32 0.0, %v4460
        %v4462 = vpop.f32.mrb[0].mxu0
        %4463 = vdwg.mxu0
        %v4464 = vadd.f32 %v4356, %v4434
        %v4465 = vadd.f32 %v4357, %v4437
        %v4466 = vadd.f32 %v4358, %v4442
        %v4467 = vadd.f32 %v4359, %v4445
        %v4468 = vadd.f32 %v4360, %v4450
        %v4469 = vadd.f32 %v4361, %v4453
        %v4470 = vadd.f32 %v4362, %v4458
        %v4471 = vadd.f32 %v4363, %v4461
        %v4473 = vlaneseq
        %v4474 = vshrl.u32 %v4473, 7
        %v4475 = vsub.s32 0, %v4474
        %v4476 = vrot.slane %v3450, %v4475
        %v4478 = vadd.f32 %v4464, %v4476
        %v4479 = vadd.f32 %v4465, %v4476
        %v4480 = vadd.f32 %v4466, %v4476
        %v4481 = vadd.f32 %v4467, %v4476
        %v4482 = vadd.f32 %v4468, %v4476
        %v4483 = vadd.f32 %v4469, %v4476
        %v4484 = vadd.f32 %v4470, %v4476
        %v4485 = vadd.f32 %v4471, %v4476
        %v4486 = vld [vmem:[%s12] sm:$0xf]
        %v4487 = vld [vmem:[%s12 + $0x4] sm:$0xf]
        %v4488 = vld [vmem:[%s12 + $0x8] sm:$0xf]
        %v4489 = vld [vmem:[%s12 + $0xc] sm:$0xf]
        %v4490 = vld [vmem:[%s12 + $0x10] sm:$0xf]
        %v4491 = vld [vmem:[%s12 + $0x14] sm:$0xf]
        %v4492 = vld [vmem:[%s12 + $0x18] sm:$0xf]
        %v4493 = vld [vmem:[%s12 + $0x1c] sm:$0xf]
        %v4494 = vld [vmem:[%s12 + $0x20] sm:$0xf]
        %v4495 = vld [vmem:[%s12 + $0x24] sm:$0xf]
        %v4496 = vld [vmem:[%s12 + $0x28] sm:$0xf]
        %v4497 = vld [vmem:[%s12 + $0x2c] sm:$0xf]
        %v4498 = vld [vmem:[%s12 + $0x30] sm:$0xf]
        %v4499 = vld [vmem:[%s12 + $0x34] sm:$0xf]
        %v4500 = vld [vmem:[%s12 + $0x38] sm:$0xf]
        %v4501 = vld [vmem:[%s12 + $0x3c] sm:$0xf]
        %v4502 = vld [vmem:[%s12 + $0x40] sm:$0xf]
        %v4503 = vld [vmem:[%s12 + $0x44] sm:$0xf]
        %v4504 = vld [vmem:[%s12 + $0x48] sm:$0xf]
        %v4505 = vld [vmem:[%s12 + $0x4c] sm:$0xf]
        %v4506 = vld [vmem:[%s12 + $0x50] sm:$0xf]
        %v4507 = vld [vmem:[%s12 + $0x54] sm:$0xf]
        %v4508 = vld [vmem:[%s12 + $0x58] sm:$0xf]
        %v4509 = vld [vmem:[%s12 + $0x5c] sm:$0xf]
        %v4510 = vld [vmem:[%s12 + $0x60] sm:$0xf]
        %v4511 = vld [vmem:[%s12 + $0x64] sm:$0xf]
        %v4512 = vld [vmem:[%s12 + $0x68] sm:$0xf]
        %v4513 = vld [vmem:[%s12 + $0x6c] sm:$0xf]
        %v4514 = vld [vmem:[%s12 + $0x70] sm:$0xf]
        %v4515 = vld [vmem:[%s12 + $0x74] sm:$0xf]
        %v4516 = vld [vmem:[%s12 + $0x78] sm:$0xf]
        %v4517 = vld [vmem:[%s12 + $0x7c] sm:$0xf]
        %v4518 = vld [vmem:[%s12 + $0x80] sm:$0xf]
        %v4519 = vld [vmem:[%s12 + $0x84] sm:$0xf]
        %v4520 = vld [vmem:[%s12 + $0x88] sm:$0xf]
        %v4521 = vld [vmem:[%s12 + $0x8c] sm:$0xf]
        %v4522 = vld [vmem:[%s13] sm:$0x1]
        %4523 = vrot.lane.b32.xlu0 %v3458, 96
        %v4524 = vpop.permute.xlu0 %4523
        %4525 = vrot.lane.b32.xlu0 %v3460, 96
        %v4526 = vpop.permute.xlu0 %4525
        %4527 = vrot.lane.b32.xlu0 %v3462, 96
        %v4528 = vpop.permute.xlu0 %4527
        %4529 = vrot.lane.b32.xlu0 %v3464, 96
        %v4530 = vpop.permute.xlu0 %4529
        %4531 = vrot.lane.b32.xlu0 %v3466, 96
        %v4532 = vpop.permute.xlu0 %4531
        %4533 = vrot.lane.b32.xlu0 %v3468, 96
        %v4534 = vpop.permute.xlu0 %4533
        %4535 = vrot.lane.b32.xlu0 %v3470, 96
        %v4536 = vpop.permute.xlu0 %4535
        %v4544 = vsel %vm1034, 0.0, %v4524
        %v4545 = vsel %vm1084, %v4544, 0.0
        %v4546 = vsel %vm1085, %v4526, 0.0
        %v4547 = vsel %vm1086, %v4528, 0.0
        %v4548 = vsel %vm1087, %v4530, 0.0
        %v4549 = vsel %vm1088, %v4532, 0.0
        %v4550 = vsel %vm1089, %v4534, 0.0
        %v4551 = vsel %vm1090, %v4536, 0.0
        %v4552 = vpack.c.bf16 %v4545, 0.0
        %v4553 = vpack.c.bf16 %v4547, %v4546
        %v4554 = vpack.c.bf16 %v4549, %v4548
        %v4555 = vpack.c.bf16 %v4551, %v4550
        %4556 = vrot.lane.b32.xlu0 %v3406, 96
        %v4557 = vpop.permute.xlu0 %4556
        %4558 = vrot.lane.b32.xlu0 %v3407, 96
        %v4559 = vpop.permute.xlu0 %4558
        %4560 = vrot.lane.b32.xlu0 %v3408, 96
        %v4561 = vpop.permute.xlu0 %4560
        %4562 = vrot.lane.b32.xlu0 %v3409, 96
        %v4563 = vpop.permute.xlu0 %4562
        %4564 = vrot.lane.b32.xlu0 %v3410, 96
        %v4565 = vpop.permute.xlu0 %4564
        %4566 = vrot.lane.b32.xlu0 %v3411, 96
        %v4567 = vpop.permute.xlu0 %4566
        %4568 = vrot.lane.b32.xlu0 %v3412, 96
        %v4569 = vpop.permute.xlu0 %4568
        %v4577 = vsel %vm1130, %v4557, 0.0
        %v4578 = vsel %vm1131, %v4559, 0.0
        %v4579 = vsel %vm1132, %v4561, 0.0
        %v4580 = vsel %vm1133, %v4563, 0.0
        %v4581 = vsel %vm1134, %v4565, 0.0
        %v4582 = vsel %vm1135, %v4567, 0.0
        %v4583 = vsel %vm1136, %v4569, 0.0
        %v4584 = vpack.c.bf16 %v4577, 0.0
        %v4585 = vpack.c.bf16 %v4579, %v4578
        %v4586 = vpack.c.bf16 %v4581, %v4580
        %v4587 = vpack.c.bf16 %v4583, %v4582
        %v4592 = vunpack.c.l.b16 %v4490
        %v4593 = vunpack.c.l.b16 %v4491
        %v4594 = vunpack.c.l.b16 %v4492
        %v4595 = vunpack.c.l.b16 %v4493
        %v4596 = vpack.c.b16 %v4593, %v4592
        %v4597 = vpack.c.b16 %v4595, %v4594
        %v4601 = vsel %vm2432, %v4584, 0
        %v4604 = vsel %vm2432, %v4585, 0
        %v4607 = vsel %vm2432, %v4586, 0
        %v4610 = vsel %vm2432, %v4587, 0
        %4612 = vmatprep.subr.bf16.mxu0 0
        %4613 = vmatpush1.bf16.msra.mxu0 %v4596
        %4614 = vmatprep.subr.bf16.mxu0 0
        %4615 = vmatpush1.bf16.msra.mxu0 %v4597
        %4616 = vmatprep.subr.bf16.mxu0 0
        %4617 = vmatpush1.bf16.msra.mxu0 0
        %4618 = vmatprep.subr.bf16.mxu0 0
        %4619 = vmatpush1.bf16.msra.mxu0 0
        %4620 = vmatprep.subr.bf16.mxu0 0
        %4621 = vmatpush1.bf16.msra.mxu0 0
        %4622 = vmatprep.subr.bf16.mxu0 0
        %4623 = vmatpush1.bf16.msra.mxu0 0
        %4624 = vmatprep.subr.bf16.mxu0 0
        %4625 = vmatpush1.bf16.msra.mxu0 0
        %4626 = vmatprep.subr.bf16.mxu0 0
        %4627 = vmatpush1.bf16.msra.mxu0 0
        %4628 = vmatprep.subr.bf16.mxu0 0
        %4629 = vmatpush1.bf16.msra.mxu0 0
        %4630 = vmatprep.subr.bf16.mxu0 0
        %4631 = vmatpush1.bf16.msra.mxu0 0
        %4632 = vmatprep.subr.bf16.mxu0 0
        %4633 = vmatpush1.bf16.msra.mxu0 0
        %4634 = vmatprep.subr.bf16.mxu0 0
        %4635 = vmatpush1.bf16.msra.mxu0 0
        %4636 = vmatprep.subr.bf16.mxu0 0
        %4637 = vmatpush1.bf16.msra.mxu0 0
        %4638 = vmatprep.subr.bf16.mxu0 0
        %4639 = vmatpush1.bf16.msra.mxu0 0
        %4640 = vmatprep.subr.bf16.mxu0 0
        %4641 = vmatpush1.bf16.msra.mxu0 0
        %4642 = vmatprep.subr.bf16.mxu0 0
        %4643 = vmatpush1.bf16.msra.mxu0 0
        %4644 = vmatprep.mubr.bf16.mxu0 0
        %4645 = vmatmul.mubr.bf16.gmra.mrb[0].mxu0 %v4601
        %v4646 = vpop.f32.mrb[0].mxu0
        %v4647 = vadd.f32 0.0, %v4646
        %v4648 = vpop.f32.mrb[0].mxu0
        %v4649 = vpop.f32.mrb[0].mxu0
        %v4650 = vadd.f32 0.0, %v4649
        %v4651 = vpop.f32.mrb[0].mxu0
        %4652 = vmatprep.mubr.bf16.mxu0 0
        %4653 = vmatmul.mubr.bf16.gmra.mrb[0].mxu0 %v4604
        %v4654 = vpop.f32.mrb[0].mxu0
        %v4655 = vadd.f32 0.0, %v4654
        %v4656 = vpop.f32.mrb[0].mxu0
        %v4657 = vpop.f32.mrb[0].mxu0
        %v4658 = vadd.f32 0.0, %v4657
        %v4659 = vpop.f32.mrb[0].mxu0
        %4660 = vmatprep.mubr.bf16.mxu0 0
        %4661 = vmatmul.mubr.bf16.gmra.mrb[0].mxu0 %v4607
        %v4662 = vpop.f32.mrb[0].mxu0
        %v4663 = vadd.f32 0.0, %v4662
        %v4664 = vpop.f32.mrb[0].mxu0
        %v4665 = vpop.f32.mrb[0].mxu0
        %v4666 = vadd.f32 0.0, %v4665
        %v4667 = vpop.f32.mrb[0].mxu0
        %4668 = vmatprep.mubr.bf16.mxu0 0
        %4669 = vmatmul.mubr.bf16.gmra.mrb[0].mxu0 %v4610
        %v4670 = vpop.f32.mrb[0].mxu0
        %v4671 = vadd.f32 0.0, %v4670
        %v4672 = vpop.f32.mrb[0].mxu0
        %v4673 = vpop.f32.mrb[0].mxu0
        %v4674 = vadd.f32 0.0, %v4673
        %v4675 = vpop.f32.mrb[0].mxu0
        %4676 = vdwg.mxu0
        %v4681 = vunpack.c.l.b16 %v4486
        %v4682 = vunpack.c.l.b16 %v4487
        %v4683 = vunpack.c.l.b16 %v4488
        %v4684 = vunpack.c.l.b16 %v4489
        %v4685 = vpack.c.b16 %v4682, %v4681
        %v4686 = vpack.c.b16 %v4684, %v4683
        %v4690 = vsel %vm2432, %v4552, 0
        %v4693 = vsel %vm2432, %v4553, 0
        %v4696 = vsel %vm2432, %v4554, 0
        %v4699 = vsel %vm2432, %v4555, 0
        %4701 = vmatprep.subr.bf16.mxu0 0
        %4702 = vmatpush1.bf16.msra.mxu0 %v4685
        %4703 = vmatprep.subr.bf16.mxu0 0
        %4704 = vmatpush1.bf16.msra.mxu0 %v4686
        %4705 = vmatprep.subr.bf16.mxu0 0
        %4706 = vmatpush1.bf16.msra.mxu0 0
        %4707 = vmatprep.subr.bf16.mxu0 0
        %4708 = vmatpush1.bf16.msra.mxu0 0
        %4709 = vmatprep.subr.bf16.mxu0 0
        %4710 = vmatpush1.bf16.msra.mxu0 0
        %4711 = vmatprep.subr.bf16.mxu0 0
        %4712 = vmatpush1.bf16.msra.mxu0 0
        %4713 = vmatprep.subr.bf16.mxu0 0
        %4714 = vmatpush1.bf16.msra.mxu0 0
        %4715 = vmatprep.subr.bf16.mxu0 0
        %4716 = vmatpush1.bf16.msra.mxu0 0
        %4717 = vmatprep.subr.bf16.mxu0 0
        %4718 = vmatpush1.bf16.msra.mxu0 0
        %4719 = vmatprep.subr.bf16.mxu0 0
        %4720 = vmatpush1.bf16.msra.mxu0 0
        %4721 = vmatprep.subr.bf16.mxu0 0
        %4722 = vmatpush1.bf16.msra.mxu0 0
        %4723 = vmatprep.subr.bf16.mxu0 0
        %4724 = vmatpush1.bf16.msra.mxu0 0
        %4725 = vmatprep.subr.bf16.mxu0 0
        %4726 = vmatpush1.bf16.msra.mxu0 0
        %4727 = vmatprep.subr.bf16.mxu0 0
        %4728 = vmatpush1.bf16.msra.mxu0 0
        %4729 = vmatprep.subr.bf16.mxu0 0
        %4730 = vmatpush1.bf16.msra.mxu0 0
        %4731 = vmatprep.subr.bf16.mxu0 0
        %4732 = vmatpush1.bf16.msra.mxu0 0
        %4733 = vmatprep.mubr.bf16.mxu0 0
        %4734 = vmatmul.mubr.bf16.gmra.mrb[0].mxu0 %v4690
        %v4735 = vpop.f32.mrb[0].mxu0
        %v4736 = vadd.f32 %v4647, %v4735
        %v4737 = vpop.f32.mrb[0].mxu0
        %v4738 = vpop.f32.mrb[0].mxu0
        %v4739 = vadd.f32 %v4650, %v4738
        %v4740 = vpop.f32.mrb[0].mxu0
        %4741 = vmatprep.mubr.bf16.mxu0 0
        %4742 = vmatmul.mubr.bf16.gmra.mrb[0].mxu0 %v4693
        %v4743 = vpop.f32.mrb[0].mxu0
        %v4744 = vadd.f32 %v4655, %v4743
        %v4745 = vpop.f32.mrb[0].mxu0
        %v4746 = vpop.f32.mrb[0].mxu0
        %v4747 = vadd.f32 %v4658, %v4746
        %v4748 = vpop.f32.mrb[0].mxu0
        %4749 = vmatprep.mubr.bf16.mxu0 0
        %4750 = vmatmul.mubr.bf16.gmra.mrb[0].mxu0 %v4696
        %v4751 = vpop.f32.mrb[0].mxu0
        %v4752 = vadd.f32 %v4663, %v4751
        %v4753 = vpop.f32.mrb[0].mxu0
        %v4754 = vpop.f32.mrb[0].mxu0
        %v4755 = vadd.f32 %v4666, %v4754
        %v4756 = vpop.f32.mrb[0].mxu0
        %4757 = vmatprep.mubr.bf16.mxu0 0
        %4758 = vmatmul.mubr.bf16.gmra.mrb[0].mxu0 %v4699
        %v4759 = vpop.f32.mrb[0].mxu0
        %v4760 = vadd.f32 %v4671, %v4759
        %v4761 = vpop.f32.mrb[0].mxu0
        %v4762 = vpop.f32.mrb[0].mxu0
        %v4763 = vadd.f32 %v4674, %v4762
        %v4764 = vpop.f32.mrb[0].mxu0
        %4765 = vdwg.mxu0
        %4766 = vrot.lane.b32.xlu0 %v3680, 96
        %v4767 = vpop.permute.xlu0 %4766
        %4768 = vrot.lane.b32.xlu0 %v3682, 96
        %v4769 = vpop.permute.xlu0 %4768
        %4770 = vrot.lane.b32.xlu0 %v3684, 96
        %v4771 = vpop.permute.xlu0 %4770
        %4772 = vrot.lane.b32.xlu0 %v3686, 96
        %v4773 = vpop.permute.xlu0 %4772
        %4774 = vrot.lane.b32.xlu0 %v3688, 96
        %v4775 = vpop.permute.xlu0 %4774
        %4776 = vrot.lane.b32.xlu0 %v3690, 96
        %v4777 = vpop.permute.xlu0 %4776
        %4778 = vrot.lane.b32.xlu0 %v3692, 96
        %v4779 = vpop.permute.xlu0 %4778
        %4780 = vrot.lane.b32.xlu0 %v3694, 96
        %v4781 = vpop.permute.xlu0 %4780
        %v4790 = vsel %vm1311, 0.0, %v4767
        %v4791 = vsel %vm1368, %v4790, 0.0
        %v4792 = vsel %vm1369, %v4769, 0.0
        %v4793 = vsel %vm1370, %v4771, 0.0
        %v4794 = vsel %vm1371, %v4773, 0.0
        %v4795 = vsel %vm1372, %v4775, 0.0
        %v4796 = vsel %vm1373, %v4777, 0.0
        %v4797 = vsel %vm1374, %v4779, 0.0
        %v4798 = vsel %vm1375, %v4781, 0.0
        %v4799 = vpack.c.bf16 %v4792, %v4791
        %v4800 = vpack.c.bf16 %v4794, %v4793
        %v4801 = vpack.c.bf16 %v4796, %v4795
        %v4802 = vpack.c.bf16 %v4798, %v4797
        %v4807 = vunpack.c.l.b16 %v4494
        %v4808 = vunpack.c.l.b16 %v4495
        %v4809 = vunpack.c.l.b16 %v4496
        %v4810 = vunpack.c.l.b16 %v4497
        %v4811 = vpack.c.b16 %v4808, %v4807
        %v4812 = vpack.c.b16 %v4810, %v4809
        %v4816 = vsel %vm2432, %v4799, 0
        %v4819 = vsel %vm2432, %v4800, 0
        %v4822 = vsel %vm2432, %v4801, 0
        %v4825 = vsel %vm2432, %v4802, 0
        %4827 = vmatprep.subr.bf16.mxu0 0
        %4828 = vmatpush1.bf16.msra.mxu0 %v4811
        %4829 = vmatprep.subr.bf16.mxu0 0
        %4830 = vmatpush1.bf16.msra.mxu0 %v4812
        %4831 = vmatprep.subr.bf16.mxu0 0
        %4832 = vmatpush1.bf16.msra.mxu0 0
        %4833 = vmatprep.subr.bf16.mxu0 0
        %4834 = vmatpush1.bf16.msra.mxu0 0
        %4835 = vmatprep.subr.bf16.mxu0 0
        %4836 = vmatpush1.bf16.msra.mxu0 0
        %4837 = vmatprep.subr.bf16.mxu0 0
        %4838 = vmatpush1.bf16.msra.mxu0 0
        %4839 = vmatprep.subr.bf16.mxu0 0
        %4840 = vmatpush1.bf16.msra.mxu0 0
        %4841 = vmatprep.subr.bf16.mxu0 0
        %4842 = vmatpush1.bf16.msra.mxu0 0
        %4843 = vmatprep.subr.bf16.mxu0 0
        %4844 = vmatpush1.bf16.msra.mxu0 0
        %4845 = vmatprep.subr.bf16.mxu0 0
        %4846 = vmatpush1.bf16.msra.mxu0 0
        %4847 = vmatprep.subr.bf16.mxu0 0
        %4848 = vmatpush1.bf16.msra.mxu0 0
        %4849 = vmatprep.subr.bf16.mxu0 0
        %4850 = vmatpush1.bf16.msra.mxu0 0
        %4851 = vmatprep.subr.bf16.mxu0 0
        %4852 = vmatpush1.bf16.msra.mxu0 0
        %4853 = vmatprep.subr.bf16.mxu0 0
        %4854 = vmatpush1.bf16.msra.mxu0 0
        %4855 = vmatprep.subr.bf16.mxu0 0
        %4856 = vmatpush1.bf16.msra.mxu0 0
        %4857 = vmatprep.subr.bf16.mxu0 0
        %4858 = vmatpush1.bf16.msra.mxu0 0
        %4859 = vmatprep.mubr.bf16.mxu0 0
        %4860 = vmatmul.mubr.bf16.gmra.mrb[0].mxu0 %v4816
        %v4861 = vpop.f32.mrb[0].mxu0
        %v4862 = vadd.f32 0.0, %v4861
        %v4863 = vpop.f32.mrb[0].mxu0
        %v4864 = vpop.f32.mrb[0].mxu0
        %v4865 = vadd.f32 0.0, %v4864
        %v4866 = vpop.f32.mrb[0].mxu0
        %4867 = vmatprep.mubr.bf16.mxu0 0
        %4868 = vmatmul.mubr.bf16.gmra.mrb[0].mxu0 %v4819
        %v4869 = vpop.f32.mrb[0].mxu0
        %v4870 = vadd.f32 0.0, %v4869
        %v4871 = vpop.f32.mrb[0].mxu0
        %v4872 = vpop.f32.mrb[0].mxu0
        %v4873 = vadd.f32 0.0, %v4872
        %v4874 = vpop.f32.mrb[0].mxu0
        %4875 = vmatprep.mubr.bf16.mxu0 0
        %4876 = vmatmul.mubr.bf16.gmra.mrb[0].mxu0 %v4822
        %v4877 = vpop.f32.mrb[0].mxu0
        %v4878 = vadd.f32 0.0, %v4877
        %v4879 = vpop.f32.mrb[0].mxu0
        %v4880 = vpop.f32.mrb[0].mxu0
        %v4881 = vadd.f32 0.0, %v4880
        %v4882 = vpop.f32.mrb[0].mxu0
        %4883 = vmatprep.mubr.bf16.mxu0 0
        %4884 = vmatmul.mubr.bf16.gmra.mrb[0].mxu0 %v4825
        %v4885 = vpop.f32.mrb[0].mxu0
        %v4886 = vadd.f32 0.0, %v4885
        %v4887 = vpop.f32.mrb[0].mxu0
        %v4888 = vpop.f32.mrb[0].mxu0
        %v4889 = vadd.f32 0.0, %v4888
        %v4890 = vpop.f32.mrb[0].mxu0
        %4891 = vdwg.mxu0
        %v4892 = vadd.f32 %v4736, %v4862
        %v4893 = vadd.f32 %v4739, %v4865
        %v4894 = vadd.f32 %v4744, %v4870
        %v4895 = vadd.f32 %v4747, %v4873
        %v4896 = vadd.f32 %v4752, %v4878
        %v4897 = vadd.f32 %v4755, %v4881
        %v4898 = vadd.f32 %v4760, %v4886
        %v4899 = vadd.f32 %v4763, %v4889
        %4900 = vrot.lane.b32.xlu0 %v3814, 96
        %v4901 = vpop.permute.xlu0 %4900
        %v4903 = vsel %vm1511, %v4544, 0.0
        %v4904 = vsel %vm1512, %v4526, 0.0
        %v4905 = vsel %vm1513, %v4528, 0.0
        %v4906 = vsel %vm1514, %v4530, 0.0
        %v4907 = vsel %vm1515, %v4532, 0.0
        %v4908 = vsel %vm1516, %v4534, 0.0
        %v4909 = vsel %vm1517, %v4536, 0.0
        %v4910 = vsel %vm1518, %v4901, 0.0
        %v4911 = vpack.c.bf16 %v4904, %v4903
        %v4912 = vpack.c.bf16 %v4906, %v4905
        %v4913 = vpack.c.bf16 %v4908, %v4907
        %v4914 = vpack.c.bf16 %v4910, %v4909
        %v4919 = vunpack.c.l.b16 %v4498
        %v4920 = vunpack.c.l.b16 %v4499
        %v4921 = vunpack.c.l.b16 %v4500
        %v4922 = vunpack.c.l.b16 %v4501
        %v4923 = vpack.c.b16 %v4920, %v4919
        %v4924 = vpack.c.b16 %v4922, %v4921
        %v4928 = vsel %vm2432, %v4911, 0
        %v4931 = vsel %vm2432, %v4912, 0
        %v4934 = vsel %vm2432, %v4913, 0
        %v4937 = vsel %vm2432, %v4914, 0
        %4939 = vmatprep.subr.bf16.mxu0 0
        %4940 = vmatpush1.bf16.msra.mxu0 %v4923
        %4941 = vmatprep.subr.bf16.mxu0 0
        %4942 = vmatpush1.bf16.msra.mxu0 %v4924
        %4943 = vmatprep.subr.bf16.mxu0 0
        %4944 = vmatpush1.bf16.msra.mxu0 0
        %4945 = vmatprep.subr.bf16.mxu0 0
        %4946 = vmatpush1.bf16.msra.mxu0 0
        %4947 = vmatprep.subr.bf16.mxu0 0
        %4948 = vmatpush1.bf16.msra.mxu0 0
        %4949 = vmatprep.subr.bf16.mxu0 0
        %4950 = vmatpush1.bf16.msra.mxu0 0
        %4951 = vmatprep.subr.bf16.mxu0 0
        %4952 = vmatpush1.bf16.msra.mxu0 0
        %4953 = vmatprep.subr.bf16.mxu0 0
        %4954 = vmatpush1.bf16.msra.mxu0 0
        %4955 = vmatprep.subr.bf16.mxu0 0
        %4956 = vmatpush1.bf16.msra.mxu0 0
        %4957 = vmatprep.subr.bf16.mxu0 0
        %4958 = vmatpush1.bf16.msra.mxu0 0
        %4959 = vmatprep.subr.bf16.mxu0 0
        %4960 = vmatpush1.bf16.msra.mxu0 0
        %4961 = vmatprep.subr.bf16.mxu0 0
        %4962 = vmatpush1.bf16.msra.mxu0 0
        %4963 = vmatprep.subr.bf16.mxu0 0
        %4964 = vmatpush1.bf16.msra.mxu0 0
        %4965 = vmatprep.subr.bf16.mxu0 0
        %4966 = vmatpush1.bf16.msra.mxu0 0
        %4967 = vmatprep.subr.bf16.mxu0 0
        %4968 = vmatpush1.bf16.msra.mxu0 0
        %4969 = vmatprep.subr.bf16.mxu0 0
        %4970 = vmatpush1.bf16.msra.mxu0 0
        %4971 = vmatprep.mubr.bf16.mxu0 0
        %4972 = vmatmul.mubr.bf16.gmra.mrb[0].mxu0 %v4928
        %v4973 = vpop.f32.mrb[0].mxu0
        %v4974 = vadd.f32 0.0, %v4973
        %v4975 = vpop.f32.mrb[0].mxu0
        %v4976 = vpop.f32.mrb[0].mxu0
        %v4977 = vadd.f32 0.0, %v4976
        %v4978 = vpop.f32.mrb[0].mxu0
        %4979 = vmatprep.mubr.bf16.mxu0 0
        %4980 = vmatmul.mubr.bf16.gmra.mrb[0].mxu0 %v4931
        %v4981 = vpop.f32.mrb[0].mxu0
        %v4982 = vadd.f32 0.0, %v4981
        %v4983 = vpop.f32.mrb[0].mxu0
        %v4984 = vpop.f32.mrb[0].mxu0
        %v4985 = vadd.f32 0.0, %v4984
        %v4986 = vpop.f32.mrb[0].mxu0
        %4987 = vmatprep.mubr.bf16.mxu0 0
        %4988 = vmatmul.mubr.bf16.gmra.mrb[0].mxu0 %v4934
        %v4989 = vpop.f32.mrb[0].mxu0
        %v4990 = vadd.f32 0.0, %v4989
        %v4991 = vpop.f32.mrb[0].mxu0
        %v4992 = vpop.f32.mrb[0].mxu0
        %v4993 = vadd.f32 0.0, %v4992
        %v4994 = vpop.f32.mrb[0].mxu0
        %4995 = vmatprep.mubr.bf16.mxu0 0
        %4996 = vmatmul.mubr.bf16.gmra.mrb[0].mxu0 %v4937
        %v4997 = vpop.f32.mrb[0].mxu0
        %v4998 = vadd.f32 0.0, %v4997
        %v4999 = vpop.f32.mrb[0].mxu0
        %v5000 = vpop.f32.mrb[0].mxu0
        %v5001 = vadd.f32 0.0, %v5000
        %v5002 = vpop.f32.mrb[0].mxu0
        %5003 = vdwg.mxu0
        %v5004 = vadd.f32 %v4892, %v4974
        %v5005 = vadd.f32 %v4893, %v4977
        %v5006 = vadd.f32 %v4894, %v4982
        %v5007 = vadd.f32 %v4895, %v4985
        %v5008 = vadd.f32 %v4896, %v4990
        %v5009 = vadd.f32 %v4897, %v4993
        %v5010 = vadd.f32 %v4898, %v4998
        %v5011 = vadd.f32 %v4899, %v5001
        %5016 = vrot.lane.b32.xlu0 %v3933, 96
        %v5017 = vpop.permute.xlu0 %5016
        %5018 = vrot.lane.b32.xlu0 %v3934, 96
        %v5019 = vpop.permute.xlu0 %5018
        %5020 = vrot.lane.b32.xlu0 %v3935, 96
        %v5021 = vpop.permute.xlu0 %5020
        %5022 = vrot.lane.b32.xlu0 %v3936, 96
        %v5023 = vpop.permute.xlu0 %5022
        %v5028 = vunpack.c.l.b16 %v4502
        %v5029 = vunpack.c.l.b16 %v4503
        %v5030 = vunpack.c.l.b16 %v4504
        %v5031 = vunpack.c.l.b16 %v4505
        %v5032 = vpack.c.b16 %v5029, %v5028
        %v5033 = vpack.c.b16 %v5031, %v5030
        %v5037 = vsel %vm2432, %v5017, 0
        %v5040 = vsel %vm2432, %v5019, 0
        %v5043 = vsel %vm2432, %v5021, 0
        %v5046 = vsel %vm2432, %v5023, 0
        %5048 = vmatprep.subr.bf16.mxu0 0
        %5049 = vmatpush1.bf16.msra.mxu0 %v5032
        %5050 = vmatprep.subr.bf16.mxu0 0
        %5051 = vmatpush1.bf16.msra.mxu0 %v5033
        %5052 = vmatprep.subr.bf16.mxu0 0
        %5053 = vmatpush1.bf16.msra.mxu0 0
        %5054 = vmatprep.subr.bf16.mxu0 0
        %5055 = vmatpush1.bf16.msra.mxu0 0
        %5056 = vmatprep.subr.bf16.mxu0 0
        %5057 = vmatpush1.bf16.msra.mxu0 0
        %5058 = vmatprep.subr.bf16.mxu0 0
        %5059 = vmatpush1.bf16.msra.mxu0 0
        %5060 = vmatprep.subr.bf16.mxu0 0
        %5061 = vmatpush1.bf16.msra.mxu0 0
        %5062 = vmatprep.subr.bf16.mxu0 0
        %5063 = vmatpush1.bf16.msra.mxu0 0
        %5064 = vmatprep.subr.bf16.mxu0 0
        %5065 = vmatpush1.bf16.msra.mxu0 0
        %5066 = vmatprep.subr.bf16.mxu0 0
        %5067 = vmatpush1.bf16.msra.mxu0 0
        %5068 = vmatprep.subr.bf16.mxu0 0
        %5069 = vmatpush1.bf16.msra.mxu0 0
        %5070 = vmatprep.subr.bf16.mxu0 0
        %5071 = vmatpush1.bf16.msra.mxu0 0
        %5072 = vmatprep.subr.bf16.mxu0 0
        %5073 = vmatpush1.bf16.msra.mxu0 0
        %5074 = vmatprep.subr.bf16.mxu0 0
        %5075 = vmatpush1.bf16.msra.mxu0 0
        %5076 = vmatprep.subr.bf16.mxu0 0
        %5077 = vmatpush1.bf16.msra.mxu0 0
        %5078 = vmatprep.subr.bf16.mxu0 0
        %5079 = vmatpush1.bf16.msra.mxu0 0
        %5080 = vmatprep.mubr.bf16.mxu0 0
        %5081 = vmatmul.mubr.bf16.gmra.mrb[0].mxu0 %v5037
        %v5082 = vpop.f32.mrb[0].mxu0
        %v5083 = vadd.f32 0.0, %v5082
        %v5084 = vpop.f32.mrb[0].mxu0
        %v5085 = vpop.f32.mrb[0].mxu0
        %v5086 = vadd.f32 0.0, %v5085
        %v5087 = vpop.f32.mrb[0].mxu0
        %5088 = vmatprep.mubr.bf16.mxu0 0
        %5089 = vmatmul.mubr.bf16.gmra.mrb[0].mxu0 %v5040
        %v5090 = vpop.f32.mrb[0].mxu0
        %v5091 = vadd.f32 0.0, %v5090
        %v5092 = vpop.f32.mrb[0].mxu0
        %v5093 = vpop.f32.mrb[0].mxu0
        %v5094 = vadd.f32 0.0, %v5093
        %v5095 = vpop.f32.mrb[0].mxu0
        %5096 = vmatprep.mubr.bf16.mxu0 0
        %5097 = vmatmul.mubr.bf16.gmra.mrb[0].mxu0 %v5043
        %v5098 = vpop.f32.mrb[0].mxu0
        %v5099 = vadd.f32 0.0, %v5098
        %v5100 = vpop.f32.mrb[0].mxu0
        %v5101 = vpop.f32.mrb[0].mxu0
        %v5102 = vadd.f32 0.0, %v5101
        %v5103 = vpop.f32.mrb[0].mxu0
        %5104 = vmatprep.mubr.bf16.mxu0 0
        %5105 = vmatmul.mubr.bf16.gmra.mrb[0].mxu0 %v5046
        %v5106 = vpop.f32.mrb[0].mxu0
        %v5107 = vadd.f32 0.0, %v5106
        %v5108 = vpop.f32.mrb[0].mxu0
        %v5109 = vpop.f32.mrb[0].mxu0
        %v5110 = vadd.f32 0.0, %v5109
        %v5111 = vpop.f32.mrb[0].mxu0
        %5112 = vdwg.mxu0
        %v5113 = vadd.f32 %v5004, %v5083
        %v5114 = vadd.f32 %v5005, %v5086
        %v5115 = vadd.f32 %v5006, %v5091
        %v5116 = vadd.f32 %v5007, %v5094
        %v5117 = vadd.f32 %v5008, %v5099
        %v5118 = vadd.f32 %v5009, %v5102
        %v5119 = vadd.f32 %v5010, %v5107
        %v5120 = vadd.f32 %v5011, %v5110
        %5125 = vrot.lane.b32.xlu0 %v4044, 96
        %v5126 = vpop.permute.xlu0 %5125
        %5127 = vrot.lane.b32.xlu0 %v4045, 96
        %v5128 = vpop.permute.xlu0 %5127
        %5129 = vrot.lane.b32.xlu0 %v4046, 96
        %v5130 = vpop.permute.xlu0 %5129
        %5131 = vrot.lane.b32.xlu0 %v4047, 96
        %v5132 = vpop.permute.xlu0 %5131
        %v5137 = vunpack.c.l.b16 %v4506
        %v5138 = vunpack.c.l.b16 %v4507
        %v5139 = vunpack.c.l.b16 %v4508
        %v5140 = vunpack.c.l.b16 %v4509
        %v5141 = vpack.c.b16 %v5138, %v5137
        %v5142 = vpack.c.b16 %v5140, %v5139
        %v5146 = vsel %vm2432, %v5126, 0
        %v5149 = vsel %vm2432, %v5128, 0
        %v5152 = vsel %vm2432, %v5130, 0
        %v5155 = vsel %vm2432, %v5132, 0
        %5157 = vmatprep.subr.bf16.mxu0 0
        %5158 = vmatpush1.bf16.msra.mxu0 %v5141
        %5159 = vmatprep.subr.bf16.mxu0 0
        %5160 = vmatpush1.bf16.msra.mxu0 %v5142
        %5161 = vmatprep.subr.bf16.mxu0 0
        %5162 = vmatpush1.bf16.msra.mxu0 0
        %5163 = vmatprep.subr.bf16.mxu0 0
        %5164 = vmatpush1.bf16.msra.mxu0 0
        %5165 = vmatprep.subr.bf16.mxu0 0
        %5166 = vmatpush1.bf16.msra.mxu0 0
        %5167 = vmatprep.subr.bf16.mxu0 0
        %5168 = vmatpush1.bf16.msra.mxu0 0
        %5169 = vmatprep.subr.bf16.mxu0 0
        %5170 = vmatpush1.bf16.msra.mxu0 0
        %5171 = vmatprep.subr.bf16.mxu0 0
        %5172 = vmatpush1.bf16.msra.mxu0 0
        %5173 = vmatprep.subr.bf16.mxu0 0
        %5174 = vmatpush1.bf16.msra.mxu0 0
        %5175 = vmatprep.subr.bf16.mxu0 0
        %5176 = vmatpush1.bf16.msra.mxu0 0
        %5177 = vmatprep.subr.bf16.mxu0 0
        %5178 = vmatpush1.bf16.msra.mxu0 0
        %5179 = vmatprep.subr.bf16.mxu0 0
        %5180 = vmatpush1.bf16.msra.mxu0 0
        %5181 = vmatprep.subr.bf16.mxu0 0
        %5182 = vmatpush1.bf16.msra.mxu0 0
        %5183 = vmatprep.subr.bf16.mxu0 0
        %5184 = vmatpush1.bf16.msra.mxu0 0
        %5185 = vmatprep.subr.bf16.mxu0 0
        %5186 = vmatpush1.bf16.msra.mxu0 0
        %5187 = vmatprep.subr.bf16.mxu0 0
        %5188 = vmatpush1.bf16.msra.mxu0 0
        %5189 = vmatprep.mubr.bf16.mxu0 0
        %5190 = vmatmul.mubr.bf16.gmra.mrb[0].mxu0 %v5146
        %v5191 = vpop.f32.mrb[0].mxu0
        %v5192 = vadd.f32 0.0, %v5191
        %v5193 = vpop.f32.mrb[0].mxu0
        %v5194 = vpop.f32.mrb[0].mxu0
        %v5195 = vadd.f32 0.0, %v5194
        %v5196 = vpop.f32.mrb[0].mxu0
        %5197 = vmatprep.mubr.bf16.mxu0 0
        %5198 = vmatmul.mubr.bf16.gmra.mrb[0].mxu0 %v5149
        %v5199 = vpop.f32.mrb[0].mxu0
        %v5200 = vadd.f32 0.0, %v5199
        %v5201 = vpop.f32.mrb[0].mxu0
        %v5202 = vpop.f32.mrb[0].mxu0
        %v5203 = vadd.f32 0.0, %v5202
        %v5204 = vpop.f32.mrb[0].mxu0
        %5205 = vmatprep.mubr.bf16.mxu0 0
        %5206 = vmatmul.mubr.bf16.gmra.mrb[0].mxu0 %v5152
        %v5207 = vpop.f32.mrb[0].mxu0
        %v5208 = vadd.f32 0.0, %v5207
        %v5209 = vpop.f32.mrb[0].mxu0
        %v5210 = vpop.f32.mrb[0].mxu0
        %v5211 = vadd.f32 0.0, %v5210
        %v5212 = vpop.f32.mrb[0].mxu0
        %5213 = vmatprep.mubr.bf16.mxu0 0
        %5214 = vmatmul.mubr.bf16.gmra.mrb[0].mxu0 %v5155
        %v5215 = vpop.f32.mrb[0].mxu0
        %v5216 = vadd.f32 0.0, %v5215
        %v5217 = vpop.f32.mrb[0].mxu0
        %v5218 = vpop.f32.mrb[0].mxu0
        %v5219 = vadd.f32 0.0, %v5218
        %v5220 = vpop.f32.mrb[0].mxu0
        %5221 = vdwg.mxu0
        %v5222 = vadd.f32 %v5113, %v5192
        %v5223 = vadd.f32 %v5114, %v5195
        %v5224 = vadd.f32 %v5115, %v5200
        %v5225 = vadd.f32 %v5116, %v5203
        %v5226 = vadd.f32 %v5117, %v5208
        %v5227 = vadd.f32 %v5118, %v5211
        %v5228 = vadd.f32 %v5119, %v5216
        %v5229 = vadd.f32 %v5120, %v5219
        %5234 = vrot.lane.b32.xlu0 %v4155, 96
        %v5235 = vpop.permute.xlu0 %5234
        %5236 = vrot.lane.b32.xlu0 %v4156, 96
        %v5237 = vpop.permute.xlu0 %5236
        %5238 = vrot.lane.b32.xlu0 %v4157, 96
        %v5239 = vpop.permute.xlu0 %5238
        %5240 = vrot.lane.b32.xlu0 %v4158, 96
        %v5241 = vpop.permute.xlu0 %5240
        %v5246 = vunpack.c.l.b16 %v4510
        %v5247 = vunpack.c.l.b16 %v4511
        %v5248 = vunpack.c.l.b16 %v4512
        %v5249 = vunpack.c.l.b16 %v4513
        %v5250 = vpack.c.b16 %v5247, %v5246
        %v5251 = vpack.c.b16 %v5249, %v5248
        %v5255 = vsel %vm2432, %v5235, 0
        %v5258 = vsel %vm2432, %v5237, 0
        %v5261 = vsel %vm2432, %v5239, 0
        %v5264 = vsel %vm2432, %v5241, 0
        %5266 = vmatprep.subr.bf16.mxu0 0
        %5267 = vmatpush1.bf16.msra.mxu0 %v5250
        %5268 = vmatprep.subr.bf16.mxu0 0
        %5269 = vmatpush1.bf16.msra.mxu0 %v5251
        %5270 = vmatprep.subr.bf16.mxu0 0
        %5271 = vmatpush1.bf16.msra.mxu0 0
        %5272 = vmatprep.subr.bf16.mxu0 0
        %5273 = vmatpush1.bf16.msra.mxu0 0
        %5274 = vmatprep.subr.bf16.mxu0 0
        %5275 = vmatpush1.bf16.msra.mxu0 0
        %5276 = vmatprep.subr.bf16.mxu0 0
        %5277 = vmatpush1.bf16.msra.mxu0 0
        %5278 = vmatprep.subr.bf16.mxu0 0
        %5279 = vmatpush1.bf16.msra.mxu0 0
        %5280 = vmatprep.subr.bf16.mxu0 0
        %5281 = vmatpush1.bf16.msra.mxu0 0
        %5282 = vmatprep.subr.bf16.mxu0 0
        %5283 = vmatpush1.bf16.msra.mxu0 0
        %5284 = vmatprep.subr.bf16.mxu0 0
        %5285 = vmatpush1.bf16.msra.mxu0 0
        %5286 = vmatprep.subr.bf16.mxu0 0
        %5287 = vmatpush1.bf16.msra.mxu0 0
        %5288 = vmatprep.subr.bf16.mxu0 0
        %5289 = vmatpush1.bf16.msra.mxu0 0
        %5290 = vmatprep.subr.bf16.mxu0 0
        %5291 = vmatpush1.bf16.msra.mxu0 0
        %5292 = vmatprep.subr.bf16.mxu0 0
        %5293 = vmatpush1.bf16.msra.mxu0 0
        %5294 = vmatprep.subr.bf16.mxu0 0
        %5295 = vmatpush1.bf16.msra.mxu0 0
        %5296 = vmatprep.subr.bf16.mxu0 0
        %5297 = vmatpush1.bf16.msra.mxu0 0
        %5298 = vmatprep.mubr.bf16.mxu0 0
        %5299 = vmatmul.mubr.bf16.gmra.mrb[0].mxu0 %v5255
        %v5300 = vpop.f32.mrb[0].mxu0
        %v5301 = vadd.f32 0.0, %v5300
        %v5302 = vpop.f32.mrb[0].mxu0
        %v5303 = vpop.f32.mrb[0].mxu0
        %v5304 = vadd.f32 0.0, %v5303
        %v5305 = vpop.f32.mrb[0].mxu0
        %5306 = vmatprep.mubr.bf16.mxu0 0
        %5307 = vmatmul.mubr.bf16.gmra.mrb[0].mxu0 %v5258
        %v5308 = vpop.f32.mrb[0].mxu0
        %v5309 = vadd.f32 0.0, %v5308
        %v5310 = vpop.f32.mrb[0].mxu0
        %v5311 = vpop.f32.mrb[0].mxu0
        %v5312 = vadd.f32 0.0, %v5311
        %v5313 = vpop.f32.mrb[0].mxu0
        %5314 = vmatprep.mubr.bf16.mxu0 0
        %5315 = vmatmul.mubr.bf16.gmra.mrb[0].mxu0 %v5261
        %v5316 = vpop.f32.mrb[0].mxu0
        %v5317 = vadd.f32 0.0, %v5316
        %v5318 = vpop.f32.mrb[0].mxu0
        %v5319 = vpop.f32.mrb[0].mxu0
        %v5320 = vadd.f32 0.0, %v5319
        %v5321 = vpop.f32.mrb[0].mxu0
        %5322 = vmatprep.mubr.bf16.mxu0 0
        %5323 = vmatmul.mubr.bf16.gmra.mrb[0].mxu0 %v5264
        %v5324 = vpop.f32.mrb[0].mxu0
        %v5325 = vadd.f32 0.0, %v5324
        %v5326 = vpop.f32.mrb[0].mxu0
        %v5327 = vpop.f32.mrb[0].mxu0
        %v5328 = vadd.f32 0.0, %v5327
        %v5329 = vpop.f32.mrb[0].mxu0
        %5330 = vdwg.mxu0
        %v5331 = vadd.f32 %v5222, %v5301
        %v5332 = vadd.f32 %v5223, %v5304
        %v5333 = vadd.f32 %v5224, %v5309
        %v5334 = vadd.f32 %v5225, %v5312
        %v5335 = vadd.f32 %v5226, %v5317
        %v5336 = vadd.f32 %v5227, %v5320
        %v5337 = vadd.f32 %v5228, %v5325
        %v5338 = vadd.f32 %v5229, %v5328
        %5343 = vrot.lane.b32.xlu0 %v4263, 96
        %v5344 = vpop.permute.xlu0 %5343
        %5345 = vrot.lane.b32.xlu0 %v4264, 96
        %v5346 = vpop.permute.xlu0 %5345
        %5347 = vrot.lane.b32.xlu0 %v4265, 96
        %v5348 = vpop.permute.xlu0 %5347
        %5349 = vrot.lane.b32.xlu0 %v4266, 96
        %v5350 = vpop.permute.xlu0 %5349
        %v5355 = vunpack.c.l.b16 %v4514
        %v5356 = vunpack.c.l.b16 %v4515
        %v5357 = vunpack.c.l.b16 %v4516
        %v5358 = vunpack.c.l.b16 %v4517
        %v5359 = vpack.c.b16 %v5356, %v5355
        %v5360 = vpack.c.b16 %v5358, %v5357
        %v5364 = vsel %vm2432, %v5344, 0
        %v5367 = vsel %vm2432, %v5346, 0
        %v5370 = vsel %vm2432, %v5348, 0
        %v5373 = vsel %vm2432, %v5350, 0
        %5375 = vmatprep.subr.bf16.mxu0 0
        %5376 = vmatpush1.bf16.msra.mxu0 %v5359
        %5377 = vmatprep.subr.bf16.mxu0 0
        %5378 = vmatpush1.bf16.msra.mxu0 %v5360
        %5379 = vmatprep.subr.bf16.mxu0 0
        %5380 = vmatpush1.bf16.msra.mxu0 0
        %5381 = vmatprep.subr.bf16.mxu0 0
        %5382 = vmatpush1.bf16.msra.mxu0 0
        %5383 = vmatprep.subr.bf16.mxu0 0
        %5384 = vmatpush1.bf16.msra.mxu0 0
        %5385 = vmatprep.subr.bf16.mxu0 0
        %5386 = vmatpush1.bf16.msra.mxu0 0
        %5387 = vmatprep.subr.bf16.mxu0 0
        %5388 = vmatpush1.bf16.msra.mxu0 0
        %5389 = vmatprep.subr.bf16.mxu0 0
        %5390 = vmatpush1.bf16.msra.mxu0 0
        %5391 = vmatprep.subr.bf16.mxu0 0
        %5392 = vmatpush1.bf16.msra.mxu0 0
        %5393 = vmatprep.subr.bf16.mxu0 0
        %5394 = vmatpush1.bf16.msra.mxu0 0
        %5395 = vmatprep.subr.bf16.mxu0 0
        %5396 = vmatpush1.bf16.msra.mxu0 0
        %5397 = vmatprep.subr.bf16.mxu0 0
        %5398 = vmatpush1.bf16.msra.mxu0 0
        %5399 = vmatprep.subr.bf16.mxu0 0
        %5400 = vmatpush1.bf16.msra.mxu0 0
        %5401 = vmatprep.subr.bf16.mxu0 0
        %5402 = vmatpush1.bf16.msra.mxu0 0
        %5403 = vmatprep.subr.bf16.mxu0 0
        %5404 = vmatpush1.bf16.msra.mxu0 0
        %5405 = vmatprep.subr.bf16.mxu0 0
        %5406 = vmatpush1.bf16.msra.mxu0 0
        %5407 = vmatprep.mubr.bf16.mxu0 0
        %5408 = vmatmul.mubr.bf16.gmra.mrb[0].mxu0 %v5364
        %v5409 = vpop.f32.mrb[0].mxu0
        %v5410 = vadd.f32 0.0, %v5409
        %v5411 = vpop.f32.mrb[0].mxu0
        %v5412 = vpop.f32.mrb[0].mxu0
        %v5413 = vadd.f32 0.0, %v5412
        %v5414 = vpop.f32.mrb[0].mxu0
        %5415 = vmatprep.mubr.bf16.mxu0 0
        %5416 = vmatmul.mubr.bf16.gmra.mrb[0].mxu0 %v5367
        %v5417 = vpop.f32.mrb[0].mxu0
        %v5418 = vadd.f32 0.0, %v5417
        %v5419 = vpop.f32.mrb[0].mxu0
        %v5420 = vpop.f32.mrb[0].mxu0
        %v5421 = vadd.f32 0.0, %v5420
        %v5422 = vpop.f32.mrb[0].mxu0
        %5423 = vmatprep.mubr.bf16.mxu0 0
        %5424 = vmatmul.mubr.bf16.gmra.mrb[0].mxu0 %v5370
        %v5425 = vpop.f32.mrb[0].mxu0
        %v5426 = vadd.f32 0.0, %v5425
        %v5427 = vpop.f32.mrb[0].mxu0
        %v5428 = vpop.f32.mrb[0].mxu0
        %v5429 = vadd.f32 0.0, %v5428
        %v5430 = vpop.f32.mrb[0].mxu0
        %5431 = vmatprep.mubr.bf16.mxu0 0
        %5432 = vmatmul.mubr.bf16.gmra.mrb[0].mxu0 %v5373
        %v5433 = vpop.f32.mrb[0].mxu0
        %v5434 = vadd.f32 0.0, %v5433
        %v5435 = vpop.f32.mrb[0].mxu0
        %v5436 = vpop.f32.mrb[0].mxu0
        %v5437 = vadd.f32 0.0, %v5436
        %v5438 = vpop.f32.mrb[0].mxu0
        %5439 = vdwg.mxu0
        %v5440 = vadd.f32 %v5331, %v5410
        %v5441 = vadd.f32 %v5332, %v5413
        %v5442 = vadd.f32 %v5333, %v5418
        %v5443 = vadd.f32 %v5334, %v5421
        %v5444 = vadd.f32 %v5335, %v5426
        %v5445 = vadd.f32 %v5336, %v5429
        %v5446 = vadd.f32 %v5337, %v5434
        %v5447 = vadd.f32 %v5338, %v5437
        %5452 = vrot.lane.b32.xlu0 %v4371, 96
        %v5453 = vpop.permute.xlu0 %5452
        %5454 = vrot.lane.b32.xlu0 %v4372, 96
        %v5455 = vpop.permute.xlu0 %5454
        %5456 = vrot.lane.b32.xlu0 %v4373, 96
        %v5457 = vpop.permute.xlu0 %5456
        %5458 = vrot.lane.b32.xlu0 %v4374, 96
        %v5459 = vpop.permute.xlu0 %5458
        %v5464 = vunpack.c.l.b16 %v4518
        %v5465 = vunpack.c.l.b16 %v4519
        %v5466 = vunpack.c.l.b16 %v4520
        %v5467 = vunpack.c.l.b16 %v4521
        %v5468 = vpack.c.b16 %v5465, %v5464
        %v5469 = vpack.c.b16 %v5467, %v5466
        %v5473 = vsel %vm2432, %v5453, 0
        %v5476 = vsel %vm2432, %v5455, 0
        %v5479 = vsel %vm2432, %v5457, 0
        %v5482 = vsel %vm2432, %v5459, 0
        %5484 = vmatprep.subr.bf16.mxu0 0
        %5485 = vmatpush1.bf16.msra.mxu0 %v5468
        %5486 = vmatprep.subr.bf16.mxu0 0
        %5487 = vmatpush1.bf16.msra.mxu0 %v5469
        %5488 = vmatprep.subr.bf16.mxu0 0
        %5489 = vmatpush1.bf16.msra.mxu0 0
        %5490 = vmatprep.subr.bf16.mxu0 0
        %5491 = vmatpush1.bf16.msra.mxu0 0
        %5492 = vmatprep.subr.bf16.mxu0 0
        %5493 = vmatpush1.bf16.msra.mxu0 0
        %5494 = vmatprep.subr.bf16.mxu0 0
        %5495 = vmatpush1.bf16.msra.mxu0 0
        %5496 = vmatprep.subr.bf16.mxu0 0
        %5497 = vmatpush1.bf16.msra.mxu0 0
        %5498 = vmatprep.subr.bf16.mxu0 0
        %5499 = vmatpush1.bf16.msra.mxu0 0
        %5500 = vmatprep.subr.bf16.mxu0 0
        %5501 = vmatpush1.bf16.msra.mxu0 0
        %5502 = vmatprep.subr.bf16.mxu0 0
        %5503 = vmatpush1.bf16.msra.mxu0 0
        %5504 = vmatprep.subr.bf16.mxu0 0
        %5505 = vmatpush1.bf16.msra.mxu0 0
        %5506 = vmatprep.subr.bf16.mxu0 0
        %5507 = vmatpush1.bf16.msra.mxu0 0
        %5508 = vmatprep.subr.bf16.mxu0 0
        %5509 = vmatpush1.bf16.msra.mxu0 0
        %5510 = vmatprep.subr.bf16.mxu0 0
        %5511 = vmatpush1.bf16.msra.mxu0 0
        %5512 = vmatprep.subr.bf16.mxu0 0
        %5513 = vmatpush1.bf16.msra.mxu0 0
        %5514 = vmatprep.subr.bf16.mxu0 0
        %5515 = vmatpush1.bf16.msra.mxu0 0
        %5516 = vmatprep.mubr.bf16.mxu0 0
        %5517 = vmatmul.mubr.bf16.gmra.mrb[0].mxu0 %v5473
        %v5518 = vpop.f32.mrb[0].mxu0
        %v5519 = vadd.f32 0.0, %v5518
        %v5520 = vpop.f32.mrb[0].mxu0
        %v5521 = vpop.f32.mrb[0].mxu0
        %v5522 = vadd.f32 0.0, %v5521
        %v5523 = vpop.f32.mrb[0].mxu0
        %5524 = vmatprep.mubr.bf16.mxu0 0
        %5525 = vmatmul.mubr.bf16.gmra.mrb[0].mxu0 %v5476
        %v5526 = vpop.f32.mrb[0].mxu0
        %v5527 = vadd.f32 0.0, %v5526
        %v5528 = vpop.f32.mrb[0].mxu0
        %v5529 = vpop.f32.mrb[0].mxu0
        %v5530 = vadd.f32 0.0, %v5529
        %v5531 = vpop.f32.mrb[0].mxu0
        %5532 = vmatprep.mubr.bf16.mxu0 0
        %5533 = vmatmul.mubr.bf16.gmra.mrb[0].mxu0 %v5479
        %v5534 = vpop.f32.mrb[0].mxu0
        %v5535 = vadd.f32 0.0, %v5534
        %v5536 = vpop.f32.mrb[0].mxu0
        %v5537 = vpop.f32.mrb[0].mxu0
        %v5538 = vadd.f32 0.0, %v5537
        %v5539 = vpop.f32.mrb[0].mxu0
        %5540 = vmatprep.mubr.bf16.mxu0 0
        %5541 = vmatmul.mubr.bf16.gmra.mrb[0].mxu0 %v5482
        %v5542 = vpop.f32.mrb[0].mxu0
        %v5543 = vadd.f32 0.0, %v5542
        %v5544 = vpop.f32.mrb[0].mxu0
        %v5545 = vpop.f32.mrb[0].mxu0
        %v5546 = vadd.f32 0.0, %v5545
        %v5547 = vpop.f32.mrb[0].mxu0
        %5548 = vdwg.mxu0
        %v5549 = vadd.f32 %v5440, %v5519
        %v5550 = vadd.f32 %v5441, %v5522
        %v5551 = vadd.f32 %v5442, %v5527
        %v5552 = vadd.f32 %v5443, %v5530
        %v5553 = vadd.f32 %v5444, %v5535
        %v5554 = vadd.f32 %v5445, %v5538
        %v5555 = vadd.f32 %v5446, %v5543
        %v5556 = vadd.f32 %v5447, %v5546
        %v5558 = vlaneseq
        %v5559 = vshrl.u32 %v5558, 7
        %v5560 = vsub.s32 0, %v5559
        %v5561 = vrot.slane %v4522, %v5560
        %v5563 = vadd.f32 %v5549, %v5561
        %v5564 = vadd.f32 %v5550, %v5561
        %v5565 = vadd.f32 %v5551, %v5561
        %v5566 = vadd.f32 %v5552, %v5561
        %v5567 = vadd.f32 %v5553, %v5561
        %v5568 = vadd.f32 %v5554, %v5561
        %v5569 = vadd.f32 %v5555, %v5561
        %v5570 = vadd.f32 %v5556, %v5561
        %v5571 = vstv %s558
        %v5572 = vmul.f32 %v5563, %v5571
        %v5573 = vmul.f32 %v5564, %v5571
        %v5574 = vmul.f32 %v5565, %v5571
        %v5575 = vmul.f32 %v5566, %v5571
        %v5576 = vmul.f32 %v5567, %v5571
        %v5577 = vmul.f32 %v5568, %v5571
        %v5578 = vmul.f32 %v5569, %v5571
        %v5579 = vmul.f32 %v5570, %v5571
        %v5580 = vmax.f32 %v5572, 0.0
        %v5581 = vmax.f32 %v5573, 0.0
        %v5582 = vmax.f32 %v5574, 0.0
        %v5583 = vmax.f32 %v5575, 0.0
        %v5584 = vmax.f32 %v5576, 0.0
        %v5585 = vmax.f32 %v5577, 0.0
        %v5586 = vmax.f32 %v5578, 0.0
        %v5587 = vmax.f32 %v5579, 0.0
        %v5588 = vstv %s557
        %v5589 = vmul.f32 %v5580, %v5588
        %v5590 = vmul.f32 %v5581, %v5588
        %v5591 = vmul.f32 %v5582, %v5588
        %v5592 = vmul.f32 %v5583, %v5588
        %v5593 = vmul.f32 %v5584, %v5588
        %v5594 = vmul.f32 %v5585, %v5588
        %v5595 = vmul.f32 %v5586, %v5588
        %v5596 = vmul.f32 %v5587, %v5588
        %v5597 = vxor.u32 %v4478, 2147483648
        %v5598 = vxor.u32 %v4479, 2147483648
        %v5599 = vxor.u32 %v4480, 2147483648
        %v5600 = vxor.u32 %v4481, 2147483648
        %v5601 = vxor.u32 %v4482, 2147483648
        %v5602 = vxor.u32 %v4483, 2147483648
        %v5603 = vxor.u32 %v4484, 2147483648
        %v5604 = vxor.u32 %v4485, 2147483648
        %v5605 = vmul.f32 %v5597, 1.442695
        %v5606 = vpow.pop %v5605
        %v5607 = vmul.f32 %v5598, 1.442695
        %v5608 = vpow.pop %v5607
        %v5609 = vmul.f32 %v5599, 1.442695
        %v5610 = vpow.pop %v5609
        %v5611 = vmul.f32 %v5600, 1.442695
        %v5612 = vpow.pop %v5611
        %v5613 = vmul.f32 %v5601, 1.442695
        %v5614 = vpow.pop %v5613
        %v5615 = vmul.f32 %v5602, 1.442695
        %v5616 = vpow.pop %v5615
        %v5617 = vmul.f32 %v5603, 1.442695
        %v5618 = vpow.pop %v5617
        %v5619 = vmul.f32 %v5604, 1.442695
        %v5620 = vpow.pop %v5619
        %v5621 = vadd.f32 %v5606, 1.0
        %v5622 = vadd.f32 %v5608, 1.0
        %v5623 = vadd.f32 %v5610, 1.0
        %v5624 = vadd.f32 %v5612, 1.0
        %v5625 = vadd.f32 %v5614, 1.0
        %v5626 = vadd.f32 %v5616, 1.0
        %v5627 = vadd.f32 %v5618, 1.0
        %v5628 = vadd.f32 %v5620, 1.0
        %v5629 = vrcp.pop %v5621
        %v5630 = vmul.f32 1.0, %v5629
        %v5631 = vrcp.pop %v5622
        %v5632 = vmul.f32 1.0, %v5631
        %v5633 = vrcp.pop %v5623
        %v5634 = vmul.f32 1.0, %v5633
        %v5635 = vrcp.pop %v5624
        %v5636 = vmul.f32 1.0, %v5635
        %v5637 = vrcp.pop %v5625
        %v5638 = vmul.f32 1.0, %v5637
        %v5639 = vrcp.pop %v5626
        %v5640 = vmul.f32 1.0, %v5639
        %v5641 = vrcp.pop %v5627
        %v5642 = vmul.f32 1.0, %v5641
        %v5643 = vrcp.pop %v5628
        %v5644 = vmul.f32 1.0, %v5643
        %v5645 = vxor.u32 %v5563, 2147483648
        %v5646 = vxor.u32 %v5564, 2147483648
        %v5647 = vxor.u32 %v5565, 2147483648
        %v5648 = vxor.u32 %v5566, 2147483648
        %v5649 = vxor.u32 %v5567, 2147483648
        %v5650 = vxor.u32 %v5568, 2147483648
        %v5651 = vxor.u32 %v5569, 2147483648
        %v5652 = vxor.u32 %v5570, 2147483648
        %v5653 = vmul.f32 %v5645, 1.442695
        %v5654 = vpow.pop %v5653
        %v5655 = vmul.f32 %v5646, 1.442695
        %v5656 = vpow.pop %v5655
        %v5657 = vmul.f32 %v5647, 1.442695
        %v5658 = vpow.pop %v5657
        %v5659 = vmul.f32 %v5648, 1.442695
        %v5660 = vpow.pop %v5659
        %v5661 = vmul.f32 %v5649, 1.442695
        %v5662 = vpow.pop %v5661
        %v5663 = vmul.f32 %v5650, 1.442695
        %v5664 = vpow.pop %v5663
        %v5665 = vmul.f32 %v5651, 1.442695
        %v5666 = vpow.pop %v5665
        %v5667 = vmul.f32 %v5652, 1.442695
        %v5668 = vpow.pop %v5667
        %v5669 = vadd.f32 %v5654, 1.0
        %v5670 = vadd.f32 %v5656, 1.0
        %v5671 = vadd.f32 %v5658, 1.0
        %v5672 = vadd.f32 %v5660, 1.0
        %v5673 = vadd.f32 %v5662, 1.0
        %v5674 = vadd.f32 %v5664, 1.0
        %v5675 = vadd.f32 %v5666, 1.0
        %v5676 = vadd.f32 %v5668, 1.0
        %v5677 = vrcp.pop %v5669
        %v5678 = vmul.f32 1.0, %v5677
        %v5679 = vrcp.pop %v5670
        %v5680 = vmul.f32 1.0, %v5679
        %v5681 = vrcp.pop %v5671
        %v5682 = vmul.f32 1.0, %v5681
        %v5683 = vrcp.pop %v5672
        %v5684 = vmul.f32 1.0, %v5683
        %v5685 = vrcp.pop %v5673
        %v5686 = vmul.f32 1.0, %v5685
        %v5687 = vrcp.pop %v5674
        %v5688 = vmul.f32 1.0, %v5687
        %v5689 = vrcp.pop %v5675
        %v5690 = vmul.f32 1.0, %v5689
        %v5691 = vrcp.pop %v5676
        %v5692 = vmul.f32 1.0, %v5691
        %5694 = vset.pattern.permute.xlu0 4
        %5695 = vperm.xlu0 %5694, %v5678
        %v5696 = vpop.permute.xlu0 %5695
        %5699 = vset.pattern.permute.xlu0 4
        %5700 = vperm.xlu0 %5699, %v5680
        %v5701 = vpop.permute.xlu0 %5700
        %5704 = vset.pattern.permute.xlu0 4
        %5705 = vperm.xlu0 %5704, %v5682
        %v5706 = vpop.permute.xlu0 %5705
        %5709 = vset.pattern.permute.xlu0 4
        %5710 = vperm.xlu0 %5709, %v5684
        %v5711 = vpop.permute.xlu0 %5710
        %5714 = vset.pattern.permute.xlu0 4
        %5715 = vperm.xlu0 %5714, %v5686
        %v5716 = vpop.permute.xlu0 %5715
        %5719 = vset.pattern.permute.xlu0 4
        %5720 = vperm.xlu0 %5719, %v5688
        %v5721 = vpop.permute.xlu0 %5720
        %5724 = vset.pattern.permute.xlu0 4
        %5725 = vperm.xlu0 %5724, %v5690
        %v5726 = vpop.permute.xlu0 %5725
        %5729 = vset.pattern.permute.xlu0 4
        %5730 = vperm.xlu0 %5729, %v5692
        %v5731 = vpop.permute.xlu0 %5730
        %v5733 = vmul.f32 %v5630, %v5696
        %v5734 = vmul.f32 %v5632, %v5701
        %v5735 = vmul.f32 %v5634, %v5706
        %v5736 = vmul.f32 %v5636, %v5711
        %v5737 = vmul.f32 %v5638, %v5716
        %v5738 = vmul.f32 %v5640, %v5721
        %v5739 = vmul.f32 %v5642, %v5726
        %v5740 = vmul.f32 %v5644, %v5731
        %v5741 = vrsqrt.pop %v5733
        %v5742 = vmul.f32 %v5733, %v5741
        %vm5743 = vcmp.eq.f32.partialorder %v5733, inf
        %v5744 = vsel %vm5743, %v5733, %v5742
        %vm5745 = vcmp.eq.f32.partialorder %v5733, 0.0
        %v5746 = vand.u32 %v5733, 2147483648
        %v5747 = vsel %vm5745, %v5746, %v5744
        %v5748 = vrsqrt.pop %v5734
        %v5749 = vmul.f32 %v5734, %v5748
        %vm5750 = vcmp.eq.f32.partialorder %v5734, inf
        %v5751 = vsel %vm5750, %v5734, %v5749
        %vm5752 = vcmp.eq.f32.partialorder %v5734, 0.0
        %v5753 = vand.u32 %v5734, 2147483648
        %v5754 = vsel %vm5752, %v5753, %v5751
        %v5755 = vrsqrt.pop %v5735
        %v5756 = vmul.f32 %v5735, %v5755
        %vm5757 = vcmp.eq.f32.partialorder %v5735, inf
        %v5758 = vsel %vm5757, %v5735, %v5756
        %vm5759 = vcmp.eq.f32.partialorder %v5735, 0.0
        %v5760 = vand.u32 %v5735, 2147483648
        %v5761 = vsel %vm5759, %v5760, %v5758
        %v5762 = vrsqrt.pop %v5736
        %v5763 = vmul.f32 %v5736, %v5762
        %vm5764 = vcmp.eq.f32.partialorder %v5736, inf
        %v5765 = vsel %vm5764, %v5736, %v5763
        %vm5766 = vcmp.eq.f32.partialorder %v5736, 0.0
        %v5767 = vand.u32 %v5736, 2147483648
        %v5768 = vsel %vm5766, %v5767, %v5765
        %v5769 = vrsqrt.pop %v5737
        %v5770 = vmul.f32 %v5737, %v5769
        %vm5771 = vcmp.eq.f32.partialorder %v5737, inf
        %v5772 = vsel %vm5771, %v5737, %v5770
        %vm5773 = vcmp.eq.f32.partialorder %v5737, 0.0
        %v5774 = vand.u32 %v5737, 2147483648
        %v5775 = vsel %vm5773, %v5774, %v5772
        %v5776 = vrsqrt.pop %v5738
        %v5777 = vmul.f32 %v5738, %v5776
        %vm5778 = vcmp.eq.f32.partialorder %v5738, inf
        %v5779 = vsel %vm5778, %v5738, %v5777
        %vm5780 = vcmp.eq.f32.partialorder %v5738, 0.0
        %v5781 = vand.u32 %v5738, 2147483648
        %v5782 = vsel %vm5780, %v5781, %v5779
        %v5783 = vrsqrt.pop %v5739
        %v5784 = vmul.f32 %v5739, %v5783
        %vm5785 = vcmp.eq.f32.partialorder %v5739, inf
        %v5786 = vsel %vm5785, %v5739, %v5784
        %vm5787 = vcmp.eq.f32.partialorder %v5739, 0.0
        %v5788 = vand.u32 %v5739, 2147483648
        %v5789 = vsel %vm5787, %v5788, %v5786
        %v5790 = vrsqrt.pop %v5740
        %v5791 = vmul.f32 %v5740, %v5790
        %vm5792 = vcmp.eq.f32.partialorder %v5740, inf
        %v5793 = vsel %vm5792, %v5740, %v5791
        %vm5794 = vcmp.eq.f32.partialorder %v5740, 0.0
        %v5795 = vand.u32 %v5740, 2147483648
        %v5796 = vsel %vm5794, %v5795, %v5793
        %vm5797 = vcmask 162816
        %v5798 = vsel %vm5797, %v5747, -inf
        %5799 = vmax.xlane.f32.xlu0 %v5798
        %v5800 = vpop.xlane.xlu0 %5799
        %v5801 = vsel %vm5797, %v5754, -inf
        %5802 = vmax.xlane.f32.xlu0 %v5801
        %v5803 = vpop.xlane.xlu0 %5802
        %v5804 = vsel %vm5797, %v5761, -inf
        %5805 = vmax.xlane.f32.xlu0 %v5804
        %v5806 = vpop.xlane.xlu0 %5805
        %v5807 = vsel %vm5797, %v5768, -inf
        %5808 = vmax.xlane.f32.xlu0 %v5807
        %v5809 = vpop.xlane.xlu0 %5808
        %v5810 = vsel %vm5797, %v5775, -inf
        %5811 = vmax.xlane.f32.xlu0 %v5810
        %v5812 = vpop.xlane.xlu0 %5811
        %v5813 = vsel %vm5797, %v5782, -inf
        %5814 = vmax.xlane.f32.xlu0 %v5813
        %v5815 = vpop.xlane.xlu0 %5814
        %v5816 = vsel %vm5797, %v5789, -inf
        %5817 = vmax.xlane.f32.xlu0 %v5816
        %v5818 = vpop.xlane.xlu0 %5817
        %v5819 = vsel %vm5797, %v5796, -inf
        %5820 = vmax.xlane.f32.xlu0 %v5819
        %v5821 = vpop.xlane.xlu0 %5820
        %v5822 = vlaneseq
        %v5823 = vand.u32 %v5822, 127
        %vm5824 = vcmp.ge.f32.partialorder %v5747, %v5800
        %vm5825 = vcmp.ge.f32.partialorder %v5754, %v5803
        %vm5826 = vcmp.ge.f32.partialorder %v5761, %v5806
        %vm5827 = vcmp.ge.f32.partialorder %v5768, %v5809
        %vm5828 = vcmp.ge.f32.partialorder %v5775, %v5812
        %vm5829 = vcmp.ge.f32.partialorder %v5782, %v5815
        %vm5830 = vcmp.ge.f32.partialorder %v5789, %v5818
        %vm5831 = vcmp.ge.f32.partialorder %v5796, %v5821
        %v5832 = vsel %vm5824, %v5823, 1073741824
        %v5833 = vsel %vm5825, %v5823, 1073741824
        %v5834 = vsel %vm5826, %v5823, 1073741824
        %v5835 = vsel %vm5827, %v5823, 1073741824
        %v5836 = vsel %vm5828, %v5823, 1073741824
        %v5837 = vsel %vm5829, %v5823, 1073741824
        %v5838 = vsel %vm5830, %v5823, 1073741824
        %v5839 = vsel %vm5831, %v5823, 1073741824
        %v5840 = vsel %vm5797, %v5832, 2147483647
        %v5841 = vand.u32 %v5840, 65535
        %v5842 = vshra.s32 %v5840, 16
        %v5843 = vcvt.s32.f32 %v5841
        %v5844 = vcvt.s32.f32 %v5842
        %5845 = vmin.xlane.f32.xlu0 %v5844
        %v5846 = vpop.xlane.xlu0 %5845
        %vm5847 = vcmp.eq.f32.partialorder %v5844, %v5846
        %v5848 = vsel %vm5847, %v5843, inf
        %5849 = vmin.xlane.f32.xlu0 %v5848
        %v5850 = vpop.xlane.xlu0 %5849
        %v5851 = vcvt.f32.s32 %v5850
        %v5852 = vcvt.f32.s32 %v5846
        %v5853 = vshll.u32 %v5852, 16
        %v5854 = vadd.s32 %v5853, %v5851
        %v5855 = vsel %vm5797, %v5833, 2147483647
        %v5856 = vand.u32 %v5855, 65535
        %v5857 = vshra.s32 %v5855, 16
        %v5858 = vcvt.s32.f32 %v5856
        %v5859 = vcvt.s32.f32 %v5857
        %5860 = vmin.xlane.f32.xlu0 %v5859
        %v5861 = vpop.xlane.xlu0 %5860
        %vm5862 = vcmp.eq.f32.partialorder %v5859, %v5861
        %v5863 = vsel %vm5862, %v5858, inf
        %5864 = vmin.xlane.f32.xlu0 %v5863
        %v5865 = vpop.xlane.xlu0 %5864
        %v5866 = vcvt.f32.s32 %v5865
        %v5867 = vcvt.f32.s32 %v5861
        %v5868 = vshll.u32 %v5867, 16
        %v5869 = vadd.s32 %v5868, %v5866
        %v5870 = vsel %vm5797, %v5834, 2147483647
        %v5871 = vand.u32 %v5870, 65535
        %v5872 = vshra.s32 %v5870, 16
        %v5873 = vcvt.s32.f32 %v5871
        %v5874 = vcvt.s32.f32 %v5872
        %5875 = vmin.xlane.f32.xlu0 %v5874
        %v5876 = vpop.xlane.xlu0 %5875
        %vm5877 = vcmp.eq.f32.partialorder %v5874, %v5876
        %v5878 = vsel %vm5877, %v5873, inf
        %5879 = vmin.xlane.f32.xlu0 %v5878
        %v5880 = vpop.xlane.xlu0 %5879
        %v5881 = vcvt.f32.s32 %v5880
        %v5882 = vcvt.f32.s32 %v5876
        %v5883 = vshll.u32 %v5882, 16
        %v5884 = vadd.s32 %v5883, %v5881
        %v5885 = vsel %vm5797, %v5835, 2147483647
        %v5886 = vand.u32 %v5885, 65535
        %v5887 = vshra.s32 %v5885, 16
        %v5888 = vcvt.s32.f32 %v5886
        %v5889 = vcvt.s32.f32 %v5887
        %5890 = vmin.xlane.f32.xlu0 %v5889
        %v5891 = vpop.xlane.xlu0 %5890
        %vm5892 = vcmp.eq.f32.partialorder %v5889, %v5891
        %v5893 = vsel %vm5892, %v5888, inf
        %5894 = vmin.xlane.f32.xlu0 %v5893
        %v5895 = vpop.xlane.xlu0 %5894
        %v5896 = vcvt.f32.s32 %v5895
        %v5897 = vcvt.f32.s32 %v5891
        %v5898 = vshll.u32 %v5897, 16
        %v5899 = vadd.s32 %v5898, %v5896
        %v5900 = vsel %vm5797, %v5836, 2147483647
        %v5901 = vand.u32 %v5900, 65535
        %v5902 = vshra.s32 %v5900, 16
        %v5903 = vcvt.s32.f32 %v5901
        %v5904 = vcvt.s32.f32 %v5902
        %5905 = vmin.xlane.f32.xlu0 %v5904
        %v5906 = vpop.xlane.xlu0 %5905
        %vm5907 = vcmp.eq.f32.partialorder %v5904, %v5906
        %v5908 = vsel %vm5907, %v5903, inf
        %5909 = vmin.xlane.f32.xlu0 %v5908
        %v5910 = vpop.xlane.xlu0 %5909
        %v5911 = vcvt.f32.s32 %v5910
        %v5912 = vcvt.f32.s32 %v5906
        %v5913 = vshll.u32 %v5912, 16
        %v5914 = vadd.s32 %v5913, %v5911
        %v5915 = vsel %vm5797, %v5837, 2147483647
        %v5916 = vand.u32 %v5915, 65535
        %v5917 = vshra.s32 %v5915, 16
        %v5918 = vcvt.s32.f32 %v5916
        %v5919 = vcvt.s32.f32 %v5917
        %5920 = vmin.xlane.f32.xlu0 %v5919
        %v5921 = vpop.xlane.xlu0 %5920
        %vm5922 = vcmp.eq.f32.partialorder %v5919, %v5921
        %v5923 = vsel %vm5922, %v5918, inf
        %5924 = vmin.xlane.f32.xlu0 %v5923
        %v5925 = vpop.xlane.xlu0 %5924
        %v5926 = vcvt.f32.s32 %v5925
        %v5927 = vcvt.f32.s32 %v5921
        %v5928 = vshll.u32 %v5927, 16
        %v5929 = vadd.s32 %v5928, %v5926
        %v5930 = vsel %vm5797, %v5838, 2147483647
        %v5931 = vand.u32 %v5930, 65535
        %v5932 = vshra.s32 %v5930, 16
        %v5933 = vcvt.s32.f32 %v5931
        %v5934 = vcvt.s32.f32 %v5932
        %5935 = vmin.xlane.f32.xlu0 %v5934
        %v5936 = vpop.xlane.xlu0 %5935
        %vm5937 = vcmp.eq.f32.partialorder %v5934, %v5936
        %v5938 = vsel %vm5937, %v5933, inf
        %5939 = vmin.xlane.f32.xlu0 %v5938
        %v5940 = vpop.xlane.xlu0 %5939
        %v5941 = vcvt.f32.s32 %v5940
        %v5942 = vcvt.f32.s32 %v5936
        %v5943 = vshll.u32 %v5942, 16
        %v5944 = vadd.s32 %v5943, %v5941
        %v5945 = vsel %vm5797, %v5839, 2147483647
        %v5946 = vand.u32 %v5945, 65535
        %v5947 = vshra.s32 %v5945, 16
        %v5948 = vcvt.s32.f32 %v5946
        %v5949 = vcvt.s32.f32 %v5947
        %5950 = vmin.xlane.f32.xlu0 %v5949
        %v5951 = vpop.xlane.xlu0 %5950
        %vm5952 = vcmp.eq.f32.partialorder %v5949, %v5951
        %v5953 = vsel %vm5952, %v5948, inf
        %5954 = vmin.xlane.f32.xlu0 %v5953
        %v5955 = vpop.xlane.xlu0 %5954
        %v5956 = vcvt.f32.s32 %v5955
        %v5957 = vcvt.f32.s32 %v5951
        %v5958 = vshll.u32 %v5957, 16
        %v5959 = vadd.s32 %v5958, %v5956
        %v5960 = vcvt.s32.f32 %v559
        %v5961 = vcvt.s32.f32 %v560
        %v5962 = vcvt.s32.f32 %v561
        %v5963 = vcvt.s32.f32 %v562
        %v5964 = vcvt.s32.f32 %v563
        %v5965 = vcvt.s32.f32 %v564
        %v5966 = vcvt.s32.f32 %v565
        %v5967 = vcvt.s32.f32 %v566
        %v5968 = vadd.f32 %v5960, 0.5
        %v5969 = vadd.f32 %v5961, 0.5
        %v5970 = vadd.f32 %v5962, 0.5
        %v5971 = vadd.f32 %v5963, 0.5
        %v5972 = vadd.f32 %v5964, 0.5
        %v5973 = vadd.f32 %v5965, 0.5
        %v5974 = vadd.f32 %v5966, 0.5
        %v5975 = vadd.f32 %v5967, 0.5
        %v5976 = vmul.f32 %v5968, %v5588
        %v5977 = vmul.f32 %v5969, %v5588
        %v5978 = vmul.f32 %v5970, %v5588
        %v5979 = vmul.f32 %v5971, %v5588
        %v5980 = vmul.f32 %v5972, %v5588
        %v5981 = vmul.f32 %v5973, %v5588
        %v5982 = vmul.f32 %v5974, %v5588
        %v5983 = vmul.f32 %v5975, %v5588
        %5992 = vrot.lane.b32.xlu0 %v5589, 1
        %v5993 = vpop.permute.xlu0 %5992
        %5994 = vrot.lane.b32.xlu0 %v5590, 1
        %v5995 = vpop.permute.xlu0 %5994
        %5996 = vrot.lane.b32.xlu0 %v5591, 1
        %v5997 = vpop.permute.xlu0 %5996
        %5998 = vrot.lane.b32.xlu0 %v5592, 1
        %v5999 = vpop.permute.xlu0 %5998
        %6000 = vrot.lane.b32.xlu0 %v5593, 1
        %v6001 = vpop.permute.xlu0 %6000
        %6002 = vrot.lane.b32.xlu0 %v5594, 1
        %v6003 = vpop.permute.xlu0 %6002
        %6004 = vrot.lane.b32.xlu0 %v5595, 1
        %v6005 = vpop.permute.xlu0 %6004
        %6006 = vrot.lane.b32.xlu0 %v5596, 1
        %v6007 = vpop.permute.xlu0 %6006
        %v6016 = vsub.f32 %v5976, %v5993
        %v6017 = vsub.f32 %v5977, %v5995
        %v6018 = vsub.f32 %v5978, %v5997
        %v6019 = vsub.f32 %v5979, %v5999
        %v6020 = vsub.f32 %v5980, %v6001
        %v6021 = vsub.f32 %v5981, %v6003
        %v6022 = vsub.f32 %v5982, %v6005
        %v6023 = vsub.f32 %v5983, %v6007
        %6024 = vrot.lane.b32.xlu0 %v5589, 127
        %v6025 = vpop.permute.xlu0 %6024
        %6026 = vrot.lane.b32.xlu0 %v5590, 127
        %v6027 = vpop.permute.xlu0 %6026
        %6028 = vrot.lane.b32.xlu0 %v5591, 127
        %v6029 = vpop.permute.xlu0 %6028
        %6030 = vrot.lane.b32.xlu0 %v5592, 127
        %v6031 = vpop.permute.xlu0 %6030
        %6032 = vrot.lane.b32.xlu0 %v5593, 127
        %v6033 = vpop.permute.xlu0 %6032
        %6034 = vrot.lane.b32.xlu0 %v5594, 127
        %v6035 = vpop.permute.xlu0 %6034
        %6036 = vrot.lane.b32.xlu0 %v5595, 127
        %v6037 = vpop.permute.xlu0 %6036
        %6038 = vrot.lane.b32.xlu0 %v5596, 127
        %v6039 = vpop.permute.xlu0 %6038
        %v6048 = vsub.f32 %v5976, %v6025
        %v6049 = vsub.f32 %v5977, %v6027
        %v6050 = vsub.f32 %v5978, %v6029
        %v6051 = vsub.f32 %v5979, %v6031
        %v6052 = vsub.f32 %v5980, %v6033
        %v6053 = vsub.f32 %v5981, %v6035
        %v6054 = vsub.f32 %v5982, %v6037
        %v6055 = vsub.f32 %v5983, %v6039
        %v6056 = vadd.f32 %v5976, %v6025
        %v6057 = vadd.f32 %v5977, %v6027
        %v6058 = vadd.f32 %v5978, %v6029
        %v6059 = vadd.f32 %v5979, %v6031
        %v6060 = vadd.f32 %v5980, %v6033
        %v6061 = vadd.f32 %v5981, %v6035
        %v6062 = vadd.f32 %v5982, %v6037
        %v6063 = vadd.f32 %v5983, %v6039
        %6064 = vrot.lane.b32.xlu0 %v5589, 125
        %v6065 = vpop.permute.xlu0 %6064
        %6066 = vrot.lane.b32.xlu0 %v5590, 125
        %v6067 = vpop.permute.xlu0 %6066
        %6068 = vrot.lane.b32.xlu0 %v5591, 125
        %v6069 = vpop.permute.xlu0 %6068
        %6070 = vrot.lane.b32.xlu0 %v5592, 125
        %v6071 = vpop.permute.xlu0 %6070
        %6072 = vrot.lane.b32.xlu0 %v5593, 125
        %v6073 = vpop.permute.xlu0 %6072
        %6074 = vrot.lane.b32.xlu0 %v5594, 125
        %v6075 = vpop.permute.xlu0 %6074
        %6076 = vrot.lane.b32.xlu0 %v5595, 125
        %v6077 = vpop.permute.xlu0 %6076
        %6078 = vrot.lane.b32.xlu0 %v5596, 125
        %v6079 = vpop.permute.xlu0 %6078
        %v6088 = vadd.f32 %v5976, %v6065
        %v6089 = vadd.f32 %v5977, %v6067
        %v6090 = vadd.f32 %v5978, %v6069
        %v6091 = vadd.f32 %v5979, %v6071
        %v6092 = vadd.f32 %v5980, %v6073
        %v6093 = vadd.f32 %v5981, %v6075
        %v6094 = vadd.f32 %v5982, %v6077
        %v6095 = vadd.f32 %v5983, %v6079
        %v6096 = vcvt.s32.f32 %v5854
        %v6097 = vcvt.s32.f32 %v5869
        %v6098 = vcvt.s32.f32 %v5884
        %v6099 = vcvt.s32.f32 %v5899
        %v6100 = vcvt.s32.f32 %v5914
        %v6101 = vcvt.s32.f32 %v5929
        %v6102 = vcvt.s32.f32 %v5944
        %v6103 = vcvt.s32.f32 %v5959
        %6112 = vrot.lane.b32.xlu0 %v6016, 1
        %v6113 = vpop.permute.xlu0 %6112
        %6114 = vrot.lane.b32.xlu0 %v6017, 1
        %v6115 = vpop.permute.xlu0 %6114
        %6116 = vrot.lane.b32.xlu0 %v6018, 1
        %v6117 = vpop.permute.xlu0 %6116
        %6118 = vrot.lane.b32.xlu0 %v6019, 1
        %v6119 = vpop.permute.xlu0 %6118
        %6120 = vrot.lane.b32.xlu0 %v6020, 1
        %v6121 = vpop.permute.xlu0 %6120
        %6122 = vrot.lane.b32.xlu0 %v6021, 1
        %v6123 = vpop.permute.xlu0 %6122
        %6124 = vrot.lane.b32.xlu0 %v6022, 1
        %v6125 = vpop.permute.xlu0 %6124
        %6126 = vrot.lane.b32.xlu0 %v6023, 1
        %v6127 = vpop.permute.xlu0 %6126
        %6144 = vrot.lane.b32.xlu0 %v6048, 3
        %v6145 = vpop.permute.xlu0 %6144
        %6146 = vrot.lane.b32.xlu0 %v6049, 3
        %v6147 = vpop.permute.xlu0 %6146
        %6148 = vrot.lane.b32.xlu0 %v6050, 3
        %v6149 = vpop.permute.xlu0 %6148
        %6150 = vrot.lane.b32.xlu0 %v6051, 3
        %v6151 = vpop.permute.xlu0 %6150
        %6152 = vrot.lane.b32.xlu0 %v6052, 3
        %v6153 = vpop.permute.xlu0 %6152
        %6154 = vrot.lane.b32.xlu0 %v6053, 3
        %v6155 = vpop.permute.xlu0 %6154
        %6156 = vrot.lane.b32.xlu0 %v6054, 3
        %v6157 = vpop.permute.xlu0 %6156
        %6158 = vrot.lane.b32.xlu0 %v6055, 3
        %v6159 = vpop.permute.xlu0 %6158
        %6176 = vrot.lane.b32.xlu0 %v6056, 3
        %v6177 = vpop.permute.xlu0 %6176
        %6178 = vrot.lane.b32.xlu0 %v6057, 3
        %v6179 = vpop.permute.xlu0 %6178
        %6180 = vrot.lane.b32.xlu0 %v6058, 3
        %v6181 = vpop.permute.xlu0 %6180
        %6182 = vrot.lane.b32.xlu0 %v6059, 3
        %v6183 = vpop.permute.xlu0 %6182
        %6184 = vrot.lane.b32.xlu0 %v6060, 3
        %v6185 = vpop.permute.xlu0 %6184
        %6186 = vrot.lane.b32.xlu0 %v6061, 3
        %v6187 = vpop.permute.xlu0 %6186
        %6188 = vrot.lane.b32.xlu0 %v6062, 3
        %v6189 = vpop.permute.xlu0 %6188
        %6190 = vrot.lane.b32.xlu0 %v6063, 3
        %v6191 = vpop.permute.xlu0 %6190
        %6208 = vrot.lane.b32.xlu0 %v6088, 5
        %v6209 = vpop.permute.xlu0 %6208
        %6210 = vrot.lane.b32.xlu0 %v6089, 5
        %v6211 = vpop.permute.xlu0 %6210
        %6212 = vrot.lane.b32.xlu0 %v6090, 5
        %v6213 = vpop.permute.xlu0 %6212
        %6214 = vrot.lane.b32.xlu0 %v6091, 5
        %v6215 = vpop.permute.xlu0 %6214
        %6216 = vrot.lane.b32.xlu0 %v6092, 5
        %v6217 = vpop.permute.xlu0 %6216
        %6218 = vrot.lane.b32.xlu0 %v6093, 5
        %v6219 = vpop.permute.xlu0 %6218
        %6220 = vrot.lane.b32.xlu0 %v6094, 5
        %v6221 = vpop.permute.xlu0 %6220
        %6222 = vrot.lane.b32.xlu0 %v6095, 5
        %v6223 = vpop.permute.xlu0 %6222
        %vm6232 = vcmask 7168
        %v6233 = vsel %vm6232, %v5800, %v6096
        %v6234 = vsel %vm6232, %v5803, %v6097
        %v6235 = vsel %vm6232, %v5806, %v6098
        %v6236 = vsel %vm6232, %v5809, %v6099
        %v6237 = vsel %vm6232, %v5812, %v6100
        %v6238 = vsel %vm6232, %v5815, %v6101
        %v6239 = vsel %vm6232, %v5818, %v6102
        %v6240 = vsel %vm6232, %v5821, %v6103
        %vm6241 = vcmask 15360
        %v6242 = vsel %vm6241, %v6233, %v6113
        %v6243 = vsel %vm6241, %v6234, %v6115
        %v6244 = vsel %vm6241, %v6235, %v6117
        %v6245 = vsel %vm6241, %v6236, %v6119
        %v6246 = vsel %vm6241, %v6237, %v6121
        %v6247 = vsel %vm6241, %v6238, %v6123
        %v6248 = vsel %vm6241, %v6239, %v6125
        %v6249 = vsel %vm6241, %v6240, %v6127
        %vm6250 = vcmask 23552
        %v6251 = vsel %vm6250, %v6242, %v6145
        %v6252 = vsel %vm6250, %v6243, %v6147
        %v6253 = vsel %vm6250, %v6244, %v6149
        %v6254 = vsel %vm6250, %v6245, %v6151
        %v6255 = vsel %vm6250, %v6246, %v6153
        %v6256 = vsel %vm6250, %v6247, %v6155
        %v6257 = vsel %vm6250, %v6248, %v6157
        %v6258 = vsel %vm6250, %v6249, %v6159
        %vm6259 = vcmask 31744
        %v6260 = vsel %vm6259, %v6251, %v6177
        %v6261 = vsel %vm6259, %v6252, %v6179
        %v6262 = vsel %vm6259, %v6253, %v6181
        %v6263 = vsel %vm6259, %v6254, %v6183
        %v6264 = vsel %vm6259, %v6255, %v6185
        %v6265 = vsel %vm6259, %v6256, %v6187
        %v6266 = vsel %vm6259, %v6257, %v6189
        %v6267 = vsel %vm6259, %v6258, %v6191
        %vm6268 = vcmask 39936
        %v6269 = vsel %vm6268, %v6260, %v6209
        %v6270 = vsel %vm6268, %v6261, %v6211
        %v6271 = vsel %vm6268, %v6262, %v6213
        %v6272 = vsel %vm6268, %v6263, %v6215
        %v6273 = vsel %vm6268, %v6264, %v6217
        %v6274 = vsel %vm6268, %v6265, %v6219
        %v6275 = vsel %vm6268, %v6266, %v6221
        %v6276 = vsel %vm6268, %v6267, %v6223
        %vm6277 = vcmask 48128
        %v6278 = vsel %vm6277, %v6269, 0.0
        %v6279 = vsel %vm6277, %v6270, 0.0
        %v6280 = vsel %vm6277, %v6271, 0.0
        %v6281 = vsel %vm6277, %v6272, 0.0
        %v6282 = vsel %vm6277, %v6273, 0.0
        %v6283 = vsel %vm6277, %v6274, 0.0
        %v6284 = vsel %vm6277, %v6275, 0.0
        %v6285 = vsel %vm6277, %v6276, 0.0
        %6286 = vst.msk [vmem:[%s553] sm:$0xff] %vm1148, %v6278
        %6287 = vst.msk [vmem:[%s553 + $0x8] sm:$0xff] %vm1148, %v6279
        %6288 = vst.msk [vmem:[%s553 + $0x10] sm:$0xff] %vm1148, %v6280
        %6289 = vst.msk [vmem:[%s553 + $0x18] sm:$0xff] %vm1148, %v6281
        %6290 = vst.msk [vmem:[%s553 + $0x20] sm:$0xff] %vm1148, %v6282
        %6291 = vst.msk [vmem:[%s553 + $0x28] sm:$0xff] %vm1148, %v6283
        %6292 = vst.msk [vmem:[%s553 + $0x30] sm:$0xff] %vm1148, %v6284
        %6293 = vst.msk [vmem:[%s553 + $0x38] sm:$0xff] %vm1148, %v6285
        %p6294 = scmp.lt.s32.totalorder %s28, 2
        %s6295 = scalar_select %p6294, %s28, 2
        %s6296 = smul.addr %s6295, 8
        %s6297 = smul.addr %s6296, 8
        %s6298 = scalar_lea.vmem %s14, %s6297
        // Predicated region
        $region93: #{_fcos_forward.1} parent=75 // pred_check
          %p6299 = pneg %p355
        $region94: #{_fcos_forward.1} parent=75 // pred_check_branch
          %6301 = sbr.rel (%p6299) target = $region96
        $region95: #{_fcos_forward.1} parent=75 // pred_region
          _
        $region96: #{_fcos_forward.1} parent=75 // pred_fallthru
          _
      $region76: #{_fcos_forward.1} parent=5 // pred_fallthru
        _
      %p6302 = scmp.le.s32.totalorder 2, %s23
      // Predicated region
      $region97: #{_fcos_forward.1} parent=5 // pred_check
        %p6303 = pneg %p6302
      $region98: #{_fcos_forward.1} parent=5 // pred_check_branch
        %6305 = sbr.rel (%p6303) target = $region100
      $region99: #{_fcos_forward.1} parent=5 // pred_region
        %s6306 = ssub.s32 %s23, 2
        // Predicated region
        $region101: #{_fcos_forward.1} parent=99 // pred_check
          %p6307 = pneg %p361
        $region102: #{_fcos_forward.1} parent=99 // pred_check_branch
          %6309 = sbr.rel (%p6307) target = $region104
        $region103: #{_fcos_forward.1} parent=99 // pred_region
          %p6310 = scmp.lt.s32.totalorder %s29, 2
          %s6311 = scalar_select %p6310, %s29, 2
          %s6312 = smul.addr %s6311, 8
          %s6313 = smul.addr %s6312, 8
          %s6314 = scalar_lea.vmem %s14, %s6313
        $region104: #{_fcos_forward.1} parent=99 // pred_fallthru
          _
      $region100: #{_fcos_forward.1} parent=5 // pred_fallthru
        _
    $region6: #{_fcos_forward.1} parent=1 // loop_footer
      %s27 = sadd.s32 1, %s23
    $region7: #{_fcos_forward.1} parent=1 // loop_footer_branch
      %22 = sbr.rel target = $region3
    $region8: #{_fcos_forward.1} parent=1 // loop_exit
      _
    %6315 = vsyncpa [#allocation3], 1
    %s6316 = scalar_lea.sflag [#allocation3], 1
    %6317 = vsyncpa %s6316, 1
    %6318 = vsyncpa [#allocation5], 1
    %6319 = vsyncpa [#allocation8], 1

</llo_original>
